<compile_context>
chip_gen: v5e
topology: v5e:2x2
jax: 0.10.0
libtpu: 0.0.40
codegen_flags: <defaults>
</compile_context>

<pallas_src>
import jax
import jax.numpy as jnp
import numpy as np
from jax.experimental import pallas as pl
from jax.experimental.pallas import tpu as pltpu

H = W = 19
NQ = 21 * 21                 # 441 padded-grid rows
C1 = 32                      # conv1 real output channels
C1P = 128                    # conv1 channels padded to one full lane tile
C2 = 64                      # conv2 output channels
NPIX_OUT = 364               # 361 valid pixels + 3 zero pad rows
K_FC1 = NPIX_OUT * C2        # 23296 (= 7 * 3328)
N_FC1 = 256
N_FC2 = 361
TILE_K = 3328                # fc1 reduction tile: multiple of 128, divides 23296
LEAD = 24                    # 8-aligned zero margin of the conv2 tap buffer
BUF_ROWS = LEAD + NQ + 23    # 488 >= largest tap slice end (46 + 441 = 487)


# ---------------------------------------------------------------- conv kernel
def conv_fused_kernel(p_ref, m_ref, w1_ref, b1_ref, w2_ref, b2_ref,
                      o_ref, buf_ref):
    # p_ref : (441, 27)   conv1 im2col patches for one image (built in wrapper)
    # m_ref : (441, 1)    border-ring mask (1 inside the 19x19 board, 0 on ring)
    # w1_ref: (27, 128)   conv1 weights, Cout zero-padded 32 -> 128
    # w2_ref: (1152, 64)  conv2 weights, rows = (tap, padded Cin)
    # o_ref : (364, 64)   rows 0..360 = conv2 output in (h, w, c) order, 361..363 = 0
    # buf_ref: VMEM (488, 128) scratch holding conv1 output with zero margins.

    # conv1: one im2col matmul (K = 27), bias, relu, then zero the border ring
    h1 = jnp.dot(p_ref[...], w1_ref[...], preferred_element_type=jnp.float32)
    h1 = jnp.maximum(h1 + b1_ref[...], 0.0) * m_ref[...]            # (441, 128)

    # stage into a zero-margined slab so every conv2 tap is a contiguous slice
    buf_ref[...] = jnp.zeros_like(buf_ref)
    buf_ref[LEAD:LEAD + NQ, :] = h1                                  # 8-aligned store
    buf = buf_ref[...]

    # conv2: lane-aligned concat of the 9 taps -> single K = 1152 matmul
    taps = []
    for kh in range(3):
        for kw in range(3):
            s = LEAD + (kh - 1) * 21 + (kw - 1)                      # 2 .. 46
            taps.append(buf[s:s + NQ, :])                            # (441, 128)
    p2 = jnp.concatenate(taps, axis=-1)                              # (441, 1152)
    h2 = jnp.dot(p2, w2_ref[...], preferred_element_type=jnp.float32)
    h2 = jnp.maximum(h2 + b2_ref[...], 0.0)                          # (441, 64)

    # gather the 361 valid rows (board row h lives at padded rows (h+1)*21+1 ..)
    for h in range(19):
        o_ref[h * 19:(h + 1) * 19, :] = h2[(h + 1) * 21 + 1:(h + 1) * 21 + 20, :]
    o_ref[361:364, :] = jnp.zeros((3, C2), jnp.float32)


def conv_fused(patches, prep):
    b = patches.shape[0]
    return pl.pallas_call(
        conv_fused_kernel,
        out_shape=jax.ShapeDtypeStruct((b, NPIX_OUT, C2), jnp.float32),
        grid=(b,),
        in_specs=[
            pl.BlockSpec((None, NQ, 27), lambda i: (i, 0, 0)),
            pl.BlockSpec((NQ, 1), lambda i: (0, 0)),
            pl.BlockSpec((27, C1P), lambda i: (0, 0)),
            pl.BlockSpec((1, C1P), lambda i: (0, 0)),
            pl.BlockSpec((9 * C1P, C2), lambda i: (0, 0)),
            pl.BlockSpec((1, C2), lambda i: (0, 0)),
        ],
        out_specs=pl.BlockSpec((None, NPIX_OUT, C2), lambda i: (i, 0, 0)),
        scratch_shapes=[pltpu.VMEM((BUF_ROWS, C1P), jnp.float32)],
        compiler_params=pltpu.CompilerParams(
            dimension_semantics=("parallel",)),     # shards batch on v7x megacore
    )(patches, prep["mask"], prep["w1"], prep["b1"], prep["w2"], prep["b2"])


# ------------------------------------------------------------ fc1 + fc2 kernel
def fc_fused_kernel(x_ref, w1_ref, b1_ref, w2_ref, b2_ref, o_ref, acc_ref):
    # Streams the bf16 fc1 weight over K tiles; fc2 is applied on the last step.
    k = pl.program_id(0)

    @pl.when(k == 0)
    def _():
        acc_ref[...] = jnp.zeros_like(acc_ref)

    acc_ref[...] += jnp.dot(x_ref[...].astype(jnp.bfloat16), w1_ref[...],
                            preferred_element_type=jnp.float32)

    @pl.when(k == pl.num_programs(0) - 1)
    def _():
        hidden = jnp.maximum(acc_ref[...] + b1_ref[...], 0.0)        # (B, 256)
        o_ref[...] = (jnp.dot(hidden, w2_ref[...],
                              preferred_element_type=jnp.float32)
                      + b2_ref[...])


def fc_fused(xf, prep):
    b, kp = xf.shape
    n_k = kp // TILE_K
    return pl.pallas_call(
        fc_fused_kernel,
        out_shape=jax.ShapeDtypeStruct((b, N_FC2), jnp.float32),
        grid=(n_k,),
        in_specs=[
            pl.BlockSpec((b, TILE_K), lambda k: (0, k)),
            pl.BlockSpec((TILE_K, N_FC1), lambda k: (k, 0)),
            pl.BlockSpec((1, N_FC1), lambda k: (0, 0)),
            pl.BlockSpec((N_FC1, N_FC2), lambda k: (0, 0)),
            pl.BlockSpec((1, N_FC2), lambda k: (0, 0)),
        ],
        out_specs=pl.BlockSpec((b, N_FC2), lambda k: (0, 0)),
        scratch_shapes=[pltpu.VMEM((b, N_FC1), jnp.float32)],
        compiler_params=pltpu.CompilerParams(
            dimension_semantics=("arbitrary",)),     # reduction axis
    )(xf, prep["fc1_w"], prep["fc1_b"], prep["fc2_w"], prep["fc2_b"])


# ---------------------------------------------------- parameters & preparation
def init_params(key):
    ks = jax.random.split(key, 8)

    def u(k, shape, fan_in):
        bound = 1.0 / np.sqrt(fan_in)
        return jax.random.uniform(k, shape, jnp.float32, -bound, bound)

    return {
        "conv1_w": u(ks[0], (3, 3, 3, 32), 3 * 9),              # HWIO
        "conv1_b": u(ks[1], (32,), 3 * 9),
        "conv2_w": u(ks[2], (3, 3, 32, 64), 32 * 9),
        "conv2_b": u(ks[3], (64,), 32 * 9),
        "fc1_w": u(ks[4], (64 * 19 * 19, 256), 64 * 19 * 19),   # rows in torch
        "fc1_b": u(ks[5], (256,), 64 * 19 * 19),                # (c, h, w) order
        "fc2_w": u(ks[6], (256, 361), 256),
        "fc2_b": u(ks[7], (361,), 256),
    }


def prepare_params(p):
    """One-time (outside jit) re-layout of the weights for the fused kernels."""
    w1 = p["conv1_w"].reshape(27, C1)                            # (tap, cin) rows
    w1 = jnp.pad(w1, ((0, 0), (0, C1P - C1)))                    # pad Cout -> 128
    b1 = jnp.pad(p["conv1_b"].reshape(1, C1), ((0, 0), (0, C1P - C1)))
    w2 = p["conv2_w"].reshape(9, C1, C2)
    w2 = jnp.pad(w2, ((0, 0), (0, C1P - C1), (0, 0))).reshape(9 * C1P, C2)
    b2 = p["conv2_b"].reshape(1, C2)
    # fc1 weight: permute rows once from torch's (c, h, w) flatten to (h, w, c),
    # append zero rows for the 3 pad pixels, and store as bf16 (halves HBM read).
    fw = p["fc1_w"].reshape(C2, H, W, N_FC1).transpose(1, 2, 0, 3)
    fw = fw.reshape(H * W * C2, N_FC1)
    fw = jnp.pad(fw, ((0, 3 * C2), (0, 0))).astype(jnp.bfloat16)  # (23296, 256)
    # border-ring mask over the 441-row padded grid
    qh = np.arange(NQ) // 21
    qw = np.arange(NQ) % 21
    m = ((qh >= 1) & (qh <= 19) & (qw >= 1) & (qw <= 19)).astype(np.float32)
    return {
        "w1": w1, "b1": b1, "w2": w2, "b2": b2,
        "fc1_w": fw, "fc1_b": p["fc1_b"].reshape(1, N_FC1),
        "fc2_w": p["fc2_w"], "fc2_b": p["fc2_b"].reshape(1, N_FC2),
        "mask": jnp.asarray(m.reshape(NQ, 1)),
    }


# ------------------------------------------------------------------ forward(s)
def gocnn_forward(prep, x_nchw):
    b = x_nchw.shape[0]
    x = jnp.transpose(x_nchw, (0, 2, 3, 1)).astype(jnp.float32)     # (B,19,19,3)
    # tiny wrapper glue: conv1 im2col patches on the 21x21 padded grid
    xp = jnp.pad(x, ((0, 0), (2, 2), (2, 2), (0, 0)))               # (B,23,23,3)
    cols = [xp[:, e:e + 21, f:f + 21, :] for e in range(3) for f in range(3)]
    patches = jnp.concatenate(cols, axis=-1).reshape(b, NQ, 27)     # (B,441,27)

    conv_out = conv_fused(patches, prep)                            # (B,364,64)
    xf = conv_out.reshape(b, K_FC1)                                 # free reshape
    return fc_fused(xf, prep)                                       # (B,361)


def gocnn_reference(params, x_nchw):
    x = jnp.transpose(x_nchw, (0, 2, 3, 1)).astype(jnp.float32)
    for wn, bn in (("conv1_w", "conv1_b"), ("conv2_w", "conv2_b")):
        x = jax.lax.conv_general_dilated(
            x, params[wn], (1, 1), "SAME",
            dimension_numbers=("NHWC", "HWIO", "NHWC"),
            precision=jax.lax.Precision.HIGHEST)
        x = jnp.maximum(x + params[bn], 0.0)
    b = x.shape[0]
    x = jnp.transpose(x, (0, 3, 1, 2)).reshape(b, -1)                # torch flatten
    x = jnp.maximum(jnp.dot(x, params["fc1_w"],
                            precision=jax.lax.Precision.HIGHEST)
                    + params["fc1_b"], 0.0)
    return jnp.dot(x, params["fc2_w"],
                   precision=jax.lax.Precision.HIGHEST) + params["fc2_b"]


if __name__ == "__main__":
    key = jax.random.PRNGKey(0)
    pkey, xkey = jax.random.split(key)
    params = init_params(pkey)
    # Go board input: batch=2, 3 planes, 19x19 (fc1 requires the 19x19 spatial)
    x = jax.random.normal(xkey, (2, 3, 19, 19), jnp.float32)

    prep = prepare_params(params)               # one-time weight re-layout
    fwd = jax.jit(gocnn_forward)
    out = jax.block_until_ready(fwd(prep, x))
    assert out.shape == (2, 361), out.shape

    ref = gocnn_reference(params, x)
    err = float(jnp.max(jnp.abs(out - ref)))
    assert err < 5e-2, f"max abs err vs reference: {err}"
    print("KERNEL_OK")
</pallas_src>

<mosaic_0001>
module attributes {stable_mosaic.version = 11 : i64} {
  func.func @conv_fused_kernel(%arg0: i32, %arg1: memref<1x441x27xf32, #tpu.memory_space<vmem>>, %arg2: memref<441x1xf32, #tpu.memory_space<vmem>>, %arg3: memref<27x128xf32, #tpu.memory_space<vmem>>, %arg4: memref<1x128xf32, #tpu.memory_space<vmem>>, %arg5: memref<1152x64xf32, #tpu.memory_space<vmem>>, %arg6: memref<1x64xf32, #tpu.memory_space<vmem>>, %arg7: memref<1x364x64xf32, #tpu.memory_space<vmem>>, %arg8: memref<488x128xf32, #tpu.memory_space<vmem>>) attributes {dimension_semantics = [#tpu.dimension_semantics<parallel>], iteration_bounds = array<i64: 2>, scalar_prefetch = 0 : i64, scratch_operands = 1 : i64, tpu.core_type = #tpu.core_type<tc>, window_params = [{transform_indices = @transform_0, window_bounds = array<i64: 1, 441, 27>}, {pipeline_mode = #tpu.pipeline_mode<synchronous>, transform_indices = @transform_1, window_bounds = array<i64: 441, 1>}, {pipeline_mode = #tpu.pipeline_mode<synchronous>, transform_indices = @transform_2, window_bounds = array<i64: 27, 128>}, {pipeline_mode = #tpu.pipeline_mode<synchronous>, transform_indices = @transform_3, window_bounds = array<i64: 1, 128>}, {pipeline_mode = #tpu.pipeline_mode<synchronous>, transform_indices = @transform_4, window_bounds = array<i64: 1152, 64>}, {pipeline_mode = #tpu.pipeline_mode<synchronous>, transform_indices = @transform_5, window_bounds = array<i64: 1, 64>}, {transform_indices = @transform_6, window_bounds = array<i64: 1, 364, 64>}]} {
    %c0 = arith.constant 0 : index
    %c0_0 = arith.constant 0 : index
    %c0_1 = arith.constant 0 : index
    %0 = vector.load %arg1[%c0, %c0_0, %c0_1] : memref<1x441x27xf32, #tpu.memory_space<vmem>>, vector<1x441x27xf32>
    %1 = vector.shape_cast %0 : vector<1x441x27xf32> to vector<441x27xf32>
    %c0_2 = arith.constant 0 : index
    %c0_3 = arith.constant 0 : index
    %2 = vector.load %arg3[%c0_2, %c0_3] : memref<27x128xf32, #tpu.memory_space<vmem>>, vector<27x128xf32>
    %cst = arith.constant dense<0.000000e+00> : vector<441x128xf32>
    %3 = tpu.matmul %1, %2, %cst {dimension_numbers = #tpu.dot_dimension_numbers<[1], [0], [0], [1], [0, 0, 1, 1], [], []>} : vector<441x27xf32>, vector<27x128xf32>, vector<441x128xf32> -> vector<441x128xf32>
    %c0_4 = arith.constant 0 : index
    %c0_5 = arith.constant 0 : index
    %4 = vector.load %arg4[%c0_4, %c0_5] : memref<1x128xf32, #tpu.memory_space<vmem>>, vector<1x128xf32>
    %5 = vector.broadcast %4 : vector<1x128xf32> to vector<441x128xf32>
    %6 = arith.addf %3, %5 : vector<441x128xf32>
    %cst_6 = arith.constant 0.000000e+00 : f32
    %7 = vector.broadcast %cst_6 : f32 to vector<441x128xf32>
    %8 = arith.maximumf %6, %7 : vector<441x128xf32>
    %c0_7 = arith.constant 0 : index
    %c0_8 = arith.constant 0 : index
    %9 = vector.load %arg2[%c0_7, %c0_8] : memref<441x1xf32, #tpu.memory_space<vmem>>, vector<441x1xf32>
    %10 = vector.broadcast %9 : vector<441x1xf32> to vector<441x128xf32>
    %11 = arith.mulf %8, %10 : vector<441x128xf32>
    %cst_9 = arith.constant 0.000000e+00 : f32
    %12 = vector.broadcast %cst_9 : f32 to vector<488x128xf32>
    %c0_10 = arith.constant 0 : index
    %c0_11 = arith.constant 0 : index
    %13 = vector.load %arg8[%c0_10, %c0_11] : memref<488x128xf32, #tpu.memory_space<vmem>>, vector<488x128xf32>
    tpu.vector_store %arg8[%c0_10, %c0_11], %12 {strides = array<i32>} : memref<488x128xf32, #tpu.memory_space<vmem>>, vector<488x128xf32>,
    %c24 = arith.constant 24 : index
    %c0_12 = arith.constant 0 : index
    %14 = vector.load %arg8[%c24, %c0_12] : memref<488x128xf32, #tpu.memory_space<vmem>>, vector<441x128xf32>
    tpu.vector_store %arg8[%c24, %c0_12], %11 {strides = array<i32>} : memref<488x128xf32, #tpu.memory_space<vmem>>, vector<441x128xf32>,
    %c0_13 = arith.constant 0 : index
    %c0_14 = arith.constant 0 : index
    %15 = vector.load %arg8[%c0_13, %c0_14] : memref<488x128xf32, #tpu.memory_space<vmem>>, vector<488x128xf32>
    %16 = vector.extract_strided_slice %15 {offsets = [2, 0], sizes = [441, 128], strides = [1, 1]} : vector<488x128xf32> to vector<441x128xf32>
    %17 = vector.extract_strided_slice %15 {offsets = [3, 0], sizes = [441, 128], strides = [1, 1]} : vector<488x128xf32> to vector<441x128xf32>
    %18 = vector.extract_strided_slice %15 {offsets = [4, 0], sizes = [441, 128], strides = [1, 1]} : vector<488x128xf32> to vector<441x128xf32>
    %19 = vector.extract_strided_slice %15 {offsets = [23, 0], sizes = [441, 128], strides = [1, 1]} : vector<488x128xf32> to vector<441x128xf32>
    %20 = vector.extract_strided_slice %15 {offsets = [24, 0], sizes = [441, 128], strides = [1, 1]} : vector<488x128xf32> to vector<441x128xf32>
    %21 = vector.extract_strided_slice %15 {offsets = [25, 0], sizes = [441, 128], strides = [1, 1]} : vector<488x128xf32> to vector<441x128xf32>
    %22 = vector.extract_strided_slice %15 {offsets = [44, 0], sizes = [441, 128], strides = [1, 1]} : vector<488x128xf32> to vector<441x128xf32>
    %23 = vector.extract_strided_slice %15 {offsets = [45, 0], sizes = [441, 128], strides = [1, 1]} : vector<488x128xf32> to vector<441x128xf32>
    %24 = vector.extract_strided_slice %15 {offsets = [46, 0], sizes = [441, 128], strides = [1, 1]} : vector<488x128xf32> to vector<441x128xf32>
    %25 = tpu.concatenate %16, %17, %18, %19, %20, %21, %22, %23, %24 in 1 : vector<441x128xf32>, vector<441x128xf32>, vector<441x128xf32>, vector<441x128xf32>, vector<441x128xf32>, vector<441x128xf32>, vector<441x128xf32>, vector<441x128xf32>, vector<441x128xf32> -> vector<441x1152xf32>
    %c0_15 = arith.constant 0 : index
    %c0_16 = arith.constant 0 : index
    %26 = vector.load %arg5[%c0_15, %c0_16] : memref<1152x64xf32, #tpu.memory_space<vmem>>, vector<1152x64xf32>
    %cst_17 = arith.constant dense<0.000000e+00> : vector<441x64xf32>
    %27 = tpu.matmul %25, %26, %cst_17 {dimension_numbers = #tpu.dot_dimension_numbers<[1], [0], [0], [1], [0, 0, 1, 1], [], []>} : vector<441x1152xf32>, vector<1152x64xf32>, vector<441x64xf32> -> vector<441x64xf32>
    %c0_18 = arith.constant 0 : index
    %c0_19 = arith.constant 0 : index
    %28 = vector.load %arg6[%c0_18, %c0_19] : memref<1x64xf32, #tpu.memory_space<vmem>>, vector<1x64xf32>
    %29 = vector.broadcast %28 : vector<1x64xf32> to vector<441x64xf32>
    %30 = arith.addf %27, %29 : vector<441x64xf32>
    %cst_20 = arith.constant 0.000000e+00 : f32
    %31 = vector.broadcast %cst_20 : f32 to vector<441x64xf32>
    %32 = arith.maximumf %30, %31 : vector<441x64xf32>
    %33 = vector.extract_strided_slice %32 {offsets = [22, 0], sizes = [19, 64], strides = [1, 1]} : vector<441x64xf32> to vector<19x64xf32>
    %c0_21 = arith.constant 0 : index
    %c0_22 = arith.constant 0 : index
    %c0_23 = arith.constant 0 : index
    %34 = vector.load %arg7[%c0_21, %c0_22, %c0_23] : memref<1x364x64xf32, #tpu.memory_space<vmem>>, vector<1x19x64xf32>
    %35 = vector.shape_cast %34 : vector<1x19x64xf32> to vector<19x64xf32>
    %36 = vector.shape_cast %33 : vector<19x64xf32> to vector<1x19x64xf32>
    tpu.vector_store %arg7[%c0_21, %c0_22, %c0_23], %36 {strides = array<i32>} : memref<1x364x64xf32, #tpu.memory_space<vmem>>, vector<1x19x64xf32>,
    %37 = vector.extract_strided_slice %32 {offsets = [43, 0], sizes = [19, 64], strides = [1, 1]} : vector<441x64xf32> to vector<19x64xf32>
    %c0_24 = arith.constant 0 : index
    %c19 = arith.constant 19 : index
    %c0_25 = arith.constant 0 : index
    %38 = vector.load %arg7[%c0_24, %c19, %c0_25] : memref<1x364x64xf32, #tpu.memory_space<vmem>>, vector<1x19x64xf32>
    %39 = vector.shape_cast %38 : vector<1x19x64xf32> to vector<19x64xf32>
    %40 = vector.shape_cast %37 : vector<19x64xf32> to vector<1x19x64xf32>
    tpu.vector_store %arg7[%c0_24, %c19, %c0_25], %40 {strides = array<i32>} : memref<1x364x64xf32, #tpu.memory_space<vmem>>, vector<1x19x64xf32>,
    %41 = vector.extract_strided_slice %32 {offsets = [64, 0], sizes = [19, 64], strides = [1, 1]} : vector<441x64xf32> to vector<19x64xf32>
    %c0_26 = arith.constant 0 : index
    %c38 = arith.constant 38 : index
    %c0_27 = arith.constant 0 : index
    %42 = vector.load %arg7[%c0_26, %c38, %c0_27] : memref<1x364x64xf32, #tpu.memory_space<vmem>>, vector<1x19x64xf32>
    %43 = vector.shape_cast %42 : vector<1x19x64xf32> to vector<19x64xf32>
    %44 = vector.shape_cast %41 : vector<19x64xf32> to vector<1x19x64xf32>
    tpu.vector_store %arg7[%c0_26, %c38, %c0_27], %44 {strides = array<i32>} : memref<1x364x64xf32, #tpu.memory_space<vmem>>, vector<1x19x64xf32>,
    %45 = vector.extract_strided_slice %32 {offsets = [85, 0], sizes = [19, 64], strides = [1, 1]} : vector<441x64xf32> to vector<19x64xf32>
    %c0_28 = arith.constant 0 : index
    %c57 = arith.constant 57 : index
    %c0_29 = arith.constant 0 : index
    %46 = vector.load %arg7[%c0_28, %c57, %c0_29] : memref<1x364x64xf32, #tpu.memory_space<vmem>>, vector<1x19x64xf32>
    %47 = vector.shape_cast %46 : vector<1x19x64xf32> to vector<19x64xf32>
    %48 = vector.shape_cast %45 : vector<19x64xf32> to vector<1x19x64xf32>
    tpu.vector_store %arg7[%c0_28, %c57, %c0_29], %48 {strides = array<i32>} : memref<1x364x64xf32, #tpu.memory_space<vmem>>, vector<1x19x64xf32>,
    %49 = vector.extract_strided_slice %32 {offsets = [106, 0], sizes = [19, 64], strides = [1, 1]} : vector<441x64xf32> to vector<19x64xf32>
    %c0_30 = arith.constant 0 : index
    %c76 = arith.constant 76 : index
    %c0_31 = arith.constant 0 : index
    %50 = vector.load %arg7[%c0_30, %c76, %c0_31] : memref<1x364x64xf32, #tpu.memory_space<vmem>>, vector<1x19x64xf32>
    %51 = vector.shape_cast %50 : vector<1x19x64xf32> to vector<19x64xf32>
    %52 = vector.shape_cast %49 : vector<19x64xf32> to vector<1x19x64xf32>
    tpu.vector_store %arg7[%c0_30, %c76, %c0_31], %52 {strides = array<i32>} : memref<1x364x64xf32, #tpu.memory_space<vmem>>, vector<1x19x64xf32>,
    %53 = vector.extract_strided_slice %32 {offsets = [127, 0], sizes = [19, 64], strides = [1, 1]} : vector<441x64xf32> to vector<19x64xf32>
    %c0_32 = arith.constant 0 : index
    %c95 = arith.constant 95 : index
    %c0_33 = arith.constant 0 : index
    %54 = vector.load %arg7[%c0_32, %c95, %c0_33] : memref<1x364x64xf32, #tpu.memory_space<vmem>>, vector<1x19x64xf32>
    %55 = vector.shape_cast %54 : vector<1x19x64xf32> to vector<19x64xf32>
    %56 = vector.shape_cast %53 : vector<19x64xf32> to vector<1x19x64xf32>
    tpu.vector_store %arg7[%c0_32, %c95, %c0_33], %56 {strides = array<i32>} : memref<1x364x64xf32, #tpu.memory_space<vmem>>, vector<1x19x64xf32>,
    %57 = vector.extract_strided_slice %32 {offsets = [148, 0], sizes = [19, 64], strides = [1, 1]} : vector<441x64xf32> to vector<19x64xf32>
    %c0_34 = arith.constant 0 : index
    %c114 = arith.constant 114 : index
    %c0_35 = arith.constant 0 : index
    %58 = vector.load %arg7[%c0_34, %c114, %c0_35] : memref<1x364x64xf32, #tpu.memory_space<vmem>>, vector<1x19x64xf32>
    %59 = vector.shape_cast %58 : vector<1x19x64xf32> to vector<19x64xf32>
    %60 = vector.shape_cast %57 : vector<19x64xf32> to vector<1x19x64xf32>
    tpu.vector_store %arg7[%c0_34, %c114, %c0_35], %60 {strides = array<i32>} : memref<1x364x64xf32, #tpu.memory_space<vmem>>, vector<1x19x64xf32>,
    %61 = vector.extract_strided_slice %32 {offsets = [169, 0], sizes = [19, 64], strides = [1, 1]} : vector<441x64xf32> to vector<19x64xf32>
    %c0_36 = arith.constant 0 : index
    %c133 = arith.constant 133 : index
    %c0_37 = arith.constant 0 : index
    %62 = vector.load %arg7[%c0_36, %c133, %c0_37] : memref<1x364x64xf32, #tpu.memory_space<vmem>>, vector<1x19x64xf32>
    %63 = vector.shape_cast %62 : vector<1x19x64xf32> to vector<19x64xf32>
    %64 = vector.shape_cast %61 : vector<19x64xf32> to vector<1x19x64xf32>
    tpu.vector_store %arg7[%c0_36, %c133, %c0_37], %64 {strides = array<i32>} : memref<1x364x64xf32, #tpu.memory_space<vmem>>, vector<1x19x64xf32>,
    %65 = vector.extract_strided_slice %32 {offsets = [190, 0], sizes = [19, 64], strides = [1, 1]} : vector<441x64xf32> to vector<19x64xf32>
    %c0_38 = arith.constant 0 : index
    %c152 = arith.constant 152 : index
    %c0_39 = arith.constant 0 : index
    %66 = vector.load %arg7[%c0_38, %c152, %c0_39] : memref<1x364x64xf32, #tpu.memory_space<vmem>>, vector<1x19x64xf32>
    %67 = vector.shape_cast %66 : vector<1x19x64xf32> to vector<19x64xf32>
    %68 = vector.shape_cast %65 : vector<19x64xf32> to vector<1x19x64xf32>
    tpu.vector_store %arg7[%c0_38, %c152, %c0_39], %68 {strides = array<i32>} : memref<1x364x64xf32, #tpu.memory_space<vmem>>, vector<1x19x64xf32>,
    %69 = vector.extract_strided_slice %32 {offsets = [211, 0], sizes = [19, 64], strides = [1, 1]} : vector<441x64xf32> to vector<19x64xf32>
    %c0_40 = arith.constant 0 : index
    %c171 = arith.constant 171 : index
    %c0_41 = arith.constant 0 : index
    %70 = vector.load %arg7[%c0_40, %c171, %c0_41] : memref<1x364x64xf32, #tpu.memory_space<vmem>>, vector<1x19x64xf32>
    %71 = vector.shape_cast %70 : vector<1x19x64xf32> to vector<19x64xf32>
    %72 = vector.shape_cast %69 : vector<19x64xf32> to vector<1x19x64xf32>
    tpu.vector_store %arg7[%c0_40, %c171, %c0_41], %72 {strides = array<i32>} : memref<1x364x64xf32, #tpu.memory_space<vmem>>, vector<1x19x64xf32>,
    %73 = vector.extract_strided_slice %32 {offsets = [232, 0], sizes = [19, 64], strides = [1, 1]} : vector<441x64xf32> to vector<19x64xf32>
    %c0_42 = arith.constant 0 : index
    %c190 = arith.constant 190 : index
    %c0_43 = arith.constant 0 : index
    %74 = vector.load %arg7[%c0_42, %c190, %c0_43] : memref<1x364x64xf32, #tpu.memory_space<vmem>>, vector<1x19x64xf32>
    %75 = vector.shape_cast %74 : vector<1x19x64xf32> to vector<19x64xf32>
    %76 = vector.shape_cast %73 : vector<19x64xf32> to vector<1x19x64xf32>
    tpu.vector_store %arg7[%c0_42, %c190, %c0_43], %76 {strides = array<i32>} : memref<1x364x64xf32, #tpu.memory_space<vmem>>, vector<1x19x64xf32>,
    %77 = vector.extract_strided_slice %32 {offsets = [253, 0], sizes = [19, 64], strides = [1, 1]} : vector<441x64xf32> to vector<19x64xf32>
    %c0_44 = arith.constant 0 : index
    %c209 = arith.constant 209 : index
    %c0_45 = arith.constant 0 : index
    %78 = vector.load %arg7[%c0_44, %c209, %c0_45] : memref<1x364x64xf32, #tpu.memory_space<vmem>>, vector<1x19x64xf32>
    %79 = vector.shape_cast %78 : vector<1x19x64xf32> to vector<19x64xf32>
    %80 = vector.shape_cast %77 : vector<19x64xf32> to vector<1x19x64xf32>
    tpu.vector_store %arg7[%c0_44, %c209, %c0_45], %80 {strides = array<i32>} : memref<1x364x64xf32, #tpu.memory_space<vmem>>, vector<1x19x64xf32>,
    %81 = vector.extract_strided_slice %32 {offsets = [274, 0], sizes = [19, 64], strides = [1, 1]} : vector<441x64xf32> to vector<19x64xf32>
    %c0_46 = arith.constant 0 : index
    %c228 = arith.constant 228 : index
    %c0_47 = arith.constant 0 : index
    %82 = vector.load %arg7[%c0_46, %c228, %c0_47] : memref<1x364x64xf32, #tpu.memory_space<vmem>>, vector<1x19x64xf32>
    %83 = vector.shape_cast %82 : vector<1x19x64xf32> to vector<19x64xf32>
    %84 = vector.shape_cast %81 : vector<19x64xf32> to vector<1x19x64xf32>
    tpu.vector_store %arg7[%c0_46, %c228, %c0_47], %84 {strides = array<i32>} : memref<1x364x64xf32, #tpu.memory_space<vmem>>, vector<1x19x64xf32>,
    %85 = vector.extract_strided_slice %32 {offsets = [295, 0], sizes = [19, 64], strides = [1, 1]} : vector<441x64xf32> to vector<19x64xf32>
    %c0_48 = arith.constant 0 : index
    %c247 = arith.constant 247 : index
    %c0_49 = arith.constant 0 : index
    %86 = vector.load %arg7[%c0_48, %c247, %c0_49] : memref<1x364x64xf32, #tpu.memory_space<vmem>>, vector<1x19x64xf32>
    %87 = vector.shape_cast %86 : vector<1x19x64xf32> to vector<19x64xf32>
    %88 = vector.shape_cast %85 : vector<19x64xf32> to vector<1x19x64xf32>
    tpu.vector_store %arg7[%c0_48, %c247, %c0_49], %88 {strides = array<i32>} : memref<1x364x64xf32, #tpu.memory_space<vmem>>, vector<1x19x64xf32>,
    %89 = vector.extract_strided_slice %32 {offsets = [316, 0], sizes = [19, 64], strides = [1, 1]} : vector<441x64xf32> to vector<19x64xf32>
    %c0_50 = arith.constant 0 : index
    %c266 = arith.constant 266 : index
    %c0_51 = arith.constant 0 : index
    %90 = vector.load %arg7[%c0_50, %c266, %c0_51] : memref<1x364x64xf32, #tpu.memory_space<vmem>>, vector<1x19x64xf32>
    %91 = vector.shape_cast %90 : vector<1x19x64xf32> to vector<19x64xf32>
    %92 = vector.shape_cast %89 : vector<19x64xf32> to vector<1x19x64xf32>
    tpu.vector_store %arg7[%c0_50, %c266, %c0_51], %92 {strides = array<i32>} : memref<1x364x64xf32, #tpu.memory_space<vmem>>, vector<1x19x64xf32>,
    %93 = vector.extract_strided_slice %32 {offsets = [337, 0], sizes = [19, 64], strides = [1, 1]} : vector<441x64xf32> to vector<19x64xf32>
    %c0_52 = arith.constant 0 : index
    %c285 = arith.constant 285 : index
    %c0_53 = arith.constant 0 : index
    %94 = vector.load %arg7[%c0_52, %c285, %c0_53] : memref<1x364x64xf32, #tpu.memory_space<vmem>>, vector<1x19x64xf32>
    %95 = vector.shape_cast %94 : vector<1x19x64xf32> to vector<19x64xf32>
    %96 = vector.shape_cast %93 : vector<19x64xf32> to vector<1x19x64xf32>
    tpu.vector_store %arg7[%c0_52, %c285, %c0_53], %96 {strides = array<i32>} : memref<1x364x64xf32, #tpu.memory_space<vmem>>, vector<1x19x64xf32>,
    %97 = vector.extract_strided_slice %32 {offsets = [358, 0], sizes = [19, 64], strides = [1, 1]} : vector<441x64xf32> to vector<19x64xf32>
    %c0_54 = arith.constant 0 : index
    %c304 = arith.constant 304 : index
    %c0_55 = arith.constant 0 : index
    %98 = vector.load %arg7[%c0_54, %c304, %c0_55] : memref<1x364x64xf32, #tpu.memory_space<vmem>>, vector<1x19x64xf32>
    %99 = vector.shape_cast %98 : vector<1x19x64xf32> to vector<19x64xf32>
    %100 = vector.shape_cast %97 : vector<19x64xf32> to vector<1x19x64xf32>
    tpu.vector_store %arg7[%c0_54, %c304, %c0_55], %100 {strides = array<i32>} : memref<1x364x64xf32, #tpu.memory_space<vmem>>, vector<1x19x64xf32>,
    %101 = vector.extract_strided_slice %32 {offsets = [379, 0], sizes = [19, 64], strides = [1, 1]} : vector<441x64xf32> to vector<19x64xf32>
    %c0_56 = arith.constant 0 : index
    %c323 = arith.constant 323 : index
    %c0_57 = arith.constant 0 : index
    %102 = vector.load %arg7[%c0_56, %c323, %c0_57] : memref<1x364x64xf32, #tpu.memory_space<vmem>>, vector<1x19x64xf32>
    %103 = vector.shape_cast %102 : vector<1x19x64xf32> to vector<19x64xf32>
    %104 = vector.shape_cast %101 : vector<19x64xf32> to vector<1x19x64xf32>
    tpu.vector_store %arg7[%c0_56, %c323, %c0_57], %104 {strides = array<i32>} : memref<1x364x64xf32, #tpu.memory_space<vmem>>, vector<1x19x64xf32>,
    %105 = vector.extract_strided_slice %32 {offsets = [400, 0], sizes = [19, 64], strides = [1, 1]} : vector<441x64xf32> to vector<19x64xf32>
    %c0_58 = arith.constant 0 : index
    %c342 = arith.constant 342 : index
    %c0_59 = arith.constant 0 : index
    %106 = vector.load %arg7[%c0_58, %c342, %c0_59] : memref<1x364x64xf32, #tpu.memory_space<vmem>>, vector<1x19x64xf32>
    %107 = vector.shape_cast %106 : vector<1x19x64xf32> to vector<19x64xf32>
    %108 = vector.shape_cast %105 : vector<19x64xf32> to vector<1x19x64xf32>
    tpu.vector_store %arg7[%c0_58, %c342, %c0_59], %108 {strides = array<i32>} : memref<1x364x64xf32, #tpu.memory_space<vmem>>, vector<1x19x64xf32>,
    %cst_60 = arith.constant 0.000000e+00 : f32
    %109 = vector.broadcast %cst_60 : f32 to vector<3x64xf32>
    %c0_61 = arith.constant 0 : index
    %c361 = arith.constant 361 : index
    %c0_62 = arith.constant 0 : index
    %110 = vector.load %arg7[%c0_61, %c361, %c0_62] : memref<1x364x64xf32, #tpu.memory_space<vmem>>, vector<1x3x64xf32>
    %111 = vector.shape_cast %110 : vector<1x3x64xf32> to vector<3x64xf32>
    %112 = vector.shape_cast %109 : vector<3x64xf32> to vector<1x3x64xf32>
    tpu.vector_store %arg7[%c0_61, %c361, %c0_62], %112 {strides = array<i32>} : memref<1x364x64xf32, #tpu.memory_space<vmem>>, vector<1x3x64xf32>,
    return
  }
  func.func @transform_0(%arg0: i32) -> (i32, i32, i32) {
    %c0_i32 = arith.constant 0 : i32
    %c0_i32_0 = arith.constant 0 : i32
    %c0_i32_1 = arith.constant 0 : i32
    return %arg0, %c0_i32, %c0_i32_0 : i32, i32, i32
  }
  func.func @transform_1(%arg0: i32) -> (i32, i32) {
    %c0_i32 = arith.constant 0 : i32
    %c0_i32_0 = arith.constant 0 : i32
    %c0_i32_1 = arith.constant 0 : i32
    return %c0_i32, %c0_i32_0 : i32, i32
  }
  func.func @transform_2(%arg0: i32) -> (i32, i32) {
    %c0_i32 = arith.constant 0 : i32
    %c0_i32_0 = arith.constant 0 : i32
    %c0_i32_1 = arith.constant 0 : i32
    return %c0_i32, %c0_i32_0 : i32, i32
  }
  func.func @transform_3(%arg0: i32) -> (i32, i32) {
    %c0_i32 = arith.constant 0 : i32
    %c0_i32_0 = arith.constant 0 : i32
    %c0_i32_1 = arith.constant 0 : i32
    return %c0_i32, %c0_i32_0 : i32, i32
  }
  func.func @transform_4(%arg0: i32) -> (i32, i32) {
    %c0_i32 = arith.constant 0 : i32
    %c0_i32_0 = arith.constant 0 : i32
    %c0_i32_1 = arith.constant 0 : i32
    return %c0_i32, %c0_i32_0 : i32, i32
  }
  func.func @transform_5(%arg0: i32) -> (i32, i32) {
    %c0_i32 = arith.constant 0 : i32
    %c0_i32_0 = arith.constant 0 : i32
    %c0_i32_1 = arith.constant 0 : i32
    return %c0_i32, %c0_i32_0 : i32, i32
  }
  func.func @transform_6(%arg0: i32) -> (i32, i32, i32) {
    %c0_i32 = arith.constant 0 : i32
    %c0_i32_0 = arith.constant 0 : i32
    %c0_i32_1 = arith.constant 0 : i32
    return %arg0, %c0_i32, %c0_i32_0 : i32, i32, i32
  }
}

module attributes {stable_mosaic.version = 11 : i64} {
  func.func @fc_fused_kernel(%arg0: i32, %arg1: memref<2x3328xf32, #tpu.memory_space<vmem>>, %arg2: memref<3328x256xbf16, #tpu.memory_space<vmem>>, %arg3: memref<1x256xf32, #tpu.memory_space<vmem>>, %arg4: memref<256x361xf32, #tpu.memory_space<vmem>>, %arg5: memref<1x361xf32, #tpu.memory_space<vmem>>, %arg6: memref<2x361xf32, #tpu.memory_space<vmem>>, %arg7: memref<2x256xf32, #tpu.memory_space<vmem>>) attributes {dimension_semantics = [#tpu.dimension_semantics<arbitrary>], iteration_bounds = array<i64: 7>, scalar_prefetch = 0 : i64, scratch_operands = 1 : i64, tpu.core_type = #tpu.core_type<tc>, window_params = [{transform_indices = @transform_0, window_bounds = array<i64: 2, 3328>}, {transform_indices = @transform_1, window_bounds = array<i64: 3328, 256>}, {pipeline_mode = #tpu.pipeline_mode<synchronous>, transform_indices = @transform_2, window_bounds = array<i64: 1, 256>}, {pipeline_mode = #tpu.pipeline_mode<synchronous>, transform_indices = @transform_3, window_bounds = array<i64: 256, 361>}, {pipeline_mode = #tpu.pipeline_mode<synchronous>, transform_indices = @transform_4, window_bounds = array<i64: 1, 361>}, {pipeline_mode = #tpu.pipeline_mode<synchronous>, transform_indices = @transform_5, window_bounds = array<i64: 2, 361>}]} {
    %c0_i32 = arith.constant 0 : i32
    %0 = arith.cmpi eq, %arg0, %c0_i32 : i32
    %1 = arith.extui %0 : i1 to i32
    %c0_i32_0 = arith.constant 0 : i32
    %2 = arith.cmpi ne, %1, %c0_i32_0 : i32
    scf.if %2 {
      %cst_9 = arith.constant 0.000000e+00 : f32
      %13 = vector.broadcast %cst_9 : f32 to vector<2x256xf32>
      %c0_10 = arith.constant 0 : index
      %c0_11 = arith.constant 0 : index
      %14 = vector.load %arg7[%c0_10, %c0_11] : memref<2x256xf32, #tpu.memory_space<vmem>>, vector<2x256xf32>
      tpu.vector_store %arg7[%c0_10, %c0_11], %13 {strides = array<i32>} : memref<2x256xf32, #tpu.memory_space<vmem>>, vector<2x256xf32>,
    } else {
    }
    %c0 = arith.constant 0 : index
    %c0_1 = arith.constant 0 : index
    %3 = vector.load %arg7[%c0, %c0_1] : memref<2x256xf32, #tpu.memory_space<vmem>>, vector<2x256xf32>
    %c0_2 = arith.constant 0 : index
    %c0_3 = arith.constant 0 : index
    %4 = vector.load %arg1[%c0_2, %c0_3] : memref<2x3328xf32, #tpu.memory_space<vmem>>, vector<2x3328xf32>
    %5 = arith.truncf %4 : vector<2x3328xf32> to vector<2x3328xbf16>
    %c0_4 = arith.constant 0 : index
    %c0_5 = arith.constant 0 : index
    %6 = vector.load %arg2[%c0_4, %c0_5] : memref<3328x256xbf16, #tpu.memory_space<vmem>>, vector<3328x256xbf16>
    %cst = arith.constant dense<0.000000e+00> : vector<2x256xf32>
    %7 = tpu.matmul %5, %6, %cst {dimension_numbers = #tpu.dot_dimension_numbers<[1], [0], [0], [1], [0, 0, 1, 1], [], []>} : vector<2x3328xbf16>, vector<3328x256xbf16>, vector<2x256xf32> -> vector<2x256xf32>
    %8 = arith.addf %3, %7 : vector<2x256xf32>
    %c0_6 = arith.constant 0 : index
    %c0_7 = arith.constant 0 : index
    %9 = vector.load %arg7[%c0_6, %c0_7] : memref<2x256xf32, #tpu.memory_space<vmem>>, vector<2x256xf32>
    tpu.vector_store %arg7[%c0_6, %c0_7], %8 {strides = array<i32>} : memref<2x256xf32, #tpu.memory_space<vmem>>, vector<2x256xf32>,
    %c6_i32 = arith.constant 6 : i32
    %10 = arith.cmpi eq, %arg0, %c6_i32 : i32
    %11 = arith.extui %10 : i1 to i32
    %c0_i32_8 = arith.constant 0 : i32
    %12 = arith.cmpi ne, %11, %c0_i32_8 : i32
    scf.if %12 {
      %c0_9 = arith.constant 0 : index
      %c0_10 = arith.constant 0 : index
      %13 = vector.load %arg7[%c0_9, %c0_10] : memref<2x256xf32, #tpu.memory_space<vmem>>, vector<2x256xf32>
      %c0_11 = arith.constant 0 : index
      %c0_12 = arith.constant 0 : index
      %14 = vector.load %arg3[%c0_11, %c0_12] : memref<1x256xf32, #tpu.memory_space<vmem>>, vector<1x256xf32>
      %15 = vector.broadcast %14 : vector<1x256xf32> to vector<2x256xf32>
      %16 = arith.addf %13, %15 : vector<2x256xf32>
      %cst_13 = arith.constant 0.000000e+00 : f32
      %17 = vector.broadcast %cst_13 : f32 to vector<2x256xf32>
      %18 = arith.maximumf %16, %17 : vector<2x256xf32>
      %c0_14 = arith.constant 0 : index
      %c0_15 = arith.constant 0 : index
      %19 = vector.load %arg4[%c0_14, %c0_15] : memref<256x361xf32, #tpu.memory_space<vmem>>, vector<256x361xf32>
      %cst_16 = arith.constant dense<0.000000e+00> : vector<2x361xf32>
      %20 = tpu.matmul %18, %19, %cst_16 {dimension_numbers = #tpu.dot_dimension_numbers<[1], [0], [0], [1], [0, 0, 1, 1], [], []>} : vector<2x256xf32>, vector<256x361xf32>, vector<2x361xf32> -> vector<2x361xf32>
      %c0_17 = arith.constant 0 : index
      %c0_18 = arith.constant 0 : index
      %21 = vector.load %arg5[%c0_17, %c0_18] : memref<1x361xf32, #tpu.memory_space<vmem>>, vector<1x361xf32>
      %22 = vector.broadcast %21 : vector<1x361xf32> to vector<2x361xf32>
      %23 = arith.addf %20, %22 : vector<2x361xf32>
      %c0_19 = arith.constant 0 : index
      %c0_20 = arith.constant 0 : index
      %24 = vector.load %arg6[%c0_19, %c0_20] : memref<2x361xf32, #tpu.memory_space<vmem>>, vector<2x361xf32>
      tpu.vector_store %arg6[%c0_19, %c0_20], %23 {strides = array<i32>} : memref<2x361xf32, #tpu.memory_space<vmem>>, vector<2x361xf32>,
    } else {
    }
    return
  }
  func.func @transform_0(%arg0: i32) -> (i32, i32) {
    %c0_i32 = arith.constant 0 : i32
    %c0_i32_0 = arith.constant 0 : i32
    return %c0_i32, %arg0 : i32, i32
  }
  func.func @transform_1(%arg0: i32) -> (i32, i32) {
    %c0_i32 = arith.constant 0 : i32
    %c0_i32_0 = arith.constant 0 : i32
    return %arg0, %c0_i32 : i32, i32
  }
  func.func @transform_2(%arg0: i32) -> (i32, i32) {
    %c0_i32 = arith.constant 0 : i32
    %c0_i32_0 = arith.constant 0 : i32
    %c0_i32_1 = arith.constant 0 : i32
    return %c0_i32, %c0_i32_0 : i32, i32
  }
  func.func @transform_3(%arg0: i32) -> (i32, i32) {
    %c0_i32 = arith.constant 0 : i32
    %c0_i32_0 = arith.constant 0 : i32
    %c0_i32_1 = arith.constant 0 : i32
    return %c0_i32, %c0_i32_0 : i32, i32
  }
  func.func @transform_4(%arg0: i32) -> (i32, i32) {
    %c0_i32 = arith.constant 0 : i32
    %c0_i32_0 = arith.constant 0 : i32
    %c0_i32_1 = arith.constant 0 : i32
    return %c0_i32, %c0_i32_0 : i32, i32
  }
  func.func @transform_5(%arg0: i32) -> (i32, i32) {
    %c0_i32 = arith.constant 0 : i32
    %c0_i32_0 = arith.constant 0 : i32
    %c0_i32_1 = arith.constant 0 : i32
    return %c0_i32, %c0_i32_0 : i32, i32
  }
}

</mosaic_0001>

<llo_original>
// kernel: gocnn_forward.3
$region0: #{gocnn_forward.3}
  #allocation0 [shape = 'u32[]', space=smem, size = 0x4, offset = 0x4, fixed_abs, tag = 'smem constant byte address 0x4 - core index']
  #allocation1 [shape = 'u32[72,128]{1,0:T(1,128)}', space=vmem, size = 0x9000, scoped, tag = 'internal scratch']
  #allocation2 [shape = 'f32[2,256]{1,0:T(2,128)}', space=vmem, size = 0x800, scoped, tag = 'scratch operand']
  %s0 = inlined_call_operand.vmem [shape: f32[2,23296], index: 0, kind: input, shape index: {}]
  %s1 = inlined_call_operand.hbm [shape: bf16[23296,256], index: 1, kind: input, shape index: {}]
  %s2 = inlined_call_operand.hbm [shape: f32[1,256], index: 2, kind: input, shape index: {}]
  %s3 = inlined_call_operand.vmem [shape: f32[256,361], index: 3, kind: input, shape index: {}]
  %s4 = inlined_call_operand.hbm [shape: f32[1,361], index: 4, kind: input, shape index: {}]
  %s5 = inlined_call_operand.hbm [shape: f32[2,361], index: 5, kind: output, shape index: {}]
  %s6 = sld [smem:[#allocation0]]
  $region73: #{gocnn_forward.3} parent=0
    _
  %s8 = ssub.s32 1, %s6
  %s9 = scalar_select 0, %s8, %s6
  $region1: #{gocnn_forward.3} parent=0
    #allocation3 [shape = 'u8[3407872]{0}', space=vmem, size = 0x340000, scoped, tag = 'input window, operand 1']
    #allocation4 [shape = 's32[2]{0}', space=sflag, size = 0x8, scoped, tag = 'scoped memory for gocnn_forward.3']
    #allocation5 [shape = 's32[2]{0}', space=sflag, size = 0x8, scoped, tag = 'scoped memory for gocnn_forward.3']
    #allocation6 [shape = 'u8[1024]{0}', space=vmem, size = 0x400, scoped, tag = 'input window, operand 2, single buffered']
    #allocation7 [shape = 's32[1]{0}', space=sflag, size = 0x4, scoped, tag = 'scoped memory for gocnn_forward.3']
    #allocation8 [shape = 'u8[1536]{0}', space=vmem, size = 0x800, scoped, tag = 'input window, operand 4, single buffered']
    #allocation9 [shape = 'u8[3072]{0}', space=vmem, size = 0xc00, scoped, tag = 'output window, operand 0, single buffered']
    %10 = vsyncpa [#allocation4], 0
    %s11 = scalar_lea.sflag [#allocation4], 1
    %12 = vsyncpa %s11, 0
    %13 = vsyncpa [#allocation7], 0
    %14 = vsyncpa [#allocation5], 0
    loop: start=0, step=1, limit=9
    $region2: #{gocnn_forward.3} parent=1 // loop_pre_header
      _
    $region3: #{gocnn_forward.3} parent=1 // loop_header
      %s16 = sphi 0, %s20
      %p17 = scmp.ge.s32.totalorder %s16, 9
      %s26 = sphi 0, %s28
      %s29 = sphi 0, %s26
      %s30 = sphi 0, %s29
      %s46 = sphi 0, %s30
      %s52 = sphi 0, %s54
      %s55 = sphi 0, %s52
      %s56 = sphi 0, %s55
      %s72 = sphi 0, %s56
      %s76 = sphi 0, %s76
      %s78 = sphi 0, %s76
      %s79 = sphi 0, %s78
      %s93 = sphi 0, %s79
      %s97 = sphi 0, %s97
      %s99 = sphi 0, %s97
      %s100 = sphi 0, %s99
      %s114 = sphi 0, %s100
      %s118 = sphi 0, %s118
      %s120 = sphi 0, %s118
      %s121 = sphi 0, %s120
      %s135 = sphi 0, %s121
      %s139 = sphi 0, %s139
      %s141 = sphi 0, %s139
      %s142 = sphi 0, %s141
      %s156 = sphi 0, %s142
    $region4: #{gocnn_forward.3} parent=1 // loop_header_branch
      %19 = sbr.rel (%p17) target = $region8
    $region5: #{gocnn_forward.3} parent=1 // loop_body
      %s21 = ssub.s32 %s16, 1
      %s22 = ssub.s32 %s16, 2
      %s23 = sadd.s32 %s16, 1
      %s24 = ssub.s32 %s16, %s23
      %p25 = scmp.eq.s32.totalorder %s24, 0
      %s27 = sadd.s32 %s26, 1
      %s28 = scalar_select %p25, %s26, %s27
      %p31 = pneg %p25
      %p32 = scmp.eq.s32.totalorder %s16, 6
      %p33 = por %p31, %p32
      %p34 = scmp.ne.s32.totalorder %s26, %s29
      %p35 = scmp.eq.s32.totalorder %s16, 0
      %p36 = por %p34, %p35
      %p37 = scmp.ne.s32.totalorder %s26, %s29
      %p38 = scmp.eq.s32.totalorder %s21, 6
      %p39 = por %p37, %p38
      %p40 = scmp.ne.s32.totalorder %s29, %s30
      %p41 = scmp.eq.s32.totalorder %s21, 0
      %p42 = por %p40, %p41
      %p43 = scmp.ne.s32.totalorder %s29, %s30
      %p44 = scmp.eq.s32.totalorder %s22, 6
      %p45 = por %p43, %p44
      %p47 = scmp.ne.s32.totalorder %s30, %s46
      %p48 = scmp.eq.s32.totalorder %s22, 0
      %p49 = por %p47, %p48
      %s50 = ssub.s32 %s16, %s23
      %p51 = scmp.eq.s32.totalorder %s50, 0
      %s53 = sadd.s32 %s52, 1
      %s54 = scalar_select %p51, %s52, %s53
      %p57 = pneg %p51
      %p58 = scmp.eq.s32.totalorder %s16, 6
      %p59 = por %p57, %p58
      %p60 = scmp.ne.s32.totalorder %s52, %s55
      %p61 = scmp.eq.s32.totalorder %s16, 0
      %p62 = por %p60, %p61
      %p63 = scmp.ne.s32.totalorder %s52, %s55
      %p64 = scmp.eq.s32.totalorder %s21, 6
      %p65 = por %p63, %p64
      %p66 = scmp.ne.s32.totalorder %s55, %s56
      %p67 = scmp.eq.s32.totalorder %s21, 0
      %p68 = por %p66, %p67
      %p69 = scmp.ne.s32.totalorder %s55, %s56
      %p70 = scmp.eq.s32.totalorder %s22, 6
      %p71 = por %p69, %p70
      %p73 = scmp.ne.s32.totalorder %s56, %s72
      %p74 = scmp.eq.s32.totalorder %s22, 0
      %p75 = por %p73, %p74
      %s77 = sadd.s32 %s76, 1
      %p80 = scmp.eq.s32.totalorder %s16, 6
      %p81 = scmp.ne.s32.totalorder %s76, %s78
      %p82 = scmp.eq.s32.totalorder %s16, 0
      %p83 = por %p81, %p82
      %p84 = scmp.ne.s32.totalorder %s76, %s78
      %p85 = scmp.eq.s32.totalorder %s21, 6
      %p86 = por %p84, %p85
      %p87 = scmp.ne.s32.totalorder %s78, %s79
      %p88 = scmp.eq.s32.totalorder %s21, 0
      %p89 = por %p87, %p88
      %p90 = scmp.ne.s32.totalorder %s78, %s79
      %p91 = scmp.eq.s32.totalorder %s22, 6
      %p92 = por %p90, %p91
      %p94 = scmp.ne.s32.totalorder %s79, %s93
      %p95 = scmp.eq.s32.totalorder %s22, 0
      %p96 = por %p94, %p95
      %s98 = sadd.s32 %s97, 1
      %p101 = scmp.eq.s32.totalorder %s16, 6
      %p102 = scmp.ne.s32.totalorder %s97, %s99
      %p103 = scmp.eq.s32.totalorder %s16, 0
      %p104 = por %p102, %p103
      %p105 = scmp.ne.s32.totalorder %s97, %s99
      %p106 = scmp.eq.s32.totalorder %s21, 6
      %p107 = por %p105, %p106
      %p108 = scmp.ne.s32.totalorder %s99, %s100
      %p109 = scmp.eq.s32.totalorder %s21, 0
      %p110 = por %p108, %p109
      %p111 = scmp.ne.s32.totalorder %s99, %s100
      %p112 = scmp.eq.s32.totalorder %s22, 6
      %p113 = por %p111, %p112
      %p115 = scmp.ne.s32.totalorder %s100, %s114
      %p116 = scmp.eq.s32.totalorder %s22, 0
      %p117 = por %p115, %p116
      %s119 = sadd.s32 %s118, 1
      %p122 = scmp.eq.s32.totalorder %s16, 6
      %p123 = scmp.ne.s32.totalorder %s118, %s120
      %p124 = scmp.eq.s32.totalorder %s16, 0
      %p125 = por %p123, %p124
      %p126 = scmp.ne.s32.totalorder %s118, %s120
      %p127 = scmp.eq.s32.totalorder %s21, 6
      %p128 = por %p126, %p127
      %p129 = scmp.ne.s32.totalorder %s120, %s121
      %p130 = scmp.eq.s32.totalorder %s21, 0
      %p131 = por %p129, %p130
      %p132 = scmp.ne.s32.totalorder %s120, %s121
      %p133 = scmp.eq.s32.totalorder %s22, 6
      %p134 = por %p132, %p133
      %p136 = scmp.ne.s32.totalorder %s121, %s135
      %p137 = scmp.eq.s32.totalorder %s22, 0
      %p138 = por %p136, %p137
      %s140 = sadd.s32 %s139, 1
      %p143 = scmp.eq.s32.totalorder %s16, 6
      %p144 = scmp.ne.s32.totalorder %s139, %s141
      %p145 = scmp.eq.s32.totalorder %s16, 0
      %p146 = por %p144, %p145
      %p147 = scmp.ne.s32.totalorder %s139, %s141
      %p148 = scmp.eq.s32.totalorder %s21, 6
      %p149 = por %p147, %p148
      %p150 = scmp.ne.s32.totalorder %s141, %s142
      %p151 = scmp.eq.s32.totalorder %s21, 0
      %p152 = por %p150, %p151
      %p153 = scmp.ne.s32.totalorder %s141, %s142
      %p154 = scmp.eq.s32.totalorder %s22, 6
      %p155 = por %p153, %p154
      %p157 = scmp.ne.s32.totalorder %s142, %s156
      %p158 = scmp.eq.s32.totalorder %s22, 0
      %p159 = por %p157, %p158
      %p160 = scmp.le.s32.totalorder 1, %s16
      %p161 = scmp.lt.s32.totalorder %s16, 8
      %p162 = pnand %p160, %p161
      %p163 = pneg %p162
      // Predicated region
      $region9: #{gocnn_forward.3} parent=5 // pred_check
        _
      $region10: #{gocnn_forward.3} parent=5 // pred_check_branch
        %165 = sbr.rel (%p162) target = $region12
      $region11: #{gocnn_forward.3} parent=5 // pred_region
        %s166 = ssub.s32 %s16, 1
        // Predicated region
        $region13: #{gocnn_forward.3} parent=11 // pred_check
          %p167 = pneg %p89
        $region14: #{gocnn_forward.3} parent=11 // pred_check_branch
          %169 = sbr.rel (%p167) target = $region16
        $region15: #{gocnn_forward.3} parent=11 // pred_region
          %171 = vsyncadd [#allocation7], 0
          %s173 = sshll.u32 %s2, 4
          %s174 = int_to_ptr.hbm [resolvable:$true] %s173
          %s175 = sshll.u32 [#allocation6], 4
          %s176 = int_to_ptr.vmem [resolvable:$true] %s175
          %178 = dma.hbm_to_vmem [thread:$0]  %s174, 32, %s176, [#allocation7]
        $region16: #{gocnn_forward.3} parent=11 // pred_fallthru
          _
        // Predicated region
        $region17: #{gocnn_forward.3} parent=11 // pred_check
          %p179 = pneg %p110
        $region18: #{gocnn_forward.3} parent=11 // pred_check_branch
          %181 = sbr.rel (%p179) target = $region20
        $region19: #{gocnn_forward.3} parent=11 // pred_region
          _
        $region20: #{gocnn_forward.3} parent=11 // pred_fallthru
          _
        // Predicated region
        $region21: #{gocnn_forward.3} parent=11 // pred_check
          %p182 = pneg %p131
        $region22: #{gocnn_forward.3} parent=11 // pred_check_branch
          %184 = sbr.rel (%p182) target = $region24
        $region23: #{gocnn_forward.3} parent=11 // pred_region
          %186 = vsyncadd [#allocation7], 0
          %s188 = sshll.u32 %s4, 4
          %s189 = int_to_ptr.hbm [resolvable:$true] %s188
          %s190 = sshll.u32 [#allocation8], 4
          %s191 = int_to_ptr.vmem [resolvable:$true] %s190
          %193 = dma.hbm_to_vmem [thread:$0]  %s189, 48, %s191, [#allocation7]
        $region24: #{gocnn_forward.3} parent=11 // pred_fallthru
          _
      $region12: #{gocnn_forward.3} parent=5 // pred_fallthru
        _
      %p194 = scmp.lt.s32.totalorder %s16, 7
      // Predicated region
      $region25: #{gocnn_forward.3} parent=5 // pred_check
        %p195 = pneg %p194
      $region26: #{gocnn_forward.3} parent=5 // pred_check_branch
        %197 = sbr.rel (%p195) target = $region28
      $region27: #{gocnn_forward.3} parent=5 // pred_region
        // Predicated region
        $region29: #{gocnn_forward.3} parent=27 // pred_check
          %p198 = pneg %p36
        $region30: #{gocnn_forward.3} parent=27 // pred_check_branch
          %200 = sbr.rel (%p198) target = $region32
        $region31: #{gocnn_forward.3} parent=27 // pred_region
          %s201 = smul.u32 26, %s16
          %p202 = scmp.lt.s32.totalorder %s201, 181
          %s203 = scalar_select %p202, %s201, 181
          %s204 = smul.addr %s203, 2
          %s205 = scalar_lea.vmem %s0, %s204
          %s206 = smul.u32 26, %s16
        $region32: #{gocnn_forward.3} parent=27 // pred_fallthru
          _
        // Predicated region
        $region33: #{gocnn_forward.3} parent=27 // pred_check
          %p207 = pneg %p62
        $region34: #{gocnn_forward.3} parent=27 // pred_check_branch
          %209 = sbr.rel (%p207) target = $region36
        $region35: #{gocnn_forward.3} parent=27 // pred_region
          %s210 = sand.u32 %s52, 1
          %s211 = scalar_lea.sflag [#allocation4], %s210
          %s212 = sand.u32 %s52, 1
          %s213 = smul.addr %s212, 3328
          %s214 = scalar_lea.vmem [#allocation3], %s213
          %s215 = smul.u32 416, %s16
          %217 = vsyncadd %s211, 0
          %s218 = smul.addr %s215, 2
          %s219 = smul.addr %s218, 4
          %s220 = scalar_lea.hbm %s1, %s219
          %s221 = sshll.u32 %s220, 4
          %s222 = int_to_ptr.hbm [resolvable:$true] %s221
          %s223 = sshll.u32 %s214, 4
          %s224 = int_to_ptr.vmem [resolvable:$true] %s223
          %229 = dma.hbm_to_vmem [thread:$0]  %s222, 53248, %s224, %s211, 128, 128, 8
        $region36: #{gocnn_forward.3} parent=27 // pred_fallthru
          _
      $region28: #{gocnn_forward.3} parent=5 // pred_fallthru
        _
      %p230 = scmp.le.s32.totalorder 1, %s16
      %p231 = scmp.lt.s32.totalorder %s16, 8
      %p232 = pnand %p230, %p231
      %p233 = pneg %p232
      // Predicated region
      $region37: #{gocnn_forward.3} parent=5 // pred_check
        _
      $region38: #{gocnn_forward.3} parent=5 // pred_check_branch
        %235 = sbr.rel (%p232) target = $region40
      $region39: #{gocnn_forward.3} parent=5 // pred_region
        %s236 = ssub.s32 %s16, 1
        %s237 = sand.u32 %s55, 1
        %s238 = scalar_lea.sflag [#allocation4], %s237
        %s239 = sand.u32 %s55, 1
        %s240 = smul.addr %s239, 3328
        %s241 = scalar_lea.vmem [#allocation3], %s240
        // Predicated region
        $region41: #{gocnn_forward.3} parent=39 // pred_check
          %p242 = pneg %p68
        $region42: #{gocnn_forward.3} parent=39 // pred_check_branch
          %244 = sbr.rel (%p242) target = $region44
        $region43: #{gocnn_forward.3} parent=39 // pred_region
          %246 = dma.done %s238, 53248
        $region44: #{gocnn_forward.3} parent=39 // pred_fallthru
          _
        // Predicated region
        $region45: #{gocnn_forward.3} parent=39 // pred_check
          %p247 = pneg %p89
        $region46: #{gocnn_forward.3} parent=39 // pred_check_branch
          %249 = sbr.rel (%p247) target = $region48
        $region47: #{gocnn_forward.3} parent=39 // pred_region
          %251 = dma.done [#allocation7], 32
        $region48: #{gocnn_forward.3} parent=39 // pred_fallthru
          _
        // Predicated region
        $region49: #{gocnn_forward.3} parent=39 // pred_check
          %p252 = pneg %p131
        $region50: #{gocnn_forward.3} parent=39 // pred_check_branch
          %254 = sbr.rel (%p252) target = $region52
        $region51: #{gocnn_forward.3} parent=39 // pred_region
          %256 = dma.done [#allocation7], 48
        $region52: #{gocnn_forward.3} parent=39 // pred_fallthru
          _
        %s257 = smul.u32 26, %s21
        %p258 = scmp.lt.s32.totalorder %s257, 181
        %s259 = scalar_select %p258, %s257, 181
        %s260 = smul.addr %s259, 2
        %s261 = scalar_lea.vmem %s0, %s260
        %p262 = pneg %p42
        %p263 = pneg %p39
        %s264 = sand.u32 %s55, 1
        %s265 = scalar_lea.sflag [#allocation4], %s264
        %s266 = sand.u32 %s55, 1
        %s267 = smul.addr %s266, 3328
        %s268 = scalar_lea.vmem [#allocation3], %s267
        %p269 = pneg %p68
        %p270 = pneg %p65
        %p271 = pneg %p89
        %p272 = pneg %p86
        %p273 = pneg %p110
        %p274 = pneg %p107
        %p275 = pneg %p131
        %p276 = pneg %p128
        %p277 = pneg %p152
        %p278 = pneg %p149
        %s279 = smul.u32 26, %s21
        %p280 = scmp.lt.s32.totalorder %s279, 181
        %s281 = scalar_select %p280, %s279, 181
        %s282 = smul.addr %s281, 2
        %s283 = scalar_lea.vmem %s0, %s282
        %s284 = smul.u32 26, %s21
        %s285 = smul.u32 416, %s21
        %p286 = scmp.eq.s32.totalorder %s21, 0
        // Predicated region
        $region53: #{gocnn_forward.3} parent=39 // pred_check
          %p287 = pneg %p286
        $region54: #{gocnn_forward.3} parent=39 // pred_check_branch
          %289 = sbr.rel (%p287) target = $region56
        $region55: #{gocnn_forward.3} parent=39 // pred_region
          %290 = vst [vmem:[#allocation2] sm:$0xf] 0.0
        $region56: #{gocnn_forward.3} parent=39 // pred_fallthru
          _
        %v291 = vld [vmem:[#allocation2] sm:$0xf]
        %v292 = vld [vmem:[%s283] sm:$0xff]
        %v293 = vld [vmem:[%s283 + $0x8] sm:$0xff]
        %v294 = vld [vmem:[%s283 + $0x10] sm:$0xff]
        %v295 = vld [vmem:[%s283 + $0x18] sm:$0xff]
        %v296 = vld [vmem:[%s283 + $0x20] sm:$0xff]
        %v297 = vld [vmem:[%s283 + $0x28] sm:$0xff]
        %v298 = vld [vmem:[%s283 + $0x30] sm:$0xf]
        %306 = vst [vmem:[#allocation1] ss:$4 sm:$0xff] %v292
        %s307 = scalar_lea.vmem [#allocation1], 32
        %308 = vst [vmem:[%s307] ss:$4 sm:$0xff] %v293
        %v309 = vld.sshfl [vmem:[#allocation1] sm:$0xff pattern:$0x73625140]
        %v310 = vld.sshfl [vmem:[#allocation1 + $0x8] sm:$0xff pattern:$0x73625140]
        %v311 = vld.sshfl [vmem:[#allocation1 + $0x10] sm:$0xff pattern:$0x73625140]
        %v312 = vld.sshfl [vmem:[#allocation1 + $0x18] sm:$0xff pattern:$0x73625140]
        %v313 = vld.sshfl [vmem:[#allocation1 + $0x20] sm:$0xff pattern:$0x73625140]
        %v314 = vld.sshfl [vmem:[#allocation1 + $0x28] sm:$0xff pattern:$0x73625140]
        %v315 = vld.sshfl [vmem:[#allocation1 + $0x30] sm:$0xff pattern:$0x73625140]
        %v316 = vld.sshfl [vmem:[#allocation1 + $0x38] sm:$0xff pattern:$0x73625140]
        %317 = vst [vmem:[#allocation1] ss:$4 sm:$0xff] %v294
        %318 = vst [vmem:[%s307] ss:$4 sm:$0xff] %v295
        %v319 = vld.sshfl [vmem:[#allocation1] sm:$0xff pattern:$0x73625140]
        %v320 = vld.sshfl [vmem:[#allocation1 + $0x8] sm:$0xff pattern:$0x73625140]
        %v321 = vld.sshfl [vmem:[#allocation1 + $0x10] sm:$0xff pattern:$0x73625140]
        %v322 = vld.sshfl [vmem:[#allocation1 + $0x18] sm:$0xff pattern:$0x73625140]
        %v323 = vld.sshfl [vmem:[#allocation1 + $0x20] sm:$0xff pattern:$0x73625140]
        %v324 = vld.sshfl [vmem:[#allocation1 + $0x28] sm:$0xff pattern:$0x73625140]
        %v325 = vld.sshfl [vmem:[#allocation1 + $0x30] sm:$0xff pattern:$0x73625140]
        %v326 = vld.sshfl [vmem:[#allocation1 + $0x38] sm:$0xff pattern:$0x73625140]
        %327 = vst [vmem:[#allocation1] ss:$4 sm:$0xff] %v296
        %328 = vst [vmem:[%s307] ss:$4 sm:$0xff] %v297
        %v329 = vld.sshfl [vmem:[#allocation1] sm:$0xff pattern:$0x73625140]
        %v330 = vld.sshfl [vmem:[#allocation1 + $0x8] sm:$0xff pattern:$0x73625140]
        %v331 = vld.sshfl [vmem:[#allocation1 + $0x10] sm:$0xff pattern:$0x73625140]
        %v332 = vld.sshfl [vmem:[#allocation1 + $0x18] sm:$0xff pattern:$0x73625140]
        %v333 = vld.sshfl [vmem:[#allocation1 + $0x20] sm:$0xff pattern:$0x73625140]
        %v334 = vld.sshfl [vmem:[#allocation1 + $0x28] sm:$0xff pattern:$0x73625140]
        %v335 = vld.sshfl [vmem:[#allocation1 + $0x30] sm:$0xff pattern:$0x73625140]
        %v336 = vld.sshfl [vmem:[#allocation1 + $0x38] sm:$0xff pattern:$0x73625140]
        %337 = vst [vmem:[#allocation1] ss:$4 sm:$0xff] %v298
        %v338 = vld.sshfl [vmem:[#allocation1] sm:$0xff pattern:$0x73625140]
        %v339 = vld.sshfl [vmem:[#allocation1 + $0x8] sm:$0xff pattern:$0x73625140]
        %v366 = vpack.c.bf16 %v309, %v309
        %v367 = vpack.c.bf16 %v310, %v310
        %v368 = vpack.c.bf16 %v311, %v311
        %v369 = vpack.c.bf16 %v312, %v312
        %v370 = vpack.c.bf16 %v313, %v313
        %v371 = vpack.c.bf16 %v314, %v314
        %v372 = vpack.c.bf16 %v315, %v315
        %v373 = vpack.c.bf16 %v316, %v316
        %v374 = vpack.c.bf16 %v319, %v319
        %v375 = vpack.c.bf16 %v320, %v320
        %v376 = vpack.c.bf16 %v321, %v321
        %v377 = vpack.c.bf16 %v322, %v322
        %v378 = vpack.c.bf16 %v323, %v323
        %v379 = vpack.c.bf16 %v324, %v324
        %v380 = vpack.c.bf16 %v325, %v325
        %v381 = vpack.c.bf16 %v326, %v326
        %v382 = vpack.c.bf16 %v329, %v329
        %v383 = vpack.c.bf16 %v330, %v330
        %v384 = vpack.c.bf16 %v331, %v331
        %v385 = vpack.c.bf16 %v332, %v332
        %v386 = vpack.c.bf16 %v333, %v333
        %v387 = vpack.c.bf16 %v334, %v334
        %v388 = vpack.c.bf16 %v335, %v335
        %v389 = vpack.c.bf16 %v336, %v336
        %v390 = vpack.c.bf16 %v338, %v338
        %v391 = vpack.c.bf16 %v339, %v339
        %v392 = vld [vmem:[%s241] sm:$0xff]
        %v393 = vld [vmem:[%s241 + $0x8] sm:$0xff]
        %v394 = vld [vmem:[%s241 + $0x10] sm:$0xff]
        %v395 = vld [vmem:[%s241 + $0x18] sm:$0xff]
        %v396 = vld [vmem:[%s241 + $0x20] sm:$0xff]
        %v397 = vld [vmem:[%s241 + $0x28] sm:$0xff]
        %v398 = vld [vmem:[%s241 + $0x30] sm:$0xff]
        %v399 = vld [vmem:[%s241 + $0x38] sm:$0xff]
        %v400 = vld [vmem:[%s241 + $0x40] sm:$0xff]
        %v401 = vld [vmem:[%s241 + $0x48] sm:$0xff]
        %v402 = vld [vmem:[%s241 + $0x50] sm:$0xff]
        %v403 = vld [vmem:[%s241 + $0x58] sm:$0xff]
        %v404 = vld [vmem:[%s241 + $0x60] sm:$0xff]
        %v405 = vld [vmem:[%s241 + $0x68] sm:$0xff]
        %v406 = vld [vmem:[%s241 + $0x70] sm:$0xff]
        %v407 = vld [vmem:[%s241 + $0x78] sm:$0xff]
        %v408 = vld [vmem:[%s241 + $0x80] sm:$0xff]
        %v409 = vld [vmem:[%s241 + $0x88] sm:$0xff]
        %v410 = vld [vmem:[%s241 + $0x90] sm:$0xff]
        %v411 = vld [vmem:[%s241 + $0x98] sm:$0xff]
        %v412 = vld [vmem:[%s241 + $0xa0] sm:$0xff]
        %v413 = vld [vmem:[%s241 + $0xa8] sm:$0xff]
        %v414 = vld [vmem:[%s241 + $0xb0] sm:$0xff]
        %v415 = vld [vmem:[%s241 + $0xb8] sm:$0xff]
        %v416 = vld [vmem:[%s241 + $0xc0] sm:$0xff]
        %v417 = vld [vmem:[%s241 + $0xc8] sm:$0xff]
        %v418 = vld [vmem:[%s241 + $0xd0] sm:$0xff]
        %v419 = vld [vmem:[%s241 + $0xd8] sm:$0xff]
        %v420 = vld [vmem:[%s241 + $0xe0] sm:$0xff]
        %v421 = vld [vmem:[%s241 + $0xe8] sm:$0xff]
        %v422 = vld [vmem:[%s241 + $0xf0] sm:$0xff]
        %v423 = vld [vmem:[%s241 + $0xf8] sm:$0xff]
        %v424 = vld [vmem:[%s241 + $0x100] sm:$0xff]
        %v425 = vld [vmem:[%s241 + $0x108] sm:$0xff]
        %v426 = vld [vmem:[%s241 + $0x110] sm:$0xff]
        %v427 = vld [vmem:[%s241 + $0x118] sm:$0xff]
        %v428 = vld [vmem:[%s241 + $0x120] sm:$0xff]
        %v429 = vld [vmem:[%s241 + $0x128] sm:$0xff]
        %v430 = vld [vmem:[%s241 + $0x130] sm:$0xff]
        %v431 = vld [vmem:[%s241 + $0x138] sm:$0xff]
        %v432 = vld [vmem:[%s241 + $0x140] sm:$0xff]
        %v433 = vld [vmem:[%s241 + $0x148] sm:$0xff]
        %v434 = vld [vmem:[%s241 + $0x150] sm:$0xff]
        %v435 = vld [vmem:[%s241 + $0x158] sm:$0xff]
        %v436 = vld [vmem:[%s241 + $0x160] sm:$0xff]
        %v437 = vld [vmem:[%s241 + $0x168] sm:$0xff]
        %v438 = vld [vmem:[%s241 + $0x170] sm:$0xff]
        %v439 = vld [vmem:[%s241 + $0x178] sm:$0xff]
        %v440 = vld [vmem:[%s241 + $0x180] sm:$0xff]
        %v441 = vld [vmem:[%s241 + $0x188] sm:$0xff]
        %v442 = vld [vmem:[%s241 + $0x190] sm:$0xff]
        %v443 = vld [vmem:[%s241 + $0x198] sm:$0xff]
        %v444 = vld [vmem:[%s241 + $0x1a0] sm:$0xff]
        %v445 = vld [vmem:[%s241 + $0x1a8] sm:$0xff]
        %v446 = vld [vmem:[%s241 + $0x1b0] sm:$0xff]
        %v447 = vld [vmem:[%s241 + $0x1b8] sm:$0xff]
        %v448 = vld [vmem:[%s241 + $0x1c0] sm:$0xff]
        %v449 = vld [vmem:[%s241 + $0x1c8] sm:$0xff]
        %v450 = vld [vmem:[%s241 + $0x1d0] sm:$0xff]
        %v451 = vld [vmem:[%s241 + $0x1d8] sm:$0xff]
        %v452 = vld [vmem:[%s241 + $0x1e0] sm:$0xff]
        %v453 = vld [vmem:[%s241 + $0x1e8] sm:$0xff]
        %v454 = vld [vmem:[%s241 + $0x1f0] sm:$0xff]
        %v455 = vld [vmem:[%s241 + $0x1f8] sm:$0xff]
        %v456 = vld [vmem:[%s241 + $0x200] sm:$0xff]
        %v457 = vld [vmem:[%s241 + $0x208] sm:$0xff]
        %v458 = vld [vmem:[%s241 + $0x210] sm:$0xff]
        %v459 = vld [vmem:[%s241 + $0x218] sm:$0xff]
        %v460 = vld [vmem:[%s241 + $0x220] sm:$0xff]
        %v461 = vld [vmem:[%s241 + $0x228] sm:$0xff]
        %v462 = vld [vmem:[%s241 + $0x230] sm:$0xff]
        %v463 = vld [vmem:[%s241 + $0x238] sm:$0xff]
        %v464 = vld [vmem:[%s241 + $0x240] sm:$0xff]
        %v465 = vld [vmem:[%s241 + $0x248] sm:$0xff]
        %v466 = vld [vmem:[%s241 + $0x250] sm:$0xff]
        %v467 = vld [vmem:[%s241 + $0x258] sm:$0xff]
        %v468 = vld [vmem:[%s241 + $0x260] sm:$0xff]
        %v469 = vld [vmem:[%s241 + $0x268] sm:$0xff]
        %v470 = vld [vmem:[%s241 + $0x270] sm:$0xff]
        %v471 = vld [vmem:[%s241 + $0x278] sm:$0xff]
        %v472 = vld [vmem:[%s241 + $0x280] sm:$0xff]
        %v473 = vld [vmem:[%s241 + $0x288] sm:$0xff]
        %v474 = vld [vmem:[%s241 + $0x290] sm:$0xff]
        %v475 = vld [vmem:[%s241 + $0x298] sm:$0xff]
        %v476 = vld [vmem:[%s241 + $0x2a0] sm:$0xff]
        %v477 = vld [vmem:[%s241 + $0x2a8] sm:$0xff]
        %v478 = vld [vmem:[%s241 + $0x2b0] sm:$0xff]
        %v479 = vld [vmem:[%s241 + $0x2b8] sm:$0xff]
        %v480 = vld [vmem:[%s241 + $0x2c0] sm:$0xff]
        %v481 = vld [vmem:[%s241 + $0x2c8] sm:$0xff]
        %v482 = vld [vmem:[%s241 + $0x2d0] sm:$0xff]
        %v483 = vld [vmem:[%s241 + $0x2d8] sm:$0xff]
        %v484 = vld [vmem:[%s241 + $0x2e0] sm:$0xff]
        %v485 = vld [vmem:[%s241 + $0x2e8] sm:$0xff]
        %v486 = vld [vmem:[%s241 + $0x2f0] sm:$0xff]
        %v487 = vld [vmem:[%s241 + $0x2f8] sm:$0xff]
        %v488 = vld [vmem:[%s241 + $0x300] sm:$0xff]
        %v489 = vld [vmem:[%s241 + $0x308] sm:$0xff]
        %v490 = vld [vmem:[%s241 + $0x310] sm:$0xff]
        %v491 = vld [vmem:[%s241 + $0x318] sm:$0xff]
        %v492 = vld [vmem:[%s241 + $0x320] sm:$0xff]
        %v493 = vld [vmem:[%s241 + $0x328] sm:$0xff]
        %v494 = vld [vmem:[%s241 + $0x330] sm:$0xff]
        %v495 = vld [vmem:[%s241 + $0x338] sm:$0xff]
        %v496 = vld [vmem:[%s241 + $0x340] sm:$0xff]
        %v497 = vld [vmem:[%s241 + $0x348] sm:$0xff]
        %v498 = vld [vmem:[%s241 + $0x350] sm:$0xff]
        %v499 = vld [vmem:[%s241 + $0x358] sm:$0xff]
        %v500 = vld [vmem:[%s241 + $0x360] sm:$0xff]
        %v501 = vld [vmem:[%s241 + $0x368] sm:$0xff]
        %v502 = vld [vmem:[%s241 + $0x370] sm:$0xff]
        %v503 = vld [vmem:[%s241 + $0x378] sm:$0xff]
        %v504 = vld [vmem:[%s241 + $0x380] sm:$0xff]
        %v505 = vld [vmem:[%s241 + $0x388] sm:$0xff]
        %v506 = vld [vmem:[%s241 + $0x390] sm:$0xff]
        %v507 = vld [vmem:[%s241 + $0x398] sm:$0xff]
        %v508 = vld [vmem:[%s241 + $0x3a0] sm:$0xff]
        %v509 = vld [vmem:[%s241 + $0x3a8] sm:$0xff]
        %v510 = vld [vmem:[%s241 + $0x3b0] sm:$0xff]
        %v511 = vld [vmem:[%s241 + $0x3b8] sm:$0xff]
        %v512 = vld [vmem:[%s241 + $0x3c0] sm:$0xff]
        %v513 = vld [vmem:[%s241 + $0x3c8] sm:$0xff]
        %v514 = vld [vmem:[%s241 + $0x3d0] sm:$0xff]
        %v515 = vld [vmem:[%s241 + $0x3d8] sm:$0xff]
        %v516 = vld [vmem:[%s241 + $0x3e0] sm:$0xff]
        %v517 = vld [vmem:[%s241 + $0x3e8] sm:$0xff]
        %v518 = vld [vmem:[%s241 + $0x3f0] sm:$0xff]
        %v519 = vld [vmem:[%s241 + $0x3f8] sm:$0xff]
        %v520 = vld [vmem:[%s241 + $0x400] sm:$0xff]
        %v521 = vld [vmem:[%s241 + $0x408] sm:$0xff]
        %v522 = vld [vmem:[%s241 + $0x410] sm:$0xff]
        %v523 = vld [vmem:[%s241 + $0x418] sm:$0xff]
        %v524 = vld [vmem:[%s241 + $0x420] sm:$0xff]
        %v525 = vld [vmem:[%s241 + $0x428] sm:$0xff]
        %v526 = vld [vmem:[%s241 + $0x430] sm:$0xff]
        %v527 = vld [vmem:[%s241 + $0x438] sm:$0xff]
        %v528 = vld [vmem:[%s241 + $0x440] sm:$0xff]
        %v529 = vld [vmem:[%s241 + $0x448] sm:$0xff]
        %v530 = vld [vmem:[%s241 + $0x450] sm:$0xff]
        %v531 = vld [vmem:[%s241 + $0x458] sm:$0xff]
        %v532 = vld [vmem:[%s241 + $0x460] sm:$0xff]
        %v533 = vld [vmem:[%s241 + $0x468] sm:$0xff]
        %v534 = vld [vmem:[%s241 + $0x470] sm:$0xff]
        %v535 = vld [vmem:[%s241 + $0x478] sm:$0xff]
        %v536 = vld [vmem:[%s241 + $0x480] sm:$0xff]
        %v537 = vld [vmem:[%s241 + $0x488] sm:$0xff]
        %v538 = vld [vmem:[%s241 + $0x490] sm:$0xff]
        %v539 = vld [vmem:[%s241 + $0x498] sm:$0xff]
        %v540 = vld [vmem:[%s241 + $0x4a0] sm:$0xff]
        %v541 = vld [vmem:[%s241 + $0x4a8] sm:$0xff]
        %v542 = vld [vmem:[%s241 + $0x4b0] sm:$0xff]
        %v543 = vld [vmem:[%s241 + $0x4b8] sm:$0xff]
        %v544 = vld [vmem:[%s241 + $0x4c0] sm:$0xff]
        %v545 = vld [vmem:[%s241 + $0x4c8] sm:$0xff]
        %v546 = vld [vmem:[%s241 + $0x4d0] sm:$0xff]
        %v547 = vld [vmem:[%s241 + $0x4d8] sm:$0xff]
        %v548 = vld [vmem:[%s241 + $0x4e0] sm:$0xff]
        %v549 = vld [vmem:[%s241 + $0x4e8] sm:$0xff]
        %v550 = vld [vmem:[%s241 + $0x4f0] sm:$0xff]
        %v551 = vld [vmem:[%s241 + $0x4f8] sm:$0xff]
        %v552 = vld [vmem:[%s241 + $0x500] sm:$0xff]
        %v553 = vld [vmem:[%s241 + $0x508] sm:$0xff]
        %v554 = vld [vmem:[%s241 + $0x510] sm:$0xff]
        %v555 = vld [vmem:[%s241 + $0x518] sm:$0xff]
        %v556 = vld [vmem:[%s241 + $0x520] sm:$0xff]
        %v557 = vld [vmem:[%s241 + $0x528] sm:$0xff]
        %v558 = vld [vmem:[%s241 + $0x530] sm:$0xff]
        %v559 = vld [vmem:[%s241 + $0x538] sm:$0xff]
        %v560 = vld [vmem:[%s241 + $0x540] sm:$0xff]
        %v561 = vld [vmem:[%s241 + $0x548] sm:$0xff]
        %v562 = vld [vmem:[%s241 + $0x550] sm:$0xff]
        %v563 = vld [vmem:[%s241 + $0x558] sm:$0xff]
        %v564 = vld [vmem:[%s241 + $0x560] sm:$0xff]
        %v565 = vld [vmem:[%s241 + $0x568] sm:$0xff]
        %v566 = vld [vmem:[%s241 + $0x570] sm:$0xff]
        %v567 = vld [vmem:[%s241 + $0x578] sm:$0xff]
        %v568 = vld [vmem:[%s241 + $0x580] sm:$0xff]
        %v569 = vld [vmem:[%s241 + $0x588] sm:$0xff]
        %v570 = vld [vmem:[%s241 + $0x590] sm:$0xff]
        %v571 = vld [vmem:[%s241 + $0x598] sm:$0xff]
        %v572 = vld [vmem:[%s241 + $0x5a0] sm:$0xff]
        %v573 = vld [vmem:[%s241 + $0x5a8] sm:$0xff]
        %v574 = vld [vmem:[%s241 + $0x5b0] sm:$0xff]
        %v575 = vld [vmem:[%s241 + $0x5b8] sm:$0xff]
        %v576 = vld [vmem:[%s241 + $0x5c0] sm:$0xff]
        %v577 = vld [vmem:[%s241 + $0x5c8] sm:$0xff]
        %v578 = vld [vmem:[%s241 + $0x5d0] sm:$0xff]
        %v579 = vld [vmem:[%s241 + $0x5d8] sm:$0xff]
        %v580 = vld [vmem:[%s241 + $0x5e0] sm:$0xff]
        %v581 = vld [vmem:[%s241 + $0x5e8] sm:$0xff]
        %v582 = vld [vmem:[%s241 + $0x5f0] sm:$0xff]
        %v583 = vld [vmem:[%s241 + $0x5f8] sm:$0xff]
        %v584 = vld [vmem:[%s241 + $0x600] sm:$0xff]
        %v585 = vld [vmem:[%s241 + $0x608] sm:$0xff]
        %v586 = vld [vmem:[%s241 + $0x610] sm:$0xff]
        %v587 = vld [vmem:[%s241 + $0x618] sm:$0xff]
        %v588 = vld [vmem:[%s241 + $0x620] sm:$0xff]
        %v589 = vld [vmem:[%s241 + $0x628] sm:$0xff]
        %v590 = vld [vmem:[%s241 + $0x630] sm:$0xff]
        %v591 = vld [vmem:[%s241 + $0x638] sm:$0xff]
        %v592 = vld [vmem:[%s241 + $0x640] sm:$0xff]
        %v593 = vld [vmem:[%s241 + $0x648] sm:$0xff]
        %v594 = vld [vmem:[%s241 + $0x650] sm:$0xff]
        %v595 = vld [vmem:[%s241 + $0x658] sm:$0xff]
        %v596 = vld [vmem:[%s241 + $0x660] sm:$0xff]
        %v597 = vld [vmem:[%s241 + $0x668] sm:$0xff]
        %v598 = vld [vmem:[%s241 + $0x670] sm:$0xff]
        %v599 = vld [vmem:[%s241 + $0x678] sm:$0xff]
        %v600 = vld [vmem:[%s241 + $0x680] sm:$0xff]
        %v601 = vld [vmem:[%s241 + $0x688] sm:$0xff]
        %v602 = vld [vmem:[%s241 + $0x690] sm:$0xff]
        %v603 = vld [vmem:[%s241 + $0x698] sm:$0xff]
        %v604 = vld [vmem:[%s241 + $0x6a0] sm:$0xff]
        %v605 = vld [vmem:[%s241 + $0x6a8] sm:$0xff]
        %v606 = vld [vmem:[%s241 + $0x6b0] sm:$0xff]
        %v607 = vld [vmem:[%s241 + $0x6b8] sm:$0xff]
        %v608 = vld [vmem:[%s241 + $0x6c0] sm:$0xff]
        %v609 = vld [vmem:[%s241 + $0x6c8] sm:$0xff]
        %v610 = vld [vmem:[%s241 + $0x6d0] sm:$0xff]
        %v611 = vld [vmem:[%s241 + $0x6d8] sm:$0xff]
        %v612 = vld [vmem:[%s241 + $0x6e0] sm:$0xff]
        %v613 = vld [vmem:[%s241 + $0x6e8] sm:$0xff]
        %v614 = vld [vmem:[%s241 + $0x6f0] sm:$0xff]
        %v615 = vld [vmem:[%s241 + $0x6f8] sm:$0xff]
        %v616 = vld [vmem:[%s241 + $0x700] sm:$0xff]
        %v617 = vld [vmem:[%s241 + $0x708] sm:$0xff]
        %v618 = vld [vmem:[%s241 + $0x710] sm:$0xff]
        %v619 = vld [vmem:[%s241 + $0x718] sm:$0xff]
        %v620 = vld [vmem:[%s241 + $0x720] sm:$0xff]
        %v621 = vld [vmem:[%s241 + $0x728] sm:$0xff]
        %v622 = vld [vmem:[%s241 + $0x730] sm:$0xff]
        %v623 = vld [vmem:[%s241 + $0x738] sm:$0xff]
        %v624 = vld [vmem:[%s241 + $0x740] sm:$0xff]
        %v625 = vld [vmem:[%s241 + $0x748] sm:$0xff]
        %v626 = vld [vmem:[%s241 + $0x750] sm:$0xff]
        %v627 = vld [vmem:[%s241 + $0x758] sm:$0xff]
        %v628 = vld [vmem:[%s241 + $0x760] sm:$0xff]
        %v629 = vld [vmem:[%s241 + $0x768] sm:$0xff]
        %v630 = vld [vmem:[%s241 + $0x770] sm:$0xff]
        %v631 = vld [vmem:[%s241 + $0x778] sm:$0xff]
        %v632 = vld [vmem:[%s241 + $0x780] sm:$0xff]
        %v633 = vld [vmem:[%s241 + $0x788] sm:$0xff]
        %v634 = vld [vmem:[%s241 + $0x790] sm:$0xff]
        %v635 = vld [vmem:[%s241 + $0x798] sm:$0xff]
        %v636 = vld [vmem:[%s241 + $0x7a0] sm:$0xff]
        %v637 = vld [vmem:[%s241 + $0x7a8] sm:$0xff]
        %v638 = vld [vmem:[%s241 + $0x7b0] sm:$0xff]
        %v639 = vld [vmem:[%s241 + $0x7b8] sm:$0xff]
        %v640 = vld [vmem:[%s241 + $0x7c0] sm:$0xff]
        %v641 = vld [vmem:[%s241 + $0x7c8] sm:$0xff]
        %v642 = vld [vmem:[%s241 + $0x7d0] sm:$0xff]
        %v643 = vld [vmem:[%s241 + $0x7d8] sm:$0xff]
        %v644 = vld [vmem:[%s241 + $0x7e0] sm:$0xff]
        %v645 = vld [vmem:[%s241 + $0x7e8] sm:$0xff]
        %v646 = vld [vmem:[%s241 + $0x7f0] sm:$0xff]
        %v647 = vld [vmem:[%s241 + $0x7f8] sm:$0xff]
        %v648 = vld [vmem:[%s241 + $0x800] sm:$0xff]
        %v649 = vld [vmem:[%s241 + $0x808] sm:$0xff]
        %v650 = vld [vmem:[%s241 + $0x810] sm:$0xff]
        %v651 = vld [vmem:[%s241 + $0x818] sm:$0xff]
        %v652 = vld [vmem:[%s241 + $0x820] sm:$0xff]
        %v653 = vld [vmem:[%s241 + $0x828] sm:$0xff]
        %v654 = vld [vmem:[%s241 + $0x830] sm:$0xff]
        %v655 = vld [vmem:[%s241 + $0x838] sm:$0xff]
        %v656 = vld [vmem:[%s241 + $0x840] sm:$0xff]
        %v657 = vld [vmem:[%s241 + $0x848] sm:$0xff]
        %v658 = vld [vmem:[%s241 + $0x850] sm:$0xff]
        %v659 = vld [vmem:[%s241 + $0x858] sm:$0xff]
        %v660 = vld [vmem:[%s241 + $0x860] sm:$0xff]
        %v661 = vld [vmem:[%s241 + $0x868] sm:$0xff]
        %v662 = vld [vmem:[%s241 + $0x870] sm:$0xff]
        %v663 = vld [vmem:[%s241 + $0x878] sm:$0xff]
        %v664 = vld [vmem:[%s241 + $0x880] sm:$0xff]
        %v665 = vld [vmem:[%s241 + $0x888] sm:$0xff]
        %v666 = vld [vmem:[%s241 + $0x890] sm:$0xff]
        %v667 = vld [vmem:[%s241 + $0x898] sm:$0xff]
        %v668 = vld [vmem:[%s241 + $0x8a0] sm:$0xff]
        %v669 = vld [vmem:[%s241 + $0x8a8] sm:$0xff]
        %v670 = vld [vmem:[%s241 + $0x8b0] sm:$0xff]
        %v671 = vld [vmem:[%s241 + $0x8b8] sm:$0xff]
        %v672 = vld [vmem:[%s241 + $0x8c0] sm:$0xff]
        %v673 = vld [vmem:[%s241 + $0x8c8] sm:$0xff]
        %v674 = vld [vmem:[%s241 + $0x8d0] sm:$0xff]
        %v675 = vld [vmem:[%s241 + $0x8d8] sm:$0xff]
        %v676 = vld [vmem:[%s241 + $0x8e0] sm:$0xff]
        %v677 = vld [vmem:[%s241 + $0x8e8] sm:$0xff]
        %v678 = vld [vmem:[%s241 + $0x8f0] sm:$0xff]
        %v679 = vld [vmem:[%s241 + $0x8f8] sm:$0xff]
        %v680 = vld [vmem:[%s241 + $0x900] sm:$0xff]
        %v681 = vld [vmem:[%s241 + $0x908] sm:$0xff]
        %v682 = vld [vmem:[%s241 + $0x910] sm:$0xff]
        %v683 = vld [vmem:[%s241 + $0x918] sm:$0xff]
        %v684 = vld [vmem:[%s241 + $0x920] sm:$0xff]
        %v685 = vld [vmem:[%s241 + $0x928] sm:$0xff]
        %v686 = vld [vmem:[%s241 + $0x930] sm:$0xff]
        %v687 = vld [vmem:[%s241 + $0x938] sm:$0xff]
        %v688 = vld [vmem:[%s241 + $0x940] sm:$0xff]
        %v689 = vld [vmem:[%s241 + $0x948] sm:$0xff]
        %v690 = vld [vmem:[%s241 + $0x950] sm:$0xff]
        %v691 = vld [vmem:[%s241 + $0x958] sm:$0xff]
        %v692 = vld [vmem:[%s241 + $0x960] sm:$0xff]
        %v693 = vld [vmem:[%s241 + $0x968] sm:$0xff]
        %v694 = vld [vmem:[%s241 + $0x970] sm:$0xff]
        %v695 = vld [vmem:[%s241 + $0x978] sm:$0xff]
        %v696 = vld [vmem:[%s241 + $0x980] sm:$0xff]
        %v697 = vld [vmem:[%s241 + $0x988] sm:$0xff]
        %v698 = vld [vmem:[%s241 + $0x990] sm:$0xff]
        %v699 = vld [vmem:[%s241 + $0x998] sm:$0xff]
        %v700 = vld [vmem:[%s241 + $0x9a0] sm:$0xff]
        %v701 = vld [vmem:[%s241 + $0x9a8] sm:$0xff]
        %v702 = vld [vmem:[%s241 + $0x9b0] sm:$0xff]
        %v703 = vld [vmem:[%s241 + $0x9b8] sm:$0xff]
        %v704 = vld [vmem:[%s241 + $0x9c0] sm:$0xff]
        %v705 = vld [vmem:[%s241 + $0x9c8] sm:$0xff]
        %v706 = vld [vmem:[%s241 + $0x9d0] sm:$0xff]
        %v707 = vld [vmem:[%s241 + $0x9d8] sm:$0xff]
        %v708 = vld [vmem:[%s241 + $0x9e0] sm:$0xff]
        %v709 = vld [vmem:[%s241 + $0x9e8] sm:$0xff]
        %v710 = vld [vmem:[%s241 + $0x9f0] sm:$0xff]
        %v711 = vld [vmem:[%s241 + $0x9f8] sm:$0xff]
        %v712 = vld [vmem:[%s241 + $0xa00] sm:$0xff]
        %v713 = vld [vmem:[%s241 + $0xa08] sm:$0xff]
        %v714 = vld [vmem:[%s241 + $0xa10] sm:$0xff]
        %v715 = vld [vmem:[%s241 + $0xa18] sm:$0xff]
        %v716 = vld [vmem:[%s241 + $0xa20] sm:$0xff]
        %v717 = vld [vmem:[%s241 + $0xa28] sm:$0xff]
        %v718 = vld [vmem:[%s241 + $0xa30] sm:$0xff]
        %v719 = vld [vmem:[%s241 + $0xa38] sm:$0xff]
        %v720 = vld [vmem:[%s241 + $0xa40] sm:$0xff]
        %v721 = vld [vmem:[%s241 + $0xa48] sm:$0xff]
        %v722 = vld [vmem:[%s241 + $0xa50] sm:$0xff]
        %v723 = vld [vmem:[%s241 + $0xa58] sm:$0xff]
        %v724 = vld [vmem:[%s241 + $0xa60] sm:$0xff]
        %v725 = vld [vmem:[%s241 + $0xa68] sm:$0xff]
        %v726 = vld [vmem:[%s241 + $0xa70] sm:$0xff]
        %v727 = vld [vmem:[%s241 + $0xa78] sm:$0xff]
        %v728 = vld [vmem:[%s241 + $0xa80] sm:$0xff]
        %v729 = vld [vmem:[%s241 + $0xa88] sm:$0xff]
        %v730 = vld [vmem:[%s241 + $0xa90] sm:$0xff]
        %v731 = vld [vmem:[%s241 + $0xa98] sm:$0xff]
        %v732 = vld [vmem:[%s241 + $0xaa0] sm:$0xff]
        %v733 = vld [vmem:[%s241 + $0xaa8] sm:$0xff]
        %v734 = vld [vmem:[%s241 + $0xab0] sm:$0xff]
        %v735 = vld [vmem:[%s241 + $0xab8] sm:$0xff]
        %v736 = vld [vmem:[%s241 + $0xac0] sm:$0xff]
        %v737 = vld [vmem:[%s241 + $0xac8] sm:$0xff]
        %v738 = vld [vmem:[%s241 + $0xad0] sm:$0xff]
        %v739 = vld [vmem:[%s241 + $0xad8] sm:$0xff]
        %v740 = vld [vmem:[%s241 + $0xae0] sm:$0xff]
        %v741 = vld [vmem:[%s241 + $0xae8] sm:$0xff]
        %v742 = vld [vmem:[%s241 + $0xaf0] sm:$0xff]
        %v743 = vld [vmem:[%s241 + $0xaf8] sm:$0xff]
        %v744 = vld [vmem:[%s241 + $0xb00] sm:$0xff]
        %v745 = vld [vmem:[%s241 + $0xb08] sm:$0xff]
        %v746 = vld [vmem:[%s241 + $0xb10] sm:$0xff]
        %v747 = vld [vmem:[%s241 + $0xb18] sm:$0xff]
        %v748 = vld [vmem:[%s241 + $0xb20] sm:$0xff]
        %v749 = vld [vmem:[%s241 + $0xb28] sm:$0xff]
        %v750 = vld [vmem:[%s241 + $0xb30] sm:$0xff]
        %v751 = vld [vmem:[%s241 + $0xb38] sm:$0xff]
        %v752 = vld [vmem:[%s241 + $0xb40] sm:$0xff]
        %v753 = vld [vmem:[%s241 + $0xb48] sm:$0xff]
        %v754 = vld [vmem:[%s241 + $0xb50] sm:$0xff]
        %v755 = vld [vmem:[%s241 + $0xb58] sm:$0xff]
        %v756 = vld [vmem:[%s241 + $0xb60] sm:$0xff]
        %v757 = vld [vmem:[%s241 + $0xb68] sm:$0xff]
        %v758 = vld [vmem:[%s241 + $0xb70] sm:$0xff]
        %v759 = vld [vmem:[%s241 + $0xb78] sm:$0xff]
        %v760 = vld [vmem:[%s241 + $0xb80] sm:$0xff]
        %v761 = vld [vmem:[%s241 + $0xb88] sm:$0xff]
        %v762 = vld [vmem:[%s241 + $0xb90] sm:$0xff]
        %v763 = vld [vmem:[%s241 + $0xb98] sm:$0xff]
        %v764 = vld [vmem:[%s241 + $0xba0] sm:$0xff]
        %v765 = vld [vmem:[%s241 + $0xba8] sm:$0xff]
        %v766 = vld [vmem:[%s241 + $0xbb0] sm:$0xff]
        %v767 = vld [vmem:[%s241 + $0xbb8] sm:$0xff]
        %v768 = vld [vmem:[%s241 + $0xbc0] sm:$0xff]
        %v769 = vld [vmem:[%s241 + $0xbc8] sm:$0xff]
        %v770 = vld [vmem:[%s241 + $0xbd0] sm:$0xff]
        %v771 = vld [vmem:[%s241 + $0xbd8] sm:$0xff]
        %v772 = vld [vmem:[%s241 + $0xbe0] sm:$0xff]
        %v773 = vld [vmem:[%s241 + $0xbe8] sm:$0xff]
        %v774 = vld [vmem:[%s241 + $0xbf0] sm:$0xff]
        %v775 = vld [vmem:[%s241 + $0xbf8] sm:$0xff]
        %v776 = vld [vmem:[%s241 + $0xc00] sm:$0xff]
        %v777 = vld [vmem:[%s241 + $0xc08] sm:$0xff]
        %v778 = vld [vmem:[%s241 + $0xc10] sm:$0xff]
        %v779 = vld [vmem:[%s241 + $0xc18] sm:$0xff]
        %v780 = vld [vmem:[%s241 + $0xc20] sm:$0xff]
        %v781 = vld [vmem:[%s241 + $0xc28] sm:$0xff]
        %v782 = vld [vmem:[%s241 + $0xc30] sm:$0xff]
        %v783 = vld [vmem:[%s241 + $0xc38] sm:$0xff]
        %v784 = vld [vmem:[%s241 + $0xc40] sm:$0xff]
        %v785 = vld [vmem:[%s241 + $0xc48] sm:$0xff]
        %v786 = vld [vmem:[%s241 + $0xc50] sm:$0xff]
        %v787 = vld [vmem:[%s241 + $0xc58] sm:$0xff]
        %v788 = vld [vmem:[%s241 + $0xc60] sm:$0xff]
        %v789 = vld [vmem:[%s241 + $0xc68] sm:$0xff]
        %v790 = vld [vmem:[%s241 + $0xc70] sm:$0xff]
        %v791 = vld [vmem:[%s241 + $0xc78] sm:$0xff]
        %v792 = vld [vmem:[%s241 + $0xc80] sm:$0xff]
        %v793 = vld [vmem:[%s241 + $0xc88] sm:$0xff]
        %v794 = vld [vmem:[%s241 + $0xc90] sm:$0xff]
        %v795 = vld [vmem:[%s241 + $0xc98] sm:$0xff]
        %v796 = vld [vmem:[%s241 + $0xca0] sm:$0xff]
        %v797 = vld [vmem:[%s241 + $0xca8] sm:$0xff]
        %v798 = vld [vmem:[%s241 + $0xcb0] sm:$0xff]
        %v799 = vld [vmem:[%s241 + $0xcb8] sm:$0xff]
        %v800 = vld [vmem:[%s241 + $0xcc0] sm:$0xff]
        %v801 = vld [vmem:[%s241 + $0xcc8] sm:$0xff]
        %v802 = vld [vmem:[%s241 + $0xcd0] sm:$0xff]
        %v803 = vld [vmem:[%s241 + $0xcd8] sm:$0xff]
        %v804 = vld [vmem:[%s241 + $0xce0] sm:$0xff]
        %v805 = vld [vmem:[%s241 + $0xce8] sm:$0xff]
        %v806 = vld [vmem:[%s241 + $0xcf0] sm:$0xff]
        %v807 = vld [vmem:[%s241 + $0xcf8] sm:$0xff]
        %v1224 = vunpack.c.l.b16 %v392
        %v1225 = vunpack.c.h.b16 %v392
        %v1226 = vunpack.c.l.b16 %v393
        %v1227 = vunpack.c.h.b16 %v393
        %v1228 = vunpack.c.l.b16 %v394
        %v1229 = vunpack.c.h.b16 %v394
        %v1230 = vunpack.c.l.b16 %v395
        %v1231 = vunpack.c.h.b16 %v395
        %v1232 = vunpack.c.l.b16 %v396
        %v1233 = vunpack.c.h.b16 %v396
        %v1234 = vunpack.c.l.b16 %v397
        %v1235 = vunpack.c.h.b16 %v397
        %v1236 = vunpack.c.l.b16 %v398
        %v1237 = vunpack.c.h.b16 %v398
        %v1238 = vunpack.c.l.b16 %v399
        %v1239 = vunpack.c.h.b16 %v399
        %v1240 = vunpack.c.l.b16 %v400
        %v1241 = vunpack.c.h.b16 %v400
        %v1242 = vunpack.c.l.b16 %v401
        %v1243 = vunpack.c.h.b16 %v401
        %v1244 = vunpack.c.l.b16 %v402
        %v1245 = vunpack.c.h.b16 %v402
        %v1246 = vunpack.c.l.b16 %v403
        %v1247 = vunpack.c.h.b16 %v403
        %v1248 = vunpack.c.l.b16 %v404
        %v1249 = vunpack.c.h.b16 %v404
        %v1250 = vunpack.c.l.b16 %v405
        %v1251 = vunpack.c.h.b16 %v405
        %v1252 = vunpack.c.l.b16 %v406
        %v1253 = vunpack.c.h.b16 %v406
        %v1254 = vunpack.c.l.b16 %v407
        %v1255 = vunpack.c.h.b16 %v407
        %v1256 = vunpack.c.l.b16 %v408
        %v1257 = vunpack.c.h.b16 %v408
        %v1258 = vunpack.c.l.b16 %v409
        %v1259 = vunpack.c.h.b16 %v409
        %v1260 = vunpack.c.l.b16 %v410
        %v1261 = vunpack.c.h.b16 %v410
        %v1262 = vunpack.c.l.b16 %v411
        %v1263 = vunpack.c.h.b16 %v411
        %v1264 = vunpack.c.l.b16 %v412
        %v1265 = vunpack.c.h.b16 %v412
        %v1266 = vunpack.c.l.b16 %v413
        %v1267 = vunpack.c.h.b16 %v413
        %v1268 = vunpack.c.l.b16 %v414
        %v1269 = vunpack.c.h.b16 %v414
        %v1270 = vunpack.c.l.b16 %v415
        %v1271 = vunpack.c.h.b16 %v415
        %v1272 = vunpack.c.l.b16 %v416
        %v1273 = vunpack.c.h.b16 %v416
        %v1274 = vunpack.c.l.b16 %v417
        %v1275 = vunpack.c.h.b16 %v417
        %v1276 = vunpack.c.l.b16 %v418
        %v1277 = vunpack.c.h.b16 %v418
        %v1278 = vunpack.c.l.b16 %v419
        %v1279 = vunpack.c.h.b16 %v419
        %v1280 = vunpack.c.l.b16 %v420
        %v1281 = vunpack.c.h.b16 %v420
        %v1282 = vunpack.c.l.b16 %v421
        %v1283 = vunpack.c.h.b16 %v421
        %v1284 = vunpack.c.l.b16 %v422
        %v1285 = vunpack.c.h.b16 %v422
        %v1286 = vunpack.c.l.b16 %v423
        %v1287 = vunpack.c.h.b16 %v423
        %v1288 = vunpack.c.l.b16 %v424
        %v1289 = vunpack.c.h.b16 %v424
        %v1290 = vunpack.c.l.b16 %v425
        %v1291 = vunpack.c.h.b16 %v425
        %v1292 = vunpack.c.l.b16 %v426
        %v1293 = vunpack.c.h.b16 %v426
        %v1294 = vunpack.c.l.b16 %v427
        %v1295 = vunpack.c.h.b16 %v427
        %v1296 = vunpack.c.l.b16 %v428
        %v1297 = vunpack.c.h.b16 %v428
        %v1298 = vunpack.c.l.b16 %v429
        %v1299 = vunpack.c.h.b16 %v429
        %v1300 = vunpack.c.l.b16 %v430
        %v1301 = vunpack.c.h.b16 %v430
        %v1302 = vunpack.c.l.b16 %v431
        %v1303 = vunpack.c.h.b16 %v431
        %v1304 = vunpack.c.l.b16 %v432
        %v1305 = vunpack.c.h.b16 %v432
        %v1306 = vunpack.c.l.b16 %v433
        %v1307 = vunpack.c.h.b16 %v433
        %v1308 = vunpack.c.l.b16 %v434
        %v1309 = vunpack.c.h.b16 %v434
        %v1310 = vunpack.c.l.b16 %v435
        %v1311 = vunpack.c.h.b16 %v435
        %v1312 = vunpack.c.l.b16 %v436
        %v1313 = vunpack.c.h.b16 %v436
        %v1314 = vunpack.c.l.b16 %v437
        %v1315 = vunpack.c.h.b16 %v437
        %v1316 = vunpack.c.l.b16 %v438
        %v1317 = vunpack.c.h.b16 %v438
        %v1318 = vunpack.c.l.b16 %v439
        %v1319 = vunpack.c.h.b16 %v439
        %v1320 = vunpack.c.l.b16 %v440
        %v1321 = vunpack.c.h.b16 %v440
        %v1322 = vunpack.c.l.b16 %v441
        %v1323 = vunpack.c.h.b16 %v441
        %v1324 = vunpack.c.l.b16 %v442
        %v1325 = vunpack.c.h.b16 %v442
        %v1326 = vunpack.c.l.b16 %v443
        %v1327 = vunpack.c.h.b16 %v443
        %v1328 = vunpack.c.l.b16 %v444
        %v1329 = vunpack.c.h.b16 %v444
        %v1330 = vunpack.c.l.b16 %v445
        %v1331 = vunpack.c.h.b16 %v445
        %v1332 = vunpack.c.l.b16 %v446
        %v1333 = vunpack.c.h.b16 %v446
        %v1334 = vunpack.c.l.b16 %v447
        %v1335 = vunpack.c.h.b16 %v447
        %v1336 = vunpack.c.l.b16 %v448
        %v1337 = vunpack.c.h.b16 %v448
        %v1338 = vunpack.c.l.b16 %v449
        %v1339 = vunpack.c.h.b16 %v449
        %v1340 = vunpack.c.l.b16 %v450
        %v1341 = vunpack.c.h.b16 %v450
        %v1342 = vunpack.c.l.b16 %v451
        %v1343 = vunpack.c.h.b16 %v451
        %v1344 = vunpack.c.l.b16 %v452
        %v1345 = vunpack.c.h.b16 %v452
        %v1346 = vunpack.c.l.b16 %v453
        %v1347 = vunpack.c.h.b16 %v453
        %v1348 = vunpack.c.l.b16 %v454
        %v1349 = vunpack.c.h.b16 %v454
        %v1350 = vunpack.c.l.b16 %v455
        %v1351 = vunpack.c.h.b16 %v455
        %v1352 = vunpack.c.l.b16 %v456
        %v1353 = vunpack.c.h.b16 %v456
        %v1354 = vunpack.c.l.b16 %v457
        %v1355 = vunpack.c.h.b16 %v457
        %v1356 = vunpack.c.l.b16 %v458
        %v1357 = vunpack.c.h.b16 %v458
        %v1358 = vunpack.c.l.b16 %v459
        %v1359 = vunpack.c.h.b16 %v459
        %v1360 = vunpack.c.l.b16 %v460
        %v1361 = vunpack.c.h.b16 %v460
        %v1362 = vunpack.c.l.b16 %v461
        %v1363 = vunpack.c.h.b16 %v461
        %v1364 = vunpack.c.l.b16 %v462
        %v1365 = vunpack.c.h.b16 %v462
        %v1366 = vunpack.c.l.b16 %v463
        %v1367 = vunpack.c.h.b16 %v463
        %v1368 = vunpack.c.l.b16 %v464
        %v1369 = vunpack.c.h.b16 %v464
        %v1370 = vunpack.c.l.b16 %v465
        %v1371 = vunpack.c.h.b16 %v465
        %v1372 = vunpack.c.l.b16 %v466
        %v1373 = vunpack.c.h.b16 %v466
        %v1374 = vunpack.c.l.b16 %v467
        %v1375 = vunpack.c.h.b16 %v467
        %v1376 = vunpack.c.l.b16 %v468
        %v1377 = vunpack.c.h.b16 %v468
        %v1378 = vunpack.c.l.b16 %v469
        %v1379 = vunpack.c.h.b16 %v469
        %v1380 = vunpack.c.l.b16 %v470
        %v1381 = vunpack.c.h.b16 %v470
        %v1382 = vunpack.c.l.b16 %v471
        %v1383 = vunpack.c.h.b16 %v471
        %v1384 = vunpack.c.l.b16 %v472
        %v1385 = vunpack.c.h.b16 %v472
        %v1386 = vunpack.c.l.b16 %v473
        %v1387 = vunpack.c.h.b16 %v473
        %v1388 = vunpack.c.l.b16 %v474
        %v1389 = vunpack.c.h.b16 %v474
        %v1390 = vunpack.c.l.b16 %v475
        %v1391 = vunpack.c.h.b16 %v475
        %v1392 = vunpack.c.l.b16 %v476
        %v1393 = vunpack.c.h.b16 %v476
        %v1394 = vunpack.c.l.b16 %v477
        %v1395 = vunpack.c.h.b16 %v477
        %v1396 = vunpack.c.l.b16 %v478
        %v1397 = vunpack.c.h.b16 %v478
        %v1398 = vunpack.c.l.b16 %v479
        %v1399 = vunpack.c.h.b16 %v479
        %v1400 = vunpack.c.l.b16 %v480
        %v1401 = vunpack.c.h.b16 %v480
        %v1402 = vunpack.c.l.b16 %v481
        %v1403 = vunpack.c.h.b16 %v481
        %v1404 = vunpack.c.l.b16 %v482
        %v1405 = vunpack.c.h.b16 %v482
        %v1406 = vunpack.c.l.b16 %v483
        %v1407 = vunpack.c.h.b16 %v483
        %v1408 = vunpack.c.l.b16 %v484
        %v1409 = vunpack.c.h.b16 %v484
        %v1410 = vunpack.c.l.b16 %v485
        %v1411 = vunpack.c.h.b16 %v485
        %v1412 = vunpack.c.l.b16 %v486
        %v1413 = vunpack.c.h.b16 %v486
        %v1414 = vunpack.c.l.b16 %v487
        %v1415 = vunpack.c.h.b16 %v487
        %v1416 = vunpack.c.l.b16 %v488
        %v1417 = vunpack.c.h.b16 %v488
        %v1418 = vunpack.c.l.b16 %v489
        %v1419 = vunpack.c.h.b16 %v489
        %v1420 = vunpack.c.l.b16 %v490
        %v1421 = vunpack.c.h.b16 %v490
        %v1422 = vunpack.c.l.b16 %v491
        %v1423 = vunpack.c.h.b16 %v491
        %v1424 = vunpack.c.l.b16 %v492
        %v1425 = vunpack.c.h.b16 %v492
        %v1426 = vunpack.c.l.b16 %v493
        %v1427 = vunpack.c.h.b16 %v493
        %v1428 = vunpack.c.l.b16 %v494
        %v1429 = vunpack.c.h.b16 %v494
        %v1430 = vunpack.c.l.b16 %v495
        %v1431 = vunpack.c.h.b16 %v495
        %v1432 = vunpack.c.l.b16 %v496
        %v1433 = vunpack.c.h.b16 %v496
        %v1434 = vunpack.c.l.b16 %v497
        %v1435 = vunpack.c.h.b16 %v497
        %v1436 = vunpack.c.l.b16 %v498
        %v1437 = vunpack.c.h.b16 %v498
        %v1438 = vunpack.c.l.b16 %v499
        %v1439 = vunpack.c.h.b16 %v499
        %v1440 = vunpack.c.l.b16 %v500
        %v1441 = vunpack.c.h.b16 %v500
        %v1442 = vunpack.c.l.b16 %v501
        %v1443 = vunpack.c.h.b16 %v501
        %v1444 = vunpack.c.l.b16 %v502
        %v1445 = vunpack.c.h.b16 %v502
        %v1446 = vunpack.c.l.b16 %v503
        %v1447 = vunpack.c.h.b16 %v503
        %v1448 = vunpack.c.l.b16 %v504
        %v1449 = vunpack.c.h.b16 %v504
        %v1450 = vunpack.c.l.b16 %v505
        %v1451 = vunpack.c.h.b16 %v505
        %v1452 = vunpack.c.l.b16 %v506
        %v1453 = vunpack.c.h.b16 %v506
        %v1454 = vunpack.c.l.b16 %v507
        %v1455 = vunpack.c.h.b16 %v507
        %v1456 = vunpack.c.l.b16 %v508
        %v1457 = vunpack.c.h.b16 %v508
        %v1458 = vunpack.c.l.b16 %v509
        %v1459 = vunpack.c.h.b16 %v509
        %v1460 = vunpack.c.l.b16 %v510
        %v1461 = vunpack.c.h.b16 %v510
        %v1462 = vunpack.c.l.b16 %v511
        %v1463 = vunpack.c.h.b16 %v511
        %v1464 = vunpack.c.l.b16 %v512
        %v1465 = vunpack.c.h.b16 %v512
        %v1466 = vunpack.c.l.b16 %v513
        %v1467 = vunpack.c.h.b16 %v513
        %v1468 = vunpack.c.l.b16 %v514
        %v1469 = vunpack.c.h.b16 %v514
        %v1470 = vunpack.c.l.b16 %v515
        %v1471 = vunpack.c.h.b16 %v515
        %v1472 = vunpack.c.l.b16 %v516
        %v1473 = vunpack.c.h.b16 %v516
        %v1474 = vunpack.c.l.b16 %v517
        %v1475 = vunpack.c.h.b16 %v517
        %v1476 = vunpack.c.l.b16 %v518
        %v1477 = vunpack.c.h.b16 %v518
        %v1478 = vunpack.c.l.b16 %v519
        %v1479 = vunpack.c.h.b16 %v519
        %v1480 = vunpack.c.l.b16 %v520
        %v1481 = vunpack.c.h.b16 %v520
        %v1482 = vunpack.c.l.b16 %v521
        %v1483 = vunpack.c.h.b16 %v521
        %v1484 = vunpack.c.l.b16 %v522
        %v1485 = vunpack.c.h.b16 %v522
        %v1486 = vunpack.c.l.b16 %v523
        %v1487 = vunpack.c.h.b16 %v523
        %v1488 = vunpack.c.l.b16 %v524
        %v1489 = vunpack.c.h.b16 %v524
        %v1490 = vunpack.c.l.b16 %v525
        %v1491 = vunpack.c.h.b16 %v525
        %v1492 = vunpack.c.l.b16 %v526
        %v1493 = vunpack.c.h.b16 %v526
        %v1494 = vunpack.c.l.b16 %v527
        %v1495 = vunpack.c.h.b16 %v527
        %v1496 = vunpack.c.l.b16 %v528
        %v1497 = vunpack.c.h.b16 %v528
        %v1498 = vunpack.c.l.b16 %v529
        %v1499 = vunpack.c.h.b16 %v529
        %v1500 = vunpack.c.l.b16 %v530
        %v1501 = vunpack.c.h.b16 %v530
        %v1502 = vunpack.c.l.b16 %v531
        %v1503 = vunpack.c.h.b16 %v531
        %v1504 = vunpack.c.l.b16 %v532
        %v1505 = vunpack.c.h.b16 %v532
        %v1506 = vunpack.c.l.b16 %v533
        %v1507 = vunpack.c.h.b16 %v533
        %v1508 = vunpack.c.l.b16 %v534
        %v1509 = vunpack.c.h.b16 %v534
        %v1510 = vunpack.c.l.b16 %v535
        %v1511 = vunpack.c.h.b16 %v535
        %v1512 = vunpack.c.l.b16 %v536
        %v1513 = vunpack.c.h.b16 %v536
        %v1514 = vunpack.c.l.b16 %v537
        %v1515 = vunpack.c.h.b16 %v537
        %v1516 = vunpack.c.l.b16 %v538
        %v1517 = vunpack.c.h.b16 %v538
        %v1518 = vunpack.c.l.b16 %v539
        %v1519 = vunpack.c.h.b16 %v539
        %v1520 = vunpack.c.l.b16 %v540
        %v1521 = vunpack.c.h.b16 %v540
        %v1522 = vunpack.c.l.b16 %v541
        %v1523 = vunpack.c.h.b16 %v541
        %v1524 = vunpack.c.l.b16 %v542
        %v1525 = vunpack.c.h.b16 %v542
        %v1526 = vunpack.c.l.b16 %v543
        %v1527 = vunpack.c.h.b16 %v543
        %v1528 = vunpack.c.l.b16 %v544
        %v1529 = vunpack.c.h.b16 %v544
        %v1530 = vunpack.c.l.b16 %v545
        %v1531 = vunpack.c.h.b16 %v545
        %v1532 = vunpack.c.l.b16 %v546
        %v1533 = vunpack.c.h.b16 %v546
        %v1534 = vunpack.c.l.b16 %v547
        %v1535 = vunpack.c.h.b16 %v547
        %v1536 = vunpack.c.l.b16 %v548
        %v1537 = vunpack.c.h.b16 %v548
        %v1538 = vunpack.c.l.b16 %v549
        %v1539 = vunpack.c.h.b16 %v549
        %v1540 = vunpack.c.l.b16 %v550
        %v1541 = vunpack.c.h.b16 %v550
        %v1542 = vunpack.c.l.b16 %v551
        %v1543 = vunpack.c.h.b16 %v551
        %v1544 = vunpack.c.l.b16 %v552
        %v1545 = vunpack.c.h.b16 %v552
        %v1546 = vunpack.c.l.b16 %v553
        %v1547 = vunpack.c.h.b16 %v553
        %v1548 = vunpack.c.l.b16 %v554
        %v1549 = vunpack.c.h.b16 %v554
        %v1550 = vunpack.c.l.b16 %v555
        %v1551 = vunpack.c.h.b16 %v555
        %v1552 = vunpack.c.l.b16 %v556
        %v1553 = vunpack.c.h.b16 %v556
        %v1554 = vunpack.c.l.b16 %v557
        %v1555 = vunpack.c.h.b16 %v557
        %v1556 = vunpack.c.l.b16 %v558
        %v1557 = vunpack.c.h.b16 %v558
        %v1558 = vunpack.c.l.b16 %v559
        %v1559 = vunpack.c.h.b16 %v559
        %v1560 = vunpack.c.l.b16 %v560
        %v1561 = vunpack.c.h.b16 %v560
        %v1562 = vunpack.c.l.b16 %v561
        %v1563 = vunpack.c.h.b16 %v561
        %v1564 = vunpack.c.l.b16 %v562
        %v1565 = vunpack.c.h.b16 %v562
        %v1566 = vunpack.c.l.b16 %v563
        %v1567 = vunpack.c.h.b16 %v563
        %v1568 = vunpack.c.l.b16 %v564
        %v1569 = vunpack.c.h.b16 %v564
        %v1570 = vunpack.c.l.b16 %v565
        %v1571 = vunpack.c.h.b16 %v565
        %v1572 = vunpack.c.l.b16 %v566
        %v1573 = vunpack.c.h.b16 %v566
        %v1574 = vunpack.c.l.b16 %v567
        %v1575 = vunpack.c.h.b16 %v567
        %v1576 = vunpack.c.l.b16 %v568
        %v1577 = vunpack.c.h.b16 %v568
        %v1578 = vunpack.c.l.b16 %v569
        %v1579 = vunpack.c.h.b16 %v569
        %v1580 = vunpack.c.l.b16 %v570
        %v1581 = vunpack.c.h.b16 %v570
        %v1582 = vunpack.c.l.b16 %v571
        %v1583 = vunpack.c.h.b16 %v571
        %v1584 = vunpack.c.l.b16 %v572
        %v1585 = vunpack.c.h.b16 %v572
        %v1586 = vunpack.c.l.b16 %v573
        %v1587 = vunpack.c.h.b16 %v573
        %v1588 = vunpack.c.l.b16 %v574
        %v1589 = vunpack.c.h.b16 %v574
        %v1590 = vunpack.c.l.b16 %v575
        %v1591 = vunpack.c.h.b16 %v575
        %v1592 = vunpack.c.l.b16 %v576
        %v1593 = vunpack.c.h.b16 %v576
        %v1594 = vunpack.c.l.b16 %v577
        %v1595 = vunpack.c.h.b16 %v577
        %v1596 = vunpack.c.l.b16 %v578
        %v1597 = vunpack.c.h.b16 %v578
        %v1598 = vunpack.c.l.b16 %v579
        %v1599 = vunpack.c.h.b16 %v579
        %v1600 = vunpack.c.l.b16 %v580
        %v1601 = vunpack.c.h.b16 %v580
        %v1602 = vunpack.c.l.b16 %v581
        %v1603 = vunpack.c.h.b16 %v581
        %v1604 = vunpack.c.l.b16 %v582
        %v1605 = vunpack.c.h.b16 %v582
        %v1606 = vunpack.c.l.b16 %v583
        %v1607 = vunpack.c.h.b16 %v583
        %v1608 = vunpack.c.l.b16 %v584
        %v1609 = vunpack.c.h.b16 %v584
        %v1610 = vunpack.c.l.b16 %v585
        %v1611 = vunpack.c.h.b16 %v585
        %v1612 = vunpack.c.l.b16 %v586
        %v1613 = vunpack.c.h.b16 %v586
        %v1614 = vunpack.c.l.b16 %v587
        %v1615 = vunpack.c.h.b16 %v587
        %v1616 = vunpack.c.l.b16 %v588
        %v1617 = vunpack.c.h.b16 %v588
        %v1618 = vunpack.c.l.b16 %v589
        %v1619 = vunpack.c.h.b16 %v589
        %v1620 = vunpack.c.l.b16 %v590
        %v1621 = vunpack.c.h.b16 %v590
        %v1622 = vunpack.c.l.b16 %v591
        %v1623 = vunpack.c.h.b16 %v591
        %v1624 = vunpack.c.l.b16 %v592
        %v1625 = vunpack.c.h.b16 %v592
        %v1626 = vunpack.c.l.b16 %v593
        %v1627 = vunpack.c.h.b16 %v593
        %v1628 = vunpack.c.l.b16 %v594
        %v1629 = vunpack.c.h.b16 %v594
        %v1630 = vunpack.c.l.b16 %v595
        %v1631 = vunpack.c.h.b16 %v595
        %v1632 = vunpack.c.l.b16 %v596
        %v1633 = vunpack.c.h.b16 %v596
        %v1634 = vunpack.c.l.b16 %v597
        %v1635 = vunpack.c.h.b16 %v597
        %v1636 = vunpack.c.l.b16 %v598
        %v1637 = vunpack.c.h.b16 %v598
        %v1638 = vunpack.c.l.b16 %v599
        %v1639 = vunpack.c.h.b16 %v599
        %v1640 = vunpack.c.l.b16 %v600
        %v1641 = vunpack.c.h.b16 %v600
        %v1642 = vunpack.c.l.b16 %v601
        %v1643 = vunpack.c.h.b16 %v601
        %v1644 = vunpack.c.l.b16 %v602
        %v1645 = vunpack.c.h.b16 %v602
        %v1646 = vunpack.c.l.b16 %v603
        %v1647 = vunpack.c.h.b16 %v603
        %v1648 = vunpack.c.l.b16 %v604
        %v1649 = vunpack.c.h.b16 %v604
        %v1650 = vunpack.c.l.b16 %v605
        %v1651 = vunpack.c.h.b16 %v605
        %v1652 = vunpack.c.l.b16 %v606
        %v1653 = vunpack.c.h.b16 %v606
        %v1654 = vunpack.c.l.b16 %v607
        %v1655 = vunpack.c.h.b16 %v607
        %v1656 = vunpack.c.l.b16 %v608
        %v1657 = vunpack.c.h.b16 %v608
        %v1658 = vunpack.c.l.b16 %v609
        %v1659 = vunpack.c.h.b16 %v609
        %v1660 = vunpack.c.l.b16 %v610
        %v1661 = vunpack.c.h.b16 %v610
        %v1662 = vunpack.c.l.b16 %v611
        %v1663 = vunpack.c.h.b16 %v611
        %v1664 = vunpack.c.l.b16 %v612
        %v1665 = vunpack.c.h.b16 %v612
        %v1666 = vunpack.c.l.b16 %v613
        %v1667 = vunpack.c.h.b16 %v613
        %v1668 = vunpack.c.l.b16 %v614
        %v1669 = vunpack.c.h.b16 %v614
        %v1670 = vunpack.c.l.b16 %v615
        %v1671 = vunpack.c.h.b16 %v615
        %v1672 = vunpack.c.l.b16 %v616
        %v1673 = vunpack.c.h.b16 %v616
        %v1674 = vunpack.c.l.b16 %v617
        %v1675 = vunpack.c.h.b16 %v617
        %v1676 = vunpack.c.l.b16 %v618
        %v1677 = vunpack.c.h.b16 %v618
        %v1678 = vunpack.c.l.b16 %v619
        %v1679 = vunpack.c.h.b16 %v619
        %v1680 = vunpack.c.l.b16 %v620
        %v1681 = vunpack.c.h.b16 %v620
        %v1682 = vunpack.c.l.b16 %v621
        %v1683 = vunpack.c.h.b16 %v621
        %v1684 = vunpack.c.l.b16 %v622
        %v1685 = vunpack.c.h.b16 %v622
        %v1686 = vunpack.c.l.b16 %v623
        %v1687 = vunpack.c.h.b16 %v623
        %v1688 = vunpack.c.l.b16 %v624
        %v1689 = vunpack.c.h.b16 %v624
        %v1690 = vunpack.c.l.b16 %v625
        %v1691 = vunpack.c.h.b16 %v625
        %v1692 = vunpack.c.l.b16 %v626
        %v1693 = vunpack.c.h.b16 %v626
        %v1694 = vunpack.c.l.b16 %v627
        %v1695 = vunpack.c.h.b16 %v627
        %v1696 = vunpack.c.l.b16 %v628
        %v1697 = vunpack.c.h.b16 %v628
        %v1698 = vunpack.c.l.b16 %v629
        %v1699 = vunpack.c.h.b16 %v629
        %v1700 = vunpack.c.l.b16 %v630
        %v1701 = vunpack.c.h.b16 %v630
        %v1702 = vunpack.c.l.b16 %v631
        %v1703 = vunpack.c.h.b16 %v631
        %v1704 = vunpack.c.l.b16 %v632
        %v1705 = vunpack.c.h.b16 %v632
        %v1706 = vunpack.c.l.b16 %v633
        %v1707 = vunpack.c.h.b16 %v633
        %v1708 = vunpack.c.l.b16 %v634
        %v1709 = vunpack.c.h.b16 %v634
        %v1710 = vunpack.c.l.b16 %v635
        %v1711 = vunpack.c.h.b16 %v635
        %v1712 = vunpack.c.l.b16 %v636
        %v1713 = vunpack.c.h.b16 %v636
        %v1714 = vunpack.c.l.b16 %v637
        %v1715 = vunpack.c.h.b16 %v637
        %v1716 = vunpack.c.l.b16 %v638
        %v1717 = vunpack.c.h.b16 %v638
        %v1718 = vunpack.c.l.b16 %v639
        %v1719 = vunpack.c.h.b16 %v639
        %v1720 = vunpack.c.l.b16 %v640
        %v1721 = vunpack.c.h.b16 %v640
        %v1722 = vunpack.c.l.b16 %v641
        %v1723 = vunpack.c.h.b16 %v641
        %v1724 = vunpack.c.l.b16 %v642
        %v1725 = vunpack.c.h.b16 %v642
        %v1726 = vunpack.c.l.b16 %v643
        %v1727 = vunpack.c.h.b16 %v643
        %v1728 = vunpack.c.l.b16 %v644
        %v1729 = vunpack.c.h.b16 %v644
        %v1730 = vunpack.c.l.b16 %v645
        %v1731 = vunpack.c.h.b16 %v645
        %v1732 = vunpack.c.l.b16 %v646
        %v1733 = vunpack.c.h.b16 %v646
        %v1734 = vunpack.c.l.b16 %v647
        %v1735 = vunpack.c.h.b16 %v647
        %v1736 = vunpack.c.l.b16 %v648
        %v1737 = vunpack.c.h.b16 %v648
        %v1738 = vunpack.c.l.b16 %v649
        %v1739 = vunpack.c.h.b16 %v649
        %v1740 = vunpack.c.l.b16 %v650
        %v1741 = vunpack.c.h.b16 %v650
        %v1742 = vunpack.c.l.b16 %v651
        %v1743 = vunpack.c.h.b16 %v651
        %v1744 = vunpack.c.l.b16 %v652
        %v1745 = vunpack.c.h.b16 %v652
        %v1746 = vunpack.c.l.b16 %v653
        %v1747 = vunpack.c.h.b16 %v653
        %v1748 = vunpack.c.l.b16 %v654
        %v1749 = vunpack.c.h.b16 %v654
        %v1750 = vunpack.c.l.b16 %v655
        %v1751 = vunpack.c.h.b16 %v655
        %v1752 = vunpack.c.l.b16 %v656
        %v1753 = vunpack.c.h.b16 %v656
        %v1754 = vunpack.c.l.b16 %v657
        %v1755 = vunpack.c.h.b16 %v657
        %v1756 = vunpack.c.l.b16 %v658
        %v1757 = vunpack.c.h.b16 %v658
        %v1758 = vunpack.c.l.b16 %v659
        %v1759 = vunpack.c.h.b16 %v659
        %v1760 = vunpack.c.l.b16 %v660
        %v1761 = vunpack.c.h.b16 %v660
        %v1762 = vunpack.c.l.b16 %v661
        %v1763 = vunpack.c.h.b16 %v661
        %v1764 = vunpack.c.l.b16 %v662
        %v1765 = vunpack.c.h.b16 %v662
        %v1766 = vunpack.c.l.b16 %v663
        %v1767 = vunpack.c.h.b16 %v663
        %v1768 = vunpack.c.l.b16 %v664
        %v1769 = vunpack.c.h.b16 %v664
        %v1770 = vunpack.c.l.b16 %v665
        %v1771 = vunpack.c.h.b16 %v665
        %v1772 = vunpack.c.l.b16 %v666
        %v1773 = vunpack.c.h.b16 %v666
        %v1774 = vunpack.c.l.b16 %v667
        %v1775 = vunpack.c.h.b16 %v667
        %v1776 = vunpack.c.l.b16 %v668
        %v1777 = vunpack.c.h.b16 %v668
        %v1778 = vunpack.c.l.b16 %v669
        %v1779 = vunpack.c.h.b16 %v669
        %v1780 = vunpack.c.l.b16 %v670
        %v1781 = vunpack.c.h.b16 %v670
        %v1782 = vunpack.c.l.b16 %v671
        %v1783 = vunpack.c.h.b16 %v671
        %v1784 = vunpack.c.l.b16 %v672
        %v1785 = vunpack.c.h.b16 %v672
        %v1786 = vunpack.c.l.b16 %v673
        %v1787 = vunpack.c.h.b16 %v673
        %v1788 = vunpack.c.l.b16 %v674
        %v1789 = vunpack.c.h.b16 %v674
        %v1790 = vunpack.c.l.b16 %v675
        %v1791 = vunpack.c.h.b16 %v675
        %v1792 = vunpack.c.l.b16 %v676
        %v1793 = vunpack.c.h.b16 %v676
        %v1794 = vunpack.c.l.b16 %v677
        %v1795 = vunpack.c.h.b16 %v677
        %v1796 = vunpack.c.l.b16 %v678
        %v1797 = vunpack.c.h.b16 %v678
        %v1798 = vunpack.c.l.b16 %v679
        %v1799 = vunpack.c.h.b16 %v679
        %v1800 = vunpack.c.l.b16 %v680
        %v1801 = vunpack.c.h.b16 %v680
        %v1802 = vunpack.c.l.b16 %v681
        %v1803 = vunpack.c.h.b16 %v681
        %v1804 = vunpack.c.l.b16 %v682
        %v1805 = vunpack.c.h.b16 %v682
        %v1806 = vunpack.c.l.b16 %v683
        %v1807 = vunpack.c.h.b16 %v683
        %v1808 = vunpack.c.l.b16 %v684
        %v1809 = vunpack.c.h.b16 %v684
        %v1810 = vunpack.c.l.b16 %v685
        %v1811 = vunpack.c.h.b16 %v685
        %v1812 = vunpack.c.l.b16 %v686
        %v1813 = vunpack.c.h.b16 %v686
        %v1814 = vunpack.c.l.b16 %v687
        %v1815 = vunpack.c.h.b16 %v687
        %v1816 = vunpack.c.l.b16 %v688
        %v1817 = vunpack.c.h.b16 %v688
        %v1818 = vunpack.c.l.b16 %v689
        %v1819 = vunpack.c.h.b16 %v689
        %v1820 = vunpack.c.l.b16 %v690
        %v1821 = vunpack.c.h.b16 %v690
        %v1822 = vunpack.c.l.b16 %v691
        %v1823 = vunpack.c.h.b16 %v691
        %v1824 = vunpack.c.l.b16 %v692
        %v1825 = vunpack.c.h.b16 %v692
        %v1826 = vunpack.c.l.b16 %v693
        %v1827 = vunpack.c.h.b16 %v693
        %v1828 = vunpack.c.l.b16 %v694
        %v1829 = vunpack.c.h.b16 %v694
        %v1830 = vunpack.c.l.b16 %v695
        %v1831 = vunpack.c.h.b16 %v695
        %v1832 = vunpack.c.l.b16 %v696
        %v1833 = vunpack.c.h.b16 %v696
        %v1834 = vunpack.c.l.b16 %v697
        %v1835 = vunpack.c.h.b16 %v697
        %v1836 = vunpack.c.l.b16 %v698
        %v1837 = vunpack.c.h.b16 %v698
        %v1838 = vunpack.c.l.b16 %v699
        %v1839 = vunpack.c.h.b16 %v699
        %v1840 = vunpack.c.l.b16 %v700
        %v1841 = vunpack.c.h.b16 %v700
        %v1842 = vunpack.c.l.b16 %v701
        %v1843 = vunpack.c.h.b16 %v701
        %v1844 = vunpack.c.l.b16 %v702
        %v1845 = vunpack.c.h.b16 %v702
        %v1846 = vunpack.c.l.b16 %v703
        %v1847 = vunpack.c.h.b16 %v703
        %v1848 = vunpack.c.l.b16 %v704
        %v1849 = vunpack.c.h.b16 %v704
        %v1850 = vunpack.c.l.b16 %v705
        %v1851 = vunpack.c.h.b16 %v705
        %v1852 = vunpack.c.l.b16 %v706
        %v1853 = vunpack.c.h.b16 %v706
        %v1854 = vunpack.c.l.b16 %v707
        %v1855 = vunpack.c.h.b16 %v707
        %v1856 = vunpack.c.l.b16 %v708
        %v1857 = vunpack.c.h.b16 %v708
        %v1858 = vunpack.c.l.b16 %v709
        %v1859 = vunpack.c.h.b16 %v709
        %v1860 = vunpack.c.l.b16 %v710
        %v1861 = vunpack.c.h.b16 %v710
        %v1862 = vunpack.c.l.b16 %v711
        %v1863 = vunpack.c.h.b16 %v711
        %v1864 = vunpack.c.l.b16 %v712
        %v1865 = vunpack.c.h.b16 %v712
        %v1866 = vunpack.c.l.b16 %v713
        %v1867 = vunpack.c.h.b16 %v713
        %v1868 = vunpack.c.l.b16 %v714
        %v1869 = vunpack.c.h.b16 %v714
        %v1870 = vunpack.c.l.b16 %v715
        %v1871 = vunpack.c.h.b16 %v715
        %v1872 = vunpack.c.l.b16 %v716
        %v1873 = vunpack.c.h.b16 %v716
        %v1874 = vunpack.c.l.b16 %v717
        %v1875 = vunpack.c.h.b16 %v717
        %v1876 = vunpack.c.l.b16 %v718
        %v1877 = vunpack.c.h.b16 %v718
        %v1878 = vunpack.c.l.b16 %v719
        %v1879 = vunpack.c.h.b16 %v719
        %v1880 = vunpack.c.l.b16 %v720
        %v1881 = vunpack.c.h.b16 %v720
        %v1882 = vunpack.c.l.b16 %v721
        %v1883 = vunpack.c.h.b16 %v721
        %v1884 = vunpack.c.l.b16 %v722
        %v1885 = vunpack.c.h.b16 %v722
        %v1886 = vunpack.c.l.b16 %v723
        %v1887 = vunpack.c.h.b16 %v723
        %v1888 = vunpack.c.l.b16 %v724
        %v1889 = vunpack.c.h.b16 %v724
        %v1890 = vunpack.c.l.b16 %v725
        %v1891 = vunpack.c.h.b16 %v725
        %v1892 = vunpack.c.l.b16 %v726
        %v1893 = vunpack.c.h.b16 %v726
        %v1894 = vunpack.c.l.b16 %v727
        %v1895 = vunpack.c.h.b16 %v727
        %v1896 = vunpack.c.l.b16 %v728
        %v1897 = vunpack.c.h.b16 %v728
        %v1898 = vunpack.c.l.b16 %v729
        %v1899 = vunpack.c.h.b16 %v729
        %v1900 = vunpack.c.l.b16 %v730
        %v1901 = vunpack.c.h.b16 %v730
        %v1902 = vunpack.c.l.b16 %v731
        %v1903 = vunpack.c.h.b16 %v731
        %v1904 = vunpack.c.l.b16 %v732
        %v1905 = vunpack.c.h.b16 %v732
        %v1906 = vunpack.c.l.b16 %v733
        %v1907 = vunpack.c.h.b16 %v733
        %v1908 = vunpack.c.l.b16 %v734
        %v1909 = vunpack.c.h.b16 %v734
        %v1910 = vunpack.c.l.b16 %v735
        %v1911 = vunpack.c.h.b16 %v735
        %v1912 = vunpack.c.l.b16 %v736
        %v1913 = vunpack.c.h.b16 %v736
        %v1914 = vunpack.c.l.b16 %v737
        %v1915 = vunpack.c.h.b16 %v737
        %v1916 = vunpack.c.l.b16 %v738
        %v1917 = vunpack.c.h.b16 %v738
        %v1918 = vunpack.c.l.b16 %v739
        %v1919 = vunpack.c.h.b16 %v739
        %v1920 = vunpack.c.l.b16 %v740
        %v1921 = vunpack.c.h.b16 %v740
        %v1922 = vunpack.c.l.b16 %v741
        %v1923 = vunpack.c.h.b16 %v741
        %v1924 = vunpack.c.l.b16 %v742
        %v1925 = vunpack.c.h.b16 %v742
        %v1926 = vunpack.c.l.b16 %v743
        %v1927 = vunpack.c.h.b16 %v743
        %v1928 = vunpack.c.l.b16 %v744
        %v1929 = vunpack.c.h.b16 %v744
        %v1930 = vunpack.c.l.b16 %v745
        %v1931 = vunpack.c.h.b16 %v745
        %v1932 = vunpack.c.l.b16 %v746
        %v1933 = vunpack.c.h.b16 %v746
        %v1934 = vunpack.c.l.b16 %v747
        %v1935 = vunpack.c.h.b16 %v747
        %v1936 = vunpack.c.l.b16 %v748
        %v1937 = vunpack.c.h.b16 %v748
        %v1938 = vunpack.c.l.b16 %v749
        %v1939 = vunpack.c.h.b16 %v749
        %v1940 = vunpack.c.l.b16 %v750
        %v1941 = vunpack.c.h.b16 %v750
        %v1942 = vunpack.c.l.b16 %v751
        %v1943 = vunpack.c.h.b16 %v751
        %v1944 = vunpack.c.l.b16 %v752
        %v1945 = vunpack.c.h.b16 %v752
        %v1946 = vunpack.c.l.b16 %v753
        %v1947 = vunpack.c.h.b16 %v753
        %v1948 = vunpack.c.l.b16 %v754
        %v1949 = vunpack.c.h.b16 %v754
        %v1950 = vunpack.c.l.b16 %v755
        %v1951 = vunpack.c.h.b16 %v755
        %v1952 = vunpack.c.l.b16 %v756
        %v1953 = vunpack.c.h.b16 %v756
        %v1954 = vunpack.c.l.b16 %v757
        %v1955 = vunpack.c.h.b16 %v757
        %v1956 = vunpack.c.l.b16 %v758
        %v1957 = vunpack.c.h.b16 %v758
        %v1958 = vunpack.c.l.b16 %v759
        %v1959 = vunpack.c.h.b16 %v759
        %v1960 = vunpack.c.l.b16 %v760
        %v1961 = vunpack.c.h.b16 %v760
        %v1962 = vunpack.c.l.b16 %v761
        %v1963 = vunpack.c.h.b16 %v761
        %v1964 = vunpack.c.l.b16 %v762
        %v1965 = vunpack.c.h.b16 %v762
        %v1966 = vunpack.c.l.b16 %v763
        %v1967 = vunpack.c.h.b16 %v763
        %v1968 = vunpack.c.l.b16 %v764
        %v1969 = vunpack.c.h.b16 %v764
        %v1970 = vunpack.c.l.b16 %v765
        %v1971 = vunpack.c.h.b16 %v765
        %v1972 = vunpack.c.l.b16 %v766
        %v1973 = vunpack.c.h.b16 %v766
        %v1974 = vunpack.c.l.b16 %v767
        %v1975 = vunpack.c.h.b16 %v767
        %v1976 = vunpack.c.l.b16 %v768
        %v1977 = vunpack.c.h.b16 %v768
        %v1978 = vunpack.c.l.b16 %v769
        %v1979 = vunpack.c.h.b16 %v769
        %v1980 = vunpack.c.l.b16 %v770
        %v1981 = vunpack.c.h.b16 %v770
        %v1982 = vunpack.c.l.b16 %v771
        %v1983 = vunpack.c.h.b16 %v771
        %v1984 = vunpack.c.l.b16 %v772
        %v1985 = vunpack.c.h.b16 %v772
        %v1986 = vunpack.c.l.b16 %v773
        %v1987 = vunpack.c.h.b16 %v773
        %v1988 = vunpack.c.l.b16 %v774
        %v1989 = vunpack.c.h.b16 %v774
        %v1990 = vunpack.c.l.b16 %v775
        %v1991 = vunpack.c.h.b16 %v775
        %v1992 = vunpack.c.l.b16 %v776
        %v1993 = vunpack.c.h.b16 %v776
        %v1994 = vunpack.c.l.b16 %v777
        %v1995 = vunpack.c.h.b16 %v777
        %v1996 = vunpack.c.l.b16 %v778
        %v1997 = vunpack.c.h.b16 %v778
        %v1998 = vunpack.c.l.b16 %v779
        %v1999 = vunpack.c.h.b16 %v779
        %v2000 = vunpack.c.l.b16 %v780
        %v2001 = vunpack.c.h.b16 %v780
        %v2002 = vunpack.c.l.b16 %v781
        %v2003 = vunpack.c.h.b16 %v781
        %v2004 = vunpack.c.l.b16 %v782
        %v2005 = vunpack.c.h.b16 %v782
        %v2006 = vunpack.c.l.b16 %v783
        %v2007 = vunpack.c.h.b16 %v783
        %v2008 = vunpack.c.l.b16 %v784
        %v2009 = vunpack.c.h.b16 %v784
        %v2010 = vunpack.c.l.b16 %v785
        %v2011 = vunpack.c.h.b16 %v785
        %v2012 = vunpack.c.l.b16 %v786
        %v2013 = vunpack.c.h.b16 %v786
        %v2014 = vunpack.c.l.b16 %v787
        %v2015 = vunpack.c.h.b16 %v787
        %v2016 = vunpack.c.l.b16 %v788
        %v2017 = vunpack.c.h.b16 %v788
        %v2018 = vunpack.c.l.b16 %v789
        %v2019 = vunpack.c.h.b16 %v789
        %v2020 = vunpack.c.l.b16 %v790
        %v2021 = vunpack.c.h.b16 %v790
        %v2022 = vunpack.c.l.b16 %v791
        %v2023 = vunpack.c.h.b16 %v791
        %v2024 = vunpack.c.l.b16 %v792
        %v2025 = vunpack.c.h.b16 %v792
        %v2026 = vunpack.c.l.b16 %v793
        %v2027 = vunpack.c.h.b16 %v793
        %v2028 = vunpack.c.l.b16 %v794
        %v2029 = vunpack.c.h.b16 %v794
        %v2030 = vunpack.c.l.b16 %v795
        %v2031 = vunpack.c.h.b16 %v795
        %v2032 = vunpack.c.l.b16 %v796
        %v2033 = vunpack.c.h.b16 %v796
        %v2034 = vunpack.c.l.b16 %v797
        %v2035 = vunpack.c.h.b16 %v797
        %v2036 = vunpack.c.l.b16 %v798
        %v2037 = vunpack.c.h.b16 %v798
        %v2038 = vunpack.c.l.b16 %v799
        %v2039 = vunpack.c.h.b16 %v799
        %v2040 = vunpack.c.l.b16 %v800
        %v2041 = vunpack.c.h.b16 %v800
        %v2042 = vunpack.c.l.b16 %v801
        %v2043 = vunpack.c.h.b16 %v801
        %v2044 = vunpack.c.l.b16 %v802
        %v2045 = vunpack.c.h.b16 %v802
        %v2046 = vunpack.c.l.b16 %v803
        %v2047 = vunpack.c.h.b16 %v803
        %v2048 = vunpack.c.l.b16 %v804
        %v2049 = vunpack.c.h.b16 %v804
        %v2050 = vunpack.c.l.b16 %v805
        %v2051 = vunpack.c.h.b16 %v805
        %v2052 = vunpack.c.l.b16 %v806
        %v2053 = vunpack.c.h.b16 %v806
        %v2054 = vunpack.c.l.b16 %v807
        %v2055 = vunpack.c.h.b16 %v807
        %v2056 = vpack.c.b16 %v1226, %v1224
        %v2057 = vpack.c.b16 %v1227, %v1225
        %v2058 = vpack.c.b16 %v1230, %v1228
        %v2059 = vpack.c.b16 %v1231, %v1229
        %v2060 = vpack.c.b16 %v1234, %v1232
        %v2061 = vpack.c.b16 %v1235, %v1233
        %v2062 = vpack.c.b16 %v1238, %v1236
        %v2063 = vpack.c.b16 %v1239, %v1237
        %v2064 = vpack.c.b16 %v1242, %v1240
        %v2065 = vpack.c.b16 %v1243, %v1241
        %v2066 = vpack.c.b16 %v1246, %v1244
        %v2067 = vpack.c.b16 %v1247, %v1245
        %v2068 = vpack.c.b16 %v1250, %v1248
        %v2069 = vpack.c.b16 %v1251, %v1249
        %v2070 = vpack.c.b16 %v1254, %v1252
        %v2071 = vpack.c.b16 %v1255, %v1253
        %v2072 = vpack.c.b16 %v1258, %v1256
        %v2073 = vpack.c.b16 %v1259, %v1257
        %v2074 = vpack.c.b16 %v1262, %v1260
        %v2075 = vpack.c.b16 %v1263, %v1261
        %v2076 = vpack.c.b16 %v1266, %v1264
        %v2077 = vpack.c.b16 %v1267, %v1265
        %v2078 = vpack.c.b16 %v1270, %v1268
        %v2079 = vpack.c.b16 %v1271, %v1269
        %v2080 = vpack.c.b16 %v1274, %v1272
        %v2081 = vpack.c.b16 %v1275, %v1273
        %v2082 = vpack.c.b16 %v1278, %v1276
        %v2083 = vpack.c.b16 %v1279, %v1277
        %v2084 = vpack.c.b16 %v1282, %v1280
        %v2085 = vpack.c.b16 %v1283, %v1281
        %v2086 = vpack.c.b16 %v1286, %v1284
        %v2087 = vpack.c.b16 %v1287, %v1285
        %v2088 = vpack.c.b16 %v1290, %v1288
        %v2089 = vpack.c.b16 %v1291, %v1289
        %v2090 = vpack.c.b16 %v1294, %v1292
        %v2091 = vpack.c.b16 %v1295, %v1293
        %v2092 = vpack.c.b16 %v1298, %v1296
        %v2093 = vpack.c.b16 %v1299, %v1297
        %v2094 = vpack.c.b16 %v1302, %v1300
        %v2095 = vpack.c.b16 %v1303, %v1301
        %v2096 = vpack.c.b16 %v1306, %v1304
        %v2097 = vpack.c.b16 %v1307, %v1305
        %v2098 = vpack.c.b16 %v1310, %v1308
        %v2099 = vpack.c.b16 %v1311, %v1309
        %v2100 = vpack.c.b16 %v1314, %v1312
        %v2101 = vpack.c.b16 %v1315, %v1313
        %v2102 = vpack.c.b16 %v1318, %v1316
        %v2103 = vpack.c.b16 %v1319, %v1317
        %v2104 = vpack.c.b16 %v1322, %v1320
        %v2105 = vpack.c.b16 %v1323, %v1321
        %v2106 = vpack.c.b16 %v1326, %v1324
        %v2107 = vpack.c.b16 %v1327, %v1325
        %v2108 = vpack.c.b16 %v1330, %v1328
        %v2109 = vpack.c.b16 %v1331, %v1329
        %v2110 = vpack.c.b16 %v1334, %v1332
        %v2111 = vpack.c.b16 %v1335, %v1333
        %v2112 = vpack.c.b16 %v1338, %v1336
        %v2113 = vpack.c.b16 %v1339, %v1337
        %v2114 = vpack.c.b16 %v1342, %v1340
        %v2115 = vpack.c.b16 %v1343, %v1341
        %v2116 = vpack.c.b16 %v1346, %v1344
        %v2117 = vpack.c.b16 %v1347, %v1345
        %v2118 = vpack.c.b16 %v1350, %v1348
        %v2119 = vpack.c.b16 %v1351, %v1349
        %v2120 = vpack.c.b16 %v1354, %v1352
        %v2121 = vpack.c.b16 %v1355, %v1353
        %v2122 = vpack.c.b16 %v1358, %v1356
        %v2123 = vpack.c.b16 %v1359, %v1357
        %v2124 = vpack.c.b16 %v1362, %v1360
        %v2125 = vpack.c.b16 %v1363, %v1361
        %v2126 = vpack.c.b16 %v1366, %v1364
        %v2127 = vpack.c.b16 %v1367, %v1365
        %v2128 = vpack.c.b16 %v1370, %v1368
        %v2129 = vpack.c.b16 %v1371, %v1369
        %v2130 = vpack.c.b16 %v1374, %v1372
        %v2131 = vpack.c.b16 %v1375, %v1373
        %v2132 = vpack.c.b16 %v1378, %v1376
        %v2133 = vpack.c.b16 %v1379, %v1377
        %v2134 = vpack.c.b16 %v1382, %v1380
        %v2135 = vpack.c.b16 %v1383, %v1381
        %v2136 = vpack.c.b16 %v1386, %v1384
        %v2137 = vpack.c.b16 %v1387, %v1385
        %v2138 = vpack.c.b16 %v1390, %v1388
        %v2139 = vpack.c.b16 %v1391, %v1389
        %v2140 = vpack.c.b16 %v1394, %v1392
        %v2141 = vpack.c.b16 %v1395, %v1393
        %v2142 = vpack.c.b16 %v1398, %v1396
        %v2143 = vpack.c.b16 %v1399, %v1397
        %v2144 = vpack.c.b16 %v1402, %v1400
        %v2145 = vpack.c.b16 %v1403, %v1401
        %v2146 = vpack.c.b16 %v1406, %v1404
        %v2147 = vpack.c.b16 %v1407, %v1405
        %v2148 = vpack.c.b16 %v1410, %v1408
        %v2149 = vpack.c.b16 %v1411, %v1409
        %v2150 = vpack.c.b16 %v1414, %v1412
        %v2151 = vpack.c.b16 %v1415, %v1413
        %v2152 = vpack.c.b16 %v1418, %v1416
        %v2153 = vpack.c.b16 %v1419, %v1417
        %v2154 = vpack.c.b16 %v1422, %v1420
        %v2155 = vpack.c.b16 %v1423, %v1421
        %v2156 = vpack.c.b16 %v1426, %v1424
        %v2157 = vpack.c.b16 %v1427, %v1425
        %v2158 = vpack.c.b16 %v1430, %v1428
        %v2159 = vpack.c.b16 %v1431, %v1429
        %v2160 = vpack.c.b16 %v1434, %v1432
        %v2161 = vpack.c.b16 %v1435, %v1433
        %v2162 = vpack.c.b16 %v1438, %v1436
        %v2163 = vpack.c.b16 %v1439, %v1437
        %v2164 = vpack.c.b16 %v1442, %v1440
        %v2165 = vpack.c.b16 %v1443, %v1441
        %v2166 = vpack.c.b16 %v1446, %v1444
        %v2167 = vpack.c.b16 %v1447, %v1445
        %v2168 = vpack.c.b16 %v1450, %v1448
        %v2169 = vpack.c.b16 %v1451, %v1449
        %v2170 = vpack.c.b16 %v1454, %v1452
        %v2171 = vpack.c.b16 %v1455, %v1453
        %v2172 = vpack.c.b16 %v1458, %v1456
        %v2173 = vpack.c.b16 %v1459, %v1457
        %v2174 = vpack.c.b16 %v1462, %v1460
        %v2175 = vpack.c.b16 %v1463, %v1461
        %v2176 = vpack.c.b16 %v1466, %v1464
        %v2177 = vpack.c.b16 %v1467, %v1465
        %v2178 = vpack.c.b16 %v1470, %v1468
        %v2179 = vpack.c.b16 %v1471, %v1469
        %v2180 = vpack.c.b16 %v1474, %v1472
        %v2181 = vpack.c.b16 %v1475, %v1473
        %v2182 = vpack.c.b16 %v1478, %v1476
        %v2183 = vpack.c.b16 %v1479, %v1477
        %v2184 = vpack.c.b16 %v1482, %v1480
        %v2185 = vpack.c.b16 %v1483, %v1481
        %v2186 = vpack.c.b16 %v1486, %v1484
        %v2187 = vpack.c.b16 %v1487, %v1485
        %v2188 = vpack.c.b16 %v1490, %v1488
        %v2189 = vpack.c.b16 %v1491, %v1489
        %v2190 = vpack.c.b16 %v1494, %v1492
        %v2191 = vpack.c.b16 %v1495, %v1493
        %v2192 = vpack.c.b16 %v1498, %v1496
        %v2193 = vpack.c.b16 %v1499, %v1497
        %v2194 = vpack.c.b16 %v1502, %v1500
        %v2195 = vpack.c.b16 %v1503, %v1501
        %v2196 = vpack.c.b16 %v1506, %v1504
        %v2197 = vpack.c.b16 %v1507, %v1505
        %v2198 = vpack.c.b16 %v1510, %v1508
        %v2199 = vpack.c.b16 %v1511, %v1509
        %v2200 = vpack.c.b16 %v1514, %v1512
        %v2201 = vpack.c.b16 %v1515, %v1513
        %v2202 = vpack.c.b16 %v1518, %v1516
        %v2203 = vpack.c.b16 %v1519, %v1517
        %v2204 = vpack.c.b16 %v1522, %v1520
        %v2205 = vpack.c.b16 %v1523, %v1521
        %v2206 = vpack.c.b16 %v1526, %v1524
        %v2207 = vpack.c.b16 %v1527, %v1525
        %v2208 = vpack.c.b16 %v1530, %v1528
        %v2209 = vpack.c.b16 %v1531, %v1529
        %v2210 = vpack.c.b16 %v1534, %v1532
        %v2211 = vpack.c.b16 %v1535, %v1533
        %v2212 = vpack.c.b16 %v1538, %v1536
        %v2213 = vpack.c.b16 %v1539, %v1537
        %v2214 = vpack.c.b16 %v1542, %v1540
        %v2215 = vpack.c.b16 %v1543, %v1541
        %v2216 = vpack.c.b16 %v1546, %v1544
        %v2217 = vpack.c.b16 %v1547, %v1545
        %v2218 = vpack.c.b16 %v1550, %v1548
        %v2219 = vpack.c.b16 %v1551, %v1549
        %v2220 = vpack.c.b16 %v1554, %v1552
        %v2221 = vpack.c.b16 %v1555, %v1553
        %v2222 = vpack.c.b16 %v1558, %v1556
        %v2223 = vpack.c.b16 %v1559, %v1557
        %v2224 = vpack.c.b16 %v1562, %v1560
        %v2225 = vpack.c.b16 %v1563, %v1561
        %v2226 = vpack.c.b16 %v1566, %v1564
        %v2227 = vpack.c.b16 %v1567, %v1565
        %v2228 = vpack.c.b16 %v1570, %v1568
        %v2229 = vpack.c.b16 %v1571, %v1569
        %v2230 = vpack.c.b16 %v1574, %v1572
        %v2231 = vpack.c.b16 %v1575, %v1573
        %v2232 = vpack.c.b16 %v1578, %v1576
        %v2233 = vpack.c.b16 %v1579, %v1577
        %v2234 = vpack.c.b16 %v1582, %v1580
        %v2235 = vpack.c.b16 %v1583, %v1581
        %v2236 = vpack.c.b16 %v1586, %v1584
        %v2237 = vpack.c.b16 %v1587, %v1585
        %v2238 = vpack.c.b16 %v1590, %v1588
        %v2239 = vpack.c.b16 %v1591, %v1589
        %v2240 = vpack.c.b16 %v1594, %v1592
        %v2241 = vpack.c.b16 %v1595, %v1593
        %v2242 = vpack.c.b16 %v1598, %v1596
        %v2243 = vpack.c.b16 %v1599, %v1597
        %v2244 = vpack.c.b16 %v1602, %v1600
        %v2245 = vpack.c.b16 %v1603, %v1601
        %v2246 = vpack.c.b16 %v1606, %v1604
        %v2247 = vpack.c.b16 %v1607, %v1605
        %v2248 = vpack.c.b16 %v1610, %v1608
        %v2249 = vpack.c.b16 %v1611, %v1609
        %v2250 = vpack.c.b16 %v1614, %v1612
        %v2251 = vpack.c.b16 %v1615, %v1613
        %v2252 = vpack.c.b16 %v1618, %v1616
        %v2253 = vpack.c.b16 %v1619, %v1617
        %v2254 = vpack.c.b16 %v1622, %v1620
        %v2255 = vpack.c.b16 %v1623, %v1621
        %v2256 = vpack.c.b16 %v1626, %v1624
        %v2257 = vpack.c.b16 %v1627, %v1625
        %v2258 = vpack.c.b16 %v1630, %v1628
        %v2259 = vpack.c.b16 %v1631, %v1629
        %v2260 = vpack.c.b16 %v1634, %v1632
        %v2261 = vpack.c.b16 %v1635, %v1633
        %v2262 = vpack.c.b16 %v1638, %v1636
        %v2263 = vpack.c.b16 %v1639, %v1637
        %v2264 = vpack.c.b16 %v1642, %v1640
        %v2265 = vpack.c.b16 %v1643, %v1641
        %v2266 = vpack.c.b16 %v1646, %v1644
        %v2267 = vpack.c.b16 %v1647, %v1645
        %v2268 = vpack.c.b16 %v1650, %v1648
        %v2269 = vpack.c.b16 %v1651, %v1649
        %v2270 = vpack.c.b16 %v1654, %v1652
        %v2271 = vpack.c.b16 %v1655, %v1653
        %v2272 = vpack.c.b16 %v1658, %v1656
        %v2273 = vpack.c.b16 %v1659, %v1657
        %v2274 = vpack.c.b16 %v1662, %v1660
        %v2275 = vpack.c.b16 %v1663, %v1661
        %v2276 = vpack.c.b16 %v1666, %v1664
        %v2277 = vpack.c.b16 %v1667, %v1665
        %v2278 = vpack.c.b16 %v1670, %v1668
        %v2279 = vpack.c.b16 %v1671, %v1669
        %v2280 = vpack.c.b16 %v1674, %v1672
        %v2281 = vpack.c.b16 %v1675, %v1673
        %v2282 = vpack.c.b16 %v1678, %v1676
        %v2283 = vpack.c.b16 %v1679, %v1677
        %v2284 = vpack.c.b16 %v1682, %v1680
        %v2285 = vpack.c.b16 %v1683, %v1681
        %v2286 = vpack.c.b16 %v1686, %v1684
        %v2287 = vpack.c.b16 %v1687, %v1685
        %v2288 = vpack.c.b16 %v1690, %v1688
        %v2289 = vpack.c.b16 %v1691, %v1689
        %v2290 = vpack.c.b16 %v1694, %v1692
        %v2291 = vpack.c.b16 %v1695, %v1693
        %v2292 = vpack.c.b16 %v1698, %v1696
        %v2293 = vpack.c.b16 %v1699, %v1697
        %v2294 = vpack.c.b16 %v1702, %v1700
        %v2295 = vpack.c.b16 %v1703, %v1701
        %v2296 = vpack.c.b16 %v1706, %v1704
        %v2297 = vpack.c.b16 %v1707, %v1705
        %v2298 = vpack.c.b16 %v1710, %v1708
        %v2299 = vpack.c.b16 %v1711, %v1709
        %v2300 = vpack.c.b16 %v1714, %v1712
        %v2301 = vpack.c.b16 %v1715, %v1713
        %v2302 = vpack.c.b16 %v1718, %v1716
        %v2303 = vpack.c.b16 %v1719, %v1717
        %v2304 = vpack.c.b16 %v1722, %v1720
        %v2305 = vpack.c.b16 %v1723, %v1721
        %v2306 = vpack.c.b16 %v1726, %v1724
        %v2307 = vpack.c.b16 %v1727, %v1725
        %v2308 = vpack.c.b16 %v1730, %v1728
        %v2309 = vpack.c.b16 %v1731, %v1729
        %v2310 = vpack.c.b16 %v1734, %v1732
        %v2311 = vpack.c.b16 %v1735, %v1733
        %v2312 = vpack.c.b16 %v1738, %v1736
        %v2313 = vpack.c.b16 %v1739, %v1737
        %v2314 = vpack.c.b16 %v1742, %v1740
        %v2315 = vpack.c.b16 %v1743, %v1741
        %v2316 = vpack.c.b16 %v1746, %v1744
        %v2317 = vpack.c.b16 %v1747, %v1745
        %v2318 = vpack.c.b16 %v1750, %v1748
        %v2319 = vpack.c.b16 %v1751, %v1749
        %v2320 = vpack.c.b16 %v1754, %v1752
        %v2321 = vpack.c.b16 %v1755, %v1753
        %v2322 = vpack.c.b16 %v1758, %v1756
        %v2323 = vpack.c.b16 %v1759, %v1757
        %v2324 = vpack.c.b16 %v1762, %v1760
        %v2325 = vpack.c.b16 %v1763, %v1761
        %v2326 = vpack.c.b16 %v1766, %v1764
        %v2327 = vpack.c.b16 %v1767, %v1765
        %v2328 = vpack.c.b16 %v1770, %v1768
        %v2329 = vpack.c.b16 %v1771, %v1769
        %v2330 = vpack.c.b16 %v1774, %v1772
        %v2331 = vpack.c.b16 %v1775, %v1773
        %v2332 = vpack.c.b16 %v1778, %v1776
        %v2333 = vpack.c.b16 %v1779, %v1777
        %v2334 = vpack.c.b16 %v1782, %v1780
        %v2335 = vpack.c.b16 %v1783, %v1781
        %v2336 = vpack.c.b16 %v1786, %v1784
        %v2337 = vpack.c.b16 %v1787, %v1785
        %v2338 = vpack.c.b16 %v1790, %v1788
        %v2339 = vpack.c.b16 %v1791, %v1789
        %v2340 = vpack.c.b16 %v1794, %v1792
        %v2341 = vpack.c.b16 %v1795, %v1793
        %v2342 = vpack.c.b16 %v1798, %v1796
        %v2343 = vpack.c.b16 %v1799, %v1797
        %v2344 = vpack.c.b16 %v1802, %v1800
        %v2345 = vpack.c.b16 %v1803, %v1801
        %v2346 = vpack.c.b16 %v1806, %v1804
        %v2347 = vpack.c.b16 %v1807, %v1805
        %v2348 = vpack.c.b16 %v1810, %v1808
        %v2349 = vpack.c.b16 %v1811, %v1809
        %v2350 = vpack.c.b16 %v1814, %v1812
        %v2351 = vpack.c.b16 %v1815, %v1813
        %v2352 = vpack.c.b16 %v1818, %v1816
        %v2353 = vpack.c.b16 %v1819, %v1817
        %v2354 = vpack.c.b16 %v1822, %v1820
        %v2355 = vpack.c.b16 %v1823, %v1821
        %v2356 = vpack.c.b16 %v1826, %v1824
        %v2357 = vpack.c.b16 %v1827, %v1825
        %v2358 = vpack.c.b16 %v1830, %v1828
        %v2359 = vpack.c.b16 %v1831, %v1829
        %v2360 = vpack.c.b16 %v1834, %v1832
        %v2361 = vpack.c.b16 %v1835, %v1833
        %v2362 = vpack.c.b16 %v1838, %v1836
        %v2363 = vpack.c.b16 %v1839, %v1837
        %v2364 = vpack.c.b16 %v1842, %v1840
        %v2365 = vpack.c.b16 %v1843, %v1841
        %v2366 = vpack.c.b16 %v1846, %v1844
        %v2367 = vpack.c.b16 %v1847, %v1845
        %v2368 = vpack.c.b16 %v1850, %v1848
        %v2369 = vpack.c.b16 %v1851, %v1849
        %v2370 = vpack.c.b16 %v1854, %v1852
        %v2371 = vpack.c.b16 %v1855, %v1853
        %v2372 = vpack.c.b16 %v1858, %v1856
        %v2373 = vpack.c.b16 %v1859, %v1857
        %v2374 = vpack.c.b16 %v1862, %v1860
        %v2375 = vpack.c.b16 %v1863, %v1861
        %v2376 = vpack.c.b16 %v1866, %v1864
        %v2377 = vpack.c.b16 %v1867, %v1865
        %v2378 = vpack.c.b16 %v1870, %v1868
        %v2379 = vpack.c.b16 %v1871, %v1869
        %v2380 = vpack.c.b16 %v1874, %v1872
        %v2381 = vpack.c.b16 %v1875, %v1873
        %v2382 = vpack.c.b16 %v1878, %v1876
        %v2383 = vpack.c.b16 %v1879, %v1877
        %v2384 = vpack.c.b16 %v1882, %v1880
        %v2385 = vpack.c.b16 %v1883, %v1881
        %v2386 = vpack.c.b16 %v1886, %v1884
        %v2387 = vpack.c.b16 %v1887, %v1885
        %v2388 = vpack.c.b16 %v1890, %v1888
        %v2389 = vpack.c.b16 %v1891, %v1889
        %v2390 = vpack.c.b16 %v1894, %v1892
        %v2391 = vpack.c.b16 %v1895, %v1893
        %v2392 = vpack.c.b16 %v1898, %v1896
        %v2393 = vpack.c.b16 %v1899, %v1897
        %v2394 = vpack.c.b16 %v1902, %v1900
        %v2395 = vpack.c.b16 %v1903, %v1901
        %v2396 = vpack.c.b16 %v1906, %v1904
        %v2397 = vpack.c.b16 %v1907, %v1905
        %v2398 = vpack.c.b16 %v1910, %v1908
        %v2399 = vpack.c.b16 %v1911, %v1909
        %v2400 = vpack.c.b16 %v1914, %v1912
        %v2401 = vpack.c.b16 %v1915, %v1913
        %v2402 = vpack.c.b16 %v1918, %v1916
        %v2403 = vpack.c.b16 %v1919, %v1917
        %v2404 = vpack.c.b16 %v1922, %v1920
        %v2405 = vpack.c.b16 %v1923, %v1921
        %v2406 = vpack.c.b16 %v1926, %v1924
        %v2407 = vpack.c.b16 %v1927, %v1925
        %v2408 = vpack.c.b16 %v1930, %v1928
        %v2409 = vpack.c.b16 %v1931, %v1929
        %v2410 = vpack.c.b16 %v1934, %v1932
        %v2411 = vpack.c.b16 %v1935, %v1933
        %v2412 = vpack.c.b16 %v1938, %v1936
        %v2413 = vpack.c.b16 %v1939, %v1937
        %v2414 = vpack.c.b16 %v1942, %v1940
        %v2415 = vpack.c.b16 %v1943, %v1941
        %v2416 = vpack.c.b16 %v1946, %v1944
        %v2417 = vpack.c.b16 %v1947, %v1945
        %v2418 = vpack.c.b16 %v1950, %v1948
        %v2419 = vpack.c.b16 %v1951, %v1949
        %v2420 = vpack.c.b16 %v1954, %v1952
        %v2421 = vpack.c.b16 %v1955, %v1953
        %v2422 = vpack.c.b16 %v1958, %v1956
        %v2423 = vpack.c.b16 %v1959, %v1957
        %v2424 = vpack.c.b16 %v1962, %v1960
        %v2425 = vpack.c.b16 %v1963, %v1961
        %v2426 = vpack.c.b16 %v1966, %v1964
        %v2427 = vpack.c.b16 %v1967, %v1965
        %v2428 = vpack.c.b16 %v1970, %v1968
        %v2429 = vpack.c.b16 %v1971, %v1969
        %v2430 = vpack.c.b16 %v1974, %v1972
        %v2431 = vpack.c.b16 %v1975, %v1973
        %v2432 = vpack.c.b16 %v1978, %v1976
        %v2433 = vpack.c.b16 %v1979, %v1977
        %v2434 = vpack.c.b16 %v1982, %v1980
        %v2435 = vpack.c.b16 %v1983, %v1981
        %v2436 = vpack.c.b16 %v1986, %v1984
        %v2437 = vpack.c.b16 %v1987, %v1985
        %v2438 = vpack.c.b16 %v1990, %v1988
        %v2439 = vpack.c.b16 %v1991, %v1989
        %v2440 = vpack.c.b16 %v1994, %v1992
        %v2441 = vpack.c.b16 %v1995, %v1993
        %v2442 = vpack.c.b16 %v1998, %v1996
        %v2443 = vpack.c.b16 %v1999, %v1997
        %v2444 = vpack.c.b16 %v2002, %v2000
        %v2445 = vpack.c.b16 %v2003, %v2001
        %v2446 = vpack.c.b16 %v2006, %v2004
        %v2447 = vpack.c.b16 %v2007, %v2005
        %v2448 = vpack.c.b16 %v2010, %v2008
        %v2449 = vpack.c.b16 %v2011, %v2009
        %v2450 = vpack.c.b16 %v2014, %v2012
        %v2451 = vpack.c.b16 %v2015, %v2013
        %v2452 = vpack.c.b16 %v2018, %v2016
        %v2453 = vpack.c.b16 %v2019, %v2017
        %v2454 = vpack.c.b16 %v2022, %v2020
        %v2455 = vpack.c.b16 %v2023, %v2021
        %v2456 = vpack.c.b16 %v2026, %v2024
        %v2457 = vpack.c.b16 %v2027, %v2025
        %v2458 = vpack.c.b16 %v2030, %v2028
        %v2459 = vpack.c.b16 %v2031, %v2029
        %v2460 = vpack.c.b16 %v2034, %v2032
        %v2461 = vpack.c.b16 %v2035, %v2033
        %v2462 = vpack.c.b16 %v2038, %v2036
        %v2463 = vpack.c.b16 %v2039, %v2037
        %v2464 = vpack.c.b16 %v2042, %v2040
        %v2465 = vpack.c.b16 %v2043, %v2041
        %v2466 = vpack.c.b16 %v2046, %v2044
        %v2467 = vpack.c.b16 %v2047, %v2045
        %v2468 = vpack.c.b16 %v2050, %v2048
        %v2469 = vpack.c.b16 %v2051, %v2049
        %v2470 = vpack.c.b16 %v2054, %v2052
        %v2471 = vpack.c.b16 %v2055, %v2053
        %2888 = vmatpush.bf16.msra.mxu0 %v2070
        %2889 = vmatpush.bf16.msra.mxu0 %v2068
        %2890 = vmatpush.bf16.msra.mxu0 %v2066
        %2891 = vmatpush.bf16.msra.mxu0 %v2064
        %2892 = vmatpush.bf16.msra.mxu0 %v2062
        %2893 = vmatpush.bf16.msra.mxu0 %v2060
        %2894 = vmatpush.bf16.msra.mxu0 %v2058
        %2895 = vmatpush.bf16.msra.mxu0 %v2056
        %2896 = vmatmul.bf16.gmra.mxu0 %v366
        %v2897 = vpop.f32.mrf.mxu0
        %v2898 = vadd.f32 0.0, %v2897
        %v2899 = vpop.f32.mrf.mxu0
        %2900 = vdwg.mxu0
        %2901 = vmatpush.bf16.msra.mxu0 %v2086
        %2902 = vmatpush.bf16.msra.mxu0 %v2084
        %2903 = vmatpush.bf16.msra.mxu0 %v2082
        %2904 = vmatpush.bf16.msra.mxu0 %v2080
        %2905 = vmatpush.bf16.msra.mxu0 %v2078
        %2906 = vmatpush.bf16.msra.mxu0 %v2076
        %2907 = vmatpush.bf16.msra.mxu0 %v2074
        %2908 = vmatpush.bf16.msra.mxu0 %v2072
        %2909 = vmatmul.bf16.gmra.mxu0 %v367
        %v2910 = vpop.f32.mrf.mxu0
        %v2911 = vadd.f32 %v2898, %v2910
        %v2912 = vpop.f32.mrf.mxu0
        %2913 = vdwg.mxu0
        %2914 = vmatpush.bf16.msra.mxu0 %v2102
        %2915 = vmatpush.bf16.msra.mxu0 %v2100
        %2916 = vmatpush.bf16.msra.mxu0 %v2098
        %2917 = vmatpush.bf16.msra.mxu0 %v2096
        %2918 = vmatpush.bf16.msra.mxu0 %v2094
        %2919 = vmatpush.bf16.msra.mxu0 %v2092
        %2920 = vmatpush.bf16.msra.mxu0 %v2090
        %2921 = vmatpush.bf16.msra.mxu0 %v2088
        %2922 = vmatmul.bf16.gmra.mxu0 %v368
        %v2923 = vpop.f32.mrf.mxu0
        %v2924 = vadd.f32 %v2911, %v2923
        %v2925 = vpop.f32.mrf.mxu0
        %2926 = vdwg.mxu0
        %2927 = vmatpush.bf16.msra.mxu0 %v2118
        %2928 = vmatpush.bf16.msra.mxu0 %v2116
        %2929 = vmatpush.bf16.msra.mxu0 %v2114
        %2930 = vmatpush.bf16.msra.mxu0 %v2112
        %2931 = vmatpush.bf16.msra.mxu0 %v2110
        %2932 = vmatpush.bf16.msra.mxu0 %v2108
        %2933 = vmatpush.bf16.msra.mxu0 %v2106
        %2934 = vmatpush.bf16.msra.mxu0 %v2104
        %2935 = vmatmul.bf16.gmra.mxu0 %v369
        %v2936 = vpop.f32.mrf.mxu0
        %v2937 = vadd.f32 %v2924, %v2936
        %v2938 = vpop.f32.mrf.mxu0
        %2939 = vdwg.mxu0
        %2940 = vmatpush.bf16.msra.mxu0 %v2134
        %2941 = vmatpush.bf16.msra.mxu0 %v2132
        %2942 = vmatpush.bf16.msra.mxu0 %v2130
        %2943 = vmatpush.bf16.msra.mxu0 %v2128
        %2944 = vmatpush.bf16.msra.mxu0 %v2126
        %2945 = vmatpush.bf16.msra.mxu0 %v2124
        %2946 = vmatpush.bf16.msra.mxu0 %v2122
        %2947 = vmatpush.bf16.msra.mxu0 %v2120
        %2948 = vmatmul.bf16.gmra.mxu0 %v370
        %v2949 = vpop.f32.mrf.mxu0
        %v2950 = vadd.f32 %v2937, %v2949
        %v2951 = vpop.f32.mrf.mxu0
        %2952 = vdwg.mxu0
        %2953 = vmatpush.bf16.msra.mxu0 %v2150
        %2954 = vmatpush.bf16.msra.mxu0 %v2148
        %2955 = vmatpush.bf16.msra.mxu0 %v2146
        %2956 = vmatpush.bf16.msra.mxu0 %v2144
        %2957 = vmatpush.bf16.msra.mxu0 %v2142
        %2958 = vmatpush.bf16.msra.mxu0 %v2140
        %2959 = vmatpush.bf16.msra.mxu0 %v2138
        %2960 = vmatpush.bf16.msra.mxu0 %v2136
        %2961 = vmatmul.bf16.gmra.mxu0 %v371
        %v2962 = vpop.f32.mrf.mxu0
        %v2963 = vadd.f32 %v2950, %v2962
        %v2964 = vpop.f32.mrf.mxu0
        %2965 = vdwg.mxu0
        %2966 = vmatpush.bf16.msra.mxu0 %v2166
        %2967 = vmatpush.bf16.msra.mxu0 %v2164
        %2968 = vmatpush.bf16.msra.mxu0 %v2162
        %2969 = vmatpush.bf16.msra.mxu0 %v2160
        %2970 = vmatpush.bf16.msra.mxu0 %v2158
        %2971 = vmatpush.bf16.msra.mxu0 %v2156
        %2972 = vmatpush.bf16.msra.mxu0 %v2154
        %2973 = vmatpush.bf16.msra.mxu0 %v2152
        %2974 = vmatmul.bf16.gmra.mxu0 %v372
        %v2975 = vpop.f32.mrf.mxu0
        %v2976 = vadd.f32 %v2963, %v2975
        %v2977 = vpop.f32.mrf.mxu0
        %2978 = vdwg.mxu0
        %2979 = vmatpush.bf16.msra.mxu0 %v2182
        %2980 = vmatpush.bf16.msra.mxu0 %v2180
        %2981 = vmatpush.bf16.msra.mxu0 %v2178
        %2982 = vmatpush.bf16.msra.mxu0 %v2176
        %2983 = vmatpush.bf16.msra.mxu0 %v2174
        %2984 = vmatpush.bf16.msra.mxu0 %v2172
        %2985 = vmatpush.bf16.msra.mxu0 %v2170
        %2986 = vmatpush.bf16.msra.mxu0 %v2168
        %2987 = vmatmul.bf16.gmra.mxu0 %v373
        %v2988 = vpop.f32.mrf.mxu0
        %v2989 = vadd.f32 %v2976, %v2988
        %v2990 = vpop.f32.mrf.mxu0
        %2991 = vdwg.mxu0
        %2992 = vmatpush.bf16.msra.mxu0 %v2198
        %2993 = vmatpush.bf16.msra.mxu0 %v2196
        %2994 = vmatpush.bf16.msra.mxu0 %v2194
        %2995 = vmatpush.bf16.msra.mxu0 %v2192
        %2996 = vmatpush.bf16.msra.mxu0 %v2190
        %2997 = vmatpush.bf16.msra.mxu0 %v2188
        %2998 = vmatpush.bf16.msra.mxu0 %v2186
        %2999 = vmatpush.bf16.msra.mxu0 %v2184
        %3000 = vmatmul.bf16.gmra.mxu0 %v374
        %v3001 = vpop.f32.mrf.mxu0
        %v3002 = vadd.f32 %v2989, %v3001
        %v3003 = vpop.f32.mrf.mxu0
        %3004 = vdwg.mxu0
        %3005 = vmatpush.bf16.msra.mxu0 %v2214
        %3006 = vmatpush.bf16.msra.mxu0 %v2212
        %3007 = vmatpush.bf16.msra.mxu0 %v2210
        %3008 = vmatpush.bf16.msra.mxu0 %v2208
        %3009 = vmatpush.bf16.msra.mxu0 %v2206
        %3010 = vmatpush.bf16.msra.mxu0 %v2204
        %3011 = vmatpush.bf16.msra.mxu0 %v2202
        %3012 = vmatpush.bf16.msra.mxu0 %v2200
        %3013 = vmatmul.bf16.gmra.mxu0 %v375
        %v3014 = vpop.f32.mrf.mxu0
        %v3015 = vadd.f32 %v3002, %v3014
        %v3016 = vpop.f32.mrf.mxu0
        %3017 = vdwg.mxu0
        %3018 = vmatpush.bf16.msra.mxu0 %v2230
        %3019 = vmatpush.bf16.msra.mxu0 %v2228
        %3020 = vmatpush.bf16.msra.mxu0 %v2226
        %3021 = vmatpush.bf16.msra.mxu0 %v2224
        %3022 = vmatpush.bf16.msra.mxu0 %v2222
        %3023 = vmatpush.bf16.msra.mxu0 %v2220
        %3024 = vmatpush.bf16.msra.mxu0 %v2218
        %3025 = vmatpush.bf16.msra.mxu0 %v2216
        %3026 = vmatmul.bf16.gmra.mxu0 %v376
        %v3027 = vpop.f32.mrf.mxu0
        %v3028 = vadd.f32 %v3015, %v3027
        %v3029 = vpop.f32.mrf.mxu0
        %3030 = vdwg.mxu0
        %3031 = vmatpush.bf16.msra.mxu0 %v2246
        %3032 = vmatpush.bf16.msra.mxu0 %v2244
        %3033 = vmatpush.bf16.msra.mxu0 %v2242
        %3034 = vmatpush.bf16.msra.mxu0 %v2240
        %3035 = vmatpush.bf16.msra.mxu0 %v2238
        %3036 = vmatpush.bf16.msra.mxu0 %v2236
        %3037 = vmatpush.bf16.msra.mxu0 %v2234
        %3038 = vmatpush.bf16.msra.mxu0 %v2232
        %3039 = vmatmul.bf16.gmra.mxu0 %v377
        %v3040 = vpop.f32.mrf.mxu0
        %v3041 = vadd.f32 %v3028, %v3040
        %v3042 = vpop.f32.mrf.mxu0
        %3043 = vdwg.mxu0
        %3044 = vmatpush.bf16.msra.mxu0 %v2262
        %3045 = vmatpush.bf16.msra.mxu0 %v2260
        %3046 = vmatpush.bf16.msra.mxu0 %v2258
        %3047 = vmatpush.bf16.msra.mxu0 %v2256
        %3048 = vmatpush.bf16.msra.mxu0 %v2254
        %3049 = vmatpush.bf16.msra.mxu0 %v2252
        %3050 = vmatpush.bf16.msra.mxu0 %v2250
        %3051 = vmatpush.bf16.msra.mxu0 %v2248
        %3052 = vmatmul.bf16.gmra.mxu0 %v378
        %v3053 = vpop.f32.mrf.mxu0
        %v3054 = vadd.f32 %v3041, %v3053
        %v3055 = vpop.f32.mrf.mxu0
        %3056 = vdwg.mxu0
        %3057 = vmatpush.bf16.msra.mxu0 %v2278
        %3058 = vmatpush.bf16.msra.mxu0 %v2276
        %3059 = vmatpush.bf16.msra.mxu0 %v2274
        %3060 = vmatpush.bf16.msra.mxu0 %v2272
        %3061 = vmatpush.bf16.msra.mxu0 %v2270
        %3062 = vmatpush.bf16.msra.mxu0 %v2268
        %3063 = vmatpush.bf16.msra.mxu0 %v2266
        %3064 = vmatpush.bf16.msra.mxu0 %v2264
        %3065 = vmatmul.bf16.gmra.mxu0 %v379
        %v3066 = vpop.f32.mrf.mxu0
        %v3067 = vadd.f32 %v3054, %v3066
        %v3068 = vpop.f32.mrf.mxu0
        %3069 = vdwg.mxu0
        %3070 = vmatpush.bf16.msra.mxu0 %v2294
        %3071 = vmatpush.bf16.msra.mxu0 %v2292
        %3072 = vmatpush.bf16.msra.mxu0 %v2290
        %3073 = vmatpush.bf16.msra.mxu0 %v2288
        %3074 = vmatpush.bf16.msra.mxu0 %v2286
        %3075 = vmatpush.bf16.msra.mxu0 %v2284
        %3076 = vmatpush.bf16.msra.mxu0 %v2282
        %3077 = vmatpush.bf16.msra.mxu0 %v2280
        %3078 = vmatmul.bf16.gmra.mxu0 %v380
        %v3079 = vpop.f32.mrf.mxu0
        %v3080 = vadd.f32 %v3067, %v3079
        %v3081 = vpop.f32.mrf.mxu0
        %3082 = vdwg.mxu0
        %3083 = vmatpush.bf16.msra.mxu0 %v2310
        %3084 = vmatpush.bf16.msra.mxu0 %v2308
        %3085 = vmatpush.bf16.msra.mxu0 %v2306
        %3086 = vmatpush.bf16.msra.mxu0 %v2304
        %3087 = vmatpush.bf16.msra.mxu0 %v2302
        %3088 = vmatpush.bf16.msra.mxu0 %v2300
        %3089 = vmatpush.bf16.msra.mxu0 %v2298
        %3090 = vmatpush.bf16.msra.mxu0 %v2296
        %3091 = vmatmul.bf16.gmra.mxu0 %v381
        %v3092 = vpop.f32.mrf.mxu0
        %v3093 = vadd.f32 %v3080, %v3092
        %v3094 = vpop.f32.mrf.mxu0
        %3095 = vdwg.mxu0
        %3096 = vmatpush.bf16.msra.mxu0 %v2326
        %3097 = vmatpush.bf16.msra.mxu0 %v2324
        %3098 = vmatpush.bf16.msra.mxu0 %v2322
        %3099 = vmatpush.bf16.msra.mxu0 %v2320
        %3100 = vmatpush.bf16.msra.mxu0 %v2318
        %3101 = vmatpush.bf16.msra.mxu0 %v2316
        %3102 = vmatpush.bf16.msra.mxu0 %v2314
        %3103 = vmatpush.bf16.msra.mxu0 %v2312
        %3104 = vmatmul.bf16.gmra.mxu0 %v382
        %v3105 = vpop.f32.mrf.mxu0
        %v3106 = vadd.f32 %v3093, %v3105
        %v3107 = vpop.f32.mrf.mxu0
        %3108 = vdwg.mxu0
        %3109 = vmatpush.bf16.msra.mxu0 %v2342
        %3110 = vmatpush.bf16.msra.mxu0 %v2340
        %3111 = vmatpush.bf16.msra.mxu0 %v2338
        %3112 = vmatpush.bf16.msra.mxu0 %v2336
        %3113 = vmatpush.bf16.msra.mxu0 %v2334
        %3114 = vmatpush.bf16.msra.mxu0 %v2332
        %3115 = vmatpush.bf16.msra.mxu0 %v2330
        %3116 = vmatpush.bf16.msra.mxu0 %v2328
        %3117 = vmatmul.bf16.gmra.mxu0 %v383
        %v3118 = vpop.f32.mrf.mxu0
        %v3119 = vadd.f32 %v3106, %v3118
        %v3120 = vpop.f32.mrf.mxu0
        %3121 = vdwg.mxu0
        %3122 = vmatpush.bf16.msra.mxu0 %v2358
        %3123 = vmatpush.bf16.msra.mxu0 %v2356
        %3124 = vmatpush.bf16.msra.mxu0 %v2354
        %3125 = vmatpush.bf16.msra.mxu0 %v2352
        %3126 = vmatpush.bf16.msra.mxu0 %v2350
        %3127 = vmatpush.bf16.msra.mxu0 %v2348
        %3128 = vmatpush.bf16.msra.mxu0 %v2346
        %3129 = vmatpush.bf16.msra.mxu0 %v2344
        %3130 = vmatmul.bf16.gmra.mxu0 %v384
        %v3131 = vpop.f32.mrf.mxu0
        %v3132 = vadd.f32 %v3119, %v3131
        %v3133 = vpop.f32.mrf.mxu0
        %3134 = vdwg.mxu0
        %3135 = vmatpush.bf16.msra.mxu0 %v2374
        %3136 = vmatpush.bf16.msra.mxu0 %v2372
        %3137 = vmatpush.bf16.msra.mxu0 %v2370
        %3138 = vmatpush.bf16.msra.mxu0 %v2368
        %3139 = vmatpush.bf16.msra.mxu0 %v2366
        %3140 = vmatpush.bf16.msra.mxu0 %v2364
        %3141 = vmatpush.bf16.msra.mxu0 %v2362
        %3142 = vmatpush.bf16.msra.mxu0 %v2360
        %3143 = vmatmul.bf16.gmra.mxu0 %v385
        %v3144 = vpop.f32.mrf.mxu0
        %v3145 = vadd.f32 %v3132, %v3144
        %v3146 = vpop.f32.mrf.mxu0
        %3147 = vdwg.mxu0
        %3148 = vmatpush.bf16.msra.mxu0 %v2390
        %3149 = vmatpush.bf16.msra.mxu0 %v2388
        %3150 = vmatpush.bf16.msra.mxu0 %v2386
        %3151 = vmatpush.bf16.msra.mxu0 %v2384
        %3152 = vmatpush.bf16.msra.mxu0 %v2382
        %3153 = vmatpush.bf16.msra.mxu0 %v2380
        %3154 = vmatpush.bf16.msra.mxu0 %v2378
        %3155 = vmatpush.bf16.msra.mxu0 %v2376
        %3156 = vmatmul.bf16.gmra.mxu0 %v386
        %v3157 = vpop.f32.mrf.mxu0
        %v3158 = vadd.f32 %v3145, %v3157
        %v3159 = vpop.f32.mrf.mxu0
        %3160 = vdwg.mxu0
        %3161 = vmatpush.bf16.msra.mxu0 %v2406
        %3162 = vmatpush.bf16.msra.mxu0 %v2404
        %3163 = vmatpush.bf16.msra.mxu0 %v2402
        %3164 = vmatpush.bf16.msra.mxu0 %v2400
        %3165 = vmatpush.bf16.msra.mxu0 %v2398
        %3166 = vmatpush.bf16.msra.mxu0 %v2396
        %3167 = vmatpush.bf16.msra.mxu0 %v2394
        %3168 = vmatpush.bf16.msra.mxu0 %v2392
        %3169 = vmatmul.bf16.gmra.mxu0 %v387
        %v3170 = vpop.f32.mrf.mxu0
        %v3171 = vadd.f32 %v3158, %v3170
        %v3172 = vpop.f32.mrf.mxu0
        %3173 = vdwg.mxu0
        %3174 = vmatpush.bf16.msra.mxu0 %v2422
        %3175 = vmatpush.bf16.msra.mxu0 %v2420
        %3176 = vmatpush.bf16.msra.mxu0 %v2418
        %3177 = vmatpush.bf16.msra.mxu0 %v2416
        %3178 = vmatpush.bf16.msra.mxu0 %v2414
        %3179 = vmatpush.bf16.msra.mxu0 %v2412
        %3180 = vmatpush.bf16.msra.mxu0 %v2410
        %3181 = vmatpush.bf16.msra.mxu0 %v2408
        %3182 = vmatmul.bf16.gmra.mxu0 %v388
        %v3183 = vpop.f32.mrf.mxu0
        %v3184 = vadd.f32 %v3171, %v3183
        %v3185 = vpop.f32.mrf.mxu0
        %3186 = vdwg.mxu0
        %3187 = vmatpush.bf16.msra.mxu0 %v2438
        %3188 = vmatpush.bf16.msra.mxu0 %v2436
        %3189 = vmatpush.bf16.msra.mxu0 %v2434
        %3190 = vmatpush.bf16.msra.mxu0 %v2432
        %3191 = vmatpush.bf16.msra.mxu0 %v2430
        %3192 = vmatpush.bf16.msra.mxu0 %v2428
        %3193 = vmatpush.bf16.msra.mxu0 %v2426
        %3194 = vmatpush.bf16.msra.mxu0 %v2424
        %3195 = vmatmul.bf16.gmra.mxu0 %v389
        %v3196 = vpop.f32.mrf.mxu0
        %v3197 = vadd.f32 %v3184, %v3196
        %v3198 = vpop.f32.mrf.mxu0
        %3199 = vdwg.mxu0
        %3200 = vmatpush.bf16.msra.mxu0 %v2454
        %3201 = vmatpush.bf16.msra.mxu0 %v2452
        %3202 = vmatpush.bf16.msra.mxu0 %v2450
        %3203 = vmatpush.bf16.msra.mxu0 %v2448
        %3204 = vmatpush.bf16.msra.mxu0 %v2446
        %3205 = vmatpush.bf16.msra.mxu0 %v2444
        %3206 = vmatpush.bf16.msra.mxu0 %v2442
        %3207 = vmatpush.bf16.msra.mxu0 %v2440
        %3208 = vmatmul.bf16.gmra.mxu0 %v390
        %v3209 = vpop.f32.mrf.mxu0
        %v3210 = vadd.f32 %v3197, %v3209
        %v3211 = vpop.f32.mrf.mxu0
        %3212 = vdwg.mxu0
        %3213 = vmatpush.bf16.msra.mxu0 %v2470
        %3214 = vmatpush.bf16.msra.mxu0 %v2468
        %3215 = vmatpush.bf16.msra.mxu0 %v2466
        %3216 = vmatpush.bf16.msra.mxu0 %v2464
        %3217 = vmatpush.bf16.msra.mxu0 %v2462
        %3218 = vmatpush.bf16.msra.mxu0 %v2460
        %3219 = vmatpush.bf16.msra.mxu0 %v2458
        %3220 = vmatpush.bf16.msra.mxu0 %v2456
        %3221 = vmatmul.bf16.gmra.mxu0 %v391
        %v3222 = vpop.f32.mrf.mxu0
        %v3223 = vadd.f32 %v3210, %v3222
        %v3224 = vpop.f32.mrf.mxu0
        %3225 = vdwg.mxu0
        %3226 = vmatpush.bf16.msra.mxu0 %v2071
        %3227 = vmatpush.bf16.msra.mxu0 %v2069
        %3228 = vmatpush.bf16.msra.mxu0 %v2067
        %3229 = vmatpush.bf16.msra.mxu0 %v2065
        %3230 = vmatpush.bf16.msra.mxu0 %v2063
        %3231 = vmatpush.bf16.msra.mxu0 %v2061
        %3232 = vmatpush.bf16.msra.mxu0 %v2059
        %3233 = vmatpush.bf16.msra.mxu0 %v2057
        %3234 = vmatmul.bf16.gmra.mxu0 %v366
        %v3235 = vpop.f32.mrf.mxu0
        %v3236 = vadd.f32 0.0, %v3235
        %v3237 = vpop.f32.mrf.mxu0
        %3238 = vdwg.mxu0
        %3239 = vmatpush.bf16.msra.mxu0 %v2087
        %3240 = vmatpush.bf16.msra.mxu0 %v2085
        %3241 = vmatpush.bf16.msra.mxu0 %v2083
        %3242 = vmatpush.bf16.msra.mxu0 %v2081
        %3243 = vmatpush.bf16.msra.mxu0 %v2079
        %3244 = vmatpush.bf16.msra.mxu0 %v2077
        %3245 = vmatpush.bf16.msra.mxu0 %v2075
        %3246 = vmatpush.bf16.msra.mxu0 %v2073
        %3247 = vmatmul.bf16.gmra.mxu0 %v367
        %v3248 = vpop.f32.mrf.mxu0
        %v3249 = vadd.f32 %v3236, %v3248
        %v3250 = vpop.f32.mrf.mxu0
        %3251 = vdwg.mxu0
        %3252 = vmatpush.bf16.msra.mxu0 %v2103
        %3253 = vmatpush.bf16.msra.mxu0 %v2101
        %3254 = vmatpush.bf16.msra.mxu0 %v2099
        %3255 = vmatpush.bf16.msra.mxu0 %v2097
        %3256 = vmatpush.bf16.msra.mxu0 %v2095
        %3257 = vmatpush.bf16.msra.mxu0 %v2093
        %3258 = vmatpush.bf16.msra.mxu0 %v2091
        %3259 = vmatpush.bf16.msra.mxu0 %v2089
        %3260 = vmatmul.bf16.gmra.mxu0 %v368
        %v3261 = vpop.f32.mrf.mxu0
        %v3262 = vadd.f32 %v3249, %v3261
        %v3263 = vpop.f32.mrf.mxu0
        %3264 = vdwg.mxu0
        %3265 = vmatpush.bf16.msra.mxu0 %v2119
        %3266 = vmatpush.bf16.msra.mxu0 %v2117
        %3267 = vmatpush.bf16.msra.mxu0 %v2115
        %3268 = vmatpush.bf16.msra.mxu0 %v2113
        %3269 = vmatpush.bf16.msra.mxu0 %v2111
        %3270 = vmatpush.bf16.msra.mxu0 %v2109
        %3271 = vmatpush.bf16.msra.mxu0 %v2107
        %3272 = vmatpush.bf16.msra.mxu0 %v2105
        %3273 = vmatmul.bf16.gmra.mxu0 %v369
        %v3274 = vpop.f32.mrf.mxu0
        %v3275 = vadd.f32 %v3262, %v3274
        %v3276 = vpop.f32.mrf.mxu0
        %3277 = vdwg.mxu0
        %3278 = vmatpush.bf16.msra.mxu0 %v2135
        %3279 = vmatpush.bf16.msra.mxu0 %v2133
        %3280 = vmatpush.bf16.msra.mxu0 %v2131
        %3281 = vmatpush.bf16.msra.mxu0 %v2129
        %3282 = vmatpush.bf16.msra.mxu0 %v2127
        %3283 = vmatpush.bf16.msra.mxu0 %v2125
        %3284 = vmatpush.bf16.msra.mxu0 %v2123
        %3285 = vmatpush.bf16.msra.mxu0 %v2121
        %3286 = vmatmul.bf16.gmra.mxu0 %v370
        %v3287 = vpop.f32.mrf.mxu0
        %v3288 = vadd.f32 %v3275, %v3287
        %v3289 = vpop.f32.mrf.mxu0
        %3290 = vdwg.mxu0
        %3291 = vmatpush.bf16.msra.mxu0 %v2151
        %3292 = vmatpush.bf16.msra.mxu0 %v2149
        %3293 = vmatpush.bf16.msra.mxu0 %v2147
        %3294 = vmatpush.bf16.msra.mxu0 %v2145
        %3295 = vmatpush.bf16.msra.mxu0 %v2143
        %3296 = vmatpush.bf16.msra.mxu0 %v2141
        %3297 = vmatpush.bf16.msra.mxu0 %v2139
        %3298 = vmatpush.bf16.msra.mxu0 %v2137
        %3299 = vmatmul.bf16.gmra.mxu0 %v371
        %v3300 = vpop.f32.mrf.mxu0
        %v3301 = vadd.f32 %v3288, %v3300
        %v3302 = vpop.f32.mrf.mxu0
        %3303 = vdwg.mxu0
        %3304 = vmatpush.bf16.msra.mxu0 %v2167
        %3305 = vmatpush.bf16.msra.mxu0 %v2165
        %3306 = vmatpush.bf16.msra.mxu0 %v2163
        %3307 = vmatpush.bf16.msra.mxu0 %v2161
        %3308 = vmatpush.bf16.msra.mxu0 %v2159
        %3309 = vmatpush.bf16.msra.mxu0 %v2157
        %3310 = vmatpush.bf16.msra.mxu0 %v2155
        %3311 = vmatpush.bf16.msra.mxu0 %v2153
        %3312 = vmatmul.bf16.gmra.mxu0 %v372
        %v3313 = vpop.f32.mrf.mxu0
        %v3314 = vadd.f32 %v3301, %v3313
        %v3315 = vpop.f32.mrf.mxu0
        %3316 = vdwg.mxu0
        %3317 = vmatpush.bf16.msra.mxu0 %v2183
        %3318 = vmatpush.bf16.msra.mxu0 %v2181
        %3319 = vmatpush.bf16.msra.mxu0 %v2179
        %3320 = vmatpush.bf16.msra.mxu0 %v2177
        %3321 = vmatpush.bf16.msra.mxu0 %v2175
        %3322 = vmatpush.bf16.msra.mxu0 %v2173
        %3323 = vmatpush.bf16.msra.mxu0 %v2171
        %3324 = vmatpush.bf16.msra.mxu0 %v2169
        %3325 = vmatmul.bf16.gmra.mxu0 %v373
        %v3326 = vpop.f32.mrf.mxu0
        %v3327 = vadd.f32 %v3314, %v3326
        %v3328 = vpop.f32.mrf.mxu0
        %3329 = vdwg.mxu0
        %3330 = vmatpush.bf16.msra.mxu0 %v2199
        %3331 = vmatpush.bf16.msra.mxu0 %v2197
        %3332 = vmatpush.bf16.msra.mxu0 %v2195
        %3333 = vmatpush.bf16.msra.mxu0 %v2193
        %3334 = vmatpush.bf16.msra.mxu0 %v2191
        %3335 = vmatpush.bf16.msra.mxu0 %v2189
        %3336 = vmatpush.bf16.msra.mxu0 %v2187
        %3337 = vmatpush.bf16.msra.mxu0 %v2185
        %3338 = vmatmul.bf16.gmra.mxu0 %v374
        %v3339 = vpop.f32.mrf.mxu0
        %v3340 = vadd.f32 %v3327, %v3339
        %v3341 = vpop.f32.mrf.mxu0
        %3342 = vdwg.mxu0
        %3343 = vmatpush.bf16.msra.mxu0 %v2215
        %3344 = vmatpush.bf16.msra.mxu0 %v2213
        %3345 = vmatpush.bf16.msra.mxu0 %v2211
        %3346 = vmatpush.bf16.msra.mxu0 %v2209
        %3347 = vmatpush.bf16.msra.mxu0 %v2207
        %3348 = vmatpush.bf16.msra.mxu0 %v2205
        %3349 = vmatpush.bf16.msra.mxu0 %v2203
        %3350 = vmatpush.bf16.msra.mxu0 %v2201
        %3351 = vmatmul.bf16.gmra.mxu0 %v375
        %v3352 = vpop.f32.mrf.mxu0
        %v3353 = vadd.f32 %v3340, %v3352
        %v3354 = vpop.f32.mrf.mxu0
        %3355 = vdwg.mxu0
        %3356 = vmatpush.bf16.msra.mxu0 %v2231
        %3357 = vmatpush.bf16.msra.mxu0 %v2229
        %3358 = vmatpush.bf16.msra.mxu0 %v2227
        %3359 = vmatpush.bf16.msra.mxu0 %v2225
        %3360 = vmatpush.bf16.msra.mxu0 %v2223
        %3361 = vmatpush.bf16.msra.mxu0 %v2221
        %3362 = vmatpush.bf16.msra.mxu0 %v2219
        %3363 = vmatpush.bf16.msra.mxu0 %v2217
        %3364 = vmatmul.bf16.gmra.mxu0 %v376
        %v3365 = vpop.f32.mrf.mxu0
        %v3366 = vadd.f32 %v3353, %v3365
        %v3367 = vpop.f32.mrf.mxu0
        %3368 = vdwg.mxu0
        %3369 = vmatpush.bf16.msra.mxu0 %v2247
        %3370 = vmatpush.bf16.msra.mxu0 %v2245
        %3371 = vmatpush.bf16.msra.mxu0 %v2243
        %3372 = vmatpush.bf16.msra.mxu0 %v2241
        %3373 = vmatpush.bf16.msra.mxu0 %v2239
        %3374 = vmatpush.bf16.msra.mxu0 %v2237
        %3375 = vmatpush.bf16.msra.mxu0 %v2235
        %3376 = vmatpush.bf16.msra.mxu0 %v2233
        %3377 = vmatmul.bf16.gmra.mxu0 %v377
        %v3378 = vpop.f32.mrf.mxu0
        %v3379 = vadd.f32 %v3366, %v3378
        %v3380 = vpop.f32.mrf.mxu0
        %3381 = vdwg.mxu0
        %3382 = vmatpush.bf16.msra.mxu0 %v2263
        %3383 = vmatpush.bf16.msra.mxu0 %v2261
        %3384 = vmatpush.bf16.msra.mxu0 %v2259
        %3385 = vmatpush.bf16.msra.mxu0 %v2257
        %3386 = vmatpush.bf16.msra.mxu0 %v2255
        %3387 = vmatpush.bf16.msra.mxu0 %v2253
        %3388 = vmatpush.bf16.msra.mxu0 %v2251
        %3389 = vmatpush.bf16.msra.mxu0 %v2249
        %3390 = vmatmul.bf16.gmra.mxu0 %v378
        %v3391 = vpop.f32.mrf.mxu0
        %v3392 = vadd.f32 %v3379, %v3391
        %v3393 = vpop.f32.mrf.mxu0
        %3394 = vdwg.mxu0
        %3395 = vmatpush.bf16.msra.mxu0 %v2279
        %3396 = vmatpush.bf16.msra.mxu0 %v2277
        %3397 = vmatpush.bf16.msra.mxu0 %v2275
        %3398 = vmatpush.bf16.msra.mxu0 %v2273
        %3399 = vmatpush.bf16.msra.mxu0 %v2271
        %3400 = vmatpush.bf16.msra.mxu0 %v2269
        %3401 = vmatpush.bf16.msra.mxu0 %v2267
        %3402 = vmatpush.bf16.msra.mxu0 %v2265
        %3403 = vmatmul.bf16.gmra.mxu0 %v379
        %v3404 = vpop.f32.mrf.mxu0
        %v3405 = vadd.f32 %v3392, %v3404
        %v3406 = vpop.f32.mrf.mxu0
        %3407 = vdwg.mxu0
        %3408 = vmatpush.bf16.msra.mxu0 %v2295
        %3409 = vmatpush.bf16.msra.mxu0 %v2293
        %3410 = vmatpush.bf16.msra.mxu0 %v2291
        %3411 = vmatpush.bf16.msra.mxu0 %v2289
        %3412 = vmatpush.bf16.msra.mxu0 %v2287
        %3413 = vmatpush.bf16.msra.mxu0 %v2285
        %3414 = vmatpush.bf16.msra.mxu0 %v2283
        %3415 = vmatpush.bf16.msra.mxu0 %v2281
        %3416 = vmatmul.bf16.gmra.mxu0 %v380
        %v3417 = vpop.f32.mrf.mxu0
        %v3418 = vadd.f32 %v3405, %v3417
        %v3419 = vpop.f32.mrf.mxu0
        %3420 = vdwg.mxu0
        %3421 = vmatpush.bf16.msra.mxu0 %v2311
        %3422 = vmatpush.bf16.msra.mxu0 %v2309
        %3423 = vmatpush.bf16.msra.mxu0 %v2307
        %3424 = vmatpush.bf16.msra.mxu0 %v2305
        %3425 = vmatpush.bf16.msra.mxu0 %v2303
        %3426 = vmatpush.bf16.msra.mxu0 %v2301
        %3427 = vmatpush.bf16.msra.mxu0 %v2299
        %3428 = vmatpush.bf16.msra.mxu0 %v2297
        %3429 = vmatmul.bf16.gmra.mxu0 %v381
        %v3430 = vpop.f32.mrf.mxu0
        %v3431 = vadd.f32 %v3418, %v3430
        %v3432 = vpop.f32.mrf.mxu0
        %3433 = vdwg.mxu0
        %3434 = vmatpush.bf16.msra.mxu0 %v2327
        %3435 = vmatpush.bf16.msra.mxu0 %v2325
        %3436 = vmatpush.bf16.msra.mxu0 %v2323
        %3437 = vmatpush.bf16.msra.mxu0 %v2321
        %3438 = vmatpush.bf16.msra.mxu0 %v2319
        %3439 = vmatpush.bf16.msra.mxu0 %v2317
        %3440 = vmatpush.bf16.msra.mxu0 %v2315
        %3441 = vmatpush.bf16.msra.mxu0 %v2313
        %3442 = vmatmul.bf16.gmra.mxu0 %v382
        %v3443 = vpop.f32.mrf.mxu0
        %v3444 = vadd.f32 %v3431, %v3443
        %v3445 = vpop.f32.mrf.mxu0
        %3446 = vdwg.mxu0
        %3447 = vmatpush.bf16.msra.mxu0 %v2343
        %3448 = vmatpush.bf16.msra.mxu0 %v2341
        %3449 = vmatpush.bf16.msra.mxu0 %v2339
        %3450 = vmatpush.bf16.msra.mxu0 %v2337
        %3451 = vmatpush.bf16.msra.mxu0 %v2335
        %3452 = vmatpush.bf16.msra.mxu0 %v2333
        %3453 = vmatpush.bf16.msra.mxu0 %v2331
        %3454 = vmatpush.bf16.msra.mxu0 %v2329
        %3455 = vmatmul.bf16.gmra.mxu0 %v383
        %v3456 = vpop.f32.mrf.mxu0
        %v3457 = vadd.f32 %v3444, %v3456
        %v3458 = vpop.f32.mrf.mxu0
        %3459 = vdwg.mxu0
        %3460 = vmatpush.bf16.msra.mxu0 %v2359
        %3461 = vmatpush.bf16.msra.mxu0 %v2357
        %3462 = vmatpush.bf16.msra.mxu0 %v2355
        %3463 = vmatpush.bf16.msra.mxu0 %v2353
        %3464 = vmatpush.bf16.msra.mxu0 %v2351
        %3465 = vmatpush.bf16.msra.mxu0 %v2349
        %3466 = vmatpush.bf16.msra.mxu0 %v2347
        %3467 = vmatpush.bf16.msra.mxu0 %v2345
        %3468 = vmatmul.bf16.gmra.mxu0 %v384
        %v3469 = vpop.f32.mrf.mxu0
        %v3470 = vadd.f32 %v3457, %v3469
        %v3471 = vpop.f32.mrf.mxu0
        %3472 = vdwg.mxu0
        %3473 = vmatpush.bf16.msra.mxu0 %v2375
        %3474 = vmatpush.bf16.msra.mxu0 %v2373
        %3475 = vmatpush.bf16.msra.mxu0 %v2371
        %3476 = vmatpush.bf16.msra.mxu0 %v2369
        %3477 = vmatpush.bf16.msra.mxu0 %v2367
        %3478 = vmatpush.bf16.msra.mxu0 %v2365
        %3479 = vmatpush.bf16.msra.mxu0 %v2363
        %3480 = vmatpush.bf16.msra.mxu0 %v2361
        %3481 = vmatmul.bf16.gmra.mxu0 %v385
        %v3482 = vpop.f32.mrf.mxu0
        %v3483 = vadd.f32 %v3470, %v3482
        %v3484 = vpop.f32.mrf.mxu0
        %3485 = vdwg.mxu0
        %3486 = vmatpush.bf16.msra.mxu0 %v2391
        %3487 = vmatpush.bf16.msra.mxu0 %v2389
        %3488 = vmatpush.bf16.msra.mxu0 %v2387
        %3489 = vmatpush.bf16.msra.mxu0 %v2385
        %3490 = vmatpush.bf16.msra.mxu0 %v2383
        %3491 = vmatpush.bf16.msra.mxu0 %v2381
        %3492 = vmatpush.bf16.msra.mxu0 %v2379
        %3493 = vmatpush.bf16.msra.mxu0 %v2377
        %3494 = vmatmul.bf16.gmra.mxu0 %v386
        %v3495 = vpop.f32.mrf.mxu0
        %v3496 = vadd.f32 %v3483, %v3495
        %v3497 = vpop.f32.mrf.mxu0
        %3498 = vdwg.mxu0
        %3499 = vmatpush.bf16.msra.mxu0 %v2407
        %3500 = vmatpush.bf16.msra.mxu0 %v2405
        %3501 = vmatpush.bf16.msra.mxu0 %v2403
        %3502 = vmatpush.bf16.msra.mxu0 %v2401
        %3503 = vmatpush.bf16.msra.mxu0 %v2399
        %3504 = vmatpush.bf16.msra.mxu0 %v2397
        %3505 = vmatpush.bf16.msra.mxu0 %v2395
        %3506 = vmatpush.bf16.msra.mxu0 %v2393
        %3507 = vmatmul.bf16.gmra.mxu0 %v387
        %v3508 = vpop.f32.mrf.mxu0
        %v3509 = vadd.f32 %v3496, %v3508
        %v3510 = vpop.f32.mrf.mxu0
        %3511 = vdwg.mxu0
        %3512 = vmatpush.bf16.msra.mxu0 %v2423
        %3513 = vmatpush.bf16.msra.mxu0 %v2421
        %3514 = vmatpush.bf16.msra.mxu0 %v2419
        %3515 = vmatpush.bf16.msra.mxu0 %v2417
        %3516 = vmatpush.bf16.msra.mxu0 %v2415
        %3517 = vmatpush.bf16.msra.mxu0 %v2413
        %3518 = vmatpush.bf16.msra.mxu0 %v2411
        %3519 = vmatpush.bf16.msra.mxu0 %v2409
        %3520 = vmatmul.bf16.gmra.mxu0 %v388
        %v3521 = vpop.f32.mrf.mxu0
        %v3522 = vadd.f32 %v3509, %v3521
        %v3523 = vpop.f32.mrf.mxu0
        %3524 = vdwg.mxu0
        %3525 = vmatpush.bf16.msra.mxu0 %v2439
        %3526 = vmatpush.bf16.msra.mxu0 %v2437
        %3527 = vmatpush.bf16.msra.mxu0 %v2435
        %3528 = vmatpush.bf16.msra.mxu0 %v2433
        %3529 = vmatpush.bf16.msra.mxu0 %v2431
        %3530 = vmatpush.bf16.msra.mxu0 %v2429
        %3531 = vmatpush.bf16.msra.mxu0 %v2427
        %3532 = vmatpush.bf16.msra.mxu0 %v2425
        %3533 = vmatmul.bf16.gmra.mxu0 %v389
        %v3534 = vpop.f32.mrf.mxu0
        %v3535 = vadd.f32 %v3522, %v3534
        %v3536 = vpop.f32.mrf.mxu0
        %3537 = vdwg.mxu0
        %3538 = vmatpush.bf16.msra.mxu0 %v2455
        %3539 = vmatpush.bf16.msra.mxu0 %v2453
        %3540 = vmatpush.bf16.msra.mxu0 %v2451
        %3541 = vmatpush.bf16.msra.mxu0 %v2449
        %3542 = vmatpush.bf16.msra.mxu0 %v2447
        %3543 = vmatpush.bf16.msra.mxu0 %v2445
        %3544 = vmatpush.bf16.msra.mxu0 %v2443
        %3545 = vmatpush.bf16.msra.mxu0 %v2441
        %3546 = vmatmul.bf16.gmra.mxu0 %v390
        %v3547 = vpop.f32.mrf.mxu0
        %v3548 = vadd.f32 %v3535, %v3547
        %v3549 = vpop.f32.mrf.mxu0
        %3550 = vdwg.mxu0
        %3551 = vmatpush.bf16.msra.mxu0 %v2471
        %3552 = vmatpush.bf16.msra.mxu0 %v2469
        %3553 = vmatpush.bf16.msra.mxu0 %v2467
        %3554 = vmatpush.bf16.msra.mxu0 %v2465
        %3555 = vmatpush.bf16.msra.mxu0 %v2463
        %3556 = vmatpush.bf16.msra.mxu0 %v2461
        %3557 = vmatpush.bf16.msra.mxu0 %v2459
        %3558 = vmatpush.bf16.msra.mxu0 %v2457
        %3559 = vmatmul.bf16.gmra.mxu0 %v391
        %v3560 = vpop.f32.mrf.mxu0
        %v3561 = vadd.f32 %v3548, %v3560
        %v3562 = vpop.f32.mrf.mxu0
        %3563 = vdwg.mxu0
        %v3566 = vrot.slane %v3561, 6
        %vm3567 = vcmask 1041408
        %v3568 = vsel %vm3567, %v3223, %v3566
        %v3570 = vadd.f32 %v291, %v3568
        %3571 = vst [vmem:[#allocation2] sm:$0xf] %v3570
        %p3572 = scmp.eq.s32.totalorder %s21, 6
        // Predicated region
        $region57: #{gocnn_forward.3} parent=39 // pred_check
          %p3573 = pneg %p3572
        $region58: #{gocnn_forward.3} parent=39 // pred_check_branch
          %3575 = sbr.rel (%p3573) target = $region60
        $region59: #{gocnn_forward.3} parent=39 // pred_region
          %v3576 = vld [vmem:[#allocation2] sm:$0xf]
          %v3577 = vld [vmem:[#allocation6] sm:$0x3]
          %v3579 = vperm.slane %v3577, 0
          %v3580 = vperm.slane %v3577, 1
          %v3581 = vrot.slane %v3580, 6
          %v3582 = vsel %vm3567, %v3579, %v3581
          %v3584 = vadd.f32 %v3576, %v3582
          %v3585 = vmax.f32 %v3584, 0.0
          %v3586 = vld [vmem:[%s3] sm:$0xff]
          %v3587 = vld [vmem:[%s3 + $0x8] sm:$0xff]
          %v3588 = vld [vmem:[%s3 + $0x10] sm:$0xff]
          %v3589 = vld [vmem:[%s3 + $0x18] sm:$0xff]
          %v3590 = vld [vmem:[%s3 + $0x20] sm:$0xff]
          %v3591 = vld [vmem:[%s3 + $0x28] sm:$0xff]
          %v3592 = vld [vmem:[%s3 + $0x30] sm:$0xff]
          %v3593 = vld [vmem:[%s3 + $0x38] sm:$0xff]
          %v3594 = vld [vmem:[%s3 + $0x40] sm:$0xff]
          %v3595 = vld [vmem:[%s3 + $0x48] sm:$0xff]
          %v3596 = vld [vmem:[%s3 + $0x50] sm:$0xff]
          %v3597 = vld [vmem:[%s3 + $0x58] sm:$0xff]
          %v3598 = vld [vmem:[%s3 + $0x60] sm:$0xff]
          %v3599 = vld [vmem:[%s3 + $0x68] sm:$0xff]
          %v3600 = vld [vmem:[%s3 + $0x70] sm:$0xff]
          %v3601 = vld [vmem:[%s3 + $0x78] sm:$0xff]
          %v3602 = vld [vmem:[%s3 + $0x80] sm:$0xff]
          %v3603 = vld [vmem:[%s3 + $0x88] sm:$0xff]
          %v3604 = vld [vmem:[%s3 + $0x90] sm:$0xff]
          %v3605 = vld [vmem:[%s3 + $0x98] sm:$0xff]
          %v3606 = vld [vmem:[%s3 + $0xa0] sm:$0xff]
          %v3607 = vld [vmem:[%s3 + $0xa8] sm:$0xff]
          %v3608 = vld [vmem:[%s3 + $0xb0] sm:$0xff]
          %v3609 = vld [vmem:[%s3 + $0xb8] sm:$0xff]
          %v3610 = vld [vmem:[%s3 + $0xc0] sm:$0xff]
          %v3611 = vld [vmem:[%s3 + $0xc8] sm:$0xff]
          %v3612 = vld [vmem:[%s3 + $0xd0] sm:$0xff]
          %v3613 = vld [vmem:[%s3 + $0xd8] sm:$0xff]
          %v3614 = vld [vmem:[%s3 + $0xe0] sm:$0xff]
          %v3615 = vld [vmem:[%s3 + $0xe8] sm:$0xff]
          %v3616 = vld [vmem:[%s3 + $0xf0] sm:$0xff]
          %v3617 = vld [vmem:[%s3 + $0xf8] sm:$0xff]
          %v3618 = vld [vmem:[%s3 + $0x100] sm:$0xff]
          %v3619 = vld [vmem:[%s3 + $0x108] sm:$0xff]
          %v3620 = vld [vmem:[%s3 + $0x110] sm:$0xff]
          %v3621 = vld [vmem:[%s3 + $0x118] sm:$0xff]
          %v3622 = vld [vmem:[%s3 + $0x120] sm:$0xff]
          %v3623 = vld [vmem:[%s3 + $0x128] sm:$0xff]
          %v3624 = vld [vmem:[%s3 + $0x130] sm:$0xff]
          %v3625 = vld [vmem:[%s3 + $0x138] sm:$0xff]
          %v3626 = vld [vmem:[%s3 + $0x140] sm:$0xff]
          %v3627 = vld [vmem:[%s3 + $0x148] sm:$0xff]
          %v3628 = vld [vmem:[%s3 + $0x150] sm:$0xff]
          %v3629 = vld [vmem:[%s3 + $0x158] sm:$0xff]
          %v3630 = vld [vmem:[%s3 + $0x160] sm:$0xff]
          %v3631 = vld [vmem:[%s3 + $0x168] sm:$0xff]
          %v3632 = vld [vmem:[%s3 + $0x170] sm:$0xff]
          %v3633 = vld [vmem:[%s3 + $0x178] sm:$0xff]
          %v3634 = vld [vmem:[%s3 + $0x180] sm:$0xff]
          %v3635 = vld [vmem:[%s3 + $0x188] sm:$0xff]
          %v3636 = vld [vmem:[%s3 + $0x190] sm:$0xff]
          %v3637 = vld [vmem:[%s3 + $0x198] sm:$0xff]
          %v3638 = vld [vmem:[%s3 + $0x1a0] sm:$0xff]
          %v3639 = vld [vmem:[%s3 + $0x1a8] sm:$0xff]
          %v3640 = vld [vmem:[%s3 + $0x1b0] sm:$0xff]
          %v3641 = vld [vmem:[%s3 + $0x1b8] sm:$0xff]
          %v3642 = vld [vmem:[%s3 + $0x1c0] sm:$0xff]
          %v3643 = vld [vmem:[%s3 + $0x1c8] sm:$0xff]
          %v3644 = vld [vmem:[%s3 + $0x1d0] sm:$0xff]
          %v3645 = vld [vmem:[%s3 + $0x1d8] sm:$0xff]
          %v3646 = vld [vmem:[%s3 + $0x1e0] sm:$0xff]
          %v3647 = vld [vmem:[%s3 + $0x1e8] sm:$0xff]
          %v3648 = vld [vmem:[%s3 + $0x1f0] sm:$0xff]
          %v3649 = vld [vmem:[%s3 + $0x1f8] sm:$0xff]
          %v3650 = vld [vmem:[%s3 + $0x200] sm:$0xff]
          %v3651 = vld [vmem:[%s3 + $0x208] sm:$0xff]
          %v3652 = vld [vmem:[%s3 + $0x210] sm:$0xff]
          %v3653 = vld [vmem:[%s3 + $0x218] sm:$0xff]
          %v3654 = vld [vmem:[%s3 + $0x220] sm:$0xff]
          %v3655 = vld [vmem:[%s3 + $0x228] sm:$0xff]
          %v3656 = vld [vmem:[%s3 + $0x230] sm:$0xff]
          %v3657 = vld [vmem:[%s3 + $0x238] sm:$0xff]
          %v3658 = vld [vmem:[%s3 + $0x240] sm:$0xff]
          %v3659 = vld [vmem:[%s3 + $0x248] sm:$0xff]
          %v3660 = vld [vmem:[%s3 + $0x250] sm:$0xff]
          %v3661 = vld [vmem:[%s3 + $0x258] sm:$0xff]
          %v3662 = vld [vmem:[%s3 + $0x260] sm:$0xff]
          %v3663 = vld [vmem:[%s3 + $0x268] sm:$0xff]
          %v3664 = vld [vmem:[%s3 + $0x270] sm:$0xff]
          %v3665 = vld [vmem:[%s3 + $0x278] sm:$0xff]
          %v3666 = vld [vmem:[%s3 + $0x280] sm:$0xff]
          %v3667 = vld [vmem:[%s3 + $0x288] sm:$0xff]
          %v3668 = vld [vmem:[%s3 + $0x290] sm:$0xff]
          %v3669 = vld [vmem:[%s3 + $0x298] sm:$0xff]
          %v3670 = vld [vmem:[%s3 + $0x2a0] sm:$0xff]
          %v3671 = vld [vmem:[%s3 + $0x2a8] sm:$0xff]
          %v3672 = vld [vmem:[%s3 + $0x2b0] sm:$0xff]
          %v3673 = vld [vmem:[%s3 + $0x2b8] sm:$0xff]
          %v3674 = vld [vmem:[%s3 + $0x2c0] sm:$0xff]
          %v3675 = vld [vmem:[%s3 + $0x2c8] sm:$0xff]
          %v3676 = vld [vmem:[%s3 + $0x2d0] sm:$0xff]
          %v3677 = vld [vmem:[%s3 + $0x2d8] sm:$0xff]
          %v3678 = vld [vmem:[%s3 + $0x2e0] sm:$0xff]
          %v3679 = vld [vmem:[%s3 + $0x2e8] sm:$0xff]
          %v3680 = vld [vmem:[%s3 + $0x2f0] sm:$0xff]
          %v3681 = vld [vmem:[%s3 + $0x2f8] sm:$0xff]
          %v3682 = vld [vmem:[#allocation8] sm:$0x7]
          %v3684 = vperm.slane %v3682, 0
          %v3685 = vperm.slane %v3682, 1
          %v3686 = vperm.slane %v3682, 2
          %3691 = vst [vmem:[#allocation1] ss:$4 sm:$0xff] %v3585
          %v3692 = vld.sshfl [vmem:[#allocation1] sm:$0xff pattern:$0x73625140]
          %v3693 = vld.sshfl [vmem:[#allocation1 + $0x8] sm:$0xff pattern:$0x73625140]
          %3696 = vmatpush.msra.mxu0 %v3631
          %3697 = vmatpush.msra.mxu0 %v3628
          %3698 = vmatpush.msra.mxu0 %v3625
          %3699 = vmatpush.msra.mxu0 %v3622
          %3700 = vmatpush.msra.mxu0 %v3619
          %3701 = vmatpush.msra.mxu0 %v3616
          %3702 = vmatpush.msra.mxu0 %v3613
          %3703 = vmatpush.msra.mxu0 %v3610
          %3704 = vmatpush.msra.mxu0 %v3607
          %3705 = vmatpush.msra.mxu0 %v3604
          %3706 = vmatpush.msra.mxu0 %v3601
          %3707 = vmatpush.msra.mxu0 %v3598
          %3708 = vmatpush.msra.mxu0 %v3595
          %3709 = vmatpush.msra.mxu0 %v3592
          %3710 = vmatpush.msra.mxu0 %v3589
          %3711 = vmatpush.msra.mxu0 %v3586
          %3712 = vmatmul.f32.gmra.mxu0 %v3692
          %v3713 = vpop.f32.mrf.mxu0
          %v3714 = vadd.f32 %v3684, %v3713
          %3715 = vdwg.mxu0
          %3716 = vmatpush.msra.mxu0 %v3679
          %3717 = vmatpush.msra.mxu0 %v3676
          %3718 = vmatpush.msra.mxu0 %v3673
          %3719 = vmatpush.msra.mxu0 %v3670
          %3720 = vmatpush.msra.mxu0 %v3667
          %3721 = vmatpush.msra.mxu0 %v3664
          %3722 = vmatpush.msra.mxu0 %v3661
          %3723 = vmatpush.msra.mxu0 %v3658
          %3724 = vmatpush.msra.mxu0 %v3655
          %3725 = vmatpush.msra.mxu0 %v3652
          %3726 = vmatpush.msra.mxu0 %v3649
          %3727 = vmatpush.msra.mxu0 %v3646
          %3728 = vmatpush.msra.mxu0 %v3643
          %3729 = vmatpush.msra.mxu0 %v3640
          %3730 = vmatpush.msra.mxu0 %v3637
          %3731 = vmatpush.msra.mxu0 %v3634
          %3732 = vmatmul.f32.gmra.mxu0 %v3693
          %v3733 = vpop.f32.mrf.mxu0
          %v3734 = vadd.f32 %v3714, %v3733
          %3735 = vdwg.mxu0
          %3736 = vmatpush.msra.mxu0 %v3632
          %3737 = vmatpush.msra.mxu0 %v3629
          %3738 = vmatpush.msra.mxu0 %v3626
          %3739 = vmatpush.msra.mxu0 %v3623
          %3740 = vmatpush.msra.mxu0 %v3620
          %3741 = vmatpush.msra.mxu0 %v3617
          %3742 = vmatpush.msra.mxu0 %v3614
          %3743 = vmatpush.msra.mxu0 %v3611
          %3744 = vmatpush.msra.mxu0 %v3608
          %3745 = vmatpush.msra.mxu0 %v3605
          %3746 = vmatpush.msra.mxu0 %v3602
          %3747 = vmatpush.msra.mxu0 %v3599
          %3748 = vmatpush.msra.mxu0 %v3596
          %3749 = vmatpush.msra.mxu0 %v3593
          %3750 = vmatpush.msra.mxu0 %v3590
          %3751 = vmatpush.msra.mxu0 %v3587
          %3752 = vmatmul.f32.gmra.mxu0 %v3692
          %v3753 = vpop.f32.mrf.mxu0
          %v3754 = vadd.f32 %v3685, %v3753
          %3755 = vdwg.mxu0
          %3756 = vmatpush.msra.mxu0 %v3680
          %3757 = vmatpush.msra.mxu0 %v3677
          %3758 = vmatpush.msra.mxu0 %v3674
          %3759 = vmatpush.msra.mxu0 %v3671
          %3760 = vmatpush.msra.mxu0 %v3668
          %3761 = vmatpush.msra.mxu0 %v3665
          %3762 = vmatpush.msra.mxu0 %v3662
          %3763 = vmatpush.msra.mxu0 %v3659
          %3764 = vmatpush.msra.mxu0 %v3656
          %3765 = vmatpush.msra.mxu0 %v3653
          %3766 = vmatpush.msra.mxu0 %v3650
          %3767 = vmatpush.msra.mxu0 %v3647
          %3768 = vmatpush.msra.mxu0 %v3644
          %3769 = vmatpush.msra.mxu0 %v3641
          %3770 = vmatpush.msra.mxu0 %v3638
          %3771 = vmatpush.msra.mxu0 %v3635
          %3772 = vmatmul.f32.gmra.mxu0 %v3693
          %v3773 = vpop.f32.mrf.mxu0
          %v3774 = vadd.f32 %v3754, %v3773
          %3775 = vdwg.mxu0
          %3776 = vmatpush.msra.mxu0 %v3633
          %3777 = vmatpush.msra.mxu0 %v3630
          %3778 = vmatpush.msra.mxu0 %v3627
          %3779 = vmatpush.msra.mxu0 %v3624
          %3780 = vmatpush.msra.mxu0 %v3621
          %3781 = vmatpush.msra.mxu0 %v3618
          %3782 = vmatpush.msra.mxu0 %v3615
          %3783 = vmatpush.msra.mxu0 %v3612
          %3784 = vmatpush.msra.mxu0 %v3609
          %3785 = vmatpush.msra.mxu0 %v3606
          %3786 = vmatpush.msra.mxu0 %v3603
          %3787 = vmatpush.msra.mxu0 %v3600
          %3788 = vmatpush.msra.mxu0 %v3597
          %3789 = vmatpush.msra.mxu0 %v3594
          %3790 = vmatpush.msra.mxu0 %v3591
          %3791 = vmatpush.msra.mxu0 %v3588
          %3792 = vmatmul.f32.gmra.mxu0 %v3692
          %v3793 = vpop.f32.mrf.mxu0
          %v3794 = vadd.f32 %v3686, %v3793
          %3795 = vdwg.mxu0
          %3796 = vmatpush.msra.mxu0 %v3681
          %3797 = vmatpush.msra.mxu0 %v3678
          %3798 = vmatpush.msra.mxu0 %v3675
          %3799 = vmatpush.msra.mxu0 %v3672
          %3800 = vmatpush.msra.mxu0 %v3669
          %3801 = vmatpush.msra.mxu0 %v3666
          %3802 = vmatpush.msra.mxu0 %v3663
          %3803 = vmatpush.msra.mxu0 %v3660
          %3804 = vmatpush.msra.mxu0 %v3657
          %3805 = vmatpush.msra.mxu0 %v3654
          %3806 = vmatpush.msra.mxu0 %v3651
          %3807 = vmatpush.msra.mxu0 %v3648
          %3808 = vmatpush.msra.mxu0 %v3645
          %3809 = vmatpush.msra.mxu0 %v3642
          %3810 = vmatpush.msra.mxu0 %v3639
          %3811 = vmatpush.msra.mxu0 %v3636
          %3812 = vmatmul.f32.gmra.mxu0 %v3693
          %v3813 = vpop.f32.mrf.mxu0
          %v3814 = vadd.f32 %v3794, %v3813
          %3815 = vdwg.mxu0
          %v3819 = vrot.slane %v3774, 6
          %v3820 = vrot.slane %v3814, 4
          %v3821 = vsel %vm3567, %v3734, %v3819
          %vm3822 = vcmask 1043456
          %v3823 = vsel %vm3822, %v3821, %v3820
          %vm3825 = vcmask 1043458
          %vm3826 = vmor %vm3825, %vm3567
          %vm3827 = vcmask 857092
          %vm3828 = vmor %vm3827, %vm3826
          %3829 = vst.msk [vmem:[#allocation9] sm:$0x3f] %vm3828, %v3823
        $region60: #{gocnn_forward.3} parent=39 // pred_fallthru
          _
        // Predicated region
        $region61: #{gocnn_forward.3} parent=39 // pred_check
          %p3830 = pneg %p149
        $region62: #{gocnn_forward.3} parent=39 // pred_check_branch
          %3832 = sbr.rel (%p3830) target = $region64
        $region63: #{gocnn_forward.3} parent=39 // pred_region
          %3834 = vsyncadd [#allocation5], 0
          %s3836 = sshll.u32 [#allocation9], 4
          %s3837 = int_to_ptr.vmem [resolvable:$true] %s3836
          %s3838 = sshll.u32 %s5, 4
          %s3839 = int_to_ptr.hbm [resolvable:$true] %s3838
          %3841 = dma.vmem_to_hbm [thread:$0]  %s3837, 96, %s3839, [#allocation5]
        $region64: #{gocnn_forward.3} parent=39 // pred_fallthru
          _
        // Predicated region
        $region65: #{gocnn_forward.3} parent=39 // pred_check
          %p3842 = pneg %p149
        $region66: #{gocnn_forward.3} parent=39 // pred_check_branch
          %3844 = sbr.rel (%p3842) target = $region68
        $region67: #{gocnn_forward.3} parent=39 // pred_region
          %3846 = dma.done [#allocation5], 96
        $region68: #{gocnn_forward.3} parent=39 // pred_fallthru
          _
      $region40: #{gocnn_forward.3} parent=5 // pred_fallthru
        _
      %p3847 = scmp.le.s32.totalorder 2, %s16
      // Predicated region
      $region69: #{gocnn_forward.3} parent=5 // pred_check
        %p3848 = pneg %p3847
      $region70: #{gocnn_forward.3} parent=5 // pred_check_branch
        %3850 = sbr.rel (%p3848) target = $region72
      $region71: #{gocnn_forward.3} parent=5 // pred_region
        %s3851 = ssub.s32 %s16, 2
      $region72: #{gocnn_forward.3} parent=5 // pred_fallthru
        _
    $region6: #{gocnn_forward.3} parent=1 // loop_footer
      %s20 = sadd.s32 1, %s16
    $region7: #{gocnn_forward.3} parent=1 // loop_footer_branch
      %15 = sbr.rel target = $region3
    $region8: #{gocnn_forward.3} parent=1 // loop_exit
      _
    %3852 = vsyncpa [#allocation4], 1
    %s3853 = scalar_lea.sflag [#allocation4], 1
    %3854 = vsyncpa %s3853, 1
    %3855 = vsyncpa [#allocation7], 1
    %3856 = vsyncpa [#allocation5], 1
    %s3857 = scalar_lea.sflag [#allocation5], 1
    %3858 = vsyncpa %s3857, 1

// kernel: gocnn_forward.2
$region0: #{gocnn_forward.2}
  #allocation0 [shape = 'u32[]', space=smem, size = 0x4, offset = 0x4, fixed_abs, tag = 'smem constant byte address 0x4 - core index']
  #allocation1 [shape = 'u32[72,128]{1,0:T(1,128)}', space=vmem, size = 0x9000, scoped, tag = 'internal scratch']
  #allocation2 [shape = 'f32[488,128]{1,0:T(8,128)}', space=vmem, size = 0x3d000, scoped, tag = 'scratch operand']
  %s0 = inlined_call_operand.vmem [shape: f32[2,441,27], index: 0, kind: input, shape index: {}]
  %s1 = inlined_call_operand.vmem [shape: f32[441,1], index: 1, kind: input, shape index: {}]
  %s2 = inlined_call_operand.hbm [shape: f32[27,128], index: 2, kind: input, shape index: {}]
  %s3 = inlined_call_operand.hbm [shape: f32[1,128], index: 3, kind: input, shape index: {}]
  %s4 = inlined_call_operand.vmem [shape: f32[1152,64], index: 4, kind: input, shape index: {}]
  %s5 = inlined_call_operand.hbm [shape: f32[1,64], index: 5, kind: input, shape index: {}]
  %s6 = inlined_call_operand.vmem [shape: f32[2,364,64], index: 6, kind: output, shape index: {}]
  %s7 = sld [smem:[#allocation0]]
  $region69: #{gocnn_forward.2} parent=0
    _
  %s9 = ssub.s32 1, %s7
  %s10 = scalar_select 0, %s9, %s7
  $region1: #{gocnn_forward.2} parent=0
    #allocation3 [shape = 'u8[16384]{0}', space=vmem, size = 0x4000, scoped, tag = 'input window, operand 2, single buffered']
    #allocation4 [shape = 's32[2]{0}', space=sflag, size = 0x8, scoped, tag = 'scoped memory for gocnn_forward.2']
    #allocation5 [shape = 'u8[512]{0}', space=vmem, size = 0x400, scoped, tag = 'input window, operand 3, single buffered']
    #allocation6 [shape = 's32[1]{0}', space=sflag, size = 0x4, scoped, tag = 'scoped memory for gocnn_forward.2']
    #allocation7 [shape = 'u8[512]{0}', space=vmem, size = 0x400, scoped, tag = 'input window, operand 5, single buffered']
    %11 = vsyncpa [#allocation4], 0
    %12 = vsyncpa [#allocation6], 0
    loop: start=0, step=1, limit=4
    $region2: #{gocnn_forward.2} parent=1 // loop_pre_header
      _
    $region3: #{gocnn_forward.2} parent=1 // loop_header
      %s14 = sphi 0, %s18
      %p15 = scmp.ge.s32.totalorder %s14, 4
      %s24 = sphi 0, %s26
      %s27 = sphi 0, %s24
      %s28 = sphi 0, %s27
      %s44 = sphi 0, %s28
      %s48 = sphi 0, %s48
      %s50 = sphi 0, %s48
      %s51 = sphi 0, %s50
      %s65 = sphi 0, %s51
      %s69 = sphi 0, %s69
      %s71 = sphi 0, %s69
      %s72 = sphi 0, %s71
      %s86 = sphi 0, %s72
      %s90 = sphi 0, %s90
      %s92 = sphi 0, %s90
      %s93 = sphi 0, %s92
      %s107 = sphi 0, %s93
      %s111 = sphi 0, %s111
      %s113 = sphi 0, %s111
      %s114 = sphi 0, %s113
      %s128 = sphi 0, %s114
      %s132 = sphi 0, %s132
      %s134 = sphi 0, %s132
      %s135 = sphi 0, %s134
      %s149 = sphi 0, %s135
      %s155 = sphi 0, %s157
      %s158 = sphi 0, %s155
      %s159 = sphi 0, %s158
      %s175 = sphi 0, %s159
    $region4: #{gocnn_forward.2} parent=1 // loop_header_branch
      %17 = sbr.rel (%p15) target = $region8
    $region5: #{gocnn_forward.2} parent=1 // loop_body
      %s19 = ssub.s32 %s14, 1
      %s20 = ssub.s32 %s14, 2
      %s21 = sadd.s32 %s14, 1
      %s22 = ssub.s32 %s14, %s21
      %p23 = scmp.eq.s32.totalorder %s22, 0
      %s25 = sadd.s32 %s24, 1
      %s26 = scalar_select %p23, %s24, %s25
      %p29 = pneg %p23
      %p30 = scmp.eq.s32.totalorder %s14, 1
      %p31 = por %p29, %p30
      %p32 = scmp.ne.s32.totalorder %s24, %s27
      %p33 = scmp.eq.s32.totalorder %s14, 0
      %p34 = por %p32, %p33
      %p35 = scmp.ne.s32.totalorder %s24, %s27
      %p36 = scmp.eq.s32.totalorder %s19, 1
      %p37 = por %p35, %p36
      %p38 = scmp.ne.s32.totalorder %s27, %s28
      %p39 = scmp.eq.s32.totalorder %s19, 0
      %p40 = por %p38, %p39
      %p41 = scmp.ne.s32.totalorder %s27, %s28
      %p42 = scmp.eq.s32.totalorder %s20, 1
      %p43 = por %p41, %p42
      %p45 = scmp.ne.s32.totalorder %s28, %s44
      %p46 = scmp.eq.s32.totalorder %s20, 0
      %p47 = por %p45, %p46
      %s49 = sadd.s32 %s48, 1
      %p52 = scmp.eq.s32.totalorder %s14, 1
      %p53 = scmp.ne.s32.totalorder %s48, %s50
      %p54 = scmp.eq.s32.totalorder %s14, 0
      %p55 = por %p53, %p54
      %p56 = scmp.ne.s32.totalorder %s48, %s50
      %p57 = scmp.eq.s32.totalorder %s19, 1
      %p58 = por %p56, %p57
      %p59 = scmp.ne.s32.totalorder %s50, %s51
      %p60 = scmp.eq.s32.totalorder %s19, 0
      %p61 = por %p59, %p60
      %p62 = scmp.ne.s32.totalorder %s50, %s51
      %p63 = scmp.eq.s32.totalorder %s20, 1
      %p64 = por %p62, %p63
      %p66 = scmp.ne.s32.totalorder %s51, %s65
      %p67 = scmp.eq.s32.totalorder %s20, 0
      %p68 = por %p66, %p67
      %s70 = sadd.s32 %s69, 1
      %p73 = scmp.eq.s32.totalorder %s14, 1
      %p74 = scmp.ne.s32.totalorder %s69, %s71
      %p75 = scmp.eq.s32.totalorder %s14, 0
      %p76 = por %p74, %p75
      %p77 = scmp.ne.s32.totalorder %s69, %s71
      %p78 = scmp.eq.s32.totalorder %s19, 1
      %p79 = por %p77, %p78
      %p80 = scmp.ne.s32.totalorder %s71, %s72
      %p81 = scmp.eq.s32.totalorder %s19, 0
      %p82 = por %p80, %p81
      %p83 = scmp.ne.s32.totalorder %s71, %s72
      %p84 = scmp.eq.s32.totalorder %s20, 1
      %p85 = por %p83, %p84
      %p87 = scmp.ne.s32.totalorder %s72, %s86
      %p88 = scmp.eq.s32.totalorder %s20, 0
      %p89 = por %p87, %p88
      %s91 = sadd.s32 %s90, 1
      %p94 = scmp.eq.s32.totalorder %s14, 1
      %p95 = scmp.ne.s32.totalorder %s90, %s92
      %p96 = scmp.eq.s32.totalorder %s14, 0
      %p97 = por %p95, %p96
      %p98 = scmp.ne.s32.totalorder %s90, %s92
      %p99 = scmp.eq.s32.totalorder %s19, 1
      %p100 = por %p98, %p99
      %p101 = scmp.ne.s32.totalorder %s92, %s93
      %p102 = scmp.eq.s32.totalorder %s19, 0
      %p103 = por %p101, %p102
      %p104 = scmp.ne.s32.totalorder %s92, %s93
      %p105 = scmp.eq.s32.totalorder %s20, 1
      %p106 = por %p104, %p105
      %p108 = scmp.ne.s32.totalorder %s93, %s107
      %p109 = scmp.eq.s32.totalorder %s20, 0
      %p110 = por %p108, %p109
      %s112 = sadd.s32 %s111, 1
      %p115 = scmp.eq.s32.totalorder %s14, 1
      %p116 = scmp.ne.s32.totalorder %s111, %s113
      %p117 = scmp.eq.s32.totalorder %s14, 0
      %p118 = por %p116, %p117
      %p119 = scmp.ne.s32.totalorder %s111, %s113
      %p120 = scmp.eq.s32.totalorder %s19, 1
      %p121 = por %p119, %p120
      %p122 = scmp.ne.s32.totalorder %s113, %s114
      %p123 = scmp.eq.s32.totalorder %s19, 0
      %p124 = por %p122, %p123
      %p125 = scmp.ne.s32.totalorder %s113, %s114
      %p126 = scmp.eq.s32.totalorder %s20, 1
      %p127 = por %p125, %p126
      %p129 = scmp.ne.s32.totalorder %s114, %s128
      %p130 = scmp.eq.s32.totalorder %s20, 0
      %p131 = por %p129, %p130
      %s133 = sadd.s32 %s132, 1
      %p136 = scmp.eq.s32.totalorder %s14, 1
      %p137 = scmp.ne.s32.totalorder %s132, %s134
      %p138 = scmp.eq.s32.totalorder %s14, 0
      %p139 = por %p137, %p138
      %p140 = scmp.ne.s32.totalorder %s132, %s134
      %p141 = scmp.eq.s32.totalorder %s19, 1
      %p142 = por %p140, %p141
      %p143 = scmp.ne.s32.totalorder %s134, %s135
      %p144 = scmp.eq.s32.totalorder %s19, 0
      %p145 = por %p143, %p144
      %p146 = scmp.ne.s32.totalorder %s134, %s135
      %p147 = scmp.eq.s32.totalorder %s20, 1
      %p148 = por %p146, %p147
      %p150 = scmp.ne.s32.totalorder %s135, %s149
      %p151 = scmp.eq.s32.totalorder %s20, 0
      %p152 = por %p150, %p151
      %s153 = ssub.s32 %s14, %s21
      %p154 = scmp.eq.s32.totalorder %s153, 0
      %s156 = sadd.s32 %s155, 1
      %s157 = scalar_select %p154, %s155, %s156
      %p160 = pneg %p154
      %p161 = scmp.eq.s32.totalorder %s14, 1
      %p162 = por %p160, %p161
      %p163 = scmp.ne.s32.totalorder %s155, %s158
      %p164 = scmp.eq.s32.totalorder %s14, 0
      %p165 = por %p163, %p164
      %p166 = scmp.ne.s32.totalorder %s155, %s158
      %p167 = scmp.eq.s32.totalorder %s19, 1
      %p168 = por %p166, %p167
      %p169 = scmp.ne.s32.totalorder %s158, %s159
      %p170 = scmp.eq.s32.totalorder %s19, 0
      %p171 = por %p169, %p170
      %p172 = scmp.ne.s32.totalorder %s158, %s159
      %p173 = scmp.eq.s32.totalorder %s20, 1
      %p174 = por %p172, %p173
      %p176 = scmp.ne.s32.totalorder %s159, %s175
      %p177 = scmp.eq.s32.totalorder %s20, 0
      %p178 = por %p176, %p177
      %p179 = scmp.le.s32.totalorder 1, %s14
      %p180 = scmp.lt.s32.totalorder %s14, 3
      %p181 = pnand %p179, %p180
      %p182 = pneg %p181
      // Predicated region
      $region9: #{gocnn_forward.2} parent=5 // pred_check
        _
      $region10: #{gocnn_forward.2} parent=5 // pred_check_branch
        %184 = sbr.rel (%p181) target = $region12
      $region11: #{gocnn_forward.2} parent=5 // pred_region
        %s185 = ssub.s32 %s14, 1
        // Predicated region
        $region13: #{gocnn_forward.2} parent=11 // pred_check
          %p186 = pneg %p61
        $region14: #{gocnn_forward.2} parent=11 // pred_check_branch
          %188 = sbr.rel (%p186) target = $region16
        $region15: #{gocnn_forward.2} parent=11 // pred_region
          _
        $region16: #{gocnn_forward.2} parent=11 // pred_fallthru
          _
        // Predicated region
        $region17: #{gocnn_forward.2} parent=11 // pred_check
          %p189 = pneg %p82
        $region18: #{gocnn_forward.2} parent=11 // pred_check_branch
          %191 = sbr.rel (%p189) target = $region20
        $region19: #{gocnn_forward.2} parent=11 // pred_region
          %193 = vsyncadd [#allocation4], 0
          %s194 = sshll.u32 %s2, 4
          %s195 = int_to_ptr.hbm [resolvable:$true] %s194
          %s196 = sshll.u32 [#allocation3], 4
          %s197 = int_to_ptr.vmem [resolvable:$true] %s196
          %202 = dma.hbm_to_vmem [thread:$0]  %s195, 512, %s197, [#allocation4], 128, 128, 8
        $region20: #{gocnn_forward.2} parent=11 // pred_fallthru
          _
        // Predicated region
        $region21: #{gocnn_forward.2} parent=11 // pred_check
          %p203 = pneg %p103
        $region22: #{gocnn_forward.2} parent=11 // pred_check_branch
          %205 = sbr.rel (%p203) target = $region24
        $region23: #{gocnn_forward.2} parent=11 // pred_region
          %207 = vsyncadd [#allocation6], 0
          %s209 = sshll.u32 %s3, 4
          %s210 = int_to_ptr.hbm [resolvable:$true] %s209
          %s211 = sshll.u32 [#allocation5], 4
          %s212 = int_to_ptr.vmem [resolvable:$true] %s211
          %214 = dma.hbm_to_vmem [thread:$0]  %s210, 16, %s212, [#allocation6]
        $region24: #{gocnn_forward.2} parent=11 // pred_fallthru
          _
        // Predicated region
        $region25: #{gocnn_forward.2} parent=11 // pred_check
          %p215 = pneg %p124
        $region26: #{gocnn_forward.2} parent=11 // pred_check_branch
          %217 = sbr.rel (%p215) target = $region28
        $region27: #{gocnn_forward.2} parent=11 // pred_region
          _
        $region28: #{gocnn_forward.2} parent=11 // pred_fallthru
          _
        // Predicated region
        $region29: #{gocnn_forward.2} parent=11 // pred_check
          %p218 = pneg %p145
        $region30: #{gocnn_forward.2} parent=11 // pred_check_branch
          %220 = sbr.rel (%p218) target = $region32
        $region31: #{gocnn_forward.2} parent=11 // pred_region
          %222 = vsyncadd [#allocation6], 0
          %s224 = sshll.u32 %s5, 4
          %s225 = int_to_ptr.hbm [resolvable:$true] %s224
          %s226 = sshll.u32 [#allocation7], 4
          %s227 = int_to_ptr.vmem [resolvable:$true] %s226
          %229 = dma.hbm_to_vmem [thread:$0]  %s225, 16, %s227, [#allocation6]
        $region32: #{gocnn_forward.2} parent=11 // pred_fallthru
          _
      $region12: #{gocnn_forward.2} parent=5 // pred_fallthru
        _
      %p230 = scmp.lt.s32.totalorder %s14, 2
      // Predicated region
      $region33: #{gocnn_forward.2} parent=5 // pred_check
        %p231 = pneg %p230
      $region34: #{gocnn_forward.2} parent=5 // pred_check_branch
        %233 = sbr.rel (%p231) target = $region36
      $region35: #{gocnn_forward.2} parent=5 // pred_region
        // Predicated region
        $region37: #{gocnn_forward.2} parent=35 // pred_check
          %p234 = pneg %p34
        $region38: #{gocnn_forward.2} parent=35 // pred_check_branch
          %236 = sbr.rel (%p234) target = $region40
        $region39: #{gocnn_forward.2} parent=35 // pred_region
          %p237 = scmp.lt.s32.totalorder %s14, 1
          %s238 = scalar_select %p237, %s14, 1
          %s239 = smul.addr %s238, 56
          %s240 = smul.addr %s239, 8
          %s241 = scalar_lea.vmem %s0, %s240
        $region40: #{gocnn_forward.2} parent=35 // pred_fallthru
          _
      $region36: #{gocnn_forward.2} parent=5 // pred_fallthru
        _
      %p242 = scmp.le.s32.totalorder 1, %s14
      %p243 = scmp.lt.s32.totalorder %s14, 3
      %p244 = pnand %p242, %p243
      %p245 = pneg %p244
      // Predicated region
      $region41: #{gocnn_forward.2} parent=5 // pred_check
        _
      $region42: #{gocnn_forward.2} parent=5 // pred_check_branch
        %247 = sbr.rel (%p244) target = $region44
      $region43: #{gocnn_forward.2} parent=5 // pred_region
        %s248 = ssub.s32 %s14, 1
        // Predicated region
        $region45: #{gocnn_forward.2} parent=43 // pred_check
          %p249 = pneg %p82
        $region46: #{gocnn_forward.2} parent=43 // pred_check_branch
          %251 = sbr.rel (%p249) target = $region48
        $region47: #{gocnn_forward.2} parent=43 // pred_region
          %253 = dma.done [#allocation4], 512
        $region48: #{gocnn_forward.2} parent=43 // pred_fallthru
          _
        // Predicated region
        $region49: #{gocnn_forward.2} parent=43 // pred_check
          %p254 = pneg %p103
        $region50: #{gocnn_forward.2} parent=43 // pred_check_branch
          %256 = sbr.rel (%p254) target = $region52
        $region51: #{gocnn_forward.2} parent=43 // pred_region
          %258 = dma.done [#allocation6], 16
        $region52: #{gocnn_forward.2} parent=43 // pred_fallthru
          _
        // Predicated region
        $region53: #{gocnn_forward.2} parent=43 // pred_check
          %p259 = pneg %p145
        $region54: #{gocnn_forward.2} parent=43 // pred_check_branch
          %261 = sbr.rel (%p259) target = $region56
        $region55: #{gocnn_forward.2} parent=43 // pred_region
          %263 = dma.done [#allocation6], 16
        $region56: #{gocnn_forward.2} parent=43 // pred_fallthru
          _
        %p264 = scmp.lt.s32.totalorder %s19, 1
        %s265 = scalar_select %p264, %s19, 1
        %s266 = smul.addr %s265, 56
        %s267 = smul.addr %s266, 8
        %s268 = scalar_lea.vmem %s0, %s267
        %p269 = pneg %p40
        %p270 = pneg %p37
        %p271 = pneg %p61
        %p272 = pneg %p58
        %p273 = pneg %p82
        %p274 = pneg %p79
        %p275 = pneg %p103
        %p276 = pneg %p100
        %p277 = pneg %p124
        %p278 = pneg %p121
        %p279 = pneg %p145
        %p280 = pneg %p142
        %p281 = pneg %p171
        %p282 = pneg %p168
        %p283 = scmp.lt.s32.totalorder %s19, 1
        %s284 = scalar_select %p283, %s19, 1
        %s285 = smul.addr %s284, 46
        %s286 = smul.addr %s285, 8
        %s287 = scalar_lea.vmem %s6, %s286
        %p288 = scmp.lt.s32.totalorder %s19, 1
        %s289 = scalar_select %p288, %s19, 1
        %s290 = smul.addr %s289, 56
        %s291 = smul.addr %s290, 8
        %s292 = scalar_lea.vmem %s0, %s291
        %p293 = scmp.lt.s32.totalorder %s19, 1
        %s294 = scalar_select %p293, %s19, 1
        %s295 = smul.addr %s294, 46
        %s296 = smul.addr %s295, 8
        %s297 = scalar_lea.vmem %s6, %s296
        %v298 = vld [vmem:[%s292] sm:$0xff]
        %v299 = vld [vmem:[%s292 + $0x8] sm:$0xff]
        %v300 = vld [vmem:[%s292 + $0x10] sm:$0xff]
        %v301 = vld [vmem:[%s292 + $0x18] sm:$0xff]
        %v302 = vld [vmem:[%s292 + $0x20] sm:$0xff]
        %v303 = vld [vmem:[%s292 + $0x28] sm:$0xff]
        %v304 = vld [vmem:[%s292 + $0x30] sm:$0xff]
        %v305 = vld [vmem:[%s292 + $0x38] sm:$0xff]
        %v306 = vld [vmem:[%s292 + $0x40] sm:$0xff]
        %v307 = vld [vmem:[%s292 + $0x48] sm:$0xff]
        %v308 = vld [vmem:[%s292 + $0x50] sm:$0xff]
        %v309 = vld [vmem:[%s292 + $0x58] sm:$0xff]
        %v310 = vld [vmem:[%s292 + $0x60] sm:$0xff]
        %v311 = vld [vmem:[%s292 + $0x68] sm:$0xff]
        %v312 = vld [vmem:[%s292 + $0x70] sm:$0xff]
        %v313 = vld [vmem:[%s292 + $0x78] sm:$0xff]
        %v314 = vld [vmem:[%s292 + $0x80] sm:$0xff]
        %v315 = vld [vmem:[%s292 + $0x88] sm:$0xff]
        %v316 = vld [vmem:[%s292 + $0x90] sm:$0xff]
        %v317 = vld [vmem:[%s292 + $0x98] sm:$0xff]
        %v318 = vld [vmem:[%s292 + $0xa0] sm:$0xff]
        %v319 = vld [vmem:[%s292 + $0xa8] sm:$0xff]
        %v320 = vld [vmem:[%s292 + $0xb0] sm:$0xff]
        %v321 = vld [vmem:[%s292 + $0xb8] sm:$0xff]
        %v322 = vld [vmem:[%s292 + $0xc0] sm:$0xff]
        %v323 = vld [vmem:[%s292 + $0xc8] sm:$0xff]
        %v324 = vld [vmem:[%s292 + $0xd0] sm:$0xff]
        %v325 = vld [vmem:[%s292 + $0xd8] sm:$0xff]
        %v326 = vld [vmem:[%s292 + $0xe0] sm:$0xff]
        %v327 = vld [vmem:[%s292 + $0xe8] sm:$0xff]
        %v328 = vld [vmem:[%s292 + $0xf0] sm:$0xff]
        %v329 = vld [vmem:[%s292 + $0xf8] sm:$0xff]
        %v330 = vld [vmem:[%s292 + $0x100] sm:$0xff]
        %v331 = vld [vmem:[%s292 + $0x108] sm:$0xff]
        %v332 = vld [vmem:[%s292 + $0x110] sm:$0xff]
        %v333 = vld [vmem:[%s292 + $0x118] sm:$0xff]
        %v334 = vld [vmem:[%s292 + $0x120] sm:$0xff]
        %v335 = vld [vmem:[%s292 + $0x128] sm:$0xff]
        %v336 = vld [vmem:[%s292 + $0x130] sm:$0xff]
        %v337 = vld [vmem:[%s292 + $0x138] sm:$0xff]
        %v338 = vld [vmem:[%s292 + $0x140] sm:$0xff]
        %v339 = vld [vmem:[%s292 + $0x148] sm:$0xff]
        %v340 = vld [vmem:[%s292 + $0x150] sm:$0xff]
        %v341 = vld [vmem:[%s292 + $0x158] sm:$0xff]
        %v342 = vld [vmem:[%s292 + $0x160] sm:$0xff]
        %v343 = vld [vmem:[%s292 + $0x168] sm:$0xff]
        %v344 = vld [vmem:[%s292 + $0x170] sm:$0xff]
        %v345 = vld [vmem:[%s292 + $0x178] sm:$0xff]
        %v346 = vld [vmem:[%s292 + $0x180] sm:$0xff]
        %v347 = vld [vmem:[%s292 + $0x188] sm:$0xff]
        %v348 = vld [vmem:[%s292 + $0x190] sm:$0xff]
        %v349 = vld [vmem:[%s292 + $0x198] sm:$0xff]
        %v350 = vld [vmem:[%s292 + $0x1a0] sm:$0xff]
        %v351 = vld [vmem:[%s292 + $0x1a8] sm:$0xff]
        %v352 = vld [vmem:[%s292 + $0x1b0] sm:$0xff]
        %v353 = vld [vmem:[%s292 + $0x1b8] sm:$0x1]
        %v354 = vld [vmem:[#allocation3] sm:$0xff]
        %v355 = vld [vmem:[#allocation3 + $0x8] sm:$0xff]
        %v356 = vld [vmem:[#allocation3 + $0x10] sm:$0xff]
        %v357 = vld [vmem:[#allocation3 + $0x18] sm:$0x7]
        %v358 = vld [vmem:[#allocation5] sm:$0x1]
        %v360 = vperm.slane %v358, 0
        %vm362 = vcmask 220160
        %v364 = vsel %vm362, %v298, 0
        %v367 = vsel %vm362, %v299, 0
        %v370 = vsel %vm362, %v300, 0
        %v373 = vsel %vm362, %v301, 0
        %v376 = vsel %vm362, %v302, 0
        %v379 = vsel %vm362, %v303, 0
        %v382 = vsel %vm362, %v304, 0
        %v385 = vsel %vm362, %v305, 0
        %v388 = vsel %vm362, %v306, 0
        %v391 = vsel %vm362, %v307, 0
        %v394 = vsel %vm362, %v308, 0
        %v397 = vsel %vm362, %v309, 0
        %v400 = vsel %vm362, %v310, 0
        %v403 = vsel %vm362, %v311, 0
        %v406 = vsel %vm362, %v312, 0
        %v409 = vsel %vm362, %v313, 0
        %v412 = vsel %vm362, %v314, 0
        %v415 = vsel %vm362, %v315, 0
        %v418 = vsel %vm362, %v316, 0
        %v421 = vsel %vm362, %v317, 0
        %v424 = vsel %vm362, %v318, 0
        %v427 = vsel %vm362, %v319, 0
        %v430 = vsel %vm362, %v320, 0
        %v433 = vsel %vm362, %v321, 0
        %v436 = vsel %vm362, %v322, 0
        %v439 = vsel %vm362, %v323, 0
        %v442 = vsel %vm362, %v324, 0
        %v445 = vsel %vm362, %v325, 0
        %v448 = vsel %vm362, %v326, 0
        %v451 = vsel %vm362, %v327, 0
        %v454 = vsel %vm362, %v328, 0
        %v457 = vsel %vm362, %v329, 0
        %v460 = vsel %vm362, %v330, 0
        %v463 = vsel %vm362, %v331, 0
        %v466 = vsel %vm362, %v332, 0
        %v469 = vsel %vm362, %v333, 0
        %v472 = vsel %vm362, %v334, 0
        %v475 = vsel %vm362, %v335, 0
        %v478 = vsel %vm362, %v336, 0
        %v481 = vsel %vm362, %v337, 0
        %v484 = vsel %vm362, %v338, 0
        %v487 = vsel %vm362, %v339, 0
        %v490 = vsel %vm362, %v340, 0
        %v493 = vsel %vm362, %v341, 0
        %v496 = vsel %vm362, %v342, 0
        %v499 = vsel %vm362, %v343, 0
        %v502 = vsel %vm362, %v344, 0
        %v505 = vsel %vm362, %v345, 0
        %v508 = vsel %vm362, %v346, 0
        %v511 = vsel %vm362, %v347, 0
        %v514 = vsel %vm362, %v348, 0
        %v517 = vsel %vm362, %v349, 0
        %v520 = vsel %vm362, %v350, 0
        %v523 = vsel %vm362, %v351, 0
        %v526 = vsel %vm362, %v352, 0
        %v529 = vsel %vm362, %v353, 0
        %vm531 = vcmask 1042432
        %v533 = vsel %vm531, %v357, 0
        %535 = vmatpush.msra.mxu0 0.0
        %536 = vmatpush.msra.mxu0 0.0
        %537 = vmatpush.msra.mxu0 0.0
        %538 = vmatpush.msra.mxu0 0.0
        %539 = vmatpush.msra.mxu0 0.0
        %540 = vmatpush.msra.mxu0 0.0
        %541 = vmatpush.msra.mxu0 0.0
        %542 = vmatpush.msra.mxu0 0.0
        %543 = vmatpush.msra.mxu0 0.0
        %544 = vmatpush.msra.mxu0 0.0
        %545 = vmatpush.msra.mxu0 0.0
        %546 = vmatpush.msra.mxu0 0.0
        %547 = vmatpush.msra.mxu0 %v533
        %548 = vmatpush.msra.mxu0 %v356
        %549 = vmatpush.msra.mxu0 %v355
        %550 = vmatpush.msra.mxu0 %v354
        %551 = vmatmul.f32.gmra.mxu0 %v364
        %v552 = vpop.f32.mrf.mxu0
        %v553 = vadd.f32 %v360, %v552
        %554 = vmatmul.f32.gmra.mxu0 %v367
        %v555 = vpop.f32.mrf.mxu0
        %v556 = vadd.f32 %v360, %v555
        %557 = vmatmul.f32.gmra.mxu0 %v370
        %v558 = vpop.f32.mrf.mxu0
        %v559 = vadd.f32 %v360, %v558
        %560 = vmatmul.f32.gmra.mxu0 %v373
        %v561 = vpop.f32.mrf.mxu0
        %v562 = vadd.f32 %v360, %v561
        %563 = vmatmul.f32.gmra.mxu0 %v376
        %v564 = vpop.f32.mrf.mxu0
        %v565 = vadd.f32 %v360, %v564
        %566 = vmatmul.f32.gmra.mxu0 %v379
        %v567 = vpop.f32.mrf.mxu0
        %v568 = vadd.f32 %v360, %v567
        %569 = vmatmul.f32.gmra.mxu0 %v382
        %v570 = vpop.f32.mrf.mxu0
        %v571 = vadd.f32 %v360, %v570
        %572 = vmatmul.f32.gmra.mxu0 %v385
        %v573 = vpop.f32.mrf.mxu0
        %v574 = vadd.f32 %v360, %v573
        %575 = vmatmul.f32.gmra.mxu0 %v388
        %v576 = vpop.f32.mrf.mxu0
        %v577 = vadd.f32 %v360, %v576
        %578 = vmatmul.f32.gmra.mxu0 %v391
        %v579 = vpop.f32.mrf.mxu0
        %v580 = vadd.f32 %v360, %v579
        %581 = vmatmul.f32.gmra.mxu0 %v394
        %v582 = vpop.f32.mrf.mxu0
        %v583 = vadd.f32 %v360, %v582
        %584 = vmatmul.f32.gmra.mxu0 %v397
        %v585 = vpop.f32.mrf.mxu0
        %v586 = vadd.f32 %v360, %v585
        %587 = vmatmul.f32.gmra.mxu0 %v400
        %v588 = vpop.f32.mrf.mxu0
        %v589 = vadd.f32 %v360, %v588
        %590 = vmatmul.f32.gmra.mxu0 %v403
        %v591 = vpop.f32.mrf.mxu0
        %v592 = vadd.f32 %v360, %v591
        %593 = vmatmul.f32.gmra.mxu0 %v406
        %v594 = vpop.f32.mrf.mxu0
        %v595 = vadd.f32 %v360, %v594
        %596 = vmatmul.f32.gmra.mxu0 %v409
        %v597 = vpop.f32.mrf.mxu0
        %v598 = vadd.f32 %v360, %v597
        %599 = vmatmul.f32.gmra.mxu0 %v412
        %v600 = vpop.f32.mrf.mxu0
        %v601 = vadd.f32 %v360, %v600
        %602 = vmatmul.f32.gmra.mxu0 %v415
        %v603 = vpop.f32.mrf.mxu0
        %v604 = vadd.f32 %v360, %v603
        %605 = vmatmul.f32.gmra.mxu0 %v418
        %v606 = vpop.f32.mrf.mxu0
        %v607 = vadd.f32 %v360, %v606
        %608 = vmatmul.f32.gmra.mxu0 %v421
        %v609 = vpop.f32.mrf.mxu0
        %v610 = vadd.f32 %v360, %v609
        %611 = vmatmul.f32.gmra.mxu0 %v424
        %v612 = vpop.f32.mrf.mxu0
        %v613 = vadd.f32 %v360, %v612
        %614 = vmatmul.f32.gmra.mxu0 %v427
        %v615 = vpop.f32.mrf.mxu0
        %v616 = vadd.f32 %v360, %v615
        %617 = vmatmul.f32.gmra.mxu0 %v430
        %v618 = vpop.f32.mrf.mxu0
        %v619 = vadd.f32 %v360, %v618
        %620 = vmatmul.f32.gmra.mxu0 %v433
        %v621 = vpop.f32.mrf.mxu0
        %v622 = vadd.f32 %v360, %v621
        %623 = vmatmul.f32.gmra.mxu0 %v436
        %v624 = vpop.f32.mrf.mxu0
        %v625 = vadd.f32 %v360, %v624
        %626 = vmatmul.f32.gmra.mxu0 %v439
        %v627 = vpop.f32.mrf.mxu0
        %v628 = vadd.f32 %v360, %v627
        %629 = vmatmul.f32.gmra.mxu0 %v442
        %v630 = vpop.f32.mrf.mxu0
        %v631 = vadd.f32 %v360, %v630
        %632 = vmatmul.f32.gmra.mxu0 %v445
        %v633 = vpop.f32.mrf.mxu0
        %v634 = vadd.f32 %v360, %v633
        %635 = vmatmul.f32.gmra.mxu0 %v448
        %v636 = vpop.f32.mrf.mxu0
        %v637 = vadd.f32 %v360, %v636
        %638 = vmatmul.f32.gmra.mxu0 %v451
        %v639 = vpop.f32.mrf.mxu0
        %v640 = vadd.f32 %v360, %v639
        %641 = vmatmul.f32.gmra.mxu0 %v454
        %v642 = vpop.f32.mrf.mxu0
        %v643 = vadd.f32 %v360, %v642
        %644 = vmatmul.f32.gmra.mxu0 %v457
        %v645 = vpop.f32.mrf.mxu0
        %v646 = vadd.f32 %v360, %v645
        %647 = vmatmul.f32.gmra.mxu0 %v460
        %v648 = vpop.f32.mrf.mxu0
        %v649 = vadd.f32 %v360, %v648
        %650 = vmatmul.f32.gmra.mxu0 %v463
        %v651 = vpop.f32.mrf.mxu0
        %v652 = vadd.f32 %v360, %v651
        %653 = vmatmul.f32.gmra.mxu0 %v466
        %v654 = vpop.f32.mrf.mxu0
        %v655 = vadd.f32 %v360, %v654
        %656 = vmatmul.f32.gmra.mxu0 %v469
        %v657 = vpop.f32.mrf.mxu0
        %v658 = vadd.f32 %v360, %v657
        %659 = vmatmul.f32.gmra.mxu0 %v472
        %v660 = vpop.f32.mrf.mxu0
        %v661 = vadd.f32 %v360, %v660
        %662 = vmatmul.f32.gmra.mxu0 %v475
        %v663 = vpop.f32.mrf.mxu0
        %v664 = vadd.f32 %v360, %v663
        %665 = vmatmul.f32.gmra.mxu0 %v478
        %v666 = vpop.f32.mrf.mxu0
        %v667 = vadd.f32 %v360, %v666
        %668 = vmatmul.f32.gmra.mxu0 %v481
        %v669 = vpop.f32.mrf.mxu0
        %v670 = vadd.f32 %v360, %v669
        %671 = vmatmul.f32.gmra.mxu0 %v484
        %v672 = vpop.f32.mrf.mxu0
        %v673 = vadd.f32 %v360, %v672
        %674 = vmatmul.f32.gmra.mxu0 %v487
        %v675 = vpop.f32.mrf.mxu0
        %v676 = vadd.f32 %v360, %v675
        %677 = vmatmul.f32.gmra.mxu0 %v490
        %v678 = vpop.f32.mrf.mxu0
        %v679 = vadd.f32 %v360, %v678
        %680 = vmatmul.f32.gmra.mxu0 %v493
        %v681 = vpop.f32.mrf.mxu0
        %v682 = vadd.f32 %v360, %v681
        %683 = vmatmul.f32.gmra.mxu0 %v496
        %v684 = vpop.f32.mrf.mxu0
        %v685 = vadd.f32 %v360, %v684
        %686 = vmatmul.f32.gmra.mxu0 %v499
        %v687 = vpop.f32.mrf.mxu0
        %v688 = vadd.f32 %v360, %v687
        %689 = vmatmul.f32.gmra.mxu0 %v502
        %v690 = vpop.f32.mrf.mxu0
        %v691 = vadd.f32 %v360, %v690
        %692 = vmatmul.f32.gmra.mxu0 %v505
        %v693 = vpop.f32.mrf.mxu0
        %v694 = vadd.f32 %v360, %v693
        %695 = vmatmul.f32.gmra.mxu0 %v508
        %v696 = vpop.f32.mrf.mxu0
        %v697 = vadd.f32 %v360, %v696
        %698 = vmatmul.f32.gmra.mxu0 %v511
        %v699 = vpop.f32.mrf.mxu0
        %v700 = vadd.f32 %v360, %v699
        %701 = vmatmul.f32.gmra.mxu0 %v514
        %v702 = vpop.f32.mrf.mxu0
        %v703 = vadd.f32 %v360, %v702
        %704 = vmatmul.f32.gmra.mxu0 %v517
        %v705 = vpop.f32.mrf.mxu0
        %v706 = vadd.f32 %v360, %v705
        %707 = vmatmul.f32.gmra.mxu0 %v520
        %v708 = vpop.f32.mrf.mxu0
        %v709 = vadd.f32 %v360, %v708
        %710 = vmatmul.f32.gmra.mxu0 %v523
        %v711 = vpop.f32.mrf.mxu0
        %v712 = vadd.f32 %v360, %v711
        %713 = vmatmul.f32.gmra.mxu0 %v526
        %v714 = vpop.f32.mrf.mxu0
        %v715 = vadd.f32 %v360, %v714
        %716 = vmatmul.f32.gmra.mxu0 %v529
        %v717 = vpop.f32.mrf.mxu0
        %v718 = vadd.f32 %v360, %v717
        %719 = vdwg.mxu0
        %v720 = vmax.f32 %v553, 0.0
        %v721 = vmax.f32 %v556, 0.0
        %v722 = vmax.f32 %v559, 0.0
        %v723 = vmax.f32 %v562, 0.0
        %v724 = vmax.f32 %v565, 0.0
        %v725 = vmax.f32 %v568, 0.0
        %v726 = vmax.f32 %v571, 0.0
        %v727 = vmax.f32 %v574, 0.0
        %v728 = vmax.f32 %v577, 0.0
        %v729 = vmax.f32 %v580, 0.0
        %v730 = vmax.f32 %v583, 0.0
        %v731 = vmax.f32 %v586, 0.0
        %v732 = vmax.f32 %v589, 0.0
        %v733 = vmax.f32 %v592, 0.0
        %v734 = vmax.f32 %v595, 0.0
        %v735 = vmax.f32 %v598, 0.0
        %v736 = vmax.f32 %v601, 0.0
        %v737 = vmax.f32 %v604, 0.0
        %v738 = vmax.f32 %v607, 0.0
        %v739 = vmax.f32 %v610, 0.0
        %v740 = vmax.f32 %v613, 0.0
        %v741 = vmax.f32 %v616, 0.0
        %v742 = vmax.f32 %v619, 0.0
        %v743 = vmax.f32 %v622, 0.0
        %v744 = vmax.f32 %v625, 0.0
        %v745 = vmax.f32 %v628, 0.0
        %v746 = vmax.f32 %v631, 0.0
        %v747 = vmax.f32 %v634, 0.0
        %v748 = vmax.f32 %v637, 0.0
        %v749 = vmax.f32 %v640, 0.0
        %v750 = vmax.f32 %v643, 0.0
        %v751 = vmax.f32 %v646, 0.0
        %v752 = vmax.f32 %v649, 0.0
        %v753 = vmax.f32 %v652, 0.0
        %v754 = vmax.f32 %v655, 0.0
        %v755 = vmax.f32 %v658, 0.0
        %v756 = vmax.f32 %v661, 0.0
        %v757 = vmax.f32 %v664, 0.0
        %v758 = vmax.f32 %v667, 0.0
        %v759 = vmax.f32 %v670, 0.0
        %v760 = vmax.f32 %v673, 0.0
        %v761 = vmax.f32 %v676, 0.0
        %v762 = vmax.f32 %v679, 0.0
        %v763 = vmax.f32 %v682, 0.0
        %v764 = vmax.f32 %v685, 0.0
        %v765 = vmax.f32 %v688, 0.0
        %v766 = vmax.f32 %v691, 0.0
        %v767 = vmax.f32 %v694, 0.0
        %v768 = vmax.f32 %v697, 0.0
        %v769 = vmax.f32 %v700, 0.0
        %v770 = vmax.f32 %v703, 0.0
        %v771 = vmax.f32 %v706, 0.0
        %v772 = vmax.f32 %v709, 0.0
        %v773 = vmax.f32 %v712, 0.0
        %v774 = vmax.f32 %v715, 0.0
        %v775 = vmax.f32 %v718, 0.0
        %v776 = vld [vmem:[%s1] sm:$0xff]
        %v777 = vld [vmem:[%s1 + $0x8] sm:$0xff]
        %v778 = vld [vmem:[%s1 + $0x10] sm:$0xff]
        %v779 = vld [vmem:[%s1 + $0x18] sm:$0xff]
        %v780 = vld [vmem:[%s1 + $0x20] sm:$0xff]
        %v781 = vld [vmem:[%s1 + $0x28] sm:$0xff]
        %v782 = vld [vmem:[%s1 + $0x30] sm:$0xff]
        %v783 = vld [vmem:[%s1 + $0x38] sm:$0xff]
        %v784 = vld [vmem:[%s1 + $0x40] sm:$0xff]
        %v785 = vld [vmem:[%s1 + $0x48] sm:$0xff]
        %v786 = vld [vmem:[%s1 + $0x50] sm:$0xff]
        %v787 = vld [vmem:[%s1 + $0x58] sm:$0xff]
        %v788 = vld [vmem:[%s1 + $0x60] sm:$0xff]
        %v789 = vld [vmem:[%s1 + $0x68] sm:$0xff]
        %v790 = vld [vmem:[%s1 + $0x70] sm:$0xff]
        %v791 = vld [vmem:[%s1 + $0x78] sm:$0xff]
        %v792 = vld [vmem:[%s1 + $0x80] sm:$0xff]
        %v793 = vld [vmem:[%s1 + $0x88] sm:$0xff]
        %v794 = vld [vmem:[%s1 + $0x90] sm:$0xff]
        %v795 = vld [vmem:[%s1 + $0x98] sm:$0xff]
        %v796 = vld [vmem:[%s1 + $0xa0] sm:$0xff]
        %v797 = vld [vmem:[%s1 + $0xa8] sm:$0xff]
        %v798 = vld [vmem:[%s1 + $0xb0] sm:$0xff]
        %v799 = vld [vmem:[%s1 + $0xb8] sm:$0xff]
        %v800 = vld [vmem:[%s1 + $0xc0] sm:$0xff]
        %v801 = vld [vmem:[%s1 + $0xc8] sm:$0xff]
        %v802 = vld [vmem:[%s1 + $0xd0] sm:$0xff]
        %v803 = vld [vmem:[%s1 + $0xd8] sm:$0xff]
        %v804 = vld [vmem:[%s1 + $0xe0] sm:$0xff]
        %v805 = vld [vmem:[%s1 + $0xe8] sm:$0xff]
        %v806 = vld [vmem:[%s1 + $0xf0] sm:$0xff]
        %v807 = vld [vmem:[%s1 + $0xf8] sm:$0xff]
        %v808 = vld [vmem:[%s1 + $0x100] sm:$0xff]
        %v809 = vld [vmem:[%s1 + $0x108] sm:$0xff]
        %v810 = vld [vmem:[%s1 + $0x110] sm:$0xff]
        %v811 = vld [vmem:[%s1 + $0x118] sm:$0xff]
        %v812 = vld [vmem:[%s1 + $0x120] sm:$0xff]
        %v813 = vld [vmem:[%s1 + $0x128] sm:$0xff]
        %v814 = vld [vmem:[%s1 + $0x130] sm:$0xff]
        %v815 = vld [vmem:[%s1 + $0x138] sm:$0xff]
        %v816 = vld [vmem:[%s1 + $0x140] sm:$0xff]
        %v817 = vld [vmem:[%s1 + $0x148] sm:$0xff]
        %v818 = vld [vmem:[%s1 + $0x150] sm:$0xff]
        %v819 = vld [vmem:[%s1 + $0x158] sm:$0xff]
        %v820 = vld [vmem:[%s1 + $0x160] sm:$0xff]
        %v821 = vld [vmem:[%s1 + $0x168] sm:$0xff]
        %v822 = vld [vmem:[%s1 + $0x170] sm:$0xff]
        %v823 = vld [vmem:[%s1 + $0x178] sm:$0xff]
        %v824 = vld [vmem:[%s1 + $0x180] sm:$0xff]
        %v825 = vld [vmem:[%s1 + $0x188] sm:$0xff]
        %v826 = vld [vmem:[%s1 + $0x190] sm:$0xff]
        %v827 = vld [vmem:[%s1 + $0x198] sm:$0xff]
        %v828 = vld [vmem:[%s1 + $0x1a0] sm:$0xff]
        %v829 = vld [vmem:[%s1 + $0x1a8] sm:$0xff]
        %v830 = vld [vmem:[%s1 + $0x1b0] sm:$0xff]
        %v831 = vld [vmem:[%s1 + $0x1b8] sm:$0x1]
        %833 = vset.pattern.permute.xlu0 0
        %834 = vperm.xlu0 %833, %v776
        %v835 = vpop.permute.xlu0 %834
        %838 = vset.pattern.permute.xlu0 0
        %839 = vperm.xlu0 %838, %v777
        %v840 = vpop.permute.xlu0 %839
        %843 = vset.pattern.permute.xlu0 0
        %844 = vperm.xlu0 %843, %v778
        %v845 = vpop.permute.xlu0 %844
        %848 = vset.pattern.permute.xlu0 0
        %849 = vperm.xlu0 %848, %v779
        %v850 = vpop.permute.xlu0 %849
        %853 = vset.pattern.permute.xlu0 0
        %854 = vperm.xlu0 %853, %v780
        %v855 = vpop.permute.xlu0 %854
        %858 = vset.pattern.permute.xlu0 0
        %859 = vperm.xlu0 %858, %v781
        %v860 = vpop.permute.xlu0 %859
        %863 = vset.pattern.permute.xlu0 0
        %864 = vperm.xlu0 %863, %v782
        %v865 = vpop.permute.xlu0 %864
        %868 = vset.pattern.permute.xlu0 0
        %869 = vperm.xlu0 %868, %v783
        %v870 = vpop.permute.xlu0 %869
        %873 = vset.pattern.permute.xlu0 0
        %874 = vperm.xlu0 %873, %v784
        %v875 = vpop.permute.xlu0 %874
        %878 = vset.pattern.permute.xlu0 0
        %879 = vperm.xlu0 %878, %v785
        %v880 = vpop.permute.xlu0 %879
        %883 = vset.pattern.permute.xlu0 0
        %884 = vperm.xlu0 %883, %v786
        %v885 = vpop.permute.xlu0 %884
        %888 = vset.pattern.permute.xlu0 0
        %889 = vperm.xlu0 %888, %v787
        %v890 = vpop.permute.xlu0 %889
        %893 = vset.pattern.permute.xlu0 0
        %894 = vperm.xlu0 %893, %v788
        %v895 = vpop.permute.xlu0 %894
        %898 = vset.pattern.permute.xlu0 0
        %899 = vperm.xlu0 %898, %v789
        %v900 = vpop.permute.xlu0 %899
        %903 = vset.pattern.permute.xlu0 0
        %904 = vperm.xlu0 %903, %v790
        %v905 = vpop.permute.xlu0 %904
        %908 = vset.pattern.permute.xlu0 0
        %909 = vperm.xlu0 %908, %v791
        %v910 = vpop.permute.xlu0 %909
        %913 = vset.pattern.permute.xlu0 0
        %914 = vperm.xlu0 %913, %v792
        %v915 = vpop.permute.xlu0 %914
        %918 = vset.pattern.permute.xlu0 0
        %919 = vperm.xlu0 %918, %v793
        %v920 = vpop.permute.xlu0 %919
        %923 = vset.pattern.permute.xlu0 0
        %924 = vperm.xlu0 %923, %v794
        %v925 = vpop.permute.xlu0 %924
        %928 = vset.pattern.permute.xlu0 0
        %929 = vperm.xlu0 %928, %v795
        %v930 = vpop.permute.xlu0 %929
        %933 = vset.pattern.permute.xlu0 0
        %934 = vperm.xlu0 %933, %v796
        %v935 = vpop.permute.xlu0 %934
        %938 = vset.pattern.permute.xlu0 0
        %939 = vperm.xlu0 %938, %v797
        %v940 = vpop.permute.xlu0 %939
        %943 = vset.pattern.permute.xlu0 0
        %944 = vperm.xlu0 %943, %v798
        %v945 = vpop.permute.xlu0 %944
        %948 = vset.pattern.permute.xlu0 0
        %949 = vperm.xlu0 %948, %v799
        %v950 = vpop.permute.xlu0 %949
        %953 = vset.pattern.permute.xlu0 0
        %954 = vperm.xlu0 %953, %v800
        %v955 = vpop.permute.xlu0 %954
        %958 = vset.pattern.permute.xlu0 0
        %959 = vperm.xlu0 %958, %v801
        %v960 = vpop.permute.xlu0 %959
        %963 = vset.pattern.permute.xlu0 0
        %964 = vperm.xlu0 %963, %v802
        %v965 = vpop.permute.xlu0 %964
        %968 = vset.pattern.permute.xlu0 0
        %969 = vperm.xlu0 %968, %v803
        %v970 = vpop.permute.xlu0 %969
        %973 = vset.pattern.permute.xlu0 0
        %974 = vperm.xlu0 %973, %v804
        %v975 = vpop.permute.xlu0 %974
        %978 = vset.pattern.permute.xlu0 0
        %979 = vperm.xlu0 %978, %v805
        %v980 = vpop.permute.xlu0 %979
        %983 = vset.pattern.permute.xlu0 0
        %984 = vperm.xlu0 %983, %v806
        %v985 = vpop.permute.xlu0 %984
        %988 = vset.pattern.permute.xlu0 0
        %989 = vperm.xlu0 %988, %v807
        %v990 = vpop.permute.xlu0 %989
        %993 = vset.pattern.permute.xlu0 0
        %994 = vperm.xlu0 %993, %v808
        %v995 = vpop.permute.xlu0 %994
        %998 = vset.pattern.permute.xlu0 0
        %999 = vperm.xlu0 %998, %v809
        %v1000 = vpop.permute.xlu0 %999
        %1003 = vset.pattern.permute.xlu0 0
        %1004 = vperm.xlu0 %1003, %v810
        %v1005 = vpop.permute.xlu0 %1004
        %1008 = vset.pattern.permute.xlu0 0
        %1009 = vperm.xlu0 %1008, %v811
        %v1010 = vpop.permute.xlu0 %1009
        %1013 = vset.pattern.permute.xlu0 0
        %1014 = vperm.xlu0 %1013, %v812
        %v1015 = vpop.permute.xlu0 %1014
        %1018 = vset.pattern.permute.xlu0 0
        %1019 = vperm.xlu0 %1018, %v813
        %v1020 = vpop.permute.xlu0 %1019
        %1023 = vset.pattern.permute.xlu0 0
        %1024 = vperm.xlu0 %1023, %v814
        %v1025 = vpop.permute.xlu0 %1024
        %1028 = vset.pattern.permute.xlu0 0
        %1029 = vperm.xlu0 %1028, %v815
        %v1030 = vpop.permute.xlu0 %1029
        %1033 = vset.pattern.permute.xlu0 0
        %1034 = vperm.xlu0 %1033, %v816
        %v1035 = vpop.permute.xlu0 %1034
        %1038 = vset.pattern.permute.xlu0 0
        %1039 = vperm.xlu0 %1038, %v817
        %v1040 = vpop.permute.xlu0 %1039
        %1043 = vset.pattern.permute.xlu0 0
        %1044 = vperm.xlu0 %1043, %v818
        %v1045 = vpop.permute.xlu0 %1044
        %1048 = vset.pattern.permute.xlu0 0
        %1049 = vperm.xlu0 %1048, %v819
        %v1050 = vpop.permute.xlu0 %1049
        %1053 = vset.pattern.permute.xlu0 0
        %1054 = vperm.xlu0 %1053, %v820
        %v1055 = vpop.permute.xlu0 %1054
        %1058 = vset.pattern.permute.xlu0 0
        %1059 = vperm.xlu0 %1058, %v821
        %v1060 = vpop.permute.xlu0 %1059
        %1063 = vset.pattern.permute.xlu0 0
        %1064 = vperm.xlu0 %1063, %v822
        %v1065 = vpop.permute.xlu0 %1064
        %1068 = vset.pattern.permute.xlu0 0
        %1069 = vperm.xlu0 %1068, %v823
        %v1070 = vpop.permute.xlu0 %1069
        %1073 = vset.pattern.permute.xlu0 0
        %1074 = vperm.xlu0 %1073, %v824
        %v1075 = vpop.permute.xlu0 %1074
        %1078 = vset.pattern.permute.xlu0 0
        %1079 = vperm.xlu0 %1078, %v825
        %v1080 = vpop.permute.xlu0 %1079
        %1083 = vset.pattern.permute.xlu0 0
        %1084 = vperm.xlu0 %1083, %v826
        %v1085 = vpop.permute.xlu0 %1084
        %1088 = vset.pattern.permute.xlu0 0
        %1089 = vperm.xlu0 %1088, %v827
        %v1090 = vpop.permute.xlu0 %1089
        %1093 = vset.pattern.permute.xlu0 0
        %1094 = vperm.xlu0 %1093, %v828
        %v1095 = vpop.permute.xlu0 %1094
        %1098 = vset.pattern.permute.xlu0 0
        %1099 = vperm.xlu0 %1098, %v829
        %v1100 = vpop.permute.xlu0 %1099
        %1103 = vset.pattern.permute.xlu0 0
        %1104 = vperm.xlu0 %1103, %v830
        %v1105 = vpop.permute.xlu0 %1104
        %1108 = vset.pattern.permute.xlu0 0
        %1109 = vperm.xlu0 %1108, %v831
        %v1110 = vpop.permute.xlu0 %1109
        %v1112 = vmul.f32 %v720, %v835
        %v1113 = vmul.f32 %v721, %v840
        %v1114 = vmul.f32 %v722, %v845
        %v1115 = vmul.f32 %v723, %v850
        %v1116 = vmul.f32 %v724, %v855
        %v1117 = vmul.f32 %v725, %v860
        %v1118 = vmul.f32 %v726, %v865
        %v1119 = vmul.f32 %v727, %v870
        %v1120 = vmul.f32 %v728, %v875
        %v1121 = vmul.f32 %v729, %v880
        %v1122 = vmul.f32 %v730, %v885
        %v1123 = vmul.f32 %v731, %v890
        %v1124 = vmul.f32 %v732, %v895
        %v1125 = vmul.f32 %v733, %v900
        %v1126 = vmul.f32 %v734, %v905
        %v1127 = vmul.f32 %v735, %v910
        %v1128 = vmul.f32 %v736, %v915
        %v1129 = vmul.f32 %v737, %v920
        %v1130 = vmul.f32 %v738, %v925
        %v1131 = vmul.f32 %v739, %v930
        %v1132 = vmul.f32 %v740, %v935
        %v1133 = vmul.f32 %v741, %v940
        %v1134 = vmul.f32 %v742, %v945
        %v1135 = vmul.f32 %v743, %v950
        %v1136 = vmul.f32 %v744, %v955
        %v1137 = vmul.f32 %v745, %v960
        %v1138 = vmul.f32 %v746, %v965
        %v1139 = vmul.f32 %v747, %v970
        %v1140 = vmul.f32 %v748, %v975
        %v1141 = vmul.f32 %v749, %v980
        %v1142 = vmul.f32 %v750, %v985
        %v1143 = vmul.f32 %v751, %v990
        %v1144 = vmul.f32 %v752, %v995
        %v1145 = vmul.f32 %v753, %v1000
        %v1146 = vmul.f32 %v754, %v1005
        %v1147 = vmul.f32 %v755, %v1010
        %v1148 = vmul.f32 %v756, %v1015
        %v1149 = vmul.f32 %v757, %v1020
        %v1150 = vmul.f32 %v758, %v1025
        %v1151 = vmul.f32 %v759, %v1030
        %v1152 = vmul.f32 %v760, %v1035
        %v1153 = vmul.f32 %v761, %v1040
        %v1154 = vmul.f32 %v762, %v1045
        %v1155 = vmul.f32 %v763, %v1050
        %v1156 = vmul.f32 %v764, %v1055
        %v1157 = vmul.f32 %v765, %v1060
        %v1158 = vmul.f32 %v766, %v1065
        %v1159 = vmul.f32 %v767, %v1070
        %v1160 = vmul.f32 %v768, %v1075
        %v1161 = vmul.f32 %v769, %v1080
        %v1162 = vmul.f32 %v770, %v1085
        %v1163 = vmul.f32 %v771, %v1090
        %v1164 = vmul.f32 %v772, %v1095
        %v1165 = vmul.f32 %v773, %v1100
        %v1166 = vmul.f32 %v774, %v1105
        %v1167 = vmul.f32 %v775, %v1110
        %1168 = vst [vmem:[#allocation2] sm:$0xff] 0.0
        %1169 = vst [vmem:[#allocation2 + $0x8] sm:$0xff] 0.0
        %1170 = vst [vmem:[#allocation2 + $0x10] sm:$0xff] 0.0
        %1171 = vst [vmem:[#allocation2 + $0x18] sm:$0xff] 0.0
        %1172 = vst [vmem:[#allocation2 + $0x20] sm:$0xff] 0.0
        %1173 = vst [vmem:[#allocation2 + $0x28] sm:$0xff] 0.0
        %1174 = vst [vmem:[#allocation2 + $0x30] sm:$0xff] 0.0
        %1175 = vst [vmem:[#allocation2 + $0x38] sm:$0xff] 0.0
        %1176 = vst [vmem:[#allocation2 + $0x40] sm:$0xff] 0.0
        %1177 = vst [vmem:[#allocation2 + $0x48] sm:$0xff] 0.0
        %1178 = vst [vmem:[#allocation2 + $0x50] sm:$0xff] 0.0
        %1179 = vst [vmem:[#allocation2 + $0x58] sm:$0xff] 0.0
        %1180 = vst [vmem:[#allocation2 + $0x60] sm:$0xff] 0.0
        %1181 = vst [vmem:[#allocation2 + $0x68] sm:$0xff] 0.0
        %1182 = vst [vmem:[#allocation2 + $0x70] sm:$0xff] 0.0
        %1183 = vst [vmem:[#allocation2 + $0x78] sm:$0xff] 0.0
        %1184 = vst [vmem:[#allocation2 + $0x80] sm:$0xff] 0.0
        %1185 = vst [vmem:[#allocation2 + $0x88] sm:$0xff] 0.0
        %1186 = vst [vmem:[#allocation2 + $0x90] sm:$0xff] 0.0
        %1187 = vst [vmem:[#allocation2 + $0x98] sm:$0xff] 0.0
        %1188 = vst [vmem:[#allocation2 + $0xa0] sm:$0xff] 0.0
        %1189 = vst [vmem:[#allocation2 + $0xa8] sm:$0xff] 0.0
        %1190 = vst [vmem:[#allocation2 + $0xb0] sm:$0xff] 0.0
        %1191 = vst [vmem:[#allocation2 + $0xb8] sm:$0xff] 0.0
        %1192 = vst [vmem:[#allocation2 + $0xc0] sm:$0xff] 0.0
        %1193 = vst [vmem:[#allocation2 + $0xc8] sm:$0xff] 0.0
        %1194 = vst [vmem:[#allocation2 + $0xd0] sm:$0xff] 0.0
        %1195 = vst [vmem:[#allocation2 + $0xd8] sm:$0xff] 0.0
        %1196 = vst [vmem:[#allocation2 + $0xe0] sm:$0xff] 0.0
        %1197 = vst [vmem:[#allocation2 + $0xe8] sm:$0xff] 0.0
        %1198 = vst [vmem:[#allocation2 + $0xf0] sm:$0xff] 0.0
        %1199 = vst [vmem:[#allocation2 + $0xf8] sm:$0xff] 0.0
        %1200 = vst [vmem:[#allocation2 + $0x100] sm:$0xff] 0.0
        %1201 = vst [vmem:[#allocation2 + $0x108] sm:$0xff] 0.0
        %1202 = vst [vmem:[#allocation2 + $0x110] sm:$0xff] 0.0
        %1203 = vst [vmem:[#allocation2 + $0x118] sm:$0xff] 0.0
        %1204 = vst [vmem:[#allocation2 + $0x120] sm:$0xff] 0.0
        %1205 = vst [vmem:[#allocation2 + $0x128] sm:$0xff] 0.0
        %1206 = vst [vmem:[#allocation2 + $0x130] sm:$0xff] 0.0
        %1207 = vst [vmem:[#allocation2 + $0x138] sm:$0xff] 0.0
        %1208 = vst [vmem:[#allocation2 + $0x140] sm:$0xff] 0.0
        %1209 = vst [vmem:[#allocation2 + $0x148] sm:$0xff] 0.0
        %1210 = vst [vmem:[#allocation2 + $0x150] sm:$0xff] 0.0
        %1211 = vst [vmem:[#allocation2 + $0x158] sm:$0xff] 0.0
        %1212 = vst [vmem:[#allocation2 + $0x160] sm:$0xff] 0.0
        %1213 = vst [vmem:[#allocation2 + $0x168] sm:$0xff] 0.0
        %1214 = vst [vmem:[#allocation2 + $0x170] sm:$0xff] 0.0
        %1215 = vst [vmem:[#allocation2 + $0x178] sm:$0xff] 0.0
        %1216 = vst [vmem:[#allocation2 + $0x180] sm:$0xff] 0.0
        %1217 = vst [vmem:[#allocation2 + $0x188] sm:$0xff] 0.0
        %1218 = vst [vmem:[#allocation2 + $0x190] sm:$0xff] 0.0
        %1219 = vst [vmem:[#allocation2 + $0x198] sm:$0xff] 0.0
        %1220 = vst [vmem:[#allocation2 + $0x1a0] sm:$0xff] 0.0
        %1221 = vst [vmem:[#allocation2 + $0x1a8] sm:$0xff] 0.0
        %1222 = vst [vmem:[#allocation2 + $0x1b0] sm:$0xff] 0.0
        %1223 = vst [vmem:[#allocation2 + $0x1b8] sm:$0xff] 0.0
        %1224 = vst [vmem:[#allocation2 + $0x1c0] sm:$0xff] 0.0
        %1225 = vst [vmem:[#allocation2 + $0x1c8] sm:$0xff] 0.0
        %1226 = vst [vmem:[#allocation2 + $0x1d0] sm:$0xff] 0.0
        %1227 = vst [vmem:[#allocation2 + $0x1d8] sm:$0xff] 0.0
        %1228 = vst [vmem:[#allocation2 + $0x1e0] sm:$0xff] 0.0
        %1229 = vst [vmem:[#allocation2 + $0x18] sm:$0xff] %v1112
        %1230 = vst [vmem:[#allocation2 + $0x20] sm:$0xff] %v1113
        %1231 = vst [vmem:[#allocation2 + $0x28] sm:$0xff] %v1114
        %1232 = vst [vmem:[#allocation2 + $0x30] sm:$0xff] %v1115
        %1233 = vst [vmem:[#allocation2 + $0x38] sm:$0xff] %v1116
        %1234 = vst [vmem:[#allocation2 + $0x40] sm:$0xff] %v1117
        %1235 = vst [vmem:[#allocation2 + $0x48] sm:$0xff] %v1118
        %1236 = vst [vmem:[#allocation2 + $0x50] sm:$0xff] %v1119
        %1237 = vst [vmem:[#allocation2 + $0x58] sm:$0xff] %v1120
        %1238 = vst [vmem:[#allocation2 + $0x60] sm:$0xff] %v1121
        %1239 = vst [vmem:[#allocation2 + $0x68] sm:$0xff] %v1122
        %1240 = vst [vmem:[#allocation2 + $0x70] sm:$0xff] %v1123
        %1241 = vst [vmem:[#allocation2 + $0x78] sm:$0xff] %v1124
        %1242 = vst [vmem:[#allocation2 + $0x80] sm:$0xff] %v1125
        %1243 = vst [vmem:[#allocation2 + $0x88] sm:$0xff] %v1126
        %1244 = vst [vmem:[#allocation2 + $0x90] sm:$0xff] %v1127
        %1245 = vst [vmem:[#allocation2 + $0x98] sm:$0xff] %v1128
        %1246 = vst [vmem:[#allocation2 + $0xa0] sm:$0xff] %v1129
        %1247 = vst [vmem:[#allocation2 + $0xa8] sm:$0xff] %v1130
        %1248 = vst [vmem:[#allocation2 + $0xb0] sm:$0xff] %v1131
        %1249 = vst [vmem:[#allocation2 + $0xb8] sm:$0xff] %v1132
        %1250 = vst [vmem:[#allocation2 + $0xc0] sm:$0xff] %v1133
        %1251 = vst [vmem:[#allocation2 + $0xc8] sm:$0xff] %v1134
        %1252 = vst [vmem:[#allocation2 + $0xd0] sm:$0xff] %v1135
        %1253 = vst [vmem:[#allocation2 + $0xd8] sm:$0xff] %v1136
        %1254 = vst [vmem:[#allocation2 + $0xe0] sm:$0xff] %v1137
        %1255 = vst [vmem:[#allocation2 + $0xe8] sm:$0xff] %v1138
        %1256 = vst [vmem:[#allocation2 + $0xf0] sm:$0xff] %v1139
        %1257 = vst [vmem:[#allocation2 + $0xf8] sm:$0xff] %v1140
        %1258 = vst [vmem:[#allocation2 + $0x100] sm:$0xff] %v1141
        %1259 = vst [vmem:[#allocation2 + $0x108] sm:$0xff] %v1142
        %1260 = vst [vmem:[#allocation2 + $0x110] sm:$0xff] %v1143
        %1261 = vst [vmem:[#allocation2 + $0x118] sm:$0xff] %v1144
        %1262 = vst [vmem:[#allocation2 + $0x120] sm:$0xff] %v1145
        %1263 = vst [vmem:[#allocation2 + $0x128] sm:$0xff] %v1146
        %1264 = vst [vmem:[#allocation2 + $0x130] sm:$0xff] %v1147
        %1265 = vst [vmem:[#allocation2 + $0x138] sm:$0xff] %v1148
        %1266 = vst [vmem:[#allocation2 + $0x140] sm:$0xff] %v1149
        %1267 = vst [vmem:[#allocation2 + $0x148] sm:$0xff] %v1150
        %1268 = vst [vmem:[#allocation2 + $0x150] sm:$0xff] %v1151
        %1269 = vst [vmem:[#allocation2 + $0x158] sm:$0xff] %v1152
        %1270 = vst [vmem:[#allocation2 + $0x160] sm:$0xff] %v1153
        %1271 = vst [vmem:[#allocation2 + $0x168] sm:$0xff] %v1154
        %1272 = vst [vmem:[#allocation2 + $0x170] sm:$0xff] %v1155
        %1273 = vst [vmem:[#allocation2 + $0x178] sm:$0xff] %v1156
        %1274 = vst [vmem:[#allocation2 + $0x180] sm:$0xff] %v1157
        %1275 = vst [vmem:[#allocation2 + $0x188] sm:$0xff] %v1158
        %1276 = vst [vmem:[#allocation2 + $0x190] sm:$0xff] %v1159
        %1277 = vst [vmem:[#allocation2 + $0x198] sm:$0xff] %v1160
        %1278 = vst [vmem:[#allocation2 + $0x1a0] sm:$0xff] %v1161
        %1279 = vst [vmem:[#allocation2 + $0x1a8] sm:$0xff] %v1162
        %1280 = vst [vmem:[#allocation2 + $0x1b0] sm:$0xff] %v1163
        %1281 = vst [vmem:[#allocation2 + $0x1b8] sm:$0xff] %v1164
        %1282 = vst [vmem:[#allocation2 + $0x1c0] sm:$0xff] %v1165
        %1283 = vst [vmem:[#allocation2 + $0x1c8] sm:$0xff] %v1166
        %1284 = vst [vmem:[#allocation2 + $0x1d0] sm:$0x1] %v1167
        %v1285 = vld [vmem:[#allocation2] sm:$0xff]
        %v1286 = vld [vmem:[#allocation2 + $0x8] sm:$0xff]
        %v1287 = vld [vmem:[#allocation2 + $0x10] sm:$0xff]
        %v1288 = vld [vmem:[#allocation2 + $0x18] sm:$0xff]
        %v1289 = vld [vmem:[#allocation2 + $0x20] sm:$0xff]
        %v1290 = vld [vmem:[#allocation2 + $0x28] sm:$0xff]
        %v1291 = vld [vmem:[#allocation2 + $0x30] sm:$0xff]
        %v1292 = vld [vmem:[#allocation2 + $0x38] sm:$0xff]
        %v1293 = vld [vmem:[#allocation2 + $0x40] sm:$0xff]
        %v1294 = vld [vmem:[#allocation2 + $0x48] sm:$0xff]
        %v1295 = vld [vmem:[#allocation2 + $0x50] sm:$0xff]
        %v1296 = vld [vmem:[#allocation2 + $0x58] sm:$0xff]
        %v1297 = vld [vmem:[#allocation2 + $0x60] sm:$0xff]
        %v1298 = vld [vmem:[#allocation2 + $0x68] sm:$0xff]
        %v1299 = vld [vmem:[#allocation2 + $0x70] sm:$0xff]
        %v1300 = vld [vmem:[#allocation2 + $0x78] sm:$0xff]
        %v1301 = vld [vmem:[#allocation2 + $0x80] sm:$0xff]
        %v1302 = vld [vmem:[#allocation2 + $0x88] sm:$0xff]
        %v1303 = vld [vmem:[#allocation2 + $0x90] sm:$0xff]
        %v1304 = vld [vmem:[#allocation2 + $0x98] sm:$0xff]
        %v1305 = vld [vmem:[#allocation2 + $0xa0] sm:$0xff]
        %v1306 = vld [vmem:[#allocation2 + $0xa8] sm:$0xff]
        %v1307 = vld [vmem:[#allocation2 + $0xb0] sm:$0xff]
        %v1308 = vld [vmem:[#allocation2 + $0xb8] sm:$0xff]
        %v1309 = vld [vmem:[#allocation2 + $0xc0] sm:$0xff]
        %v1310 = vld [vmem:[#allocation2 + $0xc8] sm:$0xff]
        %v1311 = vld [vmem:[#allocation2 + $0xd0] sm:$0xff]
        %v1312 = vld [vmem:[#allocation2 + $0xd8] sm:$0xff]
        %v1313 = vld [vmem:[#allocation2 + $0xe0] sm:$0xff]
        %v1314 = vld [vmem:[#allocation2 + $0xe8] sm:$0xff]
        %v1315 = vld [vmem:[#allocation2 + $0xf0] sm:$0xff]
        %v1316 = vld [vmem:[#allocation2 + $0xf8] sm:$0xff]
        %v1317 = vld [vmem:[#allocation2 + $0x100] sm:$0xff]
        %v1318 = vld [vmem:[#allocation2 + $0x108] sm:$0xff]
        %v1319 = vld [vmem:[#allocation2 + $0x110] sm:$0xff]
        %v1320 = vld [vmem:[#allocation2 + $0x118] sm:$0xff]
        %v1321 = vld [vmem:[#allocation2 + $0x120] sm:$0xff]
        %v1322 = vld [vmem:[#allocation2 + $0x128] sm:$0xff]
        %v1323 = vld [vmem:[#allocation2 + $0x130] sm:$0xff]
        %v1324 = vld [vmem:[#allocation2 + $0x138] sm:$0xff]
        %v1325 = vld [vmem:[#allocation2 + $0x140] sm:$0xff]
        %v1326 = vld [vmem:[#allocation2 + $0x148] sm:$0xff]
        %v1327 = vld [vmem:[#allocation2 + $0x150] sm:$0xff]
        %v1328 = vld [vmem:[#allocation2 + $0x158] sm:$0xff]
        %v1329 = vld [vmem:[#allocation2 + $0x160] sm:$0xff]
        %v1330 = vld [vmem:[#allocation2 + $0x168] sm:$0xff]
        %v1331 = vld [vmem:[#allocation2 + $0x170] sm:$0xff]
        %v1332 = vld [vmem:[#allocation2 + $0x178] sm:$0xff]
        %v1333 = vld [vmem:[#allocation2 + $0x180] sm:$0xff]
        %v1334 = vld [vmem:[#allocation2 + $0x188] sm:$0xff]
        %v1335 = vld [vmem:[#allocation2 + $0x190] sm:$0xff]
        %v1336 = vld [vmem:[#allocation2 + $0x198] sm:$0xff]
        %v1337 = vld [vmem:[#allocation2 + $0x1a0] sm:$0xff]
        %v1338 = vld [vmem:[#allocation2 + $0x1a8] sm:$0xff]
        %v1339 = vld [vmem:[#allocation2 + $0x1b0] sm:$0xff]
        %v1340 = vld [vmem:[#allocation2 + $0x1b8] sm:$0xff]
        %v1341 = vld [vmem:[#allocation2 + $0x1c0] sm:$0xff]
        %v1342 = vld [vmem:[#allocation2 + $0x1c8] sm:$0xff]
        %v1343 = vld [vmem:[#allocation2 + $0x1d0] sm:$0xff]
        %v1344 = vld [vmem:[#allocation2 + $0x1d8] sm:$0xff]
        %v1345 = vld [vmem:[#allocation2 + $0x1e0] sm:$0xff]
        %vm1402 = vcmask 1046528
        %v1403 = vrot.slane %v1285, 1
        %v1404 = vrot.slane %v1286, 1
        %v1405 = vsel %vm1402, %v1403, %v1404
        %v1406 = vrot.slane %v1287, 1
        %v1407 = vsel %vm1402, %v1404, %v1406
        %v1408 = vrot.slane %v1288, 1
        %v1409 = vsel %vm1402, %v1406, %v1408
        %v1410 = vrot.slane %v1289, 1
        %v1411 = vsel %vm1402, %v1408, %v1410
        %v1412 = vrot.slane %v1290, 1
        %v1413 = vsel %vm1402, %v1410, %v1412
        %v1414 = vrot.slane %v1291, 1
        %v1415 = vsel %vm1402, %v1412, %v1414
        %v1416 = vrot.slane %v1292, 1
        %v1417 = vsel %vm1402, %v1414, %v1416
        %v1418 = vrot.slane %v1293, 1
        %v1419 = vsel %vm1402, %v1416, %v1418
        %v1420 = vrot.slane %v1294, 1
        %v1421 = vsel %vm1402, %v1418, %v1420
        %v1422 = vrot.slane %v1295, 1
        %v1423 = vsel %vm1402, %v1420, %v1422
        %v1424 = vrot.slane %v1296, 1
        %v1425 = vsel %vm1402, %v1422, %v1424
        %v1426 = vrot.slane %v1297, 1
        %v1427 = vsel %vm1402, %v1424, %v1426
        %v1428 = vrot.slane %v1298, 1
        %v1429 = vsel %vm1402, %v1426, %v1428
        %v1430 = vrot.slane %v1299, 1
        %v1431 = vsel %vm1402, %v1428, %v1430
        %v1432 = vrot.slane %v1300, 1
        %v1433 = vsel %vm1402, %v1430, %v1432
        %v1434 = vrot.slane %v1301, 1
        %v1435 = vsel %vm1402, %v1432, %v1434
        %v1436 = vrot.slane %v1302, 1
        %v1437 = vsel %vm1402, %v1434, %v1436
        %v1438 = vrot.slane %v1303, 1
        %v1439 = vsel %vm1402, %v1436, %v1438
        %v1440 = vrot.slane %v1304, 1
        %v1441 = vsel %vm1402, %v1438, %v1440
        %v1442 = vrot.slane %v1305, 1
        %v1443 = vsel %vm1402, %v1440, %v1442
        %v1444 = vrot.slane %v1306, 1
        %v1445 = vsel %vm1402, %v1442, %v1444
        %v1446 = vrot.slane %v1307, 1
        %v1447 = vsel %vm1402, %v1444, %v1446
        %v1448 = vrot.slane %v1308, 1
        %v1449 = vsel %vm1402, %v1446, %v1448
        %v1450 = vrot.slane %v1309, 1
        %v1451 = vsel %vm1402, %v1448, %v1450
        %v1452 = vrot.slane %v1310, 1
        %v1453 = vsel %vm1402, %v1450, %v1452
        %v1454 = vrot.slane %v1311, 1
        %v1455 = vsel %vm1402, %v1452, %v1454
        %v1456 = vrot.slane %v1312, 1
        %v1457 = vsel %vm1402, %v1454, %v1456
        %v1458 = vrot.slane %v1313, 1
        %v1459 = vsel %vm1402, %v1456, %v1458
        %v1460 = vrot.slane %v1314, 1
        %v1461 = vsel %vm1402, %v1458, %v1460
        %v1462 = vrot.slane %v1315, 1
        %v1463 = vsel %vm1402, %v1460, %v1462
        %v1464 = vrot.slane %v1316, 1
        %v1465 = vsel %vm1402, %v1462, %v1464
        %v1466 = vrot.slane %v1317, 1
        %v1467 = vsel %vm1402, %v1464, %v1466
        %v1468 = vrot.slane %v1318, 1
        %v1469 = vsel %vm1402, %v1466, %v1468
        %v1470 = vrot.slane %v1319, 1
        %v1471 = vsel %vm1402, %v1468, %v1470
        %v1472 = vrot.slane %v1320, 1
        %v1473 = vsel %vm1402, %v1470, %v1472
        %v1474 = vrot.slane %v1321, 1
        %v1475 = vsel %vm1402, %v1472, %v1474
        %v1476 = vrot.slane %v1322, 1
        %v1477 = vsel %vm1402, %v1474, %v1476
        %v1478 = vrot.slane %v1323, 1
        %v1479 = vsel %vm1402, %v1476, %v1478
        %v1480 = vrot.slane %v1324, 1
        %v1481 = vsel %vm1402, %v1478, %v1480
        %v1482 = vrot.slane %v1325, 1
        %v1483 = vsel %vm1402, %v1480, %v1482
        %v1484 = vrot.slane %v1326, 1
        %v1485 = vsel %vm1402, %v1482, %v1484
        %v1486 = vrot.slane %v1327, 1
        %v1487 = vsel %vm1402, %v1484, %v1486
        %v1488 = vrot.slane %v1328, 1
        %v1489 = vsel %vm1402, %v1486, %v1488
        %v1490 = vrot.slane %v1329, 1
        %v1491 = vsel %vm1402, %v1488, %v1490
        %v1492 = vrot.slane %v1330, 1
        %v1493 = vsel %vm1402, %v1490, %v1492
        %v1494 = vrot.slane %v1331, 1
        %v1495 = vsel %vm1402, %v1492, %v1494
        %v1496 = vrot.slane %v1332, 1
        %v1497 = vsel %vm1402, %v1494, %v1496
        %v1498 = vrot.slane %v1333, 1
        %v1499 = vsel %vm1402, %v1496, %v1498
        %v1500 = vrot.slane %v1334, 1
        %v1501 = vsel %vm1402, %v1498, %v1500
        %v1502 = vrot.slane %v1335, 1
        %v1503 = vsel %vm1402, %v1500, %v1502
        %v1504 = vrot.slane %v1336, 1
        %v1505 = vsel %vm1402, %v1502, %v1504
        %v1506 = vrot.slane %v1337, 1
        %v1507 = vsel %vm1402, %v1504, %v1506
        %v1508 = vrot.slane %v1338, 1
        %v1509 = vsel %vm1402, %v1506, %v1508
        %v1510 = vrot.slane %v1339, 1
        %v1511 = vsel %vm1402, %v1508, %v1510
        %v1512 = vrot.slane %v1340, 1
        %v1513 = vsel %vm1402, %v1510, %v1512
        %vm1514 = vcmask 1045504
        %v1515 = vrot.slane %v1285, 2
        %v1516 = vrot.slane %v1286, 2
        %v1517 = vsel %vm1514, %v1515, %v1516
        %v1518 = vrot.slane %v1287, 2
        %v1519 = vsel %vm1514, %v1516, %v1518
        %v1520 = vrot.slane %v1288, 2
        %v1521 = vsel %vm1514, %v1518, %v1520
        %v1522 = vrot.slane %v1289, 2
        %v1523 = vsel %vm1514, %v1520, %v1522
        %v1524 = vrot.slane %v1290, 2
        %v1525 = vsel %vm1514, %v1522, %v1524
        %v1526 = vrot.slane %v1291, 2
        %v1527 = vsel %vm1514, %v1524, %v1526
        %v1528 = vrot.slane %v1292, 2
        %v1529 = vsel %vm1514, %v1526, %v1528
        %v1530 = vrot.slane %v1293, 2
        %v1531 = vsel %vm1514, %v1528, %v1530
        %v1532 = vrot.slane %v1294, 2
        %v1533 = vsel %vm1514, %v1530, %v1532
        %v1534 = vrot.slane %v1295, 2
        %v1535 = vsel %vm1514, %v1532, %v1534
        %v1536 = vrot.slane %v1296, 2
        %v1537 = vsel %vm1514, %v1534, %v1536
        %v1538 = vrot.slane %v1297, 2
        %v1539 = vsel %vm1514, %v1536, %v1538
        %v1540 = vrot.slane %v1298, 2
        %v1541 = vsel %vm1514, %v1538, %v1540
        %v1542 = vrot.slane %v1299, 2
        %v1543 = vsel %vm1514, %v1540, %v1542
        %v1544 = vrot.slane %v1300, 2
        %v1545 = vsel %vm1514, %v1542, %v1544
        %v1546 = vrot.slane %v1301, 2
        %v1547 = vsel %vm1514, %v1544, %v1546
        %v1548 = vrot.slane %v1302, 2
        %v1549 = vsel %vm1514, %v1546, %v1548
        %v1550 = vrot.slane %v1303, 2
        %v1551 = vsel %vm1514, %v1548, %v1550
        %v1552 = vrot.slane %v1304, 2
        %v1553 = vsel %vm1514, %v1550, %v1552
        %v1554 = vrot.slane %v1305, 2
        %v1555 = vsel %vm1514, %v1552, %v1554
        %v1556 = vrot.slane %v1306, 2
        %v1557 = vsel %vm1514, %v1554, %v1556
        %v1558 = vrot.slane %v1307, 2
        %v1559 = vsel %vm1514, %v1556, %v1558
        %v1560 = vrot.slane %v1308, 2
        %v1561 = vsel %vm1514, %v1558, %v1560
        %v1562 = vrot.slane %v1309, 2
        %v1563 = vsel %vm1514, %v1560, %v1562
        %v1564 = vrot.slane %v1310, 2
        %v1565 = vsel %vm1514, %v1562, %v1564
        %v1566 = vrot.slane %v1311, 2
        %v1567 = vsel %vm1514, %v1564, %v1566
        %v1568 = vrot.slane %v1312, 2
        %v1569 = vsel %vm1514, %v1566, %v1568
        %v1570 = vrot.slane %v1313, 2
        %v1571 = vsel %vm1514, %v1568, %v1570
        %v1572 = vrot.slane %v1314, 2
        %v1573 = vsel %vm1514, %v1570, %v1572
        %v1574 = vrot.slane %v1315, 2
        %v1575 = vsel %vm1514, %v1572, %v1574
        %v1576 = vrot.slane %v1316, 2
        %v1577 = vsel %vm1514, %v1574, %v1576
        %v1578 = vrot.slane %v1317, 2
        %v1579 = vsel %vm1514, %v1576, %v1578
        %v1580 = vrot.slane %v1318, 2
        %v1581 = vsel %vm1514, %v1578, %v1580
        %v1582 = vrot.slane %v1319, 2
        %v1583 = vsel %vm1514, %v1580, %v1582
        %v1584 = vrot.slane %v1320, 2
        %v1585 = vsel %vm1514, %v1582, %v1584
        %v1586 = vrot.slane %v1321, 2
        %v1587 = vsel %vm1514, %v1584, %v1586
        %v1588 = vrot.slane %v1322, 2
        %v1589 = vsel %vm1514, %v1586, %v1588
        %v1590 = vrot.slane %v1323, 2
        %v1591 = vsel %vm1514, %v1588, %v1590
        %v1592 = vrot.slane %v1324, 2
        %v1593 = vsel %vm1514, %v1590, %v1592
        %v1594 = vrot.slane %v1325, 2
        %v1595 = vsel %vm1514, %v1592, %v1594
        %v1596 = vrot.slane %v1326, 2
        %v1597 = vsel %vm1514, %v1594, %v1596
        %v1598 = vrot.slane %v1327, 2
        %v1599 = vsel %vm1514, %v1596, %v1598
        %v1600 = vrot.slane %v1328, 2
        %v1601 = vsel %vm1514, %v1598, %v1600
        %v1602 = vrot.slane %v1329, 2
        %v1603 = vsel %vm1514, %v1600, %v1602
        %v1604 = vrot.slane %v1330, 2
        %v1605 = vsel %vm1514, %v1602, %v1604
        %v1606 = vrot.slane %v1331, 2
        %v1607 = vsel %vm1514, %v1604, %v1606
        %v1608 = vrot.slane %v1332, 2
        %v1609 = vsel %vm1514, %v1606, %v1608
        %v1610 = vrot.slane %v1333, 2
        %v1611 = vsel %vm1514, %v1608, %v1610
        %v1612 = vrot.slane %v1334, 2
        %v1613 = vsel %vm1514, %v1610, %v1612
        %v1614 = vrot.slane %v1335, 2
        %v1615 = vsel %vm1514, %v1612, %v1614
        %v1616 = vrot.slane %v1336, 2
        %v1617 = vsel %vm1514, %v1614, %v1616
        %v1618 = vrot.slane %v1337, 2
        %v1619 = vsel %vm1514, %v1616, %v1618
        %v1620 = vrot.slane %v1338, 2
        %v1621 = vsel %vm1514, %v1618, %v1620
        %v1622 = vrot.slane %v1339, 2
        %v1623 = vsel %vm1514, %v1620, %v1622
        %v1624 = vrot.slane %v1340, 2
        %v1625 = vsel %vm1514, %v1622, %v1624
        %v1628 = vrot.slane %v1287, 5
        %v1629 = vrot.slane %v1288, 5
        %v1630 = vsel %vm531, %v1628, %v1629
        %v1631 = vrot.slane %v1289, 5
        %v1632 = vsel %vm531, %v1629, %v1631
        %v1633 = vrot.slane %v1290, 5
        %v1634 = vsel %vm531, %v1631, %v1633
        %v1635 = vrot.slane %v1291, 5
        %v1636 = vsel %vm531, %v1633, %v1635
        %v1637 = vrot.slane %v1292, 5
        %v1638 = vsel %vm531, %v1635, %v1637
        %v1639 = vrot.slane %v1293, 5
        %v1640 = vsel %vm531, %v1637, %v1639
        %v1641 = vrot.slane %v1294, 5
        %v1642 = vsel %vm531, %v1639, %v1641
        %v1643 = vrot.slane %v1295, 5
        %v1644 = vsel %vm531, %v1641, %v1643
        %v1645 = vrot.slane %v1296, 5
        %v1646 = vsel %vm531, %v1643, %v1645
        %v1647 = vrot.slane %v1297, 5
        %v1648 = vsel %vm531, %v1645, %v1647
        %v1649 = vrot.slane %v1298, 5
        %v1650 = vsel %vm531, %v1647, %v1649
        %v1651 = vrot.slane %v1299, 5
        %v1652 = vsel %vm531, %v1649, %v1651
        %v1653 = vrot.slane %v1300, 5
        %v1654 = vsel %vm531, %v1651, %v1653
        %v1655 = vrot.slane %v1301, 5
        %v1656 = vsel %vm531, %v1653, %v1655
        %v1657 = vrot.slane %v1302, 5
        %v1658 = vsel %vm531, %v1655, %v1657
        %v1659 = vrot.slane %v1303, 5
        %v1660 = vsel %vm531, %v1657, %v1659
        %v1661 = vrot.slane %v1304, 5
        %v1662 = vsel %vm531, %v1659, %v1661
        %v1663 = vrot.slane %v1305, 5
        %v1664 = vsel %vm531, %v1661, %v1663
        %v1665 = vrot.slane %v1306, 5
        %v1666 = vsel %vm531, %v1663, %v1665
        %v1667 = vrot.slane %v1307, 5
        %v1668 = vsel %vm531, %v1665, %v1667
        %v1669 = vrot.slane %v1308, 5
        %v1670 = vsel %vm531, %v1667, %v1669
        %v1671 = vrot.slane %v1309, 5
        %v1672 = vsel %vm531, %v1669, %v1671
        %v1673 = vrot.slane %v1310, 5
        %v1674 = vsel %vm531, %v1671, %v1673
        %v1675 = vrot.slane %v1311, 5
        %v1676 = vsel %vm531, %v1673, %v1675
        %v1677 = vrot.slane %v1312, 5
        %v1678 = vsel %vm531, %v1675, %v1677
        %v1679 = vrot.slane %v1313, 5
        %v1680 = vsel %vm531, %v1677, %v1679
        %v1681 = vrot.slane %v1314, 5
        %v1682 = vsel %vm531, %v1679, %v1681
        %v1683 = vrot.slane %v1315, 5
        %v1684 = vsel %vm531, %v1681, %v1683
        %v1685 = vrot.slane %v1316, 5
        %v1686 = vsel %vm531, %v1683, %v1685
        %v1687 = vrot.slane %v1317, 5
        %v1688 = vsel %vm531, %v1685, %v1687
        %v1689 = vrot.slane %v1318, 5
        %v1690 = vsel %vm531, %v1687, %v1689
        %v1691 = vrot.slane %v1319, 5
        %v1692 = vsel %vm531, %v1689, %v1691
        %v1693 = vrot.slane %v1320, 5
        %v1694 = vsel %vm531, %v1691, %v1693
        %v1695 = vrot.slane %v1321, 5
        %v1696 = vsel %vm531, %v1693, %v1695
        %v1697 = vrot.slane %v1322, 5
        %v1698 = vsel %vm531, %v1695, %v1697
        %v1699 = vrot.slane %v1323, 5
        %v1700 = vsel %vm531, %v1697, %v1699
        %v1701 = vrot.slane %v1324, 5
        %v1702 = vsel %vm531, %v1699, %v1701
        %v1703 = vrot.slane %v1325, 5
        %v1704 = vsel %vm531, %v1701, %v1703
        %v1705 = vrot.slane %v1326, 5
        %v1706 = vsel %vm531, %v1703, %v1705
        %v1707 = vrot.slane %v1327, 5
        %v1708 = vsel %vm531, %v1705, %v1707
        %v1709 = vrot.slane %v1328, 5
        %v1710 = vsel %vm531, %v1707, %v1709
        %v1711 = vrot.slane %v1329, 5
        %v1712 = vsel %vm531, %v1709, %v1711
        %v1713 = vrot.slane %v1330, 5
        %v1714 = vsel %vm531, %v1711, %v1713
        %v1715 = vrot.slane %v1331, 5
        %v1716 = vsel %vm531, %v1713, %v1715
        %v1717 = vrot.slane %v1332, 5
        %v1718 = vsel %vm531, %v1715, %v1717
        %v1719 = vrot.slane %v1333, 5
        %v1720 = vsel %vm531, %v1717, %v1719
        %v1721 = vrot.slane %v1334, 5
        %v1722 = vsel %vm531, %v1719, %v1721
        %v1723 = vrot.slane %v1335, 5
        %v1724 = vsel %vm531, %v1721, %v1723
        %v1725 = vrot.slane %v1336, 5
        %v1726 = vsel %vm531, %v1723, %v1725
        %v1727 = vrot.slane %v1337, 5
        %v1728 = vsel %vm531, %v1725, %v1727
        %v1729 = vrot.slane %v1338, 5
        %v1730 = vsel %vm531, %v1727, %v1729
        %v1731 = vrot.slane %v1339, 5
        %v1732 = vsel %vm531, %v1729, %v1731
        %v1733 = vrot.slane %v1340, 5
        %v1734 = vsel %vm531, %v1731, %v1733
        %v1735 = vrot.slane %v1341, 5
        %v1736 = vsel %vm531, %v1733, %v1735
        %v1737 = vrot.slane %v1342, 5
        %v1738 = vsel %vm531, %v1735, %v1737
        %vm1740 = vcmask 1041408
        %v1741 = vrot.slane %v1288, 6
        %v1742 = vrot.slane %v1289, 6
        %v1743 = vsel %vm1740, %v1741, %v1742
        %v1744 = vrot.slane %v1290, 6
        %v1745 = vsel %vm1740, %v1742, %v1744
        %v1746 = vrot.slane %v1291, 6
        %v1747 = vsel %vm1740, %v1744, %v1746
        %v1748 = vrot.slane %v1292, 6
        %v1749 = vsel %vm1740, %v1746, %v1748
        %v1750 = vrot.slane %v1293, 6
        %v1751 = vsel %vm1740, %v1748, %v1750
        %v1752 = vrot.slane %v1294, 6
        %v1753 = vsel %vm1740, %v1750, %v1752
        %v1754 = vrot.slane %v1295, 6
        %v1755 = vsel %vm1740, %v1752, %v1754
        %v1756 = vrot.slane %v1296, 6
        %v1757 = vsel %vm1740, %v1754, %v1756
        %v1758 = vrot.slane %v1297, 6
        %v1759 = vsel %vm1740, %v1756, %v1758
        %v1760 = vrot.slane %v1298, 6
        %v1761 = vsel %vm1740, %v1758, %v1760
        %v1762 = vrot.slane %v1299, 6
        %v1763 = vsel %vm1740, %v1760, %v1762
        %v1764 = vrot.slane %v1300, 6
        %v1765 = vsel %vm1740, %v1762, %v1764
        %v1766 = vrot.slane %v1301, 6
        %v1767 = vsel %vm1740, %v1764, %v1766
        %v1768 = vrot.slane %v1302, 6
        %v1769 = vsel %vm1740, %v1766, %v1768
        %v1770 = vrot.slane %v1303, 6
        %v1771 = vsel %vm1740, %v1768, %v1770
        %v1772 = vrot.slane %v1304, 6
        %v1773 = vsel %vm1740, %v1770, %v1772
        %v1774 = vrot.slane %v1305, 6
        %v1775 = vsel %vm1740, %v1772, %v1774
        %v1776 = vrot.slane %v1306, 6
        %v1777 = vsel %vm1740, %v1774, %v1776
        %v1778 = vrot.slane %v1307, 6
        %v1779 = vsel %vm1740, %v1776, %v1778
        %v1780 = vrot.slane %v1308, 6
        %v1781 = vsel %vm1740, %v1778, %v1780
        %v1782 = vrot.slane %v1309, 6
        %v1783 = vsel %vm1740, %v1780, %v1782
        %v1784 = vrot.slane %v1310, 6
        %v1785 = vsel %vm1740, %v1782, %v1784
        %v1786 = vrot.slane %v1311, 6
        %v1787 = vsel %vm1740, %v1784, %v1786
        %v1788 = vrot.slane %v1312, 6
        %v1789 = vsel %vm1740, %v1786, %v1788
        %v1790 = vrot.slane %v1313, 6
        %v1791 = vsel %vm1740, %v1788, %v1790
        %v1792 = vrot.slane %v1314, 6
        %v1793 = vsel %vm1740, %v1790, %v1792
        %v1794 = vrot.slane %v1315, 6
        %v1795 = vsel %vm1740, %v1792, %v1794
        %v1796 = vrot.slane %v1316, 6
        %v1797 = vsel %vm1740, %v1794, %v1796
        %v1798 = vrot.slane %v1317, 6
        %v1799 = vsel %vm1740, %v1796, %v1798
        %v1800 = vrot.slane %v1318, 6
        %v1801 = vsel %vm1740, %v1798, %v1800
        %v1802 = vrot.slane %v1319, 6
        %v1803 = vsel %vm1740, %v1800, %v1802
        %v1804 = vrot.slane %v1320, 6
        %v1805 = vsel %vm1740, %v1802, %v1804
        %v1806 = vrot.slane %v1321, 6
        %v1807 = vsel %vm1740, %v1804, %v1806
        %v1808 = vrot.slane %v1322, 6
        %v1809 = vsel %vm1740, %v1806, %v1808
        %v1810 = vrot.slane %v1323, 6
        %v1811 = vsel %vm1740, %v1808, %v1810
        %v1812 = vrot.slane %v1324, 6
        %v1813 = vsel %vm1740, %v1810, %v1812
        %v1814 = vrot.slane %v1325, 6
        %v1815 = vsel %vm1740, %v1812, %v1814
        %v1816 = vrot.slane %v1326, 6
        %v1817 = vsel %vm1740, %v1814, %v1816
        %v1818 = vrot.slane %v1327, 6
        %v1819 = vsel %vm1740, %v1816, %v1818
        %v1820 = vrot.slane %v1328, 6
        %v1821 = vsel %vm1740, %v1818, %v1820
        %v1822 = vrot.slane %v1329, 6
        %v1823 = vsel %vm1740, %v1820, %v1822
        %v1824 = vrot.slane %v1330, 6
        %v1825 = vsel %vm1740, %v1822, %v1824
        %v1826 = vrot.slane %v1331, 6
        %v1827 = vsel %vm1740, %v1824, %v1826
        %v1828 = vrot.slane %v1332, 6
        %v1829 = vsel %vm1740, %v1826, %v1828
        %v1830 = vrot.slane %v1333, 6
        %v1831 = vsel %vm1740, %v1828, %v1830
        %v1832 = vrot.slane %v1334, 6
        %v1833 = vsel %vm1740, %v1830, %v1832
        %v1834 = vrot.slane %v1335, 6
        %v1835 = vsel %vm1740, %v1832, %v1834
        %v1836 = vrot.slane %v1336, 6
        %v1837 = vsel %vm1740, %v1834, %v1836
        %v1838 = vrot.slane %v1337, 6
        %v1839 = vsel %vm1740, %v1836, %v1838
        %v1840 = vrot.slane %v1338, 6
        %v1841 = vsel %vm1740, %v1838, %v1840
        %v1842 = vrot.slane %v1339, 6
        %v1843 = vsel %vm1740, %v1840, %v1842
        %v1844 = vrot.slane %v1340, 6
        %v1845 = vsel %vm1740, %v1842, %v1844
        %v1846 = vrot.slane %v1341, 6
        %v1847 = vsel %vm1740, %v1844, %v1846
        %v1848 = vrot.slane %v1342, 6
        %v1849 = vsel %vm1740, %v1846, %v1848
        %v1850 = vrot.slane %v1343, 6
        %v1851 = vsel %vm1740, %v1848, %v1850
        %vm1852 = vcmask 1040384
        %v1853 = vrot.slane %v1288, 7
        %v1854 = vrot.slane %v1289, 7
        %v1855 = vsel %vm1852, %v1853, %v1854
        %v1856 = vrot.slane %v1290, 7
        %v1857 = vsel %vm1852, %v1854, %v1856
        %v1858 = vrot.slane %v1291, 7
        %v1859 = vsel %vm1852, %v1856, %v1858
        %v1860 = vrot.slane %v1292, 7
        %v1861 = vsel %vm1852, %v1858, %v1860
        %v1862 = vrot.slane %v1293, 7
        %v1863 = vsel %vm1852, %v1860, %v1862
        %v1864 = vrot.slane %v1294, 7
        %v1865 = vsel %vm1852, %v1862, %v1864
        %v1866 = vrot.slane %v1295, 7
        %v1867 = vsel %vm1852, %v1864, %v1866
        %v1868 = vrot.slane %v1296, 7
        %v1869 = vsel %vm1852, %v1866, %v1868
        %v1870 = vrot.slane %v1297, 7
        %v1871 = vsel %vm1852, %v1868, %v1870
        %v1872 = vrot.slane %v1298, 7
        %v1873 = vsel %vm1852, %v1870, %v1872
        %v1874 = vrot.slane %v1299, 7
        %v1875 = vsel %vm1852, %v1872, %v1874
        %v1876 = vrot.slane %v1300, 7
        %v1877 = vsel %vm1852, %v1874, %v1876
        %v1878 = vrot.slane %v1301, 7
        %v1879 = vsel %vm1852, %v1876, %v1878
        %v1880 = vrot.slane %v1302, 7
        %v1881 = vsel %vm1852, %v1878, %v1880
        %v1882 = vrot.slane %v1303, 7
        %v1883 = vsel %vm1852, %v1880, %v1882
        %v1884 = vrot.slane %v1304, 7
        %v1885 = vsel %vm1852, %v1882, %v1884
        %v1886 = vrot.slane %v1305, 7
        %v1887 = vsel %vm1852, %v1884, %v1886
        %v1888 = vrot.slane %v1306, 7
        %v1889 = vsel %vm1852, %v1886, %v1888
        %v1890 = vrot.slane %v1307, 7
        %v1891 = vsel %vm1852, %v1888, %v1890
        %v1892 = vrot.slane %v1308, 7
        %v1893 = vsel %vm1852, %v1890, %v1892
        %v1894 = vrot.slane %v1309, 7
        %v1895 = vsel %vm1852, %v1892, %v1894
        %v1896 = vrot.slane %v1310, 7
        %v1897 = vsel %vm1852, %v1894, %v1896
        %v1898 = vrot.slane %v1311, 7
        %v1899 = vsel %vm1852, %v1896, %v1898
        %v1900 = vrot.slane %v1312, 7
        %v1901 = vsel %vm1852, %v1898, %v1900
        %v1902 = vrot.slane %v1313, 7
        %v1903 = vsel %vm1852, %v1900, %v1902
        %v1904 = vrot.slane %v1314, 7
        %v1905 = vsel %vm1852, %v1902, %v1904
        %v1906 = vrot.slane %v1315, 7
        %v1907 = vsel %vm1852, %v1904, %v1906
        %v1908 = vrot.slane %v1316, 7
        %v1909 = vsel %vm1852, %v1906, %v1908
        %v1910 = vrot.slane %v1317, 7
        %v1911 = vsel %vm1852, %v1908, %v1910
        %v1912 = vrot.slane %v1318, 7
        %v1913 = vsel %vm1852, %v1910, %v1912
        %v1914 = vrot.slane %v1319, 7
        %v1915 = vsel %vm1852, %v1912, %v1914
        %v1916 = vrot.slane %v1320, 7
        %v1917 = vsel %vm1852, %v1914, %v1916
        %v1918 = vrot.slane %v1321, 7
        %v1919 = vsel %vm1852, %v1916, %v1918
        %v1920 = vrot.slane %v1322, 7
        %v1921 = vsel %vm1852, %v1918, %v1920
        %v1922 = vrot.slane %v1323, 7
        %v1923 = vsel %vm1852, %v1920, %v1922
        %v1924 = vrot.slane %v1324, 7
        %v1925 = vsel %vm1852, %v1922, %v1924
        %v1926 = vrot.slane %v1325, 7
        %v1927 = vsel %vm1852, %v1924, %v1926
        %v1928 = vrot.slane %v1326, 7
        %v1929 = vsel %vm1852, %v1926, %v1928
        %v1930 = vrot.slane %v1327, 7
        %v1931 = vsel %vm1852, %v1928, %v1930
        %v1932 = vrot.slane %v1328, 7
        %v1933 = vsel %vm1852, %v1930, %v1932
        %v1934 = vrot.slane %v1329, 7
        %v1935 = vsel %vm1852, %v1932, %v1934
        %v1936 = vrot.slane %v1330, 7
        %v1937 = vsel %vm1852, %v1934, %v1936
        %v1938 = vrot.slane %v1331, 7
        %v1939 = vsel %vm1852, %v1936, %v1938
        %v1940 = vrot.slane %v1332, 7
        %v1941 = vsel %vm1852, %v1938, %v1940
        %v1942 = vrot.slane %v1333, 7
        %v1943 = vsel %vm1852, %v1940, %v1942
        %v1944 = vrot.slane %v1334, 7
        %v1945 = vsel %vm1852, %v1942, %v1944
        %v1946 = vrot.slane %v1335, 7
        %v1947 = vsel %vm1852, %v1944, %v1946
        %v1948 = vrot.slane %v1336, 7
        %v1949 = vsel %vm1852, %v1946, %v1948
        %v1950 = vrot.slane %v1337, 7
        %v1951 = vsel %vm1852, %v1948, %v1950
        %v1952 = vrot.slane %v1338, 7
        %v1953 = vsel %vm1852, %v1950, %v1952
        %v1954 = vrot.slane %v1339, 7
        %v1955 = vsel %vm1852, %v1952, %v1954
        %v1956 = vrot.slane %v1340, 7
        %v1957 = vsel %vm1852, %v1954, %v1956
        %v1958 = vrot.slane %v1341, 7
        %v1959 = vsel %vm1852, %v1956, %v1958
        %v1960 = vrot.slane %v1342, 7
        %v1961 = vsel %vm1852, %v1958, %v1960
        %v1962 = vrot.slane %v1343, 7
        %v1963 = vsel %vm1852, %v1960, %v1962
        %v1966 = vrot.slane %v1341, 2
        %v1967 = vsel %vm1514, %v1624, %v1966
        %v1968 = vrot.slane %v1342, 2
        %v1969 = vsel %vm1514, %v1966, %v1968
        %v1970 = vrot.slane %v1343, 2
        %v1971 = vsel %vm1514, %v1968, %v1970
        %v1972 = vrot.slane %v1344, 2
        %v1973 = vsel %vm1514, %v1970, %v1972
        %v1974 = vrot.slane %v1345, 2
        %v1975 = vsel %vm1514, %v1972, %v1974
        %vm1976 = vcmask 1044480
        %v1977 = vrot.slane %v1290, 3
        %v1978 = vrot.slane %v1291, 3
        %v1979 = vsel %vm1976, %v1977, %v1978
        %v1980 = vrot.slane %v1292, 3
        %v1981 = vsel %vm1976, %v1978, %v1980
        %v1982 = vrot.slane %v1293, 3
        %v1983 = vsel %vm1976, %v1980, %v1982
        %v1984 = vrot.slane %v1294, 3
        %v1985 = vsel %vm1976, %v1982, %v1984
        %v1986 = vrot.slane %v1295, 3
        %v1987 = vsel %vm1976, %v1984, %v1986
        %v1988 = vrot.slane %v1296, 3
        %v1989 = vsel %vm1976, %v1986, %v1988
        %v1990 = vrot.slane %v1297, 3
        %v1991 = vsel %vm1976, %v1988, %v1990
        %v1992 = vrot.slane %v1298, 3
        %v1993 = vsel %vm1976, %v1990, %v1992
        %v1994 = vrot.slane %v1299, 3
        %v1995 = vsel %vm1976, %v1992, %v1994
        %v1996 = vrot.slane %v1300, 3
        %v1997 = vsel %vm1976, %v1994, %v1996
        %v1998 = vrot.slane %v1301, 3
        %v1999 = vsel %vm1976, %v1996, %v1998
        %v2000 = vrot.slane %v1302, 3
        %v2001 = vsel %vm1976, %v1998, %v2000
        %v2002 = vrot.slane %v1303, 3
        %v2003 = vsel %vm1976, %v2000, %v2002
        %v2004 = vrot.slane %v1304, 3
        %v2005 = vsel %vm1976, %v2002, %v2004
        %v2006 = vrot.slane %v1305, 3
        %v2007 = vsel %vm1976, %v2004, %v2006
        %v2008 = vrot.slane %v1306, 3
        %v2009 = vsel %vm1976, %v2006, %v2008
        %v2010 = vrot.slane %v1307, 3
        %v2011 = vsel %vm1976, %v2008, %v2010
        %v2012 = vrot.slane %v1308, 3
        %v2013 = vsel %vm1976, %v2010, %v2012
        %v2014 = vrot.slane %v1309, 3
        %v2015 = vsel %vm1976, %v2012, %v2014
        %v2016 = vrot.slane %v1310, 3
        %v2017 = vsel %vm1976, %v2014, %v2016
        %v2018 = vrot.slane %v1311, 3
        %v2019 = vsel %vm1976, %v2016, %v2018
        %v2020 = vrot.slane %v1312, 3
        %v2021 = vsel %vm1976, %v2018, %v2020
        %v2022 = vrot.slane %v1313, 3
        %v2023 = vsel %vm1976, %v2020, %v2022
        %v2024 = vrot.slane %v1314, 3
        %v2025 = vsel %vm1976, %v2022, %v2024
        %v2026 = vrot.slane %v1315, 3
        %v2027 = vsel %vm1976, %v2024, %v2026
        %v2028 = vrot.slane %v1316, 3
        %v2029 = vsel %vm1976, %v2026, %v2028
        %v2030 = vrot.slane %v1317, 3
        %v2031 = vsel %vm1976, %v2028, %v2030
        %v2032 = vrot.slane %v1318, 3
        %v2033 = vsel %vm1976, %v2030, %v2032
        %v2034 = vrot.slane %v1319, 3
        %v2035 = vsel %vm1976, %v2032, %v2034
        %v2036 = vrot.slane %v1320, 3
        %v2037 = vsel %vm1976, %v2034, %v2036
        %v2038 = vrot.slane %v1321, 3
        %v2039 = vsel %vm1976, %v2036, %v2038
        %v2040 = vrot.slane %v1322, 3
        %v2041 = vsel %vm1976, %v2038, %v2040
        %v2042 = vrot.slane %v1323, 3
        %v2043 = vsel %vm1976, %v2040, %v2042
        %v2044 = vrot.slane %v1324, 3
        %v2045 = vsel %vm1976, %v2042, %v2044
        %v2046 = vrot.slane %v1325, 3
        %v2047 = vsel %vm1976, %v2044, %v2046
        %v2048 = vrot.slane %v1326, 3
        %v2049 = vsel %vm1976, %v2046, %v2048
        %v2050 = vrot.slane %v1327, 3
        %v2051 = vsel %vm1976, %v2048, %v2050
        %v2052 = vrot.slane %v1328, 3
        %v2053 = vsel %vm1976, %v2050, %v2052
        %v2054 = vrot.slane %v1329, 3
        %v2055 = vsel %vm1976, %v2052, %v2054
        %v2056 = vrot.slane %v1330, 3
        %v2057 = vsel %vm1976, %v2054, %v2056
        %v2058 = vrot.slane %v1331, 3
        %v2059 = vsel %vm1976, %v2056, %v2058
        %v2060 = vrot.slane %v1332, 3
        %v2061 = vsel %vm1976, %v2058, %v2060
        %v2062 = vrot.slane %v1333, 3
        %v2063 = vsel %vm1976, %v2060, %v2062
        %v2064 = vrot.slane %v1334, 3
        %v2065 = vsel %vm1976, %v2062, %v2064
        %v2066 = vrot.slane %v1335, 3
        %v2067 = vsel %vm1976, %v2064, %v2066
        %v2068 = vrot.slane %v1336, 3
        %v2069 = vsel %vm1976, %v2066, %v2068
        %v2070 = vrot.slane %v1337, 3
        %v2071 = vsel %vm1976, %v2068, %v2070
        %v2072 = vrot.slane %v1338, 3
        %v2073 = vsel %vm1976, %v2070, %v2072
        %v2074 = vrot.slane %v1339, 3
        %v2075 = vsel %vm1976, %v2072, %v2074
        %v2076 = vrot.slane %v1340, 3
        %v2077 = vsel %vm1976, %v2074, %v2076
        %v2078 = vrot.slane %v1341, 3
        %v2079 = vsel %vm1976, %v2076, %v2078
        %v2080 = vrot.slane %v1342, 3
        %v2081 = vsel %vm1976, %v2078, %v2080
        %v2082 = vrot.slane %v1343, 3
        %v2083 = vsel %vm1976, %v2080, %v2082
        %v2084 = vrot.slane %v1344, 3
        %v2085 = vsel %vm1976, %v2082, %v2084
        %v2086 = vrot.slane %v1345, 3
        %v2087 = vsel %vm1976, %v2084, %v2086
        %vm2088 = vcmask 1043456
        %v2089 = vrot.slane %v1290, 4
        %v2090 = vrot.slane %v1291, 4
        %v2091 = vsel %vm2088, %v2089, %v2090
        %v2092 = vrot.slane %v1292, 4
        %v2093 = vsel %vm2088, %v2090, %v2092
        %v2094 = vrot.slane %v1293, 4
        %v2095 = vsel %vm2088, %v2092, %v2094
        %v2096 = vrot.slane %v1294, 4
        %v2097 = vsel %vm2088, %v2094, %v2096
        %v2098 = vrot.slane %v1295, 4
        %v2099 = vsel %vm2088, %v2096, %v2098
        %v2100 = vrot.slane %v1296, 4
        %v2101 = vsel %vm2088, %v2098, %v2100
        %v2102 = vrot.slane %v1297, 4
        %v2103 = vsel %vm2088, %v2100, %v2102
        %v2104 = vrot.slane %v1298, 4
        %v2105 = vsel %vm2088, %v2102, %v2104
        %v2106 = vrot.slane %v1299, 4
        %v2107 = vsel %vm2088, %v2104, %v2106
        %v2108 = vrot.slane %v1300, 4
        %v2109 = vsel %vm2088, %v2106, %v2108
        %v2110 = vrot.slane %v1301, 4
        %v2111 = vsel %vm2088, %v2108, %v2110
        %v2112 = vrot.slane %v1302, 4
        %v2113 = vsel %vm2088, %v2110, %v2112
        %v2114 = vrot.slane %v1303, 4
        %v2115 = vsel %vm2088, %v2112, %v2114
        %v2116 = vrot.slane %v1304, 4
        %v2117 = vsel %vm2088, %v2114, %v2116
        %v2118 = vrot.slane %v1305, 4
        %v2119 = vsel %vm2088, %v2116, %v2118
        %v2120 = vrot.slane %v1306, 4
        %v2121 = vsel %vm2088, %v2118, %v2120
        %v2122 = vrot.slane %v1307, 4
        %v2123 = vsel %vm2088, %v2120, %v2122
        %v2124 = vrot.slane %v1308, 4
        %v2125 = vsel %vm2088, %v2122, %v2124
        %v2126 = vrot.slane %v1309, 4
        %v2127 = vsel %vm2088, %v2124, %v2126
        %v2128 = vrot.slane %v1310, 4
        %v2129 = vsel %vm2088, %v2126, %v2128
        %v2130 = vrot.slane %v1311, 4
        %v2131 = vsel %vm2088, %v2128, %v2130
        %v2132 = vrot.slane %v1312, 4
        %v2133 = vsel %vm2088, %v2130, %v2132
        %v2134 = vrot.slane %v1313, 4
        %v2135 = vsel %vm2088, %v2132, %v2134
        %v2136 = vrot.slane %v1314, 4
        %v2137 = vsel %vm2088, %v2134, %v2136
        %v2138 = vrot.slane %v1315, 4
        %v2139 = vsel %vm2088, %v2136, %v2138
        %v2140 = vrot.slane %v1316, 4
        %v2141 = vsel %vm2088, %v2138, %v2140
        %v2142 = vrot.slane %v1317, 4
        %v2143 = vsel %vm2088, %v2140, %v2142
        %v2144 = vrot.slane %v1318, 4
        %v2145 = vsel %vm2088, %v2142, %v2144
        %v2146 = vrot.slane %v1319, 4
        %v2147 = vsel %vm2088, %v2144, %v2146
        %v2148 = vrot.slane %v1320, 4
        %v2149 = vsel %vm2088, %v2146, %v2148
        %v2150 = vrot.slane %v1321, 4
        %v2151 = vsel %vm2088, %v2148, %v2150
        %v2152 = vrot.slane %v1322, 4
        %v2153 = vsel %vm2088, %v2150, %v2152
        %v2154 = vrot.slane %v1323, 4
        %v2155 = vsel %vm2088, %v2152, %v2154
        %v2156 = vrot.slane %v1324, 4
        %v2157 = vsel %vm2088, %v2154, %v2156
        %v2158 = vrot.slane %v1325, 4
        %v2159 = vsel %vm2088, %v2156, %v2158
        %v2160 = vrot.slane %v1326, 4
        %v2161 = vsel %vm2088, %v2158, %v2160
        %v2162 = vrot.slane %v1327, 4
        %v2163 = vsel %vm2088, %v2160, %v2162
        %v2164 = vrot.slane %v1328, 4
        %v2165 = vsel %vm2088, %v2162, %v2164
        %v2166 = vrot.slane %v1329, 4
        %v2167 = vsel %vm2088, %v2164, %v2166
        %v2168 = vrot.slane %v1330, 4
        %v2169 = vsel %vm2088, %v2166, %v2168
        %v2170 = vrot.slane %v1331, 4
        %v2171 = vsel %vm2088, %v2168, %v2170
        %v2172 = vrot.slane %v1332, 4
        %v2173 = vsel %vm2088, %v2170, %v2172
        %v2174 = vrot.slane %v1333, 4
        %v2175 = vsel %vm2088, %v2172, %v2174
        %v2176 = vrot.slane %v1334, 4
        %v2177 = vsel %vm2088, %v2174, %v2176
        %v2178 = vrot.slane %v1335, 4
        %v2179 = vsel %vm2088, %v2176, %v2178
        %v2180 = vrot.slane %v1336, 4
        %v2181 = vsel %vm2088, %v2178, %v2180
        %v2182 = vrot.slane %v1337, 4
        %v2183 = vsel %vm2088, %v2180, %v2182
        %v2184 = vrot.slane %v1338, 4
        %v2185 = vsel %vm2088, %v2182, %v2184
        %v2186 = vrot.slane %v1339, 4
        %v2187 = vsel %vm2088, %v2184, %v2186
        %v2188 = vrot.slane %v1340, 4
        %v2189 = vsel %vm2088, %v2186, %v2188
        %v2190 = vrot.slane %v1341, 4
        %v2191 = vsel %vm2088, %v2188, %v2190
        %v2192 = vrot.slane %v1342, 4
        %v2193 = vsel %vm2088, %v2190, %v2192
        %v2194 = vrot.slane %v1343, 4
        %v2195 = vsel %vm2088, %v2192, %v2194
        %v2196 = vrot.slane %v1344, 4
        %v2197 = vsel %vm2088, %v2194, %v2196
        %v2198 = vrot.slane %v1345, 4
        %v2199 = vsel %vm2088, %v2196, %v2198
        %v2200 = vld [vmem:[%s4] sm:$0xff]
        %v2201 = vld [vmem:[%s4 + $0x8] sm:$0xff]
        %v2202 = vld [vmem:[%s4 + $0x10] sm:$0xff]
        %v2203 = vld [vmem:[%s4 + $0x18] sm:$0xff]
        %v2204 = vld [vmem:[%s4 + $0x20] sm:$0xff]
        %v2205 = vld [vmem:[%s4 + $0x28] sm:$0xff]
        %v2206 = vld [vmem:[%s4 + $0x30] sm:$0xff]
        %v2207 = vld [vmem:[%s4 + $0x38] sm:$0xff]
        %v2208 = vld [vmem:[%s4 + $0x40] sm:$0xff]
        %v2209 = vld [vmem:[%s4 + $0x48] sm:$0xff]
        %v2210 = vld [vmem:[%s4 + $0x50] sm:$0xff]
        %v2211 = vld [vmem:[%s4 + $0x58] sm:$0xff]
        %v2212 = vld [vmem:[%s4 + $0x60] sm:$0xff]
        %v2213 = vld [vmem:[%s4 + $0x68] sm:$0xff]
        %v2214 = vld [vmem:[%s4 + $0x70] sm:$0xff]
        %v2215 = vld [vmem:[%s4 + $0x78] sm:$0xff]
        %v2216 = vld [vmem:[%s4 + $0x80] sm:$0xff]
        %v2217 = vld [vmem:[%s4 + $0x88] sm:$0xff]
        %v2218 = vld [vmem:[%s4 + $0x90] sm:$0xff]
        %v2219 = vld [vmem:[%s4 + $0x98] sm:$0xff]
        %v2220 = vld [vmem:[%s4 + $0xa0] sm:$0xff]
        %v2221 = vld [vmem:[%s4 + $0xa8] sm:$0xff]
        %v2222 = vld [vmem:[%s4 + $0xb0] sm:$0xff]
        %v2223 = vld [vmem:[%s4 + $0xb8] sm:$0xff]
        %v2224 = vld [vmem:[%s4 + $0xc0] sm:$0xff]
        %v2225 = vld [vmem:[%s4 + $0xc8] sm:$0xff]
        %v2226 = vld [vmem:[%s4 + $0xd0] sm:$0xff]
        %v2227 = vld [vmem:[%s4 + $0xd8] sm:$0xff]
        %v2228 = vld [vmem:[%s4 + $0xe0] sm:$0xff]
        %v2229 = vld [vmem:[%s4 + $0xe8] sm:$0xff]
        %v2230 = vld [vmem:[%s4 + $0xf0] sm:$0xff]
        %v2231 = vld [vmem:[%s4 + $0xf8] sm:$0xff]
        %v2232 = vld [vmem:[%s4 + $0x100] sm:$0xff]
        %v2233 = vld [vmem:[%s4 + $0x108] sm:$0xff]
        %v2234 = vld [vmem:[%s4 + $0x110] sm:$0xff]
        %v2235 = vld [vmem:[%s4 + $0x118] sm:$0xff]
        %v2236 = vld [vmem:[%s4 + $0x120] sm:$0xff]
        %v2237 = vld [vmem:[%s4 + $0x128] sm:$0xff]
        %v2238 = vld [vmem:[%s4 + $0x130] sm:$0xff]
        %v2239 = vld [vmem:[%s4 + $0x138] sm:$0xff]
        %v2240 = vld [vmem:[%s4 + $0x140] sm:$0xff]
        %v2241 = vld [vmem:[%s4 + $0x148] sm:$0xff]
        %v2242 = vld [vmem:[%s4 + $0x150] sm:$0xff]
        %v2243 = vld [vmem:[%s4 + $0x158] sm:$0xff]
        %v2244 = vld [vmem:[%s4 + $0x160] sm:$0xff]
        %v2245 = vld [vmem:[%s4 + $0x168] sm:$0xff]
        %v2246 = vld [vmem:[%s4 + $0x170] sm:$0xff]
        %v2247 = vld [vmem:[%s4 + $0x178] sm:$0xff]
        %v2248 = vld [vmem:[%s4 + $0x180] sm:$0xff]
        %v2249 = vld [vmem:[%s4 + $0x188] sm:$0xff]
        %v2250 = vld [vmem:[%s4 + $0x190] sm:$0xff]
        %v2251 = vld [vmem:[%s4 + $0x198] sm:$0xff]
        %v2252 = vld [vmem:[%s4 + $0x1a0] sm:$0xff]
        %v2253 = vld [vmem:[%s4 + $0x1a8] sm:$0xff]
        %v2254 = vld [vmem:[%s4 + $0x1b0] sm:$0xff]
        %v2255 = vld [vmem:[%s4 + $0x1b8] sm:$0xff]
        %v2256 = vld [vmem:[%s4 + $0x1c0] sm:$0xff]
        %v2257 = vld [vmem:[%s4 + $0x1c8] sm:$0xff]
        %v2258 = vld [vmem:[%s4 + $0x1d0] sm:$0xff]
        %v2259 = vld [vmem:[%s4 + $0x1d8] sm:$0xff]
        %v2260 = vld [vmem:[%s4 + $0x1e0] sm:$0xff]
        %v2261 = vld [vmem:[%s4 + $0x1e8] sm:$0xff]
        %v2262 = vld [vmem:[%s4 + $0x1f0] sm:$0xff]
        %v2263 = vld [vmem:[%s4 + $0x1f8] sm:$0xff]
        %v2264 = vld [vmem:[%s4 + $0x200] sm:$0xff]
        %v2265 = vld [vmem:[%s4 + $0x208] sm:$0xff]
        %v2266 = vld [vmem:[%s4 + $0x210] sm:$0xff]
        %v2267 = vld [vmem:[%s4 + $0x218] sm:$0xff]
        %v2268 = vld [vmem:[%s4 + $0x220] sm:$0xff]
        %v2269 = vld [vmem:[%s4 + $0x228] sm:$0xff]
        %v2270 = vld [vmem:[%s4 + $0x230] sm:$0xff]
        %v2271 = vld [vmem:[%s4 + $0x238] sm:$0xff]
        %v2272 = vld [vmem:[%s4 + $0x240] sm:$0xff]
        %v2273 = vld [vmem:[%s4 + $0x248] sm:$0xff]
        %v2274 = vld [vmem:[%s4 + $0x250] sm:$0xff]
        %v2275 = vld [vmem:[%s4 + $0x258] sm:$0xff]
        %v2276 = vld [vmem:[%s4 + $0x260] sm:$0xff]
        %v2277 = vld [vmem:[%s4 + $0x268] sm:$0xff]
        %v2278 = vld [vmem:[%s4 + $0x270] sm:$0xff]
        %v2279 = vld [vmem:[%s4 + $0x278] sm:$0xff]
        %v2280 = vld [vmem:[%s4 + $0x280] sm:$0xff]
        %v2281 = vld [vmem:[%s4 + $0x288] sm:$0xff]
        %v2282 = vld [vmem:[%s4 + $0x290] sm:$0xff]
        %v2283 = vld [vmem:[%s4 + $0x298] sm:$0xff]
        %v2284 = vld [vmem:[%s4 + $0x2a0] sm:$0xff]
        %v2285 = vld [vmem:[%s4 + $0x2a8] sm:$0xff]
        %v2286 = vld [vmem:[%s4 + $0x2b0] sm:$0xff]
        %v2287 = vld [vmem:[%s4 + $0x2b8] sm:$0xff]
        %v2288 = vld [vmem:[%s4 + $0x2c0] sm:$0xff]
        %v2289 = vld [vmem:[%s4 + $0x2c8] sm:$0xff]
        %v2290 = vld [vmem:[%s4 + $0x2d0] sm:$0xff]
        %v2291 = vld [vmem:[%s4 + $0x2d8] sm:$0xff]
        %v2292 = vld [vmem:[%s4 + $0x2e0] sm:$0xff]
        %v2293 = vld [vmem:[%s4 + $0x2e8] sm:$0xff]
        %v2294 = vld [vmem:[%s4 + $0x2f0] sm:$0xff]
        %v2295 = vld [vmem:[%s4 + $0x2f8] sm:$0xff]
        %v2296 = vld [vmem:[%s4 + $0x300] sm:$0xff]
        %v2297 = vld [vmem:[%s4 + $0x308] sm:$0xff]
        %v2298 = vld [vmem:[%s4 + $0x310] sm:$0xff]
        %v2299 = vld [vmem:[%s4 + $0x318] sm:$0xff]
        %v2300 = vld [vmem:[%s4 + $0x320] sm:$0xff]
        %v2301 = vld [vmem:[%s4 + $0x328] sm:$0xff]
        %v2302 = vld [vmem:[%s4 + $0x330] sm:$0xff]
        %v2303 = vld [vmem:[%s4 + $0x338] sm:$0xff]
        %v2304 = vld [vmem:[%s4 + $0x340] sm:$0xff]
        %v2305 = vld [vmem:[%s4 + $0x348] sm:$0xff]
        %v2306 = vld [vmem:[%s4 + $0x350] sm:$0xff]
        %v2307 = vld [vmem:[%s4 + $0x358] sm:$0xff]
        %v2308 = vld [vmem:[%s4 + $0x360] sm:$0xff]
        %v2309 = vld [vmem:[%s4 + $0x368] sm:$0xff]
        %v2310 = vld [vmem:[%s4 + $0x370] sm:$0xff]
        %v2311 = vld [vmem:[%s4 + $0x378] sm:$0xff]
        %v2312 = vld [vmem:[%s4 + $0x380] sm:$0xff]
        %v2313 = vld [vmem:[%s4 + $0x388] sm:$0xff]
        %v2314 = vld [vmem:[%s4 + $0x390] sm:$0xff]
        %v2315 = vld [vmem:[%s4 + $0x398] sm:$0xff]
        %v2316 = vld [vmem:[%s4 + $0x3a0] sm:$0xff]
        %v2317 = vld [vmem:[%s4 + $0x3a8] sm:$0xff]
        %v2318 = vld [vmem:[%s4 + $0x3b0] sm:$0xff]
        %v2319 = vld [vmem:[%s4 + $0x3b8] sm:$0xff]
        %v2320 = vld [vmem:[%s4 + $0x3c0] sm:$0xff]
        %v2321 = vld [vmem:[%s4 + $0x3c8] sm:$0xff]
        %v2322 = vld [vmem:[%s4 + $0x3d0] sm:$0xff]
        %v2323 = vld [vmem:[%s4 + $0x3d8] sm:$0xff]
        %v2324 = vld [vmem:[%s4 + $0x3e0] sm:$0xff]
        %v2325 = vld [vmem:[%s4 + $0x3e8] sm:$0xff]
        %v2326 = vld [vmem:[%s4 + $0x3f0] sm:$0xff]
        %v2327 = vld [vmem:[%s4 + $0x3f8] sm:$0xff]
        %v2328 = vld [vmem:[%s4 + $0x400] sm:$0xff]
        %v2329 = vld [vmem:[%s4 + $0x408] sm:$0xff]
        %v2330 = vld [vmem:[%s4 + $0x410] sm:$0xff]
        %v2331 = vld [vmem:[%s4 + $0x418] sm:$0xff]
        %v2332 = vld [vmem:[%s4 + $0x420] sm:$0xff]
        %v2333 = vld [vmem:[%s4 + $0x428] sm:$0xff]
        %v2334 = vld [vmem:[%s4 + $0x430] sm:$0xff]
        %v2335 = vld [vmem:[%s4 + $0x438] sm:$0xff]
        %v2336 = vld [vmem:[%s4 + $0x440] sm:$0xff]
        %v2337 = vld [vmem:[%s4 + $0x448] sm:$0xff]
        %v2338 = vld [vmem:[%s4 + $0x450] sm:$0xff]
        %v2339 = vld [vmem:[%s4 + $0x458] sm:$0xff]
        %v2340 = vld [vmem:[%s4 + $0x460] sm:$0xff]
        %v2341 = vld [vmem:[%s4 + $0x468] sm:$0xff]
        %v2342 = vld [vmem:[%s4 + $0x470] sm:$0xff]
        %v2343 = vld [vmem:[%s4 + $0x478] sm:$0xff]
        %v2344 = vld [vmem:[#allocation7] sm:$0x1]
        %v2346 = vperm.slane %v2344, 0
        %v2348 = vrot.slane %v1405, 2
        %v2349 = vrot.slane %v1407, 2
        %v2350 = vsel %vm1514, %v2348, %v2349
        %v2351 = vrot.slane %v1517, 2
        %v2352 = vrot.slane %v1519, 2
        %v2353 = vsel %vm1514, %v2351, %v2352
        %v2354 = vrot.slane %v1630, 2
        %v2355 = vrot.slane %v1632, 2
        %v2356 = vsel %vm1514, %v2354, %v2355
        %v2357 = vrot.slane %v1741, 2
        %v2358 = vrot.slane %v1743, 2
        %v2359 = vsel %vm1514, %v2357, %v2358
        %v2360 = vrot.slane %v1853, 2
        %v2361 = vrot.slane %v1855, 2
        %v2362 = vsel %vm1514, %v2360, %v2361
        %v2363 = vrot.slane %v1527, 2
        %v2364 = vrot.slane %v1529, 2
        %v2365 = vsel %vm1514, %v2363, %v2364
        %v2366 = vrot.slane %v1979, 2
        %v2367 = vrot.slane %v1981, 2
        %v2368 = vsel %vm1514, %v2366, %v2367
        %v2369 = vrot.slane %v2091, 2
        %v2370 = vrot.slane %v2093, 2
        %v2371 = vsel %vm1514, %v2369, %v2370
        %v2372 = vrot.slane %v1409, 2
        %v2373 = vsel %vm1514, %v2349, %v2372
        %v2374 = vrot.slane %v1521, 2
        %v2375 = vsel %vm1514, %v2352, %v2374
        %v2376 = vrot.slane %v1634, 2
        %v2377 = vsel %vm1514, %v2355, %v2376
        %v2378 = vrot.slane %v1745, 2
        %v2379 = vsel %vm1514, %v2358, %v2378
        %v2380 = vrot.slane %v1857, 2
        %v2381 = vsel %vm1514, %v2361, %v2380
        %v2382 = vrot.slane %v1531, 2
        %v2383 = vsel %vm1514, %v2364, %v2382
        %v2384 = vrot.slane %v1983, 2
        %v2385 = vsel %vm1514, %v2367, %v2384
        %v2386 = vrot.slane %v2095, 2
        %v2387 = vsel %vm1514, %v2370, %v2386
        %v2388 = vrot.slane %v1411, 2
        %v2389 = vsel %vm1514, %v2372, %v2388
        %v2390 = vrot.slane %v1523, 2
        %v2391 = vsel %vm1514, %v2374, %v2390
        %v2392 = vrot.slane %v1636, 2
        %v2393 = vsel %vm1514, %v2376, %v2392
        %v2394 = vrot.slane %v1747, 2
        %v2395 = vsel %vm1514, %v2378, %v2394
        %v2396 = vrot.slane %v1859, 2
        %v2397 = vsel %vm1514, %v2380, %v2396
        %v2398 = vrot.slane %v1533, 2
        %v2399 = vsel %vm1514, %v2382, %v2398
        %v2400 = vrot.slane %v1985, 2
        %v2401 = vsel %vm1514, %v2384, %v2400
        %v2402 = vrot.slane %v2097, 2
        %v2403 = vsel %vm1514, %v2386, %v2402
        %v2404 = vrot.slane %v1413, 2
        %v2405 = vsel %vm1514, %v2388, %v2404
        %v2406 = vrot.slane %v1525, 2
        %v2407 = vsel %vm1514, %v2390, %v2406
        %v2408 = vrot.slane %v1638, 2
        %v2409 = vsel %vm1514, %v2392, %v2408
        %v2410 = vrot.slane %v1749, 2
        %v2411 = vsel %vm1514, %v2394, %v2410
        %v2412 = vrot.slane %v1861, 2
        %v2413 = vsel %vm1514, %v2396, %v2412
        %v2414 = vrot.slane %v1535, 2
        %v2415 = vsel %vm1514, %v2398, %v2414
        %v2416 = vrot.slane %v1987, 2
        %v2417 = vsel %vm1514, %v2400, %v2416
        %v2418 = vrot.slane %v2099, 2
        %v2419 = vsel %vm1514, %v2402, %v2418
        %v2420 = vrot.slane %v1415, 2
        %v2421 = vsel %vm1514, %v2404, %v2420
        %v2422 = vsel %vm1514, %v2406, %v2363
        %v2423 = vrot.slane %v1640, 2
        %v2424 = vsel %vm1514, %v2408, %v2423
        %v2425 = vrot.slane %v1751, 2
        %v2426 = vsel %vm1514, %v2410, %v2425
        %v2427 = vrot.slane %v1863, 2
        %v2428 = vsel %vm1514, %v2412, %v2427
        %v2429 = vrot.slane %v1537, 2
        %v2430 = vsel %vm1514, %v2414, %v2429
        %v2431 = vrot.slane %v1989, 2
        %v2432 = vsel %vm1514, %v2416, %v2431
        %v2433 = vrot.slane %v2101, 2
        %v2434 = vsel %vm1514, %v2418, %v2433
        %v2435 = vrot.slane %v1417, 2
        %v2436 = vsel %vm1514, %v2420, %v2435
        %v2437 = vrot.slane %v1642, 2
        %v2438 = vsel %vm1514, %v2423, %v2437
        %v2439 = vrot.slane %v1753, 2
        %v2440 = vsel %vm1514, %v2425, %v2439
        %v2441 = vrot.slane %v1865, 2
        %v2442 = vsel %vm1514, %v2427, %v2441
        %v2443 = vrot.slane %v1539, 2
        %v2444 = vsel %vm1514, %v2429, %v2443
        %v2445 = vrot.slane %v1991, 2
        %v2446 = vsel %vm1514, %v2431, %v2445
        %v2447 = vrot.slane %v2103, 2
        %v2448 = vsel %vm1514, %v2433, %v2447
        %v2449 = vrot.slane %v1419, 2
        %v2450 = vsel %vm1514, %v2435, %v2449
        %v2451 = vrot.slane %v1644, 2
        %v2452 = vsel %vm1514, %v2437, %v2451
        %v2453 = vrot.slane %v1755, 2
        %v2454 = vsel %vm1514, %v2439, %v2453
        %v2455 = vrot.slane %v1867, 2
        %v2456 = vsel %vm1514, %v2441, %v2455
        %v2457 = vrot.slane %v1541, 2
        %v2458 = vsel %vm1514, %v2443, %v2457
        %v2459 = vrot.slane %v1993, 2
        %v2460 = vsel %vm1514, %v2445, %v2459
        %v2461 = vrot.slane %v2105, 2
        %v2462 = vsel %vm1514, %v2447, %v2461
        %v2463 = vrot.slane %v1421, 2
        %v2464 = vsel %vm1514, %v2449, %v2463
        %v2465 = vrot.slane %v1646, 2
        %v2466 = vsel %vm1514, %v2451, %v2465
        %v2467 = vrot.slane %v1757, 2
        %v2468 = vsel %vm1514, %v2453, %v2467
        %v2469 = vrot.slane %v1869, 2
        %v2470 = vsel %vm1514, %v2455, %v2469
        %v2471 = vrot.slane %v1543, 2
        %v2472 = vsel %vm1514, %v2457, %v2471
        %v2473 = vrot.slane %v1995, 2
        %v2474 = vsel %vm1514, %v2459, %v2473
        %v2475 = vrot.slane %v2107, 2
        %v2476 = vsel %vm1514, %v2461, %v2475
        %v2477 = vrot.slane %v1423, 2
        %v2478 = vsel %vm1514, %v2463, %v2477
        %v2479 = vrot.slane %v1648, 2
        %v2480 = vsel %vm1514, %v2465, %v2479
        %v2481 = vrot.slane %v1759, 2
        %v2482 = vsel %vm1514, %v2467, %v2481
        %v2483 = vrot.slane %v1871, 2
        %v2484 = vsel %vm1514, %v2469, %v2483
        %v2485 = vrot.slane %v1545, 2
        %v2486 = vsel %vm1514, %v2471, %v2485
        %v2487 = vrot.slane %v1997, 2
        %v2488 = vsel %vm1514, %v2473, %v2487
        %v2489 = vrot.slane %v2109, 2
        %v2490 = vsel %vm1514, %v2475, %v2489
        %v2491 = vrot.slane %v1425, 2
        %v2492 = vsel %vm1514, %v2477, %v2491
        %v2493 = vrot.slane %v1650, 2
        %v2494 = vsel %vm1514, %v2479, %v2493
        %v2495 = vrot.slane %v1761, 2
        %v2496 = vsel %vm1514, %v2481, %v2495
        %v2497 = vrot.slane %v1873, 2
        %v2498 = vsel %vm1514, %v2483, %v2497
        %v2499 = vrot.slane %v1547, 2
        %v2500 = vsel %vm1514, %v2485, %v2499
        %v2501 = vrot.slane %v1999, 2
        %v2502 = vsel %vm1514, %v2487, %v2501
        %v2503 = vrot.slane %v2111, 2
        %v2504 = vsel %vm1514, %v2489, %v2503
        %v2505 = vrot.slane %v1427, 2
        %v2506 = vsel %vm1514, %v2491, %v2505
        %v2507 = vrot.slane %v1652, 2
        %v2508 = vsel %vm1514, %v2493, %v2507
        %v2509 = vrot.slane %v1763, 2
        %v2510 = vsel %vm1514, %v2495, %v2509
        %v2511 = vrot.slane %v1875, 2
        %v2512 = vsel %vm1514, %v2497, %v2511
        %v2513 = vrot.slane %v1549, 2
        %v2514 = vsel %vm1514, %v2499, %v2513
        %v2515 = vrot.slane %v2001, 2
        %v2516 = vsel %vm1514, %v2501, %v2515
        %v2517 = vrot.slane %v2113, 2
        %v2518 = vsel %vm1514, %v2503, %v2517
        %v2519 = vrot.slane %v1429, 2
        %v2520 = vsel %vm1514, %v2505, %v2519
        %v2521 = vrot.slane %v1654, 2
        %v2522 = vsel %vm1514, %v2507, %v2521
        %v2523 = vrot.slane %v1765, 2
        %v2524 = vsel %vm1514, %v2509, %v2523
        %v2525 = vrot.slane %v1877, 2
        %v2526 = vsel %vm1514, %v2511, %v2525
        %v2527 = vrot.slane %v1551, 2
        %v2528 = vsel %vm1514, %v2513, %v2527
        %v2529 = vrot.slane %v2003, 2
        %v2530 = vsel %vm1514, %v2515, %v2529
        %v2531 = vrot.slane %v2115, 2
        %v2532 = vsel %vm1514, %v2517, %v2531
        %v2533 = vrot.slane %v1431, 2
        %v2534 = vsel %vm1514, %v2519, %v2533
        %v2535 = vrot.slane %v1656, 2
        %v2536 = vsel %vm1514, %v2521, %v2535
        %v2537 = vrot.slane %v1767, 2
        %v2538 = vsel %vm1514, %v2523, %v2537
        %v2539 = vrot.slane %v1879, 2
        %v2540 = vsel %vm1514, %v2525, %v2539
        %v2541 = vrot.slane %v1553, 2
        %v2542 = vsel %vm1514, %v2527, %v2541
        %v2543 = vrot.slane %v2005, 2
        %v2544 = vsel %vm1514, %v2529, %v2543
        %v2545 = vrot.slane %v2117, 2
        %v2546 = vsel %vm1514, %v2531, %v2545
        %v2547 = vrot.slane %v1433, 2
        %v2548 = vsel %vm1514, %v2533, %v2547
        %v2549 = vrot.slane %v1658, 2
        %v2550 = vsel %vm1514, %v2535, %v2549
        %v2551 = vrot.slane %v1769, 2
        %v2552 = vsel %vm1514, %v2537, %v2551
        %v2553 = vrot.slane %v1881, 2
        %v2554 = vsel %vm1514, %v2539, %v2553
        %v2555 = vrot.slane %v1555, 2
        %v2556 = vsel %vm1514, %v2541, %v2555
        %v2557 = vrot.slane %v2007, 2
        %v2558 = vsel %vm1514, %v2543, %v2557
        %v2559 = vrot.slane %v2119, 2
        %v2560 = vsel %vm1514, %v2545, %v2559
        %v2561 = vrot.slane %v1435, 2
        %v2562 = vsel %vm1514, %v2547, %v2561
        %v2563 = vrot.slane %v1660, 2
        %v2564 = vsel %vm1514, %v2549, %v2563
        %v2565 = vrot.slane %v1771, 2
        %v2566 = vsel %vm1514, %v2551, %v2565
        %v2567 = vrot.slane %v1883, 2
        %v2568 = vsel %vm1514, %v2553, %v2567
        %v2569 = vrot.slane %v1557, 2
        %v2570 = vsel %vm1514, %v2555, %v2569
        %v2571 = vrot.slane %v2009, 2
        %v2572 = vsel %vm1514, %v2557, %v2571
        %v2573 = vrot.slane %v2121, 2
        %v2574 = vsel %vm1514, %v2559, %v2573
        %v2575 = vrot.slane %v1437, 2
        %v2576 = vsel %vm1514, %v2561, %v2575
        %v2577 = vrot.slane %v1662, 2
        %v2578 = vsel %vm1514, %v2563, %v2577
        %v2579 = vrot.slane %v1773, 2
        %v2580 = vsel %vm1514, %v2565, %v2579
        %v2581 = vrot.slane %v1885, 2
        %v2582 = vsel %vm1514, %v2567, %v2581
        %v2583 = vrot.slane %v1559, 2
        %v2584 = vsel %vm1514, %v2569, %v2583
        %v2585 = vrot.slane %v2011, 2
        %v2586 = vsel %vm1514, %v2571, %v2585
        %v2587 = vrot.slane %v2123, 2
        %v2588 = vsel %vm1514, %v2573, %v2587
        %v2589 = vrot.slane %v1439, 2
        %v2590 = vsel %vm1514, %v2575, %v2589
        %v2591 = vrot.slane %v1664, 2
        %v2592 = vsel %vm1514, %v2577, %v2591
        %v2593 = vrot.slane %v1775, 2
        %v2594 = vsel %vm1514, %v2579, %v2593
        %v2595 = vrot.slane %v1887, 2
        %v2596 = vsel %vm1514, %v2581, %v2595
        %v2597 = vrot.slane %v1561, 2
        %v2598 = vsel %vm1514, %v2583, %v2597
        %v2599 = vrot.slane %v2013, 2
        %v2600 = vsel %vm1514, %v2585, %v2599
        %v2601 = vrot.slane %v2125, 2
        %v2602 = vsel %vm1514, %v2587, %v2601
        %v2603 = vrot.slane %v1441, 2
        %v2604 = vsel %vm1514, %v2589, %v2603
        %v2605 = vrot.slane %v1666, 2
        %v2606 = vsel %vm1514, %v2591, %v2605
        %v2607 = vrot.slane %v1777, 2
        %v2608 = vsel %vm1514, %v2593, %v2607
        %v2609 = vrot.slane %v1889, 2
        %v2610 = vsel %vm1514, %v2595, %v2609
        %v2611 = vrot.slane %v1563, 2
        %v2612 = vsel %vm1514, %v2597, %v2611
        %v2613 = vrot.slane %v2015, 2
        %v2614 = vsel %vm1514, %v2599, %v2613
        %v2615 = vrot.slane %v2127, 2
        %v2616 = vsel %vm1514, %v2601, %v2615
        %v2617 = vrot.slane %v1443, 2
        %v2618 = vsel %vm1514, %v2603, %v2617
        %v2619 = vrot.slane %v1668, 2
        %v2620 = vsel %vm1514, %v2605, %v2619
        %v2621 = vrot.slane %v1779, 2
        %v2622 = vsel %vm1514, %v2607, %v2621
        %v2623 = vrot.slane %v1891, 2
        %v2624 = vsel %vm1514, %v2609, %v2623
        %v2625 = vrot.slane %v1565, 2
        %v2626 = vsel %vm1514, %v2611, %v2625
        %v2627 = vrot.slane %v2017, 2
        %v2628 = vsel %vm1514, %v2613, %v2627
        %v2629 = vrot.slane %v2129, 2
        %v2630 = vsel %vm1514, %v2615, %v2629
        %v2631 = vrot.slane %v1445, 2
        %v2632 = vsel %vm1514, %v2617, %v2631
        %v2633 = vrot.slane %v1670, 2
        %v2634 = vsel %vm1514, %v2619, %v2633
        %v2635 = vrot.slane %v1781, 2
        %v2636 = vsel %vm1514, %v2621, %v2635
        %v2637 = vrot.slane %v1893, 2
        %v2638 = vsel %vm1514, %v2623, %v2637
        %v2639 = vrot.slane %v1567, 2
        %v2640 = vsel %vm1514, %v2625, %v2639
        %v2641 = vrot.slane %v2019, 2
        %v2642 = vsel %vm1514, %v2627, %v2641
        %v2643 = vrot.slane %v2131, 2
        %v2644 = vsel %vm1514, %v2629, %v2643
        %v2645 = vrot.slane %v1447, 2
        %v2646 = vsel %vm1514, %v2631, %v2645
        %v2647 = vrot.slane %v1672, 2
        %v2648 = vsel %vm1514, %v2633, %v2647
        %v2649 = vrot.slane %v1783, 2
        %v2650 = vsel %vm1514, %v2635, %v2649
        %v2651 = vrot.slane %v1895, 2
        %v2652 = vsel %vm1514, %v2637, %v2651
        %v2653 = vrot.slane %v1569, 2
        %v2654 = vsel %vm1514, %v2639, %v2653
        %v2655 = vrot.slane %v2021, 2
        %v2656 = vsel %vm1514, %v2641, %v2655
        %v2657 = vrot.slane %v2133, 2
        %v2658 = vsel %vm1514, %v2643, %v2657
        %v2659 = vrot.slane %v1449, 2
        %v2660 = vsel %vm1514, %v2645, %v2659
        %v2661 = vrot.slane %v1674, 2
        %v2662 = vsel %vm1514, %v2647, %v2661
        %v2663 = vrot.slane %v1785, 2
        %v2664 = vsel %vm1514, %v2649, %v2663
        %v2665 = vrot.slane %v1897, 2
        %v2666 = vsel %vm1514, %v2651, %v2665
        %v2667 = vrot.slane %v1571, 2
        %v2668 = vsel %vm1514, %v2653, %v2667
        %v2669 = vrot.slane %v2023, 2
        %v2670 = vsel %vm1514, %v2655, %v2669
        %v2671 = vrot.slane %v2135, 2
        %v2672 = vsel %vm1514, %v2657, %v2671
        %v2673 = vrot.slane %v1451, 2
        %v2674 = vsel %vm1514, %v2659, %v2673
        %v2675 = vrot.slane %v1676, 2
        %v2676 = vsel %vm1514, %v2661, %v2675
        %v2677 = vrot.slane %v1787, 2
        %v2678 = vsel %vm1514, %v2663, %v2677
        %v2679 = vrot.slane %v1899, 2
        %v2680 = vsel %vm1514, %v2665, %v2679
        %v2681 = vrot.slane %v1573, 2
        %v2682 = vsel %vm1514, %v2667, %v2681
        %v2683 = vrot.slane %v2025, 2
        %v2684 = vsel %vm1514, %v2669, %v2683
        %v2685 = vrot.slane %v2137, 2
        %v2686 = vsel %vm1514, %v2671, %v2685
        %v2687 = vrot.slane %v1453, 2
        %v2688 = vsel %vm1514, %v2673, %v2687
        %v2689 = vrot.slane %v1678, 2
        %v2690 = vsel %vm1514, %v2675, %v2689
        %v2691 = vrot.slane %v1789, 2
        %v2692 = vsel %vm1514, %v2677, %v2691
        %v2693 = vrot.slane %v1901, 2
        %v2694 = vsel %vm1514, %v2679, %v2693
        %v2695 = vrot.slane %v1575, 2
        %v2696 = vsel %vm1514, %v2681, %v2695
        %v2697 = vrot.slane %v2027, 2
        %v2698 = vsel %vm1514, %v2683, %v2697
        %v2699 = vrot.slane %v2139, 2
        %v2700 = vsel %vm1514, %v2685, %v2699
        %v2701 = vrot.slane %v1455, 2
        %v2702 = vsel %vm1514, %v2687, %v2701
        %v2703 = vrot.slane %v1680, 2
        %v2704 = vsel %vm1514, %v2689, %v2703
        %v2705 = vrot.slane %v1791, 2
        %v2706 = vsel %vm1514, %v2691, %v2705
        %v2707 = vrot.slane %v1903, 2
        %v2708 = vsel %vm1514, %v2693, %v2707
        %v2709 = vrot.slane %v1577, 2
        %v2710 = vsel %vm1514, %v2695, %v2709
        %v2711 = vrot.slane %v2029, 2
        %v2712 = vsel %vm1514, %v2697, %v2711
        %v2713 = vrot.slane %v2141, 2
        %v2714 = vsel %vm1514, %v2699, %v2713
        %v2715 = vrot.slane %v1457, 2
        %v2716 = vsel %vm1514, %v2701, %v2715
        %v2717 = vrot.slane %v1682, 2
        %v2718 = vsel %vm1514, %v2703, %v2717
        %v2719 = vrot.slane %v1793, 2
        %v2720 = vsel %vm1514, %v2705, %v2719
        %v2721 = vrot.slane %v1905, 2
        %v2722 = vsel %vm1514, %v2707, %v2721
        %v2723 = vrot.slane %v1579, 2
        %v2724 = vsel %vm1514, %v2709, %v2723
        %v2725 = vrot.slane %v2031, 2
        %v2726 = vsel %vm1514, %v2711, %v2725
        %v2727 = vrot.slane %v2143, 2
        %v2728 = vsel %vm1514, %v2713, %v2727
        %v2729 = vrot.slane %v1459, 2
        %v2730 = vsel %vm1514, %v2715, %v2729
        %v2731 = vrot.slane %v1684, 2
        %v2732 = vsel %vm1514, %v2717, %v2731
        %v2733 = vrot.slane %v1795, 2
        %v2734 = vsel %vm1514, %v2719, %v2733
        %v2735 = vrot.slane %v1907, 2
        %v2736 = vsel %vm1514, %v2721, %v2735
        %v2737 = vrot.slane %v1581, 2
        %v2738 = vsel %vm1514, %v2723, %v2737
        %v2739 = vrot.slane %v2033, 2
        %v2740 = vsel %vm1514, %v2725, %v2739
        %v2741 = vrot.slane %v2145, 2
        %v2742 = vsel %vm1514, %v2727, %v2741
        %v2743 = vrot.slane %v1461, 2
        %v2744 = vsel %vm1514, %v2729, %v2743
        %v2745 = vrot.slane %v1686, 2
        %v2746 = vsel %vm1514, %v2731, %v2745
        %v2747 = vrot.slane %v1797, 2
        %v2748 = vsel %vm1514, %v2733, %v2747
        %v2749 = vrot.slane %v1909, 2
        %v2750 = vsel %vm1514, %v2735, %v2749
        %v2751 = vrot.slane %v1583, 2
        %v2752 = vsel %vm1514, %v2737, %v2751
        %v2753 = vrot.slane %v2035, 2
        %v2754 = vsel %vm1514, %v2739, %v2753
        %v2755 = vrot.slane %v2147, 2
        %v2756 = vsel %vm1514, %v2741, %v2755
        %v2757 = vrot.slane %v1463, 2
        %v2758 = vsel %vm1514, %v2743, %v2757
        %v2759 = vrot.slane %v1688, 2
        %v2760 = vsel %vm1514, %v2745, %v2759
        %v2761 = vrot.slane %v1799, 2
        %v2762 = vsel %vm1514, %v2747, %v2761
        %v2763 = vrot.slane %v1911, 2
        %v2764 = vsel %vm1514, %v2749, %v2763
        %v2765 = vrot.slane %v1585, 2
        %v2766 = vsel %vm1514, %v2751, %v2765
        %v2767 = vrot.slane %v2037, 2
        %v2768 = vsel %vm1514, %v2753, %v2767
        %v2769 = vrot.slane %v2149, 2
        %v2770 = vsel %vm1514, %v2755, %v2769
        %v2771 = vrot.slane %v1465, 2
        %v2772 = vsel %vm1514, %v2757, %v2771
        %v2773 = vrot.slane %v1690, 2
        %v2774 = vsel %vm1514, %v2759, %v2773
        %v2775 = vrot.slane %v1801, 2
        %v2776 = vsel %vm1514, %v2761, %v2775
        %v2777 = vrot.slane %v1913, 2
        %v2778 = vsel %vm1514, %v2763, %v2777
        %v2779 = vrot.slane %v1587, 2
        %v2780 = vsel %vm1514, %v2765, %v2779
        %v2781 = vrot.slane %v2039, 2
        %v2782 = vsel %vm1514, %v2767, %v2781
        %v2783 = vrot.slane %v2151, 2
        %v2784 = vsel %vm1514, %v2769, %v2783
        %v2785 = vrot.slane %v1467, 2
        %v2786 = vsel %vm1514, %v2771, %v2785
        %v2787 = vrot.slane %v1692, 2
        %v2788 = vsel %vm1514, %v2773, %v2787
        %v2789 = vrot.slane %v1803, 2
        %v2790 = vsel %vm1514, %v2775, %v2789
        %v2791 = vrot.slane %v1915, 2
        %v2792 = vsel %vm1514, %v2777, %v2791
        %v2793 = vrot.slane %v1589, 2
        %v2794 = vsel %vm1514, %v2779, %v2793
        %v2795 = vrot.slane %v2041, 2
        %v2796 = vsel %vm1514, %v2781, %v2795
        %v2797 = vrot.slane %v2153, 2
        %v2798 = vsel %vm1514, %v2783, %v2797
        %v2799 = vrot.slane %v1469, 2
        %v2800 = vsel %vm1514, %v2785, %v2799
        %v2801 = vrot.slane %v1694, 2
        %v2802 = vsel %vm1514, %v2787, %v2801
        %v2803 = vrot.slane %v1805, 2
        %v2804 = vsel %vm1514, %v2789, %v2803
        %v2805 = vrot.slane %v1917, 2
        %v2806 = vsel %vm1514, %v2791, %v2805
        %v2807 = vrot.slane %v1591, 2
        %v2808 = vsel %vm1514, %v2793, %v2807
        %v2809 = vrot.slane %v2043, 2
        %v2810 = vsel %vm1514, %v2795, %v2809
        %v2811 = vrot.slane %v2155, 2
        %v2812 = vsel %vm1514, %v2797, %v2811
        %v2813 = vrot.slane %v1471, 2
        %v2814 = vsel %vm1514, %v2799, %v2813
        %v2815 = vrot.slane %v1696, 2
        %v2816 = vsel %vm1514, %v2801, %v2815
        %v2817 = vrot.slane %v1807, 2
        %v2818 = vsel %vm1514, %v2803, %v2817
        %v2819 = vrot.slane %v1919, 2
        %v2820 = vsel %vm1514, %v2805, %v2819
        %v2821 = vrot.slane %v1593, 2
        %v2822 = vsel %vm1514, %v2807, %v2821
        %v2823 = vrot.slane %v2045, 2
        %v2824 = vsel %vm1514, %v2809, %v2823
        %v2825 = vrot.slane %v2157, 2
        %v2826 = vsel %vm1514, %v2811, %v2825
        %v2827 = vrot.slane %v1473, 2
        %v2828 = vsel %vm1514, %v2813, %v2827
        %v2829 = vrot.slane %v1698, 2
        %v2830 = vsel %vm1514, %v2815, %v2829
        %v2831 = vrot.slane %v1809, 2
        %v2832 = vsel %vm1514, %v2817, %v2831
        %v2833 = vrot.slane %v1921, 2
        %v2834 = vsel %vm1514, %v2819, %v2833
        %v2835 = vrot.slane %v1595, 2
        %v2836 = vsel %vm1514, %v2821, %v2835
        %v2837 = vrot.slane %v2047, 2
        %v2838 = vsel %vm1514, %v2823, %v2837
        %v2839 = vrot.slane %v2159, 2
        %v2840 = vsel %vm1514, %v2825, %v2839
        %v2841 = vrot.slane %v1475, 2
        %v2842 = vsel %vm1514, %v2827, %v2841
        %v2843 = vrot.slane %v1700, 2
        %v2844 = vsel %vm1514, %v2829, %v2843
        %v2845 = vrot.slane %v1811, 2
        %v2846 = vsel %vm1514, %v2831, %v2845
        %v2847 = vrot.slane %v1923, 2
        %v2848 = vsel %vm1514, %v2833, %v2847
        %v2849 = vrot.slane %v1597, 2
        %v2850 = vsel %vm1514, %v2835, %v2849
        %v2851 = vrot.slane %v2049, 2
        %v2852 = vsel %vm1514, %v2837, %v2851
        %v2853 = vrot.slane %v2161, 2
        %v2854 = vsel %vm1514, %v2839, %v2853
        %v2855 = vrot.slane %v1477, 2
        %v2856 = vsel %vm1514, %v2841, %v2855
        %v2857 = vrot.slane %v1702, 2
        %v2858 = vsel %vm1514, %v2843, %v2857
        %v2859 = vrot.slane %v1813, 2
        %v2860 = vsel %vm1514, %v2845, %v2859
        %v2861 = vrot.slane %v1925, 2
        %v2862 = vsel %vm1514, %v2847, %v2861
        %v2863 = vrot.slane %v1599, 2
        %v2864 = vsel %vm1514, %v2849, %v2863
        %v2865 = vrot.slane %v2051, 2
        %v2866 = vsel %vm1514, %v2851, %v2865
        %v2867 = vrot.slane %v2163, 2
        %v2868 = vsel %vm1514, %v2853, %v2867
        %v2869 = vrot.slane %v1479, 2
        %v2870 = vsel %vm1514, %v2855, %v2869
        %v2871 = vrot.slane %v1704, 2
        %v2872 = vsel %vm1514, %v2857, %v2871
        %v2873 = vrot.slane %v1815, 2
        %v2874 = vsel %vm1514, %v2859, %v2873
        %v2875 = vrot.slane %v1927, 2
        %v2876 = vsel %vm1514, %v2861, %v2875
        %v2877 = vrot.slane %v1601, 2
        %v2878 = vsel %vm1514, %v2863, %v2877
        %v2879 = vrot.slane %v2053, 2
        %v2880 = vsel %vm1514, %v2865, %v2879
        %v2881 = vrot.slane %v2165, 2
        %v2882 = vsel %vm1514, %v2867, %v2881
        %v2883 = vrot.slane %v1481, 2
        %v2884 = vsel %vm1514, %v2869, %v2883
        %v2885 = vrot.slane %v1706, 2
        %v2886 = vsel %vm1514, %v2871, %v2885
        %v2887 = vrot.slane %v1817, 2
        %v2888 = vsel %vm1514, %v2873, %v2887
        %v2889 = vrot.slane %v1929, 2
        %v2890 = vsel %vm1514, %v2875, %v2889
        %v2891 = vrot.slane %v1603, 2
        %v2892 = vsel %vm1514, %v2877, %v2891
        %v2893 = vrot.slane %v2055, 2
        %v2894 = vsel %vm1514, %v2879, %v2893
        %v2895 = vrot.slane %v2167, 2
        %v2896 = vsel %vm1514, %v2881, %v2895
        %v2897 = vrot.slane %v1483, 2
        %v2898 = vsel %vm1514, %v2883, %v2897
        %v2899 = vrot.slane %v1708, 2
        %v2900 = vsel %vm1514, %v2885, %v2899
        %v2901 = vrot.slane %v1819, 2
        %v2902 = vsel %vm1514, %v2887, %v2901
        %v2903 = vrot.slane %v1931, 2
        %v2904 = vsel %vm1514, %v2889, %v2903
        %v2905 = vrot.slane %v1605, 2
        %v2906 = vsel %vm1514, %v2891, %v2905
        %v2907 = vrot.slane %v2057, 2
        %v2908 = vsel %vm1514, %v2893, %v2907
        %v2909 = vrot.slane %v2169, 2
        %v2910 = vsel %vm1514, %v2895, %v2909
        %v2911 = vrot.slane %v1485, 2
        %v2912 = vsel %vm1514, %v2897, %v2911
        %v2913 = vrot.slane %v1710, 2
        %v2914 = vsel %vm1514, %v2899, %v2913
        %v2915 = vrot.slane %v1821, 2
        %v2916 = vsel %vm1514, %v2901, %v2915
        %v2917 = vrot.slane %v1933, 2
        %v2918 = vsel %vm1514, %v2903, %v2917
        %v2919 = vrot.slane %v1607, 2
        %v2920 = vsel %vm1514, %v2905, %v2919
        %v2921 = vrot.slane %v2059, 2
        %v2922 = vsel %vm1514, %v2907, %v2921
        %v2923 = vrot.slane %v2171, 2
        %v2924 = vsel %vm1514, %v2909, %v2923
        %v2925 = vrot.slane %v1487, 2
        %v2926 = vsel %vm1514, %v2911, %v2925
        %v2927 = vrot.slane %v1712, 2
        %v2928 = vsel %vm1514, %v2913, %v2927
        %v2929 = vrot.slane %v1823, 2
        %v2930 = vsel %vm1514, %v2915, %v2929
        %v2931 = vrot.slane %v1935, 2
        %v2932 = vsel %vm1514, %v2917, %v2931
        %v2933 = vrot.slane %v1609, 2
        %v2934 = vsel %vm1514, %v2919, %v2933
        %v2935 = vrot.slane %v2061, 2
        %v2936 = vsel %vm1514, %v2921, %v2935
        %v2937 = vrot.slane %v2173, 2
        %v2938 = vsel %vm1514, %v2923, %v2937
        %v2939 = vrot.slane %v1489, 2
        %v2940 = vsel %vm1514, %v2925, %v2939
        %v2941 = vrot.slane %v1714, 2
        %v2942 = vsel %vm1514, %v2927, %v2941
        %v2943 = vrot.slane %v1825, 2
        %v2944 = vsel %vm1514, %v2929, %v2943
        %v2945 = vrot.slane %v1937, 2
        %v2946 = vsel %vm1514, %v2931, %v2945
        %v2947 = vrot.slane %v1611, 2
        %v2948 = vsel %vm1514, %v2933, %v2947
        %v2949 = vrot.slane %v2063, 2
        %v2950 = vsel %vm1514, %v2935, %v2949
        %v2951 = vrot.slane %v2175, 2
        %v2952 = vsel %vm1514, %v2937, %v2951
        %v2953 = vrot.slane %v1491, 2
        %v2954 = vsel %vm1514, %v2939, %v2953
        %v2955 = vrot.slane %v1716, 2
        %v2956 = vsel %vm1514, %v2941, %v2955
        %v2957 = vrot.slane %v1827, 2
        %v2958 = vsel %vm1514, %v2943, %v2957
        %v2959 = vrot.slane %v1939, 2
        %v2960 = vsel %vm1514, %v2945, %v2959
        %v2961 = vrot.slane %v1613, 2
        %v2962 = vsel %vm1514, %v2947, %v2961
        %v2963 = vrot.slane %v2065, 2
        %v2964 = vsel %vm1514, %v2949, %v2963
        %v2965 = vrot.slane %v2177, 2
        %v2966 = vsel %vm1514, %v2951, %v2965
        %v2967 = vrot.slane %v1493, 2
        %v2968 = vsel %vm1514, %v2953, %v2967
        %v2969 = vrot.slane %v1718, 2
        %v2970 = vsel %vm1514, %v2955, %v2969
        %v2971 = vrot.slane %v1829, 2
        %v2972 = vsel %vm1514, %v2957, %v2971
        %v2973 = vrot.slane %v1941, 2
        %v2974 = vsel %vm1514, %v2959, %v2973
        %v2975 = vrot.slane %v1615, 2
        %v2976 = vsel %vm1514, %v2961, %v2975
        %v2977 = vrot.slane %v2067, 2
        %v2978 = vsel %vm1514, %v2963, %v2977
        %v2979 = vrot.slane %v2179, 2
        %v2980 = vsel %vm1514, %v2965, %v2979
        %v2981 = vrot.slane %v1495, 2
        %v2982 = vsel %vm1514, %v2967, %v2981
        %v2983 = vrot.slane %v1720, 2
        %v2984 = vsel %vm1514, %v2969, %v2983
        %v2985 = vrot.slane %v1831, 2
        %v2986 = vsel %vm1514, %v2971, %v2985
        %v2987 = vrot.slane %v1943, 2
        %v2988 = vsel %vm1514, %v2973, %v2987
        %v2989 = vrot.slane %v1617, 2
        %v2990 = vsel %vm1514, %v2975, %v2989
        %v2991 = vrot.slane %v2069, 2
        %v2992 = vsel %vm1514, %v2977, %v2991
        %v2993 = vrot.slane %v2181, 2
        %v2994 = vsel %vm1514, %v2979, %v2993
        %v2995 = vrot.slane %v1497, 2
        %v2996 = vsel %vm1514, %v2981, %v2995
        %v2997 = vrot.slane %v1722, 2
        %v2998 = vsel %vm1514, %v2983, %v2997
        %v2999 = vrot.slane %v1833, 2
        %v3000 = vsel %vm1514, %v2985, %v2999
        %v3001 = vrot.slane %v1945, 2
        %v3002 = vsel %vm1514, %v2987, %v3001
        %v3003 = vrot.slane %v1619, 2
        %v3004 = vsel %vm1514, %v2989, %v3003
        %v3005 = vrot.slane %v2071, 2
        %v3006 = vsel %vm1514, %v2991, %v3005
        %v3007 = vrot.slane %v2183, 2
        %v3008 = vsel %vm1514, %v2993, %v3007
        %v3009 = vrot.slane %v1499, 2
        %v3010 = vsel %vm1514, %v2995, %v3009
        %v3011 = vrot.slane %v1724, 2
        %v3012 = vsel %vm1514, %v2997, %v3011
        %v3013 = vrot.slane %v1835, 2
        %v3014 = vsel %vm1514, %v2999, %v3013
        %v3015 = vrot.slane %v1947, 2
        %v3016 = vsel %vm1514, %v3001, %v3015
        %v3017 = vrot.slane %v1621, 2
        %v3018 = vsel %vm1514, %v3003, %v3017
        %v3019 = vrot.slane %v2073, 2
        %v3020 = vsel %vm1514, %v3005, %v3019
        %v3021 = vrot.slane %v2185, 2
        %v3022 = vsel %vm1514, %v3007, %v3021
        %v3023 = vrot.slane %v1501, 2
        %v3024 = vsel %vm1514, %v3009, %v3023
        %v3025 = vrot.slane %v1726, 2
        %v3026 = vsel %vm1514, %v3011, %v3025
        %v3027 = vrot.slane %v1837, 2
        %v3028 = vsel %vm1514, %v3013, %v3027
        %v3029 = vrot.slane %v1949, 2
        %v3030 = vsel %vm1514, %v3015, %v3029
        %v3031 = vrot.slane %v1623, 2
        %v3032 = vsel %vm1514, %v3017, %v3031
        %v3033 = vrot.slane %v2075, 2
        %v3034 = vsel %vm1514, %v3019, %v3033
        %v3035 = vrot.slane %v2187, 2
        %v3036 = vsel %vm1514, %v3021, %v3035
        %v3037 = vrot.slane %v1503, 2
        %v3038 = vsel %vm1514, %v3023, %v3037
        %v3039 = vrot.slane %v1728, 2
        %v3040 = vsel %vm1514, %v3025, %v3039
        %v3041 = vrot.slane %v1839, 2
        %v3042 = vsel %vm1514, %v3027, %v3041
        %v3043 = vrot.slane %v1951, 2
        %v3044 = vsel %vm1514, %v3029, %v3043
        %v3045 = vrot.slane %v1625, 2
        %v3046 = vsel %vm1514, %v3031, %v3045
        %v3047 = vrot.slane %v2077, 2
        %v3048 = vsel %vm1514, %v3033, %v3047
        %v3049 = vrot.slane %v2189, 2
        %v3050 = vsel %vm1514, %v3035, %v3049
        %v3051 = vrot.slane %v1505, 2
        %v3052 = vsel %vm1514, %v3037, %v3051
        %v3053 = vrot.slane %v1730, 2
        %v3054 = vsel %vm1514, %v3039, %v3053
        %v3055 = vrot.slane %v1841, 2
        %v3056 = vsel %vm1514, %v3041, %v3055
        %v3057 = vrot.slane %v1953, 2
        %v3058 = vsel %vm1514, %v3043, %v3057
        %v3059 = vrot.slane %v1967, 2
        %v3060 = vsel %vm1514, %v3045, %v3059
        %v3061 = vrot.slane %v2079, 2
        %v3062 = vsel %vm1514, %v3047, %v3061
        %v3063 = vrot.slane %v2191, 2
        %v3064 = vsel %vm1514, %v3049, %v3063
        %v3065 = vrot.slane %v1507, 2
        %v3066 = vsel %vm1514, %v3051, %v3065
        %v3067 = vrot.slane %v1732, 2
        %v3068 = vsel %vm1514, %v3053, %v3067
        %v3069 = vrot.slane %v1843, 2
        %v3070 = vsel %vm1514, %v3055, %v3069
        %v3071 = vrot.slane %v1955, 2
        %v3072 = vsel %vm1514, %v3057, %v3071
        %v3073 = vrot.slane %v1969, 2
        %v3074 = vsel %vm1514, %v3059, %v3073
        %v3075 = vrot.slane %v2081, 2
        %v3076 = vsel %vm1514, %v3061, %v3075
        %v3077 = vrot.slane %v2193, 2
        %v3078 = vsel %vm1514, %v3063, %v3077
        %v3079 = vrot.slane %v1509, 2
        %v3080 = vsel %vm1514, %v3065, %v3079
        %v3081 = vrot.slane %v1734, 2
        %v3082 = vsel %vm1514, %v3067, %v3081
        %v3083 = vrot.slane %v1845, 2
        %v3084 = vsel %vm1514, %v3069, %v3083
        %v3085 = vrot.slane %v1957, 2
        %v3086 = vsel %vm1514, %v3071, %v3085
        %v3087 = vrot.slane %v1971, 2
        %v3088 = vsel %vm1514, %v3073, %v3087
        %v3089 = vrot.slane %v2083, 2
        %v3090 = vsel %vm1514, %v3075, %v3089
        %v3091 = vrot.slane %v2195, 2
        %v3092 = vsel %vm1514, %v3077, %v3091
        %v3093 = vrot.slane %v1511, 2
        %v3094 = vsel %vm1514, %v3079, %v3093
        %v3095 = vrot.slane %v1736, 2
        %v3096 = vsel %vm1514, %v3081, %v3095
        %v3097 = vrot.slane %v1847, 2
        %v3098 = vsel %vm1514, %v3083, %v3097
        %v3099 = vrot.slane %v1959, 2
        %v3100 = vsel %vm1514, %v3085, %v3099
        %v3101 = vrot.slane %v1973, 2
        %v3102 = vsel %vm1514, %v3087, %v3101
        %v3103 = vrot.slane %v2085, 2
        %v3104 = vsel %vm1514, %v3089, %v3103
        %v3105 = vrot.slane %v2197, 2
        %v3106 = vsel %vm1514, %v3091, %v3105
        %v3107 = vrot.slane %v1513, 2
        %v3108 = vsel %vm1514, %v3093, %v3107
        %v3109 = vrot.slane %v1738, 2
        %v3110 = vsel %vm1514, %v3095, %v3109
        %v3111 = vrot.slane %v1849, 2
        %v3112 = vsel %vm1514, %v3097, %v3111
        %v3113 = vrot.slane %v1961, 2
        %v3114 = vsel %vm1514, %v3099, %v3113
        %v3115 = vrot.slane %v1975, 2
        %v3116 = vsel %vm1514, %v3101, %v3115
        %v3117 = vrot.slane %v2087, 2
        %v3118 = vsel %vm1514, %v3103, %v3117
        %v3119 = vrot.slane %v2199, 2
        %v3120 = vsel %vm1514, %v3105, %v3119
        %v3121 = vrot.slane %v1512, 2
        %v3122 = vsel %vm1514, %v3107, %v3121
        %v3123 = vrot.slane %v1624, 2
        %v3124 = vsel %vm1514, %v3045, %v3123
        %v3125 = vrot.slane %v1737, 2
        %v3126 = vsel %vm1514, %v3109, %v3125
        %v3127 = vrot.slane %v1851, 2
        %v3128 = vsel %vm1514, %v3111, %v3127
        %v3129 = vrot.slane %v1963, 2
        %v3130 = vsel %vm1514, %v3113, %v3129
        %v3131 = vrot.slane %v1974, 2
        %v3132 = vsel %vm1514, %v3115, %v3131
        %v3133 = vrot.slane %v2086, 2
        %v3134 = vsel %vm1514, %v3117, %v3133
        %v3135 = vrot.slane %v2198, 2
        %v3136 = vsel %vm1514, %v3119, %v3135
        %3592 = vmatpush.msra.mxu0 %v2215
        %3593 = vmatpush.msra.mxu0 %v2214
        %3594 = vmatpush.msra.mxu0 %v2213
        %3595 = vmatpush.msra.mxu0 %v2212
        %3596 = vmatpush.msra.mxu0 %v2211
        %3597 = vmatpush.msra.mxu0 %v2210
        %3598 = vmatpush.msra.mxu0 %v2209
        %3599 = vmatpush.msra.mxu0 %v2208
        %3600 = vmatpush.msra.mxu0 %v2207
        %3601 = vmatpush.msra.mxu0 %v2206
        %3602 = vmatpush.msra.mxu0 %v2205
        %3603 = vmatpush.msra.mxu0 %v2204
        %3604 = vmatpush.msra.mxu0 %v2203
        %3605 = vmatpush.msra.mxu0 %v2202
        %3606 = vmatpush.msra.mxu0 %v2201
        %3607 = vmatpush.msra.mxu0 %v2200
        %3608 = vmatmul.f32.gmra.mxu0 %v1517
        %v3609 = vpop.f32.mrf.mxu0
        %3610 = vmatmul.f32.gmra.mxu0 %v1519
        %v3611 = vpop.f32.mrf.mxu0
        %3612 = vmatmul.f32.gmra.mxu0 %v1521
        %v3613 = vpop.f32.mrf.mxu0
        %v3614 = vadd.f32 %v2346, %v3613
        %3615 = vmatmul.f32.gmra.mxu0 %v1523
        %v3616 = vpop.f32.mrf.mxu0
        %v3617 = vadd.f32 %v2346, %v3616
        %3618 = vmatmul.f32.gmra.mxu0 %v1525
        %v3619 = vpop.f32.mrf.mxu0
        %v3620 = vadd.f32 %v2346, %v3619
        %3621 = vmatmul.f32.gmra.mxu0 %v1527
        %v3622 = vpop.f32.mrf.mxu0
        %v3623 = vadd.f32 %v2346, %v3622
        %3624 = vmatmul.f32.gmra.mxu0 %v1529
        %v3625 = vpop.f32.mrf.mxu0
        %v3626 = vadd.f32 %v2346, %v3625
        %3627 = vmatmul.f32.gmra.mxu0 %v1531
        %v3628 = vpop.f32.mrf.mxu0
        %v3629 = vadd.f32 %v2346, %v3628
        %3630 = vmatmul.f32.gmra.mxu0 %v1533
        %v3631 = vpop.f32.mrf.mxu0
        %v3632 = vadd.f32 %v2346, %v3631
        %3633 = vmatmul.f32.gmra.mxu0 %v1535
        %v3634 = vpop.f32.mrf.mxu0
        %v3635 = vadd.f32 %v2346, %v3634
        %3636 = vmatmul.f32.gmra.mxu0 %v1537
        %v3637 = vpop.f32.mrf.mxu0
        %v3638 = vadd.f32 %v2346, %v3637
        %3639 = vmatmul.f32.gmra.mxu0 %v1539
        %v3640 = vpop.f32.mrf.mxu0
        %v3641 = vadd.f32 %v2346, %v3640
        %3642 = vmatmul.f32.gmra.mxu0 %v1541
        %v3643 = vpop.f32.mrf.mxu0
        %v3644 = vadd.f32 %v2346, %v3643
        %3645 = vmatmul.f32.gmra.mxu0 %v1543
        %v3646 = vpop.f32.mrf.mxu0
        %v3647 = vadd.f32 %v2346, %v3646
        %3648 = vmatmul.f32.gmra.mxu0 %v1545
        %v3649 = vpop.f32.mrf.mxu0
        %v3650 = vadd.f32 %v2346, %v3649
        %3651 = vmatmul.f32.gmra.mxu0 %v1547
        %v3652 = vpop.f32.mrf.mxu0
        %v3653 = vadd.f32 %v2346, %v3652
        %3654 = vmatmul.f32.gmra.mxu0 %v1549
        %v3655 = vpop.f32.mrf.mxu0
        %v3656 = vadd.f32 %v2346, %v3655
        %3657 = vmatmul.f32.gmra.mxu0 %v1551
        %v3658 = vpop.f32.mrf.mxu0
        %v3659 = vadd.f32 %v2346, %v3658
        %3660 = vmatmul.f32.gmra.mxu0 %v1553
        %v3661 = vpop.f32.mrf.mxu0
        %v3662 = vadd.f32 %v2346, %v3661
        %3663 = vmatmul.f32.gmra.mxu0 %v1555
        %v3664 = vpop.f32.mrf.mxu0
        %v3665 = vadd.f32 %v2346, %v3664
        %3666 = vmatmul.f32.gmra.mxu0 %v1557
        %v3667 = vpop.f32.mrf.mxu0
        %v3668 = vadd.f32 %v2346, %v3667
        %3669 = vmatmul.f32.gmra.mxu0 %v1559
        %v3670 = vpop.f32.mrf.mxu0
        %v3671 = vadd.f32 %v2346, %v3670
        %3672 = vmatmul.f32.gmra.mxu0 %v1561
        %v3673 = vpop.f32.mrf.mxu0
        %v3674 = vadd.f32 %v2346, %v3673
        %3675 = vmatmul.f32.gmra.mxu0 %v1563
        %v3676 = vpop.f32.mrf.mxu0
        %v3677 = vadd.f32 %v2346, %v3676
        %3678 = vmatmul.f32.gmra.mxu0 %v1565
        %v3679 = vpop.f32.mrf.mxu0
        %v3680 = vadd.f32 %v2346, %v3679
        %3681 = vmatmul.f32.gmra.mxu0 %v1567
        %v3682 = vpop.f32.mrf.mxu0
        %v3683 = vadd.f32 %v2346, %v3682
        %3684 = vmatmul.f32.gmra.mxu0 %v1569
        %v3685 = vpop.f32.mrf.mxu0
        %v3686 = vadd.f32 %v2346, %v3685
        %3687 = vmatmul.f32.gmra.mxu0 %v1571
        %v3688 = vpop.f32.mrf.mxu0
        %v3689 = vadd.f32 %v2346, %v3688
        %3690 = vmatmul.f32.gmra.mxu0 %v1573
        %v3691 = vpop.f32.mrf.mxu0
        %v3692 = vadd.f32 %v2346, %v3691
        %3693 = vmatmul.f32.gmra.mxu0 %v1575
        %v3694 = vpop.f32.mrf.mxu0
        %v3695 = vadd.f32 %v2346, %v3694
        %3696 = vmatmul.f32.gmra.mxu0 %v1577
        %v3697 = vpop.f32.mrf.mxu0
        %v3698 = vadd.f32 %v2346, %v3697
        %3699 = vmatmul.f32.gmra.mxu0 %v1579
        %v3700 = vpop.f32.mrf.mxu0
        %v3701 = vadd.f32 %v2346, %v3700
        %3702 = vmatmul.f32.gmra.mxu0 %v1581
        %v3703 = vpop.f32.mrf.mxu0
        %v3704 = vadd.f32 %v2346, %v3703
        %3705 = vmatmul.f32.gmra.mxu0 %v1583
        %v3706 = vpop.f32.mrf.mxu0
        %v3707 = vadd.f32 %v2346, %v3706
        %3708 = vmatmul.f32.gmra.mxu0 %v1585
        %v3709 = vpop.f32.mrf.mxu0
        %v3710 = vadd.f32 %v2346, %v3709
        %3711 = vmatmul.f32.gmra.mxu0 %v1587
        %v3712 = vpop.f32.mrf.mxu0
        %v3713 = vadd.f32 %v2346, %v3712
        %3714 = vmatmul.f32.gmra.mxu0 %v1589
        %v3715 = vpop.f32.mrf.mxu0
        %v3716 = vadd.f32 %v2346, %v3715
        %3717 = vmatmul.f32.gmra.mxu0 %v1591
        %v3718 = vpop.f32.mrf.mxu0
        %v3719 = vadd.f32 %v2346, %v3718
        %3720 = vmatmul.f32.gmra.mxu0 %v1593
        %v3721 = vpop.f32.mrf.mxu0
        %v3722 = vadd.f32 %v2346, %v3721
        %3723 = vmatmul.f32.gmra.mxu0 %v1595
        %v3724 = vpop.f32.mrf.mxu0
        %v3725 = vadd.f32 %v2346, %v3724
        %3726 = vmatmul.f32.gmra.mxu0 %v1597
        %v3727 = vpop.f32.mrf.mxu0
        %v3728 = vadd.f32 %v2346, %v3727
        %3729 = vmatmul.f32.gmra.mxu0 %v1599
        %v3730 = vpop.f32.mrf.mxu0
        %v3731 = vadd.f32 %v2346, %v3730
        %3732 = vmatmul.f32.gmra.mxu0 %v1601
        %v3733 = vpop.f32.mrf.mxu0
        %v3734 = vadd.f32 %v2346, %v3733
        %3735 = vmatmul.f32.gmra.mxu0 %v1603
        %v3736 = vpop.f32.mrf.mxu0
        %v3737 = vadd.f32 %v2346, %v3736
        %3738 = vmatmul.f32.gmra.mxu0 %v1605
        %v3739 = vpop.f32.mrf.mxu0
        %v3740 = vadd.f32 %v2346, %v3739
        %3741 = vmatmul.f32.gmra.mxu0 %v1607
        %v3742 = vpop.f32.mrf.mxu0
        %v3743 = vadd.f32 %v2346, %v3742
        %3744 = vmatmul.f32.gmra.mxu0 %v1609
        %v3745 = vpop.f32.mrf.mxu0
        %v3746 = vadd.f32 %v2346, %v3745
        %3747 = vmatmul.f32.gmra.mxu0 %v1611
        %v3748 = vpop.f32.mrf.mxu0
        %v3749 = vadd.f32 %v2346, %v3748
        %3750 = vmatmul.f32.gmra.mxu0 %v1613
        %v3751 = vpop.f32.mrf.mxu0
        %v3752 = vadd.f32 %v2346, %v3751
        %3753 = vmatmul.f32.gmra.mxu0 %v1615
        %v3754 = vpop.f32.mrf.mxu0
        %v3755 = vadd.f32 %v2346, %v3754
        %3756 = vmatmul.f32.gmra.mxu0 %v1617
        %v3757 = vpop.f32.mrf.mxu0
        %v3758 = vadd.f32 %v2346, %v3757
        %3759 = vmatmul.f32.gmra.mxu0 %v1619
        %v3760 = vpop.f32.mrf.mxu0
        %v3761 = vadd.f32 %v2346, %v3760
        %3762 = vmatmul.f32.gmra.mxu0 %v1621
        %v3763 = vpop.f32.mrf.mxu0
        %v3764 = vadd.f32 %v2346, %v3763
        %3765 = vmatmul.f32.gmra.mxu0 %v1623
        %v3766 = vpop.f32.mrf.mxu0
        %3767 = vmatmul.f32.gmra.mxu0 %v1625
        %v3768 = vpop.f32.mrf.mxu0
        %3769 = vmatmul.f32.gmra.mxu0 %v1624
        %v3770 = vpop.f32.mrf.mxu0
        %3771 = vdwg.mxu0
        %3772 = vmatpush.msra.mxu0 %v2231
        %3773 = vmatpush.msra.mxu0 %v2230
        %3774 = vmatpush.msra.mxu0 %v2229
        %3775 = vmatpush.msra.mxu0 %v2228
        %3776 = vmatpush.msra.mxu0 %v2227
        %3777 = vmatpush.msra.mxu0 %v2226
        %3778 = vmatpush.msra.mxu0 %v2225
        %3779 = vmatpush.msra.mxu0 %v2224
        %3780 = vmatpush.msra.mxu0 %v2223
        %3781 = vmatpush.msra.mxu0 %v2222
        %3782 = vmatpush.msra.mxu0 %v2221
        %3783 = vmatpush.msra.mxu0 %v2220
        %3784 = vmatpush.msra.mxu0 %v2219
        %3785 = vmatpush.msra.mxu0 %v2218
        %3786 = vmatpush.msra.mxu0 %v2217
        %3787 = vmatpush.msra.mxu0 %v2216
        %3788 = vmatmul.f32.gmra.mxu0 %v2350
        %v3789 = vpop.f32.mrf.mxu0
        %3790 = vmatmul.f32.gmra.mxu0 %v2373
        %v3791 = vpop.f32.mrf.mxu0
        %3792 = vmatmul.f32.gmra.mxu0 %v2389
        %v3793 = vpop.f32.mrf.mxu0
        %v3794 = vadd.f32 %v3614, %v3793
        %3795 = vmatmul.f32.gmra.mxu0 %v2405
        %v3796 = vpop.f32.mrf.mxu0
        %v3797 = vadd.f32 %v3617, %v3796
        %3798 = vmatmul.f32.gmra.mxu0 %v2421
        %v3799 = vpop.f32.mrf.mxu0
        %v3800 = vadd.f32 %v3620, %v3799
        %3801 = vmatmul.f32.gmra.mxu0 %v2436
        %v3802 = vpop.f32.mrf.mxu0
        %v3803 = vadd.f32 %v3623, %v3802
        %3804 = vmatmul.f32.gmra.mxu0 %v2450
        %v3805 = vpop.f32.mrf.mxu0
        %v3806 = vadd.f32 %v3626, %v3805
        %3807 = vmatmul.f32.gmra.mxu0 %v2464
        %v3808 = vpop.f32.mrf.mxu0
        %v3809 = vadd.f32 %v3629, %v3808
        %3810 = vmatmul.f32.gmra.mxu0 %v2478
        %v3811 = vpop.f32.mrf.mxu0
        %v3812 = vadd.f32 %v3632, %v3811
        %3813 = vmatmul.f32.gmra.mxu0 %v2492
        %v3814 = vpop.f32.mrf.mxu0
        %v3815 = vadd.f32 %v3635, %v3814
        %3816 = vmatmul.f32.gmra.mxu0 %v2506
        %v3817 = vpop.f32.mrf.mxu0
        %v3818 = vadd.f32 %v3638, %v3817
        %3819 = vmatmul.f32.gmra.mxu0 %v2520
        %v3820 = vpop.f32.mrf.mxu0
        %v3821 = vadd.f32 %v3641, %v3820
        %3822 = vmatmul.f32.gmra.mxu0 %v2534
        %v3823 = vpop.f32.mrf.mxu0
        %v3824 = vadd.f32 %v3644, %v3823
        %3825 = vmatmul.f32.gmra.mxu0 %v2548
        %v3826 = vpop.f32.mrf.mxu0
        %v3827 = vadd.f32 %v3647, %v3826
        %3828 = vmatmul.f32.gmra.mxu0 %v2562
        %v3829 = vpop.f32.mrf.mxu0
        %v3830 = vadd.f32 %v3650, %v3829
        %3831 = vmatmul.f32.gmra.mxu0 %v2576
        %v3832 = vpop.f32.mrf.mxu0
        %v3833 = vadd.f32 %v3653, %v3832
        %3834 = vmatmul.f32.gmra.mxu0 %v2590
        %v3835 = vpop.f32.mrf.mxu0
        %v3836 = vadd.f32 %v3656, %v3835
        %3837 = vmatmul.f32.gmra.mxu0 %v2604
        %v3838 = vpop.f32.mrf.mxu0
        %v3839 = vadd.f32 %v3659, %v3838
        %3840 = vmatmul.f32.gmra.mxu0 %v2618
        %v3841 = vpop.f32.mrf.mxu0
        %v3842 = vadd.f32 %v3662, %v3841
        %3843 = vmatmul.f32.gmra.mxu0 %v2632
        %v3844 = vpop.f32.mrf.mxu0
        %v3845 = vadd.f32 %v3665, %v3844
        %3846 = vmatmul.f32.gmra.mxu0 %v2646
        %v3847 = vpop.f32.mrf.mxu0
        %v3848 = vadd.f32 %v3668, %v3847
        %3849 = vmatmul.f32.gmra.mxu0 %v2660
        %v3850 = vpop.f32.mrf.mxu0
        %v3851 = vadd.f32 %v3671, %v3850
        %3852 = vmatmul.f32.gmra.mxu0 %v2674
        %v3853 = vpop.f32.mrf.mxu0
        %v3854 = vadd.f32 %v3674, %v3853
        %3855 = vmatmul.f32.gmra.mxu0 %v2688
        %v3856 = vpop.f32.mrf.mxu0
        %v3857 = vadd.f32 %v3677, %v3856
        %3858 = vmatmul.f32.gmra.mxu0 %v2702
        %v3859 = vpop.f32.mrf.mxu0
        %v3860 = vadd.f32 %v3680, %v3859
        %3861 = vmatmul.f32.gmra.mxu0 %v2716
        %v3862 = vpop.f32.mrf.mxu0
        %v3863 = vadd.f32 %v3683, %v3862
        %3864 = vmatmul.f32.gmra.mxu0 %v2730
        %v3865 = vpop.f32.mrf.mxu0
        %v3866 = vadd.f32 %v3686, %v3865
        %3867 = vmatmul.f32.gmra.mxu0 %v2744
        %v3868 = vpop.f32.mrf.mxu0
        %v3869 = vadd.f32 %v3689, %v3868
        %3870 = vmatmul.f32.gmra.mxu0 %v2758
        %v3871 = vpop.f32.mrf.mxu0
        %v3872 = vadd.f32 %v3692, %v3871
        %3873 = vmatmul.f32.gmra.mxu0 %v2772
        %v3874 = vpop.f32.mrf.mxu0
        %v3875 = vadd.f32 %v3695, %v3874
        %3876 = vmatmul.f32.gmra.mxu0 %v2786
        %v3877 = vpop.f32.mrf.mxu0
        %v3878 = vadd.f32 %v3698, %v3877
        %3879 = vmatmul.f32.gmra.mxu0 %v2800
        %v3880 = vpop.f32.mrf.mxu0
        %v3881 = vadd.f32 %v3701, %v3880
        %3882 = vmatmul.f32.gmra.mxu0 %v2814
        %v3883 = vpop.f32.mrf.mxu0
        %v3884 = vadd.f32 %v3704, %v3883
        %3885 = vmatmul.f32.gmra.mxu0 %v2828
        %v3886 = vpop.f32.mrf.mxu0
        %v3887 = vadd.f32 %v3707, %v3886
        %3888 = vmatmul.f32.gmra.mxu0 %v2842
        %v3889 = vpop.f32.mrf.mxu0
        %v3890 = vadd.f32 %v3710, %v3889
        %3891 = vmatmul.f32.gmra.mxu0 %v2856
        %v3892 = vpop.f32.mrf.mxu0
        %v3893 = vadd.f32 %v3713, %v3892
        %3894 = vmatmul.f32.gmra.mxu0 %v2870
        %v3895 = vpop.f32.mrf.mxu0
        %v3896 = vadd.f32 %v3716, %v3895
        %3897 = vmatmul.f32.gmra.mxu0 %v2884
        %v3898 = vpop.f32.mrf.mxu0
        %v3899 = vadd.f32 %v3719, %v3898
        %3900 = vmatmul.f32.gmra.mxu0 %v2898
        %v3901 = vpop.f32.mrf.mxu0
        %v3902 = vadd.f32 %v3722, %v3901
        %3903 = vmatmul.f32.gmra.mxu0 %v2912
        %v3904 = vpop.f32.mrf.mxu0
        %v3905 = vadd.f32 %v3725, %v3904
        %3906 = vmatmul.f32.gmra.mxu0 %v2926
        %v3907 = vpop.f32.mrf.mxu0
        %v3908 = vadd.f32 %v3728, %v3907
        %3909 = vmatmul.f32.gmra.mxu0 %v2940
        %v3910 = vpop.f32.mrf.mxu0
        %v3911 = vadd.f32 %v3731, %v3910
        %3912 = vmatmul.f32.gmra.mxu0 %v2954
        %v3913 = vpop.f32.mrf.mxu0
        %v3914 = vadd.f32 %v3734, %v3913
        %3915 = vmatmul.f32.gmra.mxu0 %v2968
        %v3916 = vpop.f32.mrf.mxu0
        %v3917 = vadd.f32 %v3737, %v3916
        %3918 = vmatmul.f32.gmra.mxu0 %v2982
        %v3919 = vpop.f32.mrf.mxu0
        %v3920 = vadd.f32 %v3740, %v3919
        %3921 = vmatmul.f32.gmra.mxu0 %v2996
        %v3922 = vpop.f32.mrf.mxu0
        %v3923 = vadd.f32 %v3743, %v3922
        %3924 = vmatmul.f32.gmra.mxu0 %v3010
        %v3925 = vpop.f32.mrf.mxu0
        %v3926 = vadd.f32 %v3746, %v3925
        %3927 = vmatmul.f32.gmra.mxu0 %v3024
        %v3928 = vpop.f32.mrf.mxu0
        %v3929 = vadd.f32 %v3749, %v3928
        %3930 = vmatmul.f32.gmra.mxu0 %v3038
        %v3931 = vpop.f32.mrf.mxu0
        %v3932 = vadd.f32 %v3752, %v3931
        %3933 = vmatmul.f32.gmra.mxu0 %v3052
        %v3934 = vpop.f32.mrf.mxu0
        %v3935 = vadd.f32 %v3755, %v3934
        %3936 = vmatmul.f32.gmra.mxu0 %v3066
        %v3937 = vpop.f32.mrf.mxu0
        %v3938 = vadd.f32 %v3758, %v3937
        %3939 = vmatmul.f32.gmra.mxu0 %v3080
        %v3940 = vpop.f32.mrf.mxu0
        %v3941 = vadd.f32 %v3761, %v3940
        %3942 = vmatmul.f32.gmra.mxu0 %v3094
        %v3943 = vpop.f32.mrf.mxu0
        %v3944 = vadd.f32 %v3764, %v3943
        %3945 = vmatmul.f32.gmra.mxu0 %v3108
        %v3946 = vpop.f32.mrf.mxu0
        %3947 = vmatmul.f32.gmra.mxu0 %v3122
        %v3948 = vpop.f32.mrf.mxu0
        %3949 = vmatmul.f32.gmra.mxu0 %v3121
        %v3950 = vpop.f32.mrf.mxu0
        %3951 = vdwg.mxu0
        %3952 = vmatpush.msra.mxu0 %v2247
        %3953 = vmatpush.msra.mxu0 %v2246
        %3954 = vmatpush.msra.mxu0 %v2245
        %3955 = vmatpush.msra.mxu0 %v2244
        %3956 = vmatpush.msra.mxu0 %v2243
        %3957 = vmatpush.msra.mxu0 %v2242
        %3958 = vmatpush.msra.mxu0 %v2241
        %3959 = vmatpush.msra.mxu0 %v2240
        %3960 = vmatpush.msra.mxu0 %v2239
        %3961 = vmatpush.msra.mxu0 %v2238
        %3962 = vmatpush.msra.mxu0 %v2237
        %3963 = vmatpush.msra.mxu0 %v2236
        %3964 = vmatpush.msra.mxu0 %v2235
        %3965 = vmatpush.msra.mxu0 %v2234
        %3966 = vmatpush.msra.mxu0 %v2233
        %3967 = vmatpush.msra.mxu0 %v2232
        %3968 = vmatmul.f32.gmra.mxu0 %v2353
        %v3969 = vpop.f32.mrf.mxu0
        %3970 = vmatmul.f32.gmra.mxu0 %v2375
        %v3971 = vpop.f32.mrf.mxu0
        %3972 = vmatmul.f32.gmra.mxu0 %v2391
        %v3973 = vpop.f32.mrf.mxu0
        %v3974 = vadd.f32 %v3794, %v3973
        %3975 = vmatmul.f32.gmra.mxu0 %v2407
        %v3976 = vpop.f32.mrf.mxu0
        %v3977 = vadd.f32 %v3797, %v3976
        %3978 = vmatmul.f32.gmra.mxu0 %v2422
        %v3979 = vpop.f32.mrf.mxu0
        %v3980 = vadd.f32 %v3800, %v3979
        %3981 = vmatmul.f32.gmra.mxu0 %v2365
        %v3982 = vpop.f32.mrf.mxu0
        %v3983 = vadd.f32 %v3803, %v3982
        %3984 = vmatmul.f32.gmra.mxu0 %v2383
        %v3985 = vpop.f32.mrf.mxu0
        %v3986 = vadd.f32 %v3806, %v3985
        %3987 = vmatmul.f32.gmra.mxu0 %v2399
        %v3988 = vpop.f32.mrf.mxu0
        %v3989 = vadd.f32 %v3809, %v3988
        %3990 = vmatmul.f32.gmra.mxu0 %v2415
        %v3991 = vpop.f32.mrf.mxu0
        %v3992 = vadd.f32 %v3812, %v3991
        %3993 = vmatmul.f32.gmra.mxu0 %v2430
        %v3994 = vpop.f32.mrf.mxu0
        %v3995 = vadd.f32 %v3815, %v3994
        %3996 = vmatmul.f32.gmra.mxu0 %v2444
        %v3997 = vpop.f32.mrf.mxu0
        %v3998 = vadd.f32 %v3818, %v3997
        %3999 = vmatmul.f32.gmra.mxu0 %v2458
        %v4000 = vpop.f32.mrf.mxu0
        %v4001 = vadd.f32 %v3821, %v4000
        %4002 = vmatmul.f32.gmra.mxu0 %v2472
        %v4003 = vpop.f32.mrf.mxu0
        %v4004 = vadd.f32 %v3824, %v4003
        %4005 = vmatmul.f32.gmra.mxu0 %v2486
        %v4006 = vpop.f32.mrf.mxu0
        %v4007 = vadd.f32 %v3827, %v4006
        %4008 = vmatmul.f32.gmra.mxu0 %v2500
        %v4009 = vpop.f32.mrf.mxu0
        %v4010 = vadd.f32 %v3830, %v4009
        %4011 = vmatmul.f32.gmra.mxu0 %v2514
        %v4012 = vpop.f32.mrf.mxu0
        %v4013 = vadd.f32 %v3833, %v4012
        %4014 = vmatmul.f32.gmra.mxu0 %v2528
        %v4015 = vpop.f32.mrf.mxu0
        %v4016 = vadd.f32 %v3836, %v4015
        %4017 = vmatmul.f32.gmra.mxu0 %v2542
        %v4018 = vpop.f32.mrf.mxu0
        %v4019 = vadd.f32 %v3839, %v4018
        %4020 = vmatmul.f32.gmra.mxu0 %v2556
        %v4021 = vpop.f32.mrf.mxu0
        %v4022 = vadd.f32 %v3842, %v4021
        %4023 = vmatmul.f32.gmra.mxu0 %v2570
        %v4024 = vpop.f32.mrf.mxu0
        %v4025 = vadd.f32 %v3845, %v4024
        %4026 = vmatmul.f32.gmra.mxu0 %v2584
        %v4027 = vpop.f32.mrf.mxu0
        %v4028 = vadd.f32 %v3848, %v4027
        %4029 = vmatmul.f32.gmra.mxu0 %v2598
        %v4030 = vpop.f32.mrf.mxu0
        %v4031 = vadd.f32 %v3851, %v4030
        %4032 = vmatmul.f32.gmra.mxu0 %v2612
        %v4033 = vpop.f32.mrf.mxu0
        %v4034 = vadd.f32 %v3854, %v4033
        %4035 = vmatmul.f32.gmra.mxu0 %v2626
        %v4036 = vpop.f32.mrf.mxu0
        %v4037 = vadd.f32 %v3857, %v4036
        %4038 = vmatmul.f32.gmra.mxu0 %v2640
        %v4039 = vpop.f32.mrf.mxu0
        %v4040 = vadd.f32 %v3860, %v4039
        %4041 = vmatmul.f32.gmra.mxu0 %v2654
        %v4042 = vpop.f32.mrf.mxu0
        %v4043 = vadd.f32 %v3863, %v4042
        %4044 = vmatmul.f32.gmra.mxu0 %v2668
        %v4045 = vpop.f32.mrf.mxu0
        %v4046 = vadd.f32 %v3866, %v4045
        %4047 = vmatmul.f32.gmra.mxu0 %v2682
        %v4048 = vpop.f32.mrf.mxu0
        %v4049 = vadd.f32 %v3869, %v4048
        %4050 = vmatmul.f32.gmra.mxu0 %v2696
        %v4051 = vpop.f32.mrf.mxu0
        %v4052 = vadd.f32 %v3872, %v4051
        %4053 = vmatmul.f32.gmra.mxu0 %v2710
        %v4054 = vpop.f32.mrf.mxu0
        %v4055 = vadd.f32 %v3875, %v4054
        %4056 = vmatmul.f32.gmra.mxu0 %v2724
        %v4057 = vpop.f32.mrf.mxu0
        %v4058 = vadd.f32 %v3878, %v4057
        %4059 = vmatmul.f32.gmra.mxu0 %v2738
        %v4060 = vpop.f32.mrf.mxu0
        %v4061 = vadd.f32 %v3881, %v4060
        %4062 = vmatmul.f32.gmra.mxu0 %v2752
        %v4063 = vpop.f32.mrf.mxu0
        %v4064 = vadd.f32 %v3884, %v4063
        %4065 = vmatmul.f32.gmra.mxu0 %v2766
        %v4066 = vpop.f32.mrf.mxu0
        %v4067 = vadd.f32 %v3887, %v4066
        %4068 = vmatmul.f32.gmra.mxu0 %v2780
        %v4069 = vpop.f32.mrf.mxu0
        %v4070 = vadd.f32 %v3890, %v4069
        %4071 = vmatmul.f32.gmra.mxu0 %v2794
        %v4072 = vpop.f32.mrf.mxu0
        %v4073 = vadd.f32 %v3893, %v4072
        %4074 = vmatmul.f32.gmra.mxu0 %v2808
        %v4075 = vpop.f32.mrf.mxu0
        %v4076 = vadd.f32 %v3896, %v4075
        %4077 = vmatmul.f32.gmra.mxu0 %v2822
        %v4078 = vpop.f32.mrf.mxu0
        %v4079 = vadd.f32 %v3899, %v4078
        %4080 = vmatmul.f32.gmra.mxu0 %v2836
        %v4081 = vpop.f32.mrf.mxu0
        %v4082 = vadd.f32 %v3902, %v4081
        %4083 = vmatmul.f32.gmra.mxu0 %v2850
        %v4084 = vpop.f32.mrf.mxu0
        %v4085 = vadd.f32 %v3905, %v4084
        %4086 = vmatmul.f32.gmra.mxu0 %v2864
        %v4087 = vpop.f32.mrf.mxu0
        %v4088 = vadd.f32 %v3908, %v4087
        %4089 = vmatmul.f32.gmra.mxu0 %v2878
        %v4090 = vpop.f32.mrf.mxu0
        %v4091 = vadd.f32 %v3911, %v4090
        %4092 = vmatmul.f32.gmra.mxu0 %v2892
        %v4093 = vpop.f32.mrf.mxu0
        %v4094 = vadd.f32 %v3914, %v4093
        %4095 = vmatmul.f32.gmra.mxu0 %v2906
        %v4096 = vpop.f32.mrf.mxu0
        %v4097 = vadd.f32 %v3917, %v4096
        %4098 = vmatmul.f32.gmra.mxu0 %v2920
        %v4099 = vpop.f32.mrf.mxu0
        %v4100 = vadd.f32 %v3920, %v4099
        %4101 = vmatmul.f32.gmra.mxu0 %v2934
        %v4102 = vpop.f32.mrf.mxu0
        %v4103 = vadd.f32 %v3923, %v4102
        %4104 = vmatmul.f32.gmra.mxu0 %v2948
        %v4105 = vpop.f32.mrf.mxu0
        %v4106 = vadd.f32 %v3926, %v4105
        %4107 = vmatmul.f32.gmra.mxu0 %v2962
        %v4108 = vpop.f32.mrf.mxu0
        %v4109 = vadd.f32 %v3929, %v4108
        %4110 = vmatmul.f32.gmra.mxu0 %v2976
        %v4111 = vpop.f32.mrf.mxu0
        %v4112 = vadd.f32 %v3932, %v4111
        %4113 = vmatmul.f32.gmra.mxu0 %v2990
        %v4114 = vpop.f32.mrf.mxu0
        %v4115 = vadd.f32 %v3935, %v4114
        %4116 = vmatmul.f32.gmra.mxu0 %v3004
        %v4117 = vpop.f32.mrf.mxu0
        %v4118 = vadd.f32 %v3938, %v4117
        %4119 = vmatmul.f32.gmra.mxu0 %v3018
        %v4120 = vpop.f32.mrf.mxu0
        %v4121 = vadd.f32 %v3941, %v4120
        %4122 = vmatmul.f32.gmra.mxu0 %v3032
        %v4123 = vpop.f32.mrf.mxu0
        %v4124 = vadd.f32 %v3944, %v4123
        %4125 = vmatmul.f32.gmra.mxu0 %v3046
        %v4126 = vpop.f32.mrf.mxu0
        %4127 = vmatmul.f32.gmra.mxu0 %v3124
        %v4128 = vpop.f32.mrf.mxu0
        %4129 = vmatmul.f32.gmra.mxu0 %v3123
        %v4130 = vpop.f32.mrf.mxu0
        %4131 = vdwg.mxu0
        %4132 = vmatpush.msra.mxu0 %v2263
        %4133 = vmatpush.msra.mxu0 %v2262
        %4134 = vmatpush.msra.mxu0 %v2261
        %4135 = vmatpush.msra.mxu0 %v2260
        %4136 = vmatpush.msra.mxu0 %v2259
        %4137 = vmatpush.msra.mxu0 %v2258
        %4138 = vmatpush.msra.mxu0 %v2257
        %4139 = vmatpush.msra.mxu0 %v2256
        %4140 = vmatpush.msra.mxu0 %v2255
        %4141 = vmatpush.msra.mxu0 %v2254
        %4142 = vmatpush.msra.mxu0 %v2253
        %4143 = vmatpush.msra.mxu0 %v2252
        %4144 = vmatpush.msra.mxu0 %v2251
        %4145 = vmatpush.msra.mxu0 %v2250
        %4146 = vmatpush.msra.mxu0 %v2249
        %4147 = vmatpush.msra.mxu0 %v2248
        %4148 = vmatmul.f32.gmra.mxu0 %v2356
        %v4149 = vpop.f32.mrf.mxu0
        %4150 = vmatmul.f32.gmra.mxu0 %v2377
        %v4151 = vpop.f32.mrf.mxu0
        %4152 = vmatmul.f32.gmra.mxu0 %v2393
        %v4153 = vpop.f32.mrf.mxu0
        %v4154 = vadd.f32 %v3974, %v4153
        %4155 = vmatmul.f32.gmra.mxu0 %v2409
        %v4156 = vpop.f32.mrf.mxu0
        %v4157 = vadd.f32 %v3977, %v4156
        %4158 = vmatmul.f32.gmra.mxu0 %v2424
        %v4159 = vpop.f32.mrf.mxu0
        %v4160 = vadd.f32 %v3980, %v4159
        %4161 = vmatmul.f32.gmra.mxu0 %v2438
        %v4162 = vpop.f32.mrf.mxu0
        %v4163 = vadd.f32 %v3983, %v4162
        %4164 = vmatmul.f32.gmra.mxu0 %v2452
        %v4165 = vpop.f32.mrf.mxu0
        %v4166 = vadd.f32 %v3986, %v4165
        %4167 = vmatmul.f32.gmra.mxu0 %v2466
        %v4168 = vpop.f32.mrf.mxu0
        %v4169 = vadd.f32 %v3989, %v4168
        %4170 = vmatmul.f32.gmra.mxu0 %v2480
        %v4171 = vpop.f32.mrf.mxu0
        %v4172 = vadd.f32 %v3992, %v4171
        %4173 = vmatmul.f32.gmra.mxu0 %v2494
        %v4174 = vpop.f32.mrf.mxu0
        %v4175 = vadd.f32 %v3995, %v4174
        %4176 = vmatmul.f32.gmra.mxu0 %v2508
        %v4177 = vpop.f32.mrf.mxu0
        %v4178 = vadd.f32 %v3998, %v4177
        %4179 = vmatmul.f32.gmra.mxu0 %v2522
        %v4180 = vpop.f32.mrf.mxu0
        %v4181 = vadd.f32 %v4001, %v4180
        %4182 = vmatmul.f32.gmra.mxu0 %v2536
        %v4183 = vpop.f32.mrf.mxu0
        %v4184 = vadd.f32 %v4004, %v4183
        %4185 = vmatmul.f32.gmra.mxu0 %v2550
        %v4186 = vpop.f32.mrf.mxu0
        %v4187 = vadd.f32 %v4007, %v4186
        %4188 = vmatmul.f32.gmra.mxu0 %v2564
        %v4189 = vpop.f32.mrf.mxu0
        %v4190 = vadd.f32 %v4010, %v4189
        %4191 = vmatmul.f32.gmra.mxu0 %v2578
        %v4192 = vpop.f32.mrf.mxu0
        %v4193 = vadd.f32 %v4013, %v4192
        %4194 = vmatmul.f32.gmra.mxu0 %v2592
        %v4195 = vpop.f32.mrf.mxu0
        %v4196 = vadd.f32 %v4016, %v4195
        %4197 = vmatmul.f32.gmra.mxu0 %v2606
        %v4198 = vpop.f32.mrf.mxu0
        %v4199 = vadd.f32 %v4019, %v4198
        %4200 = vmatmul.f32.gmra.mxu0 %v2620
        %v4201 = vpop.f32.mrf.mxu0
        %v4202 = vadd.f32 %v4022, %v4201
        %4203 = vmatmul.f32.gmra.mxu0 %v2634
        %v4204 = vpop.f32.mrf.mxu0
        %v4205 = vadd.f32 %v4025, %v4204
        %4206 = vmatmul.f32.gmra.mxu0 %v2648
        %v4207 = vpop.f32.mrf.mxu0
        %v4208 = vadd.f32 %v4028, %v4207
        %4209 = vmatmul.f32.gmra.mxu0 %v2662
        %v4210 = vpop.f32.mrf.mxu0
        %v4211 = vadd.f32 %v4031, %v4210
        %4212 = vmatmul.f32.gmra.mxu0 %v2676
        %v4213 = vpop.f32.mrf.mxu0
        %v4214 = vadd.f32 %v4034, %v4213
        %4215 = vmatmul.f32.gmra.mxu0 %v2690
        %v4216 = vpop.f32.mrf.mxu0
        %v4217 = vadd.f32 %v4037, %v4216
        %4218 = vmatmul.f32.gmra.mxu0 %v2704
        %v4219 = vpop.f32.mrf.mxu0
        %v4220 = vadd.f32 %v4040, %v4219
        %4221 = vmatmul.f32.gmra.mxu0 %v2718
        %v4222 = vpop.f32.mrf.mxu0
        %v4223 = vadd.f32 %v4043, %v4222
        %4224 = vmatmul.f32.gmra.mxu0 %v2732
        %v4225 = vpop.f32.mrf.mxu0
        %v4226 = vadd.f32 %v4046, %v4225
        %4227 = vmatmul.f32.gmra.mxu0 %v2746
        %v4228 = vpop.f32.mrf.mxu0
        %v4229 = vadd.f32 %v4049, %v4228
        %4230 = vmatmul.f32.gmra.mxu0 %v2760
        %v4231 = vpop.f32.mrf.mxu0
        %v4232 = vadd.f32 %v4052, %v4231
        %4233 = vmatmul.f32.gmra.mxu0 %v2774
        %v4234 = vpop.f32.mrf.mxu0
        %v4235 = vadd.f32 %v4055, %v4234
        %4236 = vmatmul.f32.gmra.mxu0 %v2788
        %v4237 = vpop.f32.mrf.mxu0
        %v4238 = vadd.f32 %v4058, %v4237
        %4239 = vmatmul.f32.gmra.mxu0 %v2802
        %v4240 = vpop.f32.mrf.mxu0
        %v4241 = vadd.f32 %v4061, %v4240
        %4242 = vmatmul.f32.gmra.mxu0 %v2816
        %v4243 = vpop.f32.mrf.mxu0
        %v4244 = vadd.f32 %v4064, %v4243
        %4245 = vmatmul.f32.gmra.mxu0 %v2830
        %v4246 = vpop.f32.mrf.mxu0
        %v4247 = vadd.f32 %v4067, %v4246
        %4248 = vmatmul.f32.gmra.mxu0 %v2844
        %v4249 = vpop.f32.mrf.mxu0
        %v4250 = vadd.f32 %v4070, %v4249
        %4251 = vmatmul.f32.gmra.mxu0 %v2858
        %v4252 = vpop.f32.mrf.mxu0
        %v4253 = vadd.f32 %v4073, %v4252
        %4254 = vmatmul.f32.gmra.mxu0 %v2872
        %v4255 = vpop.f32.mrf.mxu0
        %v4256 = vadd.f32 %v4076, %v4255
        %4257 = vmatmul.f32.gmra.mxu0 %v2886
        %v4258 = vpop.f32.mrf.mxu0
        %v4259 = vadd.f32 %v4079, %v4258
        %4260 = vmatmul.f32.gmra.mxu0 %v2900
        %v4261 = vpop.f32.mrf.mxu0
        %v4262 = vadd.f32 %v4082, %v4261
        %4263 = vmatmul.f32.gmra.mxu0 %v2914
        %v4264 = vpop.f32.mrf.mxu0
        %v4265 = vadd.f32 %v4085, %v4264
        %4266 = vmatmul.f32.gmra.mxu0 %v2928
        %v4267 = vpop.f32.mrf.mxu0
        %v4268 = vadd.f32 %v4088, %v4267
        %4269 = vmatmul.f32.gmra.mxu0 %v2942
        %v4270 = vpop.f32.mrf.mxu0
        %v4271 = vadd.f32 %v4091, %v4270
        %4272 = vmatmul.f32.gmra.mxu0 %v2956
        %v4273 = vpop.f32.mrf.mxu0
        %v4274 = vadd.f32 %v4094, %v4273
        %4275 = vmatmul.f32.gmra.mxu0 %v2970
        %v4276 = vpop.f32.mrf.mxu0
        %v4277 = vadd.f32 %v4097, %v4276
        %4278 = vmatmul.f32.gmra.mxu0 %v2984
        %v4279 = vpop.f32.mrf.mxu0
        %v4280 = vadd.f32 %v4100, %v4279
        %4281 = vmatmul.f32.gmra.mxu0 %v2998
        %v4282 = vpop.f32.mrf.mxu0
        %v4283 = vadd.f32 %v4103, %v4282
        %4284 = vmatmul.f32.gmra.mxu0 %v3012
        %v4285 = vpop.f32.mrf.mxu0
        %v4286 = vadd.f32 %v4106, %v4285
        %4287 = vmatmul.f32.gmra.mxu0 %v3026
        %v4288 = vpop.f32.mrf.mxu0
        %v4289 = vadd.f32 %v4109, %v4288
        %4290 = vmatmul.f32.gmra.mxu0 %v3040
        %v4291 = vpop.f32.mrf.mxu0
        %v4292 = vadd.f32 %v4112, %v4291
        %4293 = vmatmul.f32.gmra.mxu0 %v3054
        %v4294 = vpop.f32.mrf.mxu0
        %v4295 = vadd.f32 %v4115, %v4294
        %4296 = vmatmul.f32.gmra.mxu0 %v3068
        %v4297 = vpop.f32.mrf.mxu0
        %v4298 = vadd.f32 %v4118, %v4297
        %4299 = vmatmul.f32.gmra.mxu0 %v3082
        %v4300 = vpop.f32.mrf.mxu0
        %v4301 = vadd.f32 %v4121, %v4300
        %4302 = vmatmul.f32.gmra.mxu0 %v3096
        %v4303 = vpop.f32.mrf.mxu0
        %v4304 = vadd.f32 %v4124, %v4303
        %4305 = vmatmul.f32.gmra.mxu0 %v3110
        %v4306 = vpop.f32.mrf.mxu0
        %4307 = vmatmul.f32.gmra.mxu0 %v3126
        %v4308 = vpop.f32.mrf.mxu0
        %4309 = vmatmul.f32.gmra.mxu0 %v3125
        %v4310 = vpop.f32.mrf.mxu0
        %4311 = vdwg.mxu0
        %4312 = vmatpush.msra.mxu0 %v2279
        %4313 = vmatpush.msra.mxu0 %v2278
        %4314 = vmatpush.msra.mxu0 %v2277
        %4315 = vmatpush.msra.mxu0 %v2276
        %4316 = vmatpush.msra.mxu0 %v2275
        %4317 = vmatpush.msra.mxu0 %v2274
        %4318 = vmatpush.msra.mxu0 %v2273
        %4319 = vmatpush.msra.mxu0 %v2272
        %4320 = vmatpush.msra.mxu0 %v2271
        %4321 = vmatpush.msra.mxu0 %v2270
        %4322 = vmatpush.msra.mxu0 %v2269
        %4323 = vmatpush.msra.mxu0 %v2268
        %4324 = vmatpush.msra.mxu0 %v2267
        %4325 = vmatpush.msra.mxu0 %v2266
        %4326 = vmatpush.msra.mxu0 %v2265
        %4327 = vmatpush.msra.mxu0 %v2264
        %4328 = vmatmul.f32.gmra.mxu0 %v2359
        %v4329 = vpop.f32.mrf.mxu0
        %4330 = vmatmul.f32.gmra.mxu0 %v2379
        %v4331 = vpop.f32.mrf.mxu0
        %4332 = vmatmul.f32.gmra.mxu0 %v2395
        %v4333 = vpop.f32.mrf.mxu0
        %v4334 = vadd.f32 %v4154, %v4333
        %4335 = vmatmul.f32.gmra.mxu0 %v2411
        %v4336 = vpop.f32.mrf.mxu0
        %v4337 = vadd.f32 %v4157, %v4336
        %4338 = vmatmul.f32.gmra.mxu0 %v2426
        %v4339 = vpop.f32.mrf.mxu0
        %v4340 = vadd.f32 %v4160, %v4339
        %4341 = vmatmul.f32.gmra.mxu0 %v2440
        %v4342 = vpop.f32.mrf.mxu0
        %v4343 = vadd.f32 %v4163, %v4342
        %4344 = vmatmul.f32.gmra.mxu0 %v2454
        %v4345 = vpop.f32.mrf.mxu0
        %v4346 = vadd.f32 %v4166, %v4345
        %4347 = vmatmul.f32.gmra.mxu0 %v2468
        %v4348 = vpop.f32.mrf.mxu0
        %v4349 = vadd.f32 %v4169, %v4348
        %4350 = vmatmul.f32.gmra.mxu0 %v2482
        %v4351 = vpop.f32.mrf.mxu0
        %v4352 = vadd.f32 %v4172, %v4351
        %4353 = vmatmul.f32.gmra.mxu0 %v2496
        %v4354 = vpop.f32.mrf.mxu0
        %v4355 = vadd.f32 %v4175, %v4354
        %4356 = vmatmul.f32.gmra.mxu0 %v2510
        %v4357 = vpop.f32.mrf.mxu0
        %v4358 = vadd.f32 %v4178, %v4357
        %4359 = vmatmul.f32.gmra.mxu0 %v2524
        %v4360 = vpop.f32.mrf.mxu0
        %v4361 = vadd.f32 %v4181, %v4360
        %4362 = vmatmul.f32.gmra.mxu0 %v2538
        %v4363 = vpop.f32.mrf.mxu0
        %v4364 = vadd.f32 %v4184, %v4363
        %4365 = vmatmul.f32.gmra.mxu0 %v2552
        %v4366 = vpop.f32.mrf.mxu0
        %v4367 = vadd.f32 %v4187, %v4366
        %4368 = vmatmul.f32.gmra.mxu0 %v2566
        %v4369 = vpop.f32.mrf.mxu0
        %v4370 = vadd.f32 %v4190, %v4369
        %4371 = vmatmul.f32.gmra.mxu0 %v2580
        %v4372 = vpop.f32.mrf.mxu0
        %v4373 = vadd.f32 %v4193, %v4372
        %4374 = vmatmul.f32.gmra.mxu0 %v2594
        %v4375 = vpop.f32.mrf.mxu0
        %v4376 = vadd.f32 %v4196, %v4375
        %4377 = vmatmul.f32.gmra.mxu0 %v2608
        %v4378 = vpop.f32.mrf.mxu0
        %v4379 = vadd.f32 %v4199, %v4378
        %4380 = vmatmul.f32.gmra.mxu0 %v2622
        %v4381 = vpop.f32.mrf.mxu0
        %v4382 = vadd.f32 %v4202, %v4381
        %4383 = vmatmul.f32.gmra.mxu0 %v2636
        %v4384 = vpop.f32.mrf.mxu0
        %v4385 = vadd.f32 %v4205, %v4384
        %4386 = vmatmul.f32.gmra.mxu0 %v2650
        %v4387 = vpop.f32.mrf.mxu0
        %v4388 = vadd.f32 %v4208, %v4387
        %4389 = vmatmul.f32.gmra.mxu0 %v2664
        %v4390 = vpop.f32.mrf.mxu0
        %v4391 = vadd.f32 %v4211, %v4390
        %4392 = vmatmul.f32.gmra.mxu0 %v2678
        %v4393 = vpop.f32.mrf.mxu0
        %v4394 = vadd.f32 %v4214, %v4393
        %4395 = vmatmul.f32.gmra.mxu0 %v2692
        %v4396 = vpop.f32.mrf.mxu0
        %v4397 = vadd.f32 %v4217, %v4396
        %4398 = vmatmul.f32.gmra.mxu0 %v2706
        %v4399 = vpop.f32.mrf.mxu0
        %v4400 = vadd.f32 %v4220, %v4399
        %4401 = vmatmul.f32.gmra.mxu0 %v2720
        %v4402 = vpop.f32.mrf.mxu0
        %v4403 = vadd.f32 %v4223, %v4402
        %4404 = vmatmul.f32.gmra.mxu0 %v2734
        %v4405 = vpop.f32.mrf.mxu0
        %v4406 = vadd.f32 %v4226, %v4405
        %4407 = vmatmul.f32.gmra.mxu0 %v2748
        %v4408 = vpop.f32.mrf.mxu0
        %v4409 = vadd.f32 %v4229, %v4408
        %4410 = vmatmul.f32.gmra.mxu0 %v2762
        %v4411 = vpop.f32.mrf.mxu0
        %v4412 = vadd.f32 %v4232, %v4411
        %4413 = vmatmul.f32.gmra.mxu0 %v2776
        %v4414 = vpop.f32.mrf.mxu0
        %v4415 = vadd.f32 %v4235, %v4414
        %4416 = vmatmul.f32.gmra.mxu0 %v2790
        %v4417 = vpop.f32.mrf.mxu0
        %v4418 = vadd.f32 %v4238, %v4417
        %4419 = vmatmul.f32.gmra.mxu0 %v2804
        %v4420 = vpop.f32.mrf.mxu0
        %v4421 = vadd.f32 %v4241, %v4420
        %4422 = vmatmul.f32.gmra.mxu0 %v2818
        %v4423 = vpop.f32.mrf.mxu0
        %v4424 = vadd.f32 %v4244, %v4423
        %4425 = vmatmul.f32.gmra.mxu0 %v2832
        %v4426 = vpop.f32.mrf.mxu0
        %v4427 = vadd.f32 %v4247, %v4426
        %4428 = vmatmul.f32.gmra.mxu0 %v2846
        %v4429 = vpop.f32.mrf.mxu0
        %v4430 = vadd.f32 %v4250, %v4429
        %4431 = vmatmul.f32.gmra.mxu0 %v2860
        %v4432 = vpop.f32.mrf.mxu0
        %v4433 = vadd.f32 %v4253, %v4432
        %4434 = vmatmul.f32.gmra.mxu0 %v2874
        %v4435 = vpop.f32.mrf.mxu0
        %v4436 = vadd.f32 %v4256, %v4435
        %4437 = vmatmul.f32.gmra.mxu0 %v2888
        %v4438 = vpop.f32.mrf.mxu0
        %v4439 = vadd.f32 %v4259, %v4438
        %4440 = vmatmul.f32.gmra.mxu0 %v2902
        %v4441 = vpop.f32.mrf.mxu0
        %v4442 = vadd.f32 %v4262, %v4441
        %4443 = vmatmul.f32.gmra.mxu0 %v2916
        %v4444 = vpop.f32.mrf.mxu0
        %v4445 = vadd.f32 %v4265, %v4444
        %4446 = vmatmul.f32.gmra.mxu0 %v2930
        %v4447 = vpop.f32.mrf.mxu0
        %v4448 = vadd.f32 %v4268, %v4447
        %4449 = vmatmul.f32.gmra.mxu0 %v2944
        %v4450 = vpop.f32.mrf.mxu0
        %v4451 = vadd.f32 %v4271, %v4450
        %4452 = vmatmul.f32.gmra.mxu0 %v2958
        %v4453 = vpop.f32.mrf.mxu0
        %v4454 = vadd.f32 %v4274, %v4453
        %4455 = vmatmul.f32.gmra.mxu0 %v2972
        %v4456 = vpop.f32.mrf.mxu0
        %v4457 = vadd.f32 %v4277, %v4456
        %4458 = vmatmul.f32.gmra.mxu0 %v2986
        %v4459 = vpop.f32.mrf.mxu0
        %v4460 = vadd.f32 %v4280, %v4459
        %4461 = vmatmul.f32.gmra.mxu0 %v3000
        %v4462 = vpop.f32.mrf.mxu0
        %v4463 = vadd.f32 %v4283, %v4462
        %4464 = vmatmul.f32.gmra.mxu0 %v3014
        %v4465 = vpop.f32.mrf.mxu0
        %v4466 = vadd.f32 %v4286, %v4465
        %4467 = vmatmul.f32.gmra.mxu0 %v3028
        %v4468 = vpop.f32.mrf.mxu0
        %v4469 = vadd.f32 %v4289, %v4468
        %4470 = vmatmul.f32.gmra.mxu0 %v3042
        %v4471 = vpop.f32.mrf.mxu0
        %v4472 = vadd.f32 %v4292, %v4471
        %4473 = vmatmul.f32.gmra.mxu0 %v3056
        %v4474 = vpop.f32.mrf.mxu0
        %v4475 = vadd.f32 %v4295, %v4474
        %4476 = vmatmul.f32.gmra.mxu0 %v3070
        %v4477 = vpop.f32.mrf.mxu0
        %v4478 = vadd.f32 %v4298, %v4477
        %4479 = vmatmul.f32.gmra.mxu0 %v3084
        %v4480 = vpop.f32.mrf.mxu0
        %v4481 = vadd.f32 %v4301, %v4480
        %4482 = vmatmul.f32.gmra.mxu0 %v3098
        %v4483 = vpop.f32.mrf.mxu0
        %v4484 = vadd.f32 %v4304, %v4483
        %4485 = vmatmul.f32.gmra.mxu0 %v3112
        %v4486 = vpop.f32.mrf.mxu0
        %4487 = vmatmul.f32.gmra.mxu0 %v3128
        %v4488 = vpop.f32.mrf.mxu0
        %4489 = vmatmul.f32.gmra.mxu0 %v3127
        %v4490 = vpop.f32.mrf.mxu0
        %4491 = vdwg.mxu0
        %4492 = vmatpush.msra.mxu0 %v2295
        %4493 = vmatpush.msra.mxu0 %v2294
        %4494 = vmatpush.msra.mxu0 %v2293
        %4495 = vmatpush.msra.mxu0 %v2292
        %4496 = vmatpush.msra.mxu0 %v2291
        %4497 = vmatpush.msra.mxu0 %v2290
        %4498 = vmatpush.msra.mxu0 %v2289
        %4499 = vmatpush.msra.mxu0 %v2288
        %4500 = vmatpush.msra.mxu0 %v2287
        %4501 = vmatpush.msra.mxu0 %v2286
        %4502 = vmatpush.msra.mxu0 %v2285
        %4503 = vmatpush.msra.mxu0 %v2284
        %4504 = vmatpush.msra.mxu0 %v2283
        %4505 = vmatpush.msra.mxu0 %v2282
        %4506 = vmatpush.msra.mxu0 %v2281
        %4507 = vmatpush.msra.mxu0 %v2280
        %4508 = vmatmul.f32.gmra.mxu0 %v2362
        %v4509 = vpop.f32.mrf.mxu0
        %4510 = vmatmul.f32.gmra.mxu0 %v2381
        %v4511 = vpop.f32.mrf.mxu0
        %4512 = vmatmul.f32.gmra.mxu0 %v2397
        %v4513 = vpop.f32.mrf.mxu0
        %v4514 = vadd.f32 %v4334, %v4513
        %4515 = vmatmul.f32.gmra.mxu0 %v2413
        %v4516 = vpop.f32.mrf.mxu0
        %v4517 = vadd.f32 %v4337, %v4516
        %4518 = vmatmul.f32.gmra.mxu0 %v2428
        %v4519 = vpop.f32.mrf.mxu0
        %v4520 = vadd.f32 %v4340, %v4519
        %4521 = vmatmul.f32.gmra.mxu0 %v2442
        %v4522 = vpop.f32.mrf.mxu0
        %v4523 = vadd.f32 %v4343, %v4522
        %4524 = vmatmul.f32.gmra.mxu0 %v2456
        %v4525 = vpop.f32.mrf.mxu0
        %v4526 = vadd.f32 %v4346, %v4525
        %4527 = vmatmul.f32.gmra.mxu0 %v2470
        %v4528 = vpop.f32.mrf.mxu0
        %v4529 = vadd.f32 %v4349, %v4528
        %4530 = vmatmul.f32.gmra.mxu0 %v2484
        %v4531 = vpop.f32.mrf.mxu0
        %v4532 = vadd.f32 %v4352, %v4531
        %4533 = vmatmul.f32.gmra.mxu0 %v2498
        %v4534 = vpop.f32.mrf.mxu0
        %v4535 = vadd.f32 %v4355, %v4534
        %4536 = vmatmul.f32.gmra.mxu0 %v2512
        %v4537 = vpop.f32.mrf.mxu0
        %v4538 = vadd.f32 %v4358, %v4537
        %4539 = vmatmul.f32.gmra.mxu0 %v2526
        %v4540 = vpop.f32.mrf.mxu0
        %v4541 = vadd.f32 %v4361, %v4540
        %4542 = vmatmul.f32.gmra.mxu0 %v2540
        %v4543 = vpop.f32.mrf.mxu0
        %v4544 = vadd.f32 %v4364, %v4543
        %4545 = vmatmul.f32.gmra.mxu0 %v2554
        %v4546 = vpop.f32.mrf.mxu0
        %v4547 = vadd.f32 %v4367, %v4546
        %4548 = vmatmul.f32.gmra.mxu0 %v2568
        %v4549 = vpop.f32.mrf.mxu0
        %v4550 = vadd.f32 %v4370, %v4549
        %4551 = vmatmul.f32.gmra.mxu0 %v2582
        %v4552 = vpop.f32.mrf.mxu0
        %v4553 = vadd.f32 %v4373, %v4552
        %4554 = vmatmul.f32.gmra.mxu0 %v2596
        %v4555 = vpop.f32.mrf.mxu0
        %v4556 = vadd.f32 %v4376, %v4555
        %4557 = vmatmul.f32.gmra.mxu0 %v2610
        %v4558 = vpop.f32.mrf.mxu0
        %v4559 = vadd.f32 %v4379, %v4558
        %4560 = vmatmul.f32.gmra.mxu0 %v2624
        %v4561 = vpop.f32.mrf.mxu0
        %v4562 = vadd.f32 %v4382, %v4561
        %4563 = vmatmul.f32.gmra.mxu0 %v2638
        %v4564 = vpop.f32.mrf.mxu0
        %v4565 = vadd.f32 %v4385, %v4564
        %4566 = vmatmul.f32.gmra.mxu0 %v2652
        %v4567 = vpop.f32.mrf.mxu0
        %v4568 = vadd.f32 %v4388, %v4567
        %4569 = vmatmul.f32.gmra.mxu0 %v2666
        %v4570 = vpop.f32.mrf.mxu0
        %v4571 = vadd.f32 %v4391, %v4570
        %4572 = vmatmul.f32.gmra.mxu0 %v2680
        %v4573 = vpop.f32.mrf.mxu0
        %v4574 = vadd.f32 %v4394, %v4573
        %4575 = vmatmul.f32.gmra.mxu0 %v2694
        %v4576 = vpop.f32.mrf.mxu0
        %v4577 = vadd.f32 %v4397, %v4576
        %4578 = vmatmul.f32.gmra.mxu0 %v2708
        %v4579 = vpop.f32.mrf.mxu0
        %v4580 = vadd.f32 %v4400, %v4579
        %4581 = vmatmul.f32.gmra.mxu0 %v2722
        %v4582 = vpop.f32.mrf.mxu0
        %v4583 = vadd.f32 %v4403, %v4582
        %4584 = vmatmul.f32.gmra.mxu0 %v2736
        %v4585 = vpop.f32.mrf.mxu0
        %v4586 = vadd.f32 %v4406, %v4585
        %4587 = vmatmul.f32.gmra.mxu0 %v2750
        %v4588 = vpop.f32.mrf.mxu0
        %v4589 = vadd.f32 %v4409, %v4588
        %4590 = vmatmul.f32.gmra.mxu0 %v2764
        %v4591 = vpop.f32.mrf.mxu0
        %v4592 = vadd.f32 %v4412, %v4591
        %4593 = vmatmul.f32.gmra.mxu0 %v2778
        %v4594 = vpop.f32.mrf.mxu0
        %v4595 = vadd.f32 %v4415, %v4594
        %4596 = vmatmul.f32.gmra.mxu0 %v2792
        %v4597 = vpop.f32.mrf.mxu0
        %v4598 = vadd.f32 %v4418, %v4597
        %4599 = vmatmul.f32.gmra.mxu0 %v2806
        %v4600 = vpop.f32.mrf.mxu0
        %v4601 = vadd.f32 %v4421, %v4600
        %4602 = vmatmul.f32.gmra.mxu0 %v2820
        %v4603 = vpop.f32.mrf.mxu0
        %v4604 = vadd.f32 %v4424, %v4603
        %4605 = vmatmul.f32.gmra.mxu0 %v2834
        %v4606 = vpop.f32.mrf.mxu0
        %v4607 = vadd.f32 %v4427, %v4606
        %4608 = vmatmul.f32.gmra.mxu0 %v2848
        %v4609 = vpop.f32.mrf.mxu0
        %v4610 = vadd.f32 %v4430, %v4609
        %4611 = vmatmul.f32.gmra.mxu0 %v2862
        %v4612 = vpop.f32.mrf.mxu0
        %v4613 = vadd.f32 %v4433, %v4612
        %4614 = vmatmul.f32.gmra.mxu0 %v2876
        %v4615 = vpop.f32.mrf.mxu0
        %v4616 = vadd.f32 %v4436, %v4615
        %4617 = vmatmul.f32.gmra.mxu0 %v2890
        %v4618 = vpop.f32.mrf.mxu0
        %v4619 = vadd.f32 %v4439, %v4618
        %4620 = vmatmul.f32.gmra.mxu0 %v2904
        %v4621 = vpop.f32.mrf.mxu0
        %v4622 = vadd.f32 %v4442, %v4621
        %4623 = vmatmul.f32.gmra.mxu0 %v2918
        %v4624 = vpop.f32.mrf.mxu0
        %v4625 = vadd.f32 %v4445, %v4624
        %4626 = vmatmul.f32.gmra.mxu0 %v2932
        %v4627 = vpop.f32.mrf.mxu0
        %v4628 = vadd.f32 %v4448, %v4627
        %4629 = vmatmul.f32.gmra.mxu0 %v2946
        %v4630 = vpop.f32.mrf.mxu0
        %v4631 = vadd.f32 %v4451, %v4630
        %4632 = vmatmul.f32.gmra.mxu0 %v2960
        %v4633 = vpop.f32.mrf.mxu0
        %v4634 = vadd.f32 %v4454, %v4633
        %4635 = vmatmul.f32.gmra.mxu0 %v2974
        %v4636 = vpop.f32.mrf.mxu0
        %v4637 = vadd.f32 %v4457, %v4636
        %4638 = vmatmul.f32.gmra.mxu0 %v2988
        %v4639 = vpop.f32.mrf.mxu0
        %v4640 = vadd.f32 %v4460, %v4639
        %4641 = vmatmul.f32.gmra.mxu0 %v3002
        %v4642 = vpop.f32.mrf.mxu0
        %v4643 = vadd.f32 %v4463, %v4642
        %4644 = vmatmul.f32.gmra.mxu0 %v3016
        %v4645 = vpop.f32.mrf.mxu0
        %v4646 = vadd.f32 %v4466, %v4645
        %4647 = vmatmul.f32.gmra.mxu0 %v3030
        %v4648 = vpop.f32.mrf.mxu0
        %v4649 = vadd.f32 %v4469, %v4648
        %4650 = vmatmul.f32.gmra.mxu0 %v3044
        %v4651 = vpop.f32.mrf.mxu0
        %v4652 = vadd.f32 %v4472, %v4651
        %4653 = vmatmul.f32.gmra.mxu0 %v3058
        %v4654 = vpop.f32.mrf.mxu0
        %v4655 = vadd.f32 %v4475, %v4654
        %4656 = vmatmul.f32.gmra.mxu0 %v3072
        %v4657 = vpop.f32.mrf.mxu0
        %v4658 = vadd.f32 %v4478, %v4657
        %4659 = vmatmul.f32.gmra.mxu0 %v3086
        %v4660 = vpop.f32.mrf.mxu0
        %v4661 = vadd.f32 %v4481, %v4660
        %4662 = vmatmul.f32.gmra.mxu0 %v3100
        %v4663 = vpop.f32.mrf.mxu0
        %v4664 = vadd.f32 %v4484, %v4663
        %4665 = vmatmul.f32.gmra.mxu0 %v3114
        %v4666 = vpop.f32.mrf.mxu0
        %4667 = vmatmul.f32.gmra.mxu0 %v3130
        %v4668 = vpop.f32.mrf.mxu0
        %4669 = vmatmul.f32.gmra.mxu0 %v3129
        %v4670 = vpop.f32.mrf.mxu0
        %4671 = vdwg.mxu0
        %4672 = vmatpush.msra.mxu0 %v2311
        %4673 = vmatpush.msra.mxu0 %v2310
        %4674 = vmatpush.msra.mxu0 %v2309
        %4675 = vmatpush.msra.mxu0 %v2308
        %4676 = vmatpush.msra.mxu0 %v2307
        %4677 = vmatpush.msra.mxu0 %v2306
        %4678 = vmatpush.msra.mxu0 %v2305
        %4679 = vmatpush.msra.mxu0 %v2304
        %4680 = vmatpush.msra.mxu0 %v2303
        %4681 = vmatpush.msra.mxu0 %v2302
        %4682 = vmatpush.msra.mxu0 %v2301
        %4683 = vmatpush.msra.mxu0 %v2300
        %4684 = vmatpush.msra.mxu0 %v2299
        %4685 = vmatpush.msra.mxu0 %v2298
        %4686 = vmatpush.msra.mxu0 %v2297
        %4687 = vmatpush.msra.mxu0 %v2296
        %4688 = vmatmul.f32.gmra.mxu0 %v2365
        %v4689 = vpop.f32.mrf.mxu0
        %4690 = vmatmul.f32.gmra.mxu0 %v2383
        %v4691 = vpop.f32.mrf.mxu0
        %4692 = vmatmul.f32.gmra.mxu0 %v2399
        %v4693 = vpop.f32.mrf.mxu0
        %v4694 = vadd.f32 %v4514, %v4693
        %4695 = vmatmul.f32.gmra.mxu0 %v2415
        %v4696 = vpop.f32.mrf.mxu0
        %v4697 = vadd.f32 %v4517, %v4696
        %4698 = vmatmul.f32.gmra.mxu0 %v2430
        %v4699 = vpop.f32.mrf.mxu0
        %v4700 = vadd.f32 %v4520, %v4699
        %4701 = vmatmul.f32.gmra.mxu0 %v2444
        %v4702 = vpop.f32.mrf.mxu0
        %v4703 = vadd.f32 %v4523, %v4702
        %4704 = vmatmul.f32.gmra.mxu0 %v2458
        %v4705 = vpop.f32.mrf.mxu0
        %v4706 = vadd.f32 %v4526, %v4705
        %4707 = vmatmul.f32.gmra.mxu0 %v2472
        %v4708 = vpop.f32.mrf.mxu0
        %v4709 = vadd.f32 %v4529, %v4708
        %4710 = vmatmul.f32.gmra.mxu0 %v2486
        %v4711 = vpop.f32.mrf.mxu0
        %v4712 = vadd.f32 %v4532, %v4711
        %4713 = vmatmul.f32.gmra.mxu0 %v2500
        %v4714 = vpop.f32.mrf.mxu0
        %v4715 = vadd.f32 %v4535, %v4714
        %4716 = vmatmul.f32.gmra.mxu0 %v2514
        %v4717 = vpop.f32.mrf.mxu0
        %v4718 = vadd.f32 %v4538, %v4717
        %4719 = vmatmul.f32.gmra.mxu0 %v2528
        %v4720 = vpop.f32.mrf.mxu0
        %v4721 = vadd.f32 %v4541, %v4720
        %4722 = vmatmul.f32.gmra.mxu0 %v2542
        %v4723 = vpop.f32.mrf.mxu0
        %v4724 = vadd.f32 %v4544, %v4723
        %4725 = vmatmul.f32.gmra.mxu0 %v2556
        %v4726 = vpop.f32.mrf.mxu0
        %v4727 = vadd.f32 %v4547, %v4726
        %4728 = vmatmul.f32.gmra.mxu0 %v2570
        %v4729 = vpop.f32.mrf.mxu0
        %v4730 = vadd.f32 %v4550, %v4729
        %4731 = vmatmul.f32.gmra.mxu0 %v2584
        %v4732 = vpop.f32.mrf.mxu0
        %v4733 = vadd.f32 %v4553, %v4732
        %4734 = vmatmul.f32.gmra.mxu0 %v2598
        %v4735 = vpop.f32.mrf.mxu0
        %v4736 = vadd.f32 %v4556, %v4735
        %4737 = vmatmul.f32.gmra.mxu0 %v2612
        %v4738 = vpop.f32.mrf.mxu0
        %v4739 = vadd.f32 %v4559, %v4738
        %4740 = vmatmul.f32.gmra.mxu0 %v2626
        %v4741 = vpop.f32.mrf.mxu0
        %v4742 = vadd.f32 %v4562, %v4741
        %4743 = vmatmul.f32.gmra.mxu0 %v2640
        %v4744 = vpop.f32.mrf.mxu0
        %v4745 = vadd.f32 %v4565, %v4744
        %4746 = vmatmul.f32.gmra.mxu0 %v2654
        %v4747 = vpop.f32.mrf.mxu0
        %v4748 = vadd.f32 %v4568, %v4747
        %4749 = vmatmul.f32.gmra.mxu0 %v2668
        %v4750 = vpop.f32.mrf.mxu0
        %v4751 = vadd.f32 %v4571, %v4750
        %4752 = vmatmul.f32.gmra.mxu0 %v2682
        %v4753 = vpop.f32.mrf.mxu0
        %v4754 = vadd.f32 %v4574, %v4753
        %4755 = vmatmul.f32.gmra.mxu0 %v2696
        %v4756 = vpop.f32.mrf.mxu0
        %v4757 = vadd.f32 %v4577, %v4756
        %4758 = vmatmul.f32.gmra.mxu0 %v2710
        %v4759 = vpop.f32.mrf.mxu0
        %v4760 = vadd.f32 %v4580, %v4759
        %4761 = vmatmul.f32.gmra.mxu0 %v2724
        %v4762 = vpop.f32.mrf.mxu0
        %v4763 = vadd.f32 %v4583, %v4762
        %4764 = vmatmul.f32.gmra.mxu0 %v2738
        %v4765 = vpop.f32.mrf.mxu0
        %v4766 = vadd.f32 %v4586, %v4765
        %4767 = vmatmul.f32.gmra.mxu0 %v2752
        %v4768 = vpop.f32.mrf.mxu0
        %v4769 = vadd.f32 %v4589, %v4768
        %4770 = vmatmul.f32.gmra.mxu0 %v2766
        %v4771 = vpop.f32.mrf.mxu0
        %v4772 = vadd.f32 %v4592, %v4771
        %4773 = vmatmul.f32.gmra.mxu0 %v2780
        %v4774 = vpop.f32.mrf.mxu0
        %v4775 = vadd.f32 %v4595, %v4774
        %4776 = vmatmul.f32.gmra.mxu0 %v2794
        %v4777 = vpop.f32.mrf.mxu0
        %v4778 = vadd.f32 %v4598, %v4777
        %4779 = vmatmul.f32.gmra.mxu0 %v2808
        %v4780 = vpop.f32.mrf.mxu0
        %v4781 = vadd.f32 %v4601, %v4780
        %4782 = vmatmul.f32.gmra.mxu0 %v2822
        %v4783 = vpop.f32.mrf.mxu0
        %v4784 = vadd.f32 %v4604, %v4783
        %4785 = vmatmul.f32.gmra.mxu0 %v2836
        %v4786 = vpop.f32.mrf.mxu0
        %v4787 = vadd.f32 %v4607, %v4786
        %4788 = vmatmul.f32.gmra.mxu0 %v2850
        %v4789 = vpop.f32.mrf.mxu0
        %v4790 = vadd.f32 %v4610, %v4789
        %4791 = vmatmul.f32.gmra.mxu0 %v2864
        %v4792 = vpop.f32.mrf.mxu0
        %v4793 = vadd.f32 %v4613, %v4792
        %4794 = vmatmul.f32.gmra.mxu0 %v2878
        %v4795 = vpop.f32.mrf.mxu0
        %v4796 = vadd.f32 %v4616, %v4795
        %4797 = vmatmul.f32.gmra.mxu0 %v2892
        %v4798 = vpop.f32.mrf.mxu0
        %v4799 = vadd.f32 %v4619, %v4798
        %4800 = vmatmul.f32.gmra.mxu0 %v2906
        %v4801 = vpop.f32.mrf.mxu0
        %v4802 = vadd.f32 %v4622, %v4801
        %4803 = vmatmul.f32.gmra.mxu0 %v2920
        %v4804 = vpop.f32.mrf.mxu0
        %v4805 = vadd.f32 %v4625, %v4804
        %4806 = vmatmul.f32.gmra.mxu0 %v2934
        %v4807 = vpop.f32.mrf.mxu0
        %v4808 = vadd.f32 %v4628, %v4807
        %4809 = vmatmul.f32.gmra.mxu0 %v2948
        %v4810 = vpop.f32.mrf.mxu0
        %v4811 = vadd.f32 %v4631, %v4810
        %4812 = vmatmul.f32.gmra.mxu0 %v2962
        %v4813 = vpop.f32.mrf.mxu0
        %v4814 = vadd.f32 %v4634, %v4813
        %4815 = vmatmul.f32.gmra.mxu0 %v2976
        %v4816 = vpop.f32.mrf.mxu0
        %v4817 = vadd.f32 %v4637, %v4816
        %4818 = vmatmul.f32.gmra.mxu0 %v2990
        %v4819 = vpop.f32.mrf.mxu0
        %v4820 = vadd.f32 %v4640, %v4819
        %4821 = vmatmul.f32.gmra.mxu0 %v3004
        %v4822 = vpop.f32.mrf.mxu0
        %v4823 = vadd.f32 %v4643, %v4822
        %4824 = vmatmul.f32.gmra.mxu0 %v3018
        %v4825 = vpop.f32.mrf.mxu0
        %v4826 = vadd.f32 %v4646, %v4825
        %4827 = vmatmul.f32.gmra.mxu0 %v3032
        %v4828 = vpop.f32.mrf.mxu0
        %v4829 = vadd.f32 %v4649, %v4828
        %4830 = vmatmul.f32.gmra.mxu0 %v3046
        %v4831 = vpop.f32.mrf.mxu0
        %v4832 = vadd.f32 %v4652, %v4831
        %4833 = vmatmul.f32.gmra.mxu0 %v3060
        %v4834 = vpop.f32.mrf.mxu0
        %v4835 = vadd.f32 %v4655, %v4834
        %4836 = vmatmul.f32.gmra.mxu0 %v3074
        %v4837 = vpop.f32.mrf.mxu0
        %v4838 = vadd.f32 %v4658, %v4837
        %4839 = vmatmul.f32.gmra.mxu0 %v3088
        %v4840 = vpop.f32.mrf.mxu0
        %v4841 = vadd.f32 %v4661, %v4840
        %4842 = vmatmul.f32.gmra.mxu0 %v3102
        %v4843 = vpop.f32.mrf.mxu0
        %v4844 = vadd.f32 %v4664, %v4843
        %4845 = vmatmul.f32.gmra.mxu0 %v3116
        %v4846 = vpop.f32.mrf.mxu0
        %4847 = vmatmul.f32.gmra.mxu0 %v3132
        %v4848 = vpop.f32.mrf.mxu0
        %4849 = vmatmul.f32.gmra.mxu0 %v3131
        %v4850 = vpop.f32.mrf.mxu0
        %4851 = vdwg.mxu0
        %4852 = vmatpush.msra.mxu0 %v2327
        %4853 = vmatpush.msra.mxu0 %v2326
        %4854 = vmatpush.msra.mxu0 %v2325
        %4855 = vmatpush.msra.mxu0 %v2324
        %4856 = vmatpush.msra.mxu0 %v2323
        %4857 = vmatpush.msra.mxu0 %v2322
        %4858 = vmatpush.msra.mxu0 %v2321
        %4859 = vmatpush.msra.mxu0 %v2320
        %4860 = vmatpush.msra.mxu0 %v2319
        %4861 = vmatpush.msra.mxu0 %v2318
        %4862 = vmatpush.msra.mxu0 %v2317
        %4863 = vmatpush.msra.mxu0 %v2316
        %4864 = vmatpush.msra.mxu0 %v2315
        %4865 = vmatpush.msra.mxu0 %v2314
        %4866 = vmatpush.msra.mxu0 %v2313
        %4867 = vmatpush.msra.mxu0 %v2312
        %4868 = vmatmul.f32.gmra.mxu0 %v2368
        %v4869 = vpop.f32.mrf.mxu0
        %4870 = vmatmul.f32.gmra.mxu0 %v2385
        %v4871 = vpop.f32.mrf.mxu0
        %4872 = vmatmul.f32.gmra.mxu0 %v2401
        %v4873 = vpop.f32.mrf.mxu0
        %v4874 = vadd.f32 %v4694, %v4873
        %4875 = vmatmul.f32.gmra.mxu0 %v2417
        %v4876 = vpop.f32.mrf.mxu0
        %v4877 = vadd.f32 %v4697, %v4876
        %4878 = vmatmul.f32.gmra.mxu0 %v2432
        %v4879 = vpop.f32.mrf.mxu0
        %v4880 = vadd.f32 %v4700, %v4879
        %4881 = vmatmul.f32.gmra.mxu0 %v2446
        %v4882 = vpop.f32.mrf.mxu0
        %v4883 = vadd.f32 %v4703, %v4882
        %4884 = vmatmul.f32.gmra.mxu0 %v2460
        %v4885 = vpop.f32.mrf.mxu0
        %v4886 = vadd.f32 %v4706, %v4885
        %4887 = vmatmul.f32.gmra.mxu0 %v2474
        %v4888 = vpop.f32.mrf.mxu0
        %v4889 = vadd.f32 %v4709, %v4888
        %4890 = vmatmul.f32.gmra.mxu0 %v2488
        %v4891 = vpop.f32.mrf.mxu0
        %v4892 = vadd.f32 %v4712, %v4891
        %4893 = vmatmul.f32.gmra.mxu0 %v2502
        %v4894 = vpop.f32.mrf.mxu0
        %v4895 = vadd.f32 %v4715, %v4894
        %4896 = vmatmul.f32.gmra.mxu0 %v2516
        %v4897 = vpop.f32.mrf.mxu0
        %v4898 = vadd.f32 %v4718, %v4897
        %4899 = vmatmul.f32.gmra.mxu0 %v2530
        %v4900 = vpop.f32.mrf.mxu0
        %v4901 = vadd.f32 %v4721, %v4900
        %4902 = vmatmul.f32.gmra.mxu0 %v2544
        %v4903 = vpop.f32.mrf.mxu0
        %v4904 = vadd.f32 %v4724, %v4903
        %4905 = vmatmul.f32.gmra.mxu0 %v2558
        %v4906 = vpop.f32.mrf.mxu0
        %v4907 = vadd.f32 %v4727, %v4906
        %4908 = vmatmul.f32.gmra.mxu0 %v2572
        %v4909 = vpop.f32.mrf.mxu0
        %v4910 = vadd.f32 %v4730, %v4909
        %4911 = vmatmul.f32.gmra.mxu0 %v2586
        %v4912 = vpop.f32.mrf.mxu0
        %v4913 = vadd.f32 %v4733, %v4912
        %4914 = vmatmul.f32.gmra.mxu0 %v2600
        %v4915 = vpop.f32.mrf.mxu0
        %v4916 = vadd.f32 %v4736, %v4915
        %4917 = vmatmul.f32.gmra.mxu0 %v2614
        %v4918 = vpop.f32.mrf.mxu0
        %v4919 = vadd.f32 %v4739, %v4918
        %4920 = vmatmul.f32.gmra.mxu0 %v2628
        %v4921 = vpop.f32.mrf.mxu0
        %v4922 = vadd.f32 %v4742, %v4921
        %4923 = vmatmul.f32.gmra.mxu0 %v2642
        %v4924 = vpop.f32.mrf.mxu0
        %v4925 = vadd.f32 %v4745, %v4924
        %4926 = vmatmul.f32.gmra.mxu0 %v2656
        %v4927 = vpop.f32.mrf.mxu0
        %v4928 = vadd.f32 %v4748, %v4927
        %4929 = vmatmul.f32.gmra.mxu0 %v2670
        %v4930 = vpop.f32.mrf.mxu0
        %v4931 = vadd.f32 %v4751, %v4930
        %4932 = vmatmul.f32.gmra.mxu0 %v2684
        %v4933 = vpop.f32.mrf.mxu0
        %v4934 = vadd.f32 %v4754, %v4933
        %4935 = vmatmul.f32.gmra.mxu0 %v2698
        %v4936 = vpop.f32.mrf.mxu0
        %v4937 = vadd.f32 %v4757, %v4936
        %4938 = vmatmul.f32.gmra.mxu0 %v2712
        %v4939 = vpop.f32.mrf.mxu0
        %v4940 = vadd.f32 %v4760, %v4939
        %4941 = vmatmul.f32.gmra.mxu0 %v2726
        %v4942 = vpop.f32.mrf.mxu0
        %v4943 = vadd.f32 %v4763, %v4942
        %4944 = vmatmul.f32.gmra.mxu0 %v2740
        %v4945 = vpop.f32.mrf.mxu0
        %v4946 = vadd.f32 %v4766, %v4945
        %4947 = vmatmul.f32.gmra.mxu0 %v2754
        %v4948 = vpop.f32.mrf.mxu0
        %v4949 = vadd.f32 %v4769, %v4948
        %4950 = vmatmul.f32.gmra.mxu0 %v2768
        %v4951 = vpop.f32.mrf.mxu0
        %v4952 = vadd.f32 %v4772, %v4951
        %4953 = vmatmul.f32.gmra.mxu0 %v2782
        %v4954 = vpop.f32.mrf.mxu0
        %v4955 = vadd.f32 %v4775, %v4954
        %4956 = vmatmul.f32.gmra.mxu0 %v2796
        %v4957 = vpop.f32.mrf.mxu0
        %v4958 = vadd.f32 %v4778, %v4957
        %4959 = vmatmul.f32.gmra.mxu0 %v2810
        %v4960 = vpop.f32.mrf.mxu0
        %v4961 = vadd.f32 %v4781, %v4960
        %4962 = vmatmul.f32.gmra.mxu0 %v2824
        %v4963 = vpop.f32.mrf.mxu0
        %v4964 = vadd.f32 %v4784, %v4963
        %4965 = vmatmul.f32.gmra.mxu0 %v2838
        %v4966 = vpop.f32.mrf.mxu0
        %v4967 = vadd.f32 %v4787, %v4966
        %4968 = vmatmul.f32.gmra.mxu0 %v2852
        %v4969 = vpop.f32.mrf.mxu0
        %v4970 = vadd.f32 %v4790, %v4969
        %4971 = vmatmul.f32.gmra.mxu0 %v2866
        %v4972 = vpop.f32.mrf.mxu0
        %v4973 = vadd.f32 %v4793, %v4972
        %4974 = vmatmul.f32.gmra.mxu0 %v2880
        %v4975 = vpop.f32.mrf.mxu0
        %v4976 = vadd.f32 %v4796, %v4975
        %4977 = vmatmul.f32.gmra.mxu0 %v2894
        %v4978 = vpop.f32.mrf.mxu0
        %v4979 = vadd.f32 %v4799, %v4978
        %4980 = vmatmul.f32.gmra.mxu0 %v2908
        %v4981 = vpop.f32.mrf.mxu0
        %v4982 = vadd.f32 %v4802, %v4981
        %4983 = vmatmul.f32.gmra.mxu0 %v2922
        %v4984 = vpop.f32.mrf.mxu0
        %v4985 = vadd.f32 %v4805, %v4984
        %4986 = vmatmul.f32.gmra.mxu0 %v2936
        %v4987 = vpop.f32.mrf.mxu0
        %v4988 = vadd.f32 %v4808, %v4987
        %4989 = vmatmul.f32.gmra.mxu0 %v2950
        %v4990 = vpop.f32.mrf.mxu0
        %v4991 = vadd.f32 %v4811, %v4990
        %4992 = vmatmul.f32.gmra.mxu0 %v2964
        %v4993 = vpop.f32.mrf.mxu0
        %v4994 = vadd.f32 %v4814, %v4993
        %4995 = vmatmul.f32.gmra.mxu0 %v2978
        %v4996 = vpop.f32.mrf.mxu0
        %v4997 = vadd.f32 %v4817, %v4996
        %4998 = vmatmul.f32.gmra.mxu0 %v2992
        %v4999 = vpop.f32.mrf.mxu0
        %v5000 = vadd.f32 %v4820, %v4999
        %5001 = vmatmul.f32.gmra.mxu0 %v3006
        %v5002 = vpop.f32.mrf.mxu0
        %v5003 = vadd.f32 %v4823, %v5002
        %5004 = vmatmul.f32.gmra.mxu0 %v3020
        %v5005 = vpop.f32.mrf.mxu0
        %v5006 = vadd.f32 %v4826, %v5005
        %5007 = vmatmul.f32.gmra.mxu0 %v3034
        %v5008 = vpop.f32.mrf.mxu0
        %v5009 = vadd.f32 %v4829, %v5008
        %5010 = vmatmul.f32.gmra.mxu0 %v3048
        %v5011 = vpop.f32.mrf.mxu0
        %v5012 = vadd.f32 %v4832, %v5011
        %5013 = vmatmul.f32.gmra.mxu0 %v3062
        %v5014 = vpop.f32.mrf.mxu0
        %v5015 = vadd.f32 %v4835, %v5014
        %5016 = vmatmul.f32.gmra.mxu0 %v3076
        %v5017 = vpop.f32.mrf.mxu0
        %v5018 = vadd.f32 %v4838, %v5017
        %5019 = vmatmul.f32.gmra.mxu0 %v3090
        %v5020 = vpop.f32.mrf.mxu0
        %v5021 = vadd.f32 %v4841, %v5020
        %5022 = vmatmul.f32.gmra.mxu0 %v3104
        %v5023 = vpop.f32.mrf.mxu0
        %v5024 = vadd.f32 %v4844, %v5023
        %5025 = vmatmul.f32.gmra.mxu0 %v3118
        %v5026 = vpop.f32.mrf.mxu0
        %5027 = vmatmul.f32.gmra.mxu0 %v3134
        %v5028 = vpop.f32.mrf.mxu0
        %5029 = vmatmul.f32.gmra.mxu0 %v3133
        %v5030 = vpop.f32.mrf.mxu0
        %5031 = vdwg.mxu0
        %5032 = vmatpush.msra.mxu0 %v2343
        %5033 = vmatpush.msra.mxu0 %v2342
        %5034 = vmatpush.msra.mxu0 %v2341
        %5035 = vmatpush.msra.mxu0 %v2340
        %5036 = vmatpush.msra.mxu0 %v2339
        %5037 = vmatpush.msra.mxu0 %v2338
        %5038 = vmatpush.msra.mxu0 %v2337
        %5039 = vmatpush.msra.mxu0 %v2336
        %5040 = vmatpush.msra.mxu0 %v2335
        %5041 = vmatpush.msra.mxu0 %v2334
        %5042 = vmatpush.msra.mxu0 %v2333
        %5043 = vmatpush.msra.mxu0 %v2332
        %5044 = vmatpush.msra.mxu0 %v2331
        %5045 = vmatpush.msra.mxu0 %v2330
        %5046 = vmatpush.msra.mxu0 %v2329
        %5047 = vmatpush.msra.mxu0 %v2328
        %5048 = vmatmul.f32.gmra.mxu0 %v2371
        %v5049 = vpop.f32.mrf.mxu0
        %5050 = vmatmul.f32.gmra.mxu0 %v2387
        %v5051 = vpop.f32.mrf.mxu0
        %5052 = vmatmul.f32.gmra.mxu0 %v2403
        %v5053 = vpop.f32.mrf.mxu0
        %v5054 = vadd.f32 %v4874, %v5053
        %5055 = vmatmul.f32.gmra.mxu0 %v2419
        %v5056 = vpop.f32.mrf.mxu0
        %v5057 = vadd.f32 %v4877, %v5056
        %5058 = vmatmul.f32.gmra.mxu0 %v2434
        %v5059 = vpop.f32.mrf.mxu0
        %v5060 = vadd.f32 %v4880, %v5059
        %5061 = vmatmul.f32.gmra.mxu0 %v2448
        %v5062 = vpop.f32.mrf.mxu0
        %v5063 = vadd.f32 %v4883, %v5062
        %5064 = vmatmul.f32.gmra.mxu0 %v2462
        %v5065 = vpop.f32.mrf.mxu0
        %v5066 = vadd.f32 %v4886, %v5065
        %5067 = vmatmul.f32.gmra.mxu0 %v2476
        %v5068 = vpop.f32.mrf.mxu0
        %v5069 = vadd.f32 %v4889, %v5068
        %5070 = vmatmul.f32.gmra.mxu0 %v2490
        %v5071 = vpop.f32.mrf.mxu0
        %v5072 = vadd.f32 %v4892, %v5071
        %5073 = vmatmul.f32.gmra.mxu0 %v2504
        %v5074 = vpop.f32.mrf.mxu0
        %v5075 = vadd.f32 %v4895, %v5074
        %5076 = vmatmul.f32.gmra.mxu0 %v2518
        %v5077 = vpop.f32.mrf.mxu0
        %v5078 = vadd.f32 %v4898, %v5077
        %5079 = vmatmul.f32.gmra.mxu0 %v2532
        %v5080 = vpop.f32.mrf.mxu0
        %v5081 = vadd.f32 %v4901, %v5080
        %5082 = vmatmul.f32.gmra.mxu0 %v2546
        %v5083 = vpop.f32.mrf.mxu0
        %v5084 = vadd.f32 %v4904, %v5083
        %5085 = vmatmul.f32.gmra.mxu0 %v2560
        %v5086 = vpop.f32.mrf.mxu0
        %v5087 = vadd.f32 %v4907, %v5086
        %5088 = vmatmul.f32.gmra.mxu0 %v2574
        %v5089 = vpop.f32.mrf.mxu0
        %v5090 = vadd.f32 %v4910, %v5089
        %5091 = vmatmul.f32.gmra.mxu0 %v2588
        %v5092 = vpop.f32.mrf.mxu0
        %v5093 = vadd.f32 %v4913, %v5092
        %5094 = vmatmul.f32.gmra.mxu0 %v2602
        %v5095 = vpop.f32.mrf.mxu0
        %v5096 = vadd.f32 %v4916, %v5095
        %5097 = vmatmul.f32.gmra.mxu0 %v2616
        %v5098 = vpop.f32.mrf.mxu0
        %v5099 = vadd.f32 %v4919, %v5098
        %5100 = vmatmul.f32.gmra.mxu0 %v2630
        %v5101 = vpop.f32.mrf.mxu0
        %v5102 = vadd.f32 %v4922, %v5101
        %5103 = vmatmul.f32.gmra.mxu0 %v2644
        %v5104 = vpop.f32.mrf.mxu0
        %v5105 = vadd.f32 %v4925, %v5104
        %5106 = vmatmul.f32.gmra.mxu0 %v2658
        %v5107 = vpop.f32.mrf.mxu0
        %v5108 = vadd.f32 %v4928, %v5107
        %5109 = vmatmul.f32.gmra.mxu0 %v2672
        %v5110 = vpop.f32.mrf.mxu0
        %v5111 = vadd.f32 %v4931, %v5110
        %5112 = vmatmul.f32.gmra.mxu0 %v2686
        %v5113 = vpop.f32.mrf.mxu0
        %v5114 = vadd.f32 %v4934, %v5113
        %5115 = vmatmul.f32.gmra.mxu0 %v2700
        %v5116 = vpop.f32.mrf.mxu0
        %v5117 = vadd.f32 %v4937, %v5116
        %5118 = vmatmul.f32.gmra.mxu0 %v2714
        %v5119 = vpop.f32.mrf.mxu0
        %v5120 = vadd.f32 %v4940, %v5119
        %5121 = vmatmul.f32.gmra.mxu0 %v2728
        %v5122 = vpop.f32.mrf.mxu0
        %v5123 = vadd.f32 %v4943, %v5122
        %5124 = vmatmul.f32.gmra.mxu0 %v2742
        %v5125 = vpop.f32.mrf.mxu0
        %v5126 = vadd.f32 %v4946, %v5125
        %5127 = vmatmul.f32.gmra.mxu0 %v2756
        %v5128 = vpop.f32.mrf.mxu0
        %v5129 = vadd.f32 %v4949, %v5128
        %5130 = vmatmul.f32.gmra.mxu0 %v2770
        %v5131 = vpop.f32.mrf.mxu0
        %v5132 = vadd.f32 %v4952, %v5131
        %5133 = vmatmul.f32.gmra.mxu0 %v2784
        %v5134 = vpop.f32.mrf.mxu0
        %v5135 = vadd.f32 %v4955, %v5134
        %5136 = vmatmul.f32.gmra.mxu0 %v2798
        %v5137 = vpop.f32.mrf.mxu0
        %v5138 = vadd.f32 %v4958, %v5137
        %5139 = vmatmul.f32.gmra.mxu0 %v2812
        %v5140 = vpop.f32.mrf.mxu0
        %v5141 = vadd.f32 %v4961, %v5140
        %5142 = vmatmul.f32.gmra.mxu0 %v2826
        %v5143 = vpop.f32.mrf.mxu0
        %v5144 = vadd.f32 %v4964, %v5143
        %5145 = vmatmul.f32.gmra.mxu0 %v2840
        %v5146 = vpop.f32.mrf.mxu0
        %v5147 = vadd.f32 %v4967, %v5146
        %5148 = vmatmul.f32.gmra.mxu0 %v2854
        %v5149 = vpop.f32.mrf.mxu0
        %v5150 = vadd.f32 %v4970, %v5149
        %5151 = vmatmul.f32.gmra.mxu0 %v2868
        %v5152 = vpop.f32.mrf.mxu0
        %v5153 = vadd.f32 %v4973, %v5152
        %5154 = vmatmul.f32.gmra.mxu0 %v2882
        %v5155 = vpop.f32.mrf.mxu0
        %v5156 = vadd.f32 %v4976, %v5155
        %5157 = vmatmul.f32.gmra.mxu0 %v2896
        %v5158 = vpop.f32.mrf.mxu0
        %v5159 = vadd.f32 %v4979, %v5158
        %5160 = vmatmul.f32.gmra.mxu0 %v2910
        %v5161 = vpop.f32.mrf.mxu0
        %v5162 = vadd.f32 %v4982, %v5161
        %5163 = vmatmul.f32.gmra.mxu0 %v2924
        %v5164 = vpop.f32.mrf.mxu0
        %v5165 = vadd.f32 %v4985, %v5164
        %5166 = vmatmul.f32.gmra.mxu0 %v2938
        %v5167 = vpop.f32.mrf.mxu0
        %v5168 = vadd.f32 %v4988, %v5167
        %5169 = vmatmul.f32.gmra.mxu0 %v2952
        %v5170 = vpop.f32.mrf.mxu0
        %v5171 = vadd.f32 %v4991, %v5170
        %5172 = vmatmul.f32.gmra.mxu0 %v2966
        %v5173 = vpop.f32.mrf.mxu0
        %v5174 = vadd.f32 %v4994, %v5173
        %5175 = vmatmul.f32.gmra.mxu0 %v2980
        %v5176 = vpop.f32.mrf.mxu0
        %v5177 = vadd.f32 %v4997, %v5176
        %5178 = vmatmul.f32.gmra.mxu0 %v2994
        %v5179 = vpop.f32.mrf.mxu0
        %v5180 = vadd.f32 %v5000, %v5179
        %5181 = vmatmul.f32.gmra.mxu0 %v3008
        %v5182 = vpop.f32.mrf.mxu0
        %v5183 = vadd.f32 %v5003, %v5182
        %5184 = vmatmul.f32.gmra.mxu0 %v3022
        %v5185 = vpop.f32.mrf.mxu0
        %v5186 = vadd.f32 %v5006, %v5185
        %5187 = vmatmul.f32.gmra.mxu0 %v3036
        %v5188 = vpop.f32.mrf.mxu0
        %v5189 = vadd.f32 %v5009, %v5188
        %5190 = vmatmul.f32.gmra.mxu0 %v3050
        %v5191 = vpop.f32.mrf.mxu0
        %v5192 = vadd.f32 %v5012, %v5191
        %5193 = vmatmul.f32.gmra.mxu0 %v3064
        %v5194 = vpop.f32.mrf.mxu0
        %v5195 = vadd.f32 %v5015, %v5194
        %5196 = vmatmul.f32.gmra.mxu0 %v3078
        %v5197 = vpop.f32.mrf.mxu0
        %v5198 = vadd.f32 %v5018, %v5197
        %5199 = vmatmul.f32.gmra.mxu0 %v3092
        %v5200 = vpop.f32.mrf.mxu0
        %v5201 = vadd.f32 %v5021, %v5200
        %5202 = vmatmul.f32.gmra.mxu0 %v3106
        %v5203 = vpop.f32.mrf.mxu0
        %v5204 = vadd.f32 %v5024, %v5203
        %5205 = vmatmul.f32.gmra.mxu0 %v3120
        %v5206 = vpop.f32.mrf.mxu0
        %5207 = vmatmul.f32.gmra.mxu0 %v3136
        %v5208 = vpop.f32.mrf.mxu0
        %5209 = vmatmul.f32.gmra.mxu0 %v3135
        %v5210 = vpop.f32.mrf.mxu0
        %5211 = vdwg.mxu0
        %v5212 = vmax.f32 %v5054, 0.0
        %v5213 = vmax.f32 %v5057, 0.0
        %v5214 = vmax.f32 %v5060, 0.0
        %v5215 = vmax.f32 %v5063, 0.0
        %v5216 = vmax.f32 %v5066, 0.0
        %v5217 = vmax.f32 %v5069, 0.0
        %v5218 = vmax.f32 %v5072, 0.0
        %v5219 = vmax.f32 %v5075, 0.0
        %v5220 = vmax.f32 %v5078, 0.0
        %v5221 = vmax.f32 %v5081, 0.0
        %v5222 = vmax.f32 %v5084, 0.0
        %v5223 = vmax.f32 %v5087, 0.0
        %v5224 = vmax.f32 %v5090, 0.0
        %v5225 = vmax.f32 %v5093, 0.0
        %v5226 = vmax.f32 %v5096, 0.0
        %v5227 = vmax.f32 %v5099, 0.0
        %v5228 = vmax.f32 %v5102, 0.0
        %v5229 = vmax.f32 %v5105, 0.0
        %v5230 = vmax.f32 %v5108, 0.0
        %v5231 = vmax.f32 %v5111, 0.0
        %v5232 = vmax.f32 %v5114, 0.0
        %v5233 = vmax.f32 %v5117, 0.0
        %v5234 = vmax.f32 %v5120, 0.0
        %v5235 = vmax.f32 %v5123, 0.0
        %v5236 = vmax.f32 %v5126, 0.0
        %v5237 = vmax.f32 %v5129, 0.0
        %v5238 = vmax.f32 %v5132, 0.0
        %v5239 = vmax.f32 %v5135, 0.0
        %v5240 = vmax.f32 %v5138, 0.0
        %v5241 = vmax.f32 %v5141, 0.0
        %v5242 = vmax.f32 %v5144, 0.0
        %v5243 = vmax.f32 %v5147, 0.0
        %v5244 = vmax.f32 %v5150, 0.0
        %v5245 = vmax.f32 %v5153, 0.0
        %v5246 = vmax.f32 %v5156, 0.0
        %v5247 = vmax.f32 %v5159, 0.0
        %v5248 = vmax.f32 %v5162, 0.0
        %v5249 = vmax.f32 %v5165, 0.0
        %v5250 = vmax.f32 %v5168, 0.0
        %v5251 = vmax.f32 %v5171, 0.0
        %v5252 = vmax.f32 %v5174, 0.0
        %v5253 = vmax.f32 %v5177, 0.0
        %v5254 = vmax.f32 %v5180, 0.0
        %v5255 = vmax.f32 %v5183, 0.0
        %v5256 = vmax.f32 %v5186, 0.0
        %v5257 = vmax.f32 %v5189, 0.0
        %v5258 = vmax.f32 %v5192, 0.0
        %v5259 = vmax.f32 %v5195, 0.0
        %v5260 = vmax.f32 %v5198, 0.0
        %v5261 = vmax.f32 %v5201, 0.0
        %v5262 = vmax.f32 %v5204, 0.0
        %vm5263 = vcmask 523270
        %5264 = vst.msk [vmem:[%s297 - $0x6] sm:$0xc0] %vm5263, %v5212
        %vm5265 = vcmask 523264
        %5266 = vst.msk [vmem:[%s297 + $0x2] sm:$0xff] %vm5265, %v5213
        %5267 = vst.msk [vmem:[%s297 + $0xa] sm:$0xff] %vm5265, %v5214
        %vm5268 = vcmask 516096
        %5269 = vst.msk [vmem:[%s297 + $0x12] sm:$0x1] %vm5268, %v5215
        %vm5270 = vcmask 523267
        %5271 = vst.msk [vmem:[%s297 + $0x10] sm:$0xf8] %vm5270, %v5215
        %5272 = vst.msk [vmem:[%s297 + $0x18] sm:$0xff] %vm5265, %v5216
        %vm5273 = vcmask 521216
        %5274 = vst.msk [vmem:[%s297 + $0x20] sm:$0x3f] %vm5273, %v5217
        %5275 = vst.msk [vmem:[%s297 + $0x26] sm:$0xff] %vm5265, %v5218
        %5276 = vst.msk [vmem:[%s297 + $0x2e] sm:$0xff] %vm5265, %v5219
        %vm5277 = vcmask 518144
        %5278 = vst.msk [vmem:[%s297 + $0x36] sm:$0x7] %vm5277, %v5220
        %vm5279 = vcmask 523269
        %5280 = vst.msk [vmem:[%s297 + $0x34] sm:$0xe0] %vm5279, %v5220
        %5281 = vst.msk [vmem:[%s297 + $0x3c] sm:$0xff] %vm5265, %v5221
        %5282 = vst.msk [vmem:[%s297 + $0x44] sm:$0xff] %vm5265, %v5222
        %vm5283 = vcmask 523266
        %5284 = vst.msk [vmem:[%s297 + $0x4a] sm:$0xfc] %vm5283, %v5223
        %5285 = vst.msk [vmem:[%s297 + $0x52] sm:$0xff] %vm5265, %v5224
        %vm5286 = vcmask 520192
        %5287 = vst.msk [vmem:[%s297 + $0x5a] sm:$0x1f] %vm5286, %v5225
        %vm5288 = vcmask 523271
        %5289 = vst.msk [vmem:[%s297 + $0x58] sm:$0x80] %vm5288, %v5225
        %5290 = vst.msk [vmem:[%s297 + $0x60] sm:$0xff] %vm5265, %v5226
        %5291 = vst.msk [vmem:[%s297 + $0x68] sm:$0xff] %vm5265, %v5227
        %vm5292 = vcmask 517120
        %5293 = vst.msk [vmem:[%s297 + $0x70] sm:$0x3] %vm5292, %v5228
        %vm5294 = vcmask 523268
        %5295 = vst.msk [vmem:[%s297 + $0x6e] sm:$0xf0] %vm5294, %v5228
        %5296 = vst.msk [vmem:[%s297 + $0x76] sm:$0xff] %vm5265, %v5229
        %vm5297 = vcmask 522240
        %5298 = vst.msk [vmem:[%s297 + $0x7e] sm:$0x7f] %vm5297, %v5230
        %vm5299 = vcmask 523265
        %5300 = vst.msk [vmem:[%s297 + $0x84] sm:$0xfe] %vm5299, %v5231
        %5301 = vst.msk [vmem:[%s297 + $0x8c] sm:$0xff] %vm5265, %v5232
        %vm5302 = vcmask 519168
        %5303 = vst.msk [vmem:[%s297 + $0x94] sm:$0xf] %vm5302, %v5233
        %5304 = vst.msk [vmem:[%s297 + $0x92] sm:$0xc0] %vm5263, %v5233
        %5305 = vst.msk [vmem:[%s297 + $0x9a] sm:$0xff] %vm5265, %v5234
        %5306 = vst.msk [vmem:[%s297 + $0xa2] sm:$0xff] %vm5265, %v5235
        %5307 = vst.msk [vmem:[%s297 + $0xaa] sm:$0x1] %vm5268, %v5236
        %5308 = vst.msk [vmem:[%s297 + $0xa8] sm:$0xf8] %vm5270, %v5236
        %5309 = vst.msk [vmem:[%s297 + $0xb0] sm:$0xff] %vm5265, %v5237
        %5310 = vst.msk [vmem:[%s297 + $0xb8] sm:$0x3f] %vm5273, %v5238
        %5311 = vst.msk [vmem:[%s297 + $0xbe] sm:$0xff] %vm5265, %v5239
        %5312 = vst.msk [vmem:[%s297 + $0xc6] sm:$0xff] %vm5265, %v5240
        %5313 = vst.msk [vmem:[%s297 + $0xce] sm:$0x7] %vm5277, %v5241
        %5314 = vst.msk [vmem:[%s297 + $0xcc] sm:$0xe0] %vm5279, %v5241
        %5315 = vst.msk [vmem:[%s297 + $0xd4] sm:$0xff] %vm5265, %v5242
        %5316 = vst.msk [vmem:[%s297 + $0xdc] sm:$0xff] %vm5265, %v5243
        %5317 = vst.msk [vmem:[%s297 + $0xe2] sm:$0xfc] %vm5283, %v5244
        %5318 = vst.msk [vmem:[%s297 + $0xea] sm:$0xff] %vm5265, %v5245
        %5319 = vst.msk [vmem:[%s297 + $0xf2] sm:$0x1f] %vm5286, %v5246
        %5320 = vst.msk [vmem:[%s297 + $0xf0] sm:$0x80] %vm5288, %v5246
        %5321 = vst.msk [vmem:[%s297 + $0xf8] sm:$0xff] %vm5265, %v5247
        %5322 = vst.msk [vmem:[%s297 + $0x100] sm:$0xff] %vm5265, %v5248
        %5323 = vst.msk [vmem:[%s297 + $0x108] sm:$0x3] %vm5292, %v5249
        %5324 = vst.msk [vmem:[%s297 + $0x106] sm:$0xf0] %vm5294, %v5249
        %5325 = vst.msk [vmem:[%s297 + $0x10e] sm:$0xff] %vm5265, %v5250
        %5326 = vst.msk [vmem:[%s297 + $0x116] sm:$0x7f] %vm5297, %v5251
        %5327 = vst.msk [vmem:[%s297 + $0x11c] sm:$0xfe] %vm5299, %v5252
        %5328 = vst.msk [vmem:[%s297 + $0x124] sm:$0xff] %vm5265, %v5253
        %5329 = vst.msk [vmem:[%s297 + $0x12c] sm:$0xf] %vm5302, %v5254
        %5330 = vst.msk [vmem:[%s297 + $0x12a] sm:$0xc0] %vm5263, %v5254
        %5331 = vst.msk [vmem:[%s297 + $0x132] sm:$0xff] %vm5265, %v5255
        %5332 = vst.msk [vmem:[%s297 + $0x13a] sm:$0xff] %vm5265, %v5256
        %5333 = vst.msk [vmem:[%s297 + $0x142] sm:$0x1] %vm5268, %v5257
        %5334 = vst.msk [vmem:[%s297 + $0x140] sm:$0xf8] %vm5270, %v5257
        %5335 = vst.msk [vmem:[%s297 + $0x148] sm:$0xff] %vm5265, %v5258
        %5336 = vst.msk [vmem:[%s297 + $0x150] sm:$0x3f] %vm5273, %v5259
        %5337 = vst.msk [vmem:[%s297 + $0x156] sm:$0xff] %vm5265, %v5260
        %5338 = vst.msk [vmem:[%s297 + $0x15e] sm:$0xff] %vm5265, %v5261
        %5339 = vst.msk [vmem:[%s297 + $0x166] sm:$0x7] %vm5277, %v5262
        %5340 = vst.msk [vmem:[%s297 + $0x169] sm:$0x7] %vm5277, 0.0
        %p5341 = scmp.lt.s32.totalorder %s19, 1
        %s5342 = scalar_select %p5341, %s19, 1
        %s5343 = smul.addr %s5342, 46
        %s5344 = smul.addr %s5343, 8
        %s5345 = scalar_lea.vmem %s6, %s5344
        // Predicated region
        $region57: #{gocnn_forward.2} parent=43 // pred_check
          %p5346 = pneg %p168
        $region58: #{gocnn_forward.2} parent=43 // pred_check_branch
          %5348 = sbr.rel (%p5346) target = $region60
        $region59: #{gocnn_forward.2} parent=43 // pred_region
          _
        $region60: #{gocnn_forward.2} parent=43 // pred_fallthru
          _
      $region44: #{gocnn_forward.2} parent=5 // pred_fallthru
        _
      %p5349 = scmp.le.s32.totalorder 2, %s14
      // Predicated region
      $region61: #{gocnn_forward.2} parent=5 // pred_check
        %p5350 = pneg %p5349
      $region62: #{gocnn_forward.2} parent=5 // pred_check_branch
        %5352 = sbr.rel (%p5350) target = $region64
      $region63: #{gocnn_forward.2} parent=5 // pred_region
        %s5353 = ssub.s32 %s14, 2
        // Predicated region
        $region65: #{gocnn_forward.2} parent=63 // pred_check
          %p5354 = pneg %p174
        $region66: #{gocnn_forward.2} parent=63 // pred_check_branch
          %5356 = sbr.rel (%p5354) target = $region68
        $region67: #{gocnn_forward.2} parent=63 // pred_region
          %p5357 = scmp.lt.s32.totalorder %s20, 1
          %s5358 = scalar_select %p5357, %s20, 1
          %s5359 = smul.addr %s5358, 46
          %s5360 = smul.addr %s5359, 8
          %s5361 = scalar_lea.vmem %s6, %s5360
        $region68: #{gocnn_forward.2} parent=63 // pred_fallthru
          _
      $region64: #{gocnn_forward.2} parent=5 // pred_fallthru
        _
    $region6: #{gocnn_forward.2} parent=1 // loop_footer
      %s18 = sadd.s32 1, %s14
    $region7: #{gocnn_forward.2} parent=1 // loop_footer_branch
      %13 = sbr.rel target = $region3
    $region8: #{gocnn_forward.2} parent=1 // loop_exit
      _
    %5362 = vsyncpa [#allocation4], 1
    %s5363 = scalar_lea.sflag [#allocation4], 1
    %5364 = vsyncpa %s5363, 1
    %5365 = vsyncpa [#allocation6], 1

</llo_original>
